<compile_context>
chip_gen: v7x
topology: tpu7x:2x2x1
jax: 0.10.0
libtpu: 0.0.40
codegen_flags: <defaults>
</compile_context>

<pallas_src>
import functools
import math

import jax
import jax.numpy as jnp
from jax import lax
from jax.experimental import pallas as pl
from jax.experimental.pallas import tpu as pltpu

D_MODEL = 64
NUM_HEADS = 4
HEAD_DIM = D_MODEL // NUM_HEADS
FF_DIM = 256
NUM_LAYERS = 3
TIME_STEPS = 7
INPUT_DIM = 8
LN_EPS = 1e-5


# ----------------------------- fused Pallas kernel ------------------------------

def _layer_norm(x, g, b):
    mu = jnp.mean(x, axis=-1, keepdims=True)
    var = jnp.mean(jnp.square(x - mu), axis=-1, keepdims=True)
    return (x - mu) * lax.rsqrt(var + LN_EPS) * g + b


def _gelu_exact(x):
    # PyTorch nn.GELU default (erf formulation)
    return 0.5 * x * (1.0 + lax.erf(x * (1.0 / math.sqrt(2.0))))


def _fused_forward_kernel(
    # ---- inputs (all resident in VMEM, full blocks) ----
    x_ref,                      # (B*T, F)
    fp1_w_ref, fp1_b_ref,       # (F, D), (1, D)
    fp2_w_ref, fp2_b_ref,       # (D, D), (1, D)
    proj_w_ref, proj_b_ref,     # (D, D), (1, D)
    pe_ref,                     # (T, D)
    wqkv_ref, bqkv_ref,         # (L, 3, D, D), (L, 3, 1, D)
    wout_ref, bout_ref,         # (L, D, D), (L, 1, D)
    ln1_g_ref, ln1_b_ref,       # (L, 1, D), (L, 1, D)
    wff1_ref, bff1_ref,         # (L, D, FF), (L, 1, FF)
    wff2_ref, bff2_ref,         # (L, FF, D), (L, 1, D)
    ln2_g_ref, ln2_b_ref,       # (L, 1, D), (L, 1, D)
    attn_w_ref, attn_b_ref,     # (1, D), (1, 1)
    dec1_w_ref, dec1_b_ref,     # (D, FF), (1, FF)
    dec2_w_ref, dec2_b_ref,     # (FF, FF//2), (1, FF//2)
    dec3_w_ref, dec3_b_ref,     # (FF//2, 1), (1, 1)
    # ---- outputs ----
    out_ref,                    # (B, 1)
    scores_ref,                 # (B, 1, T)  (lane-major; transposed outside)
    *, batch, time_steps):
    B, T = batch, time_steps
    D, H, Dh = D_MODEL, NUM_HEADS, HEAD_DIM
    scale = 1.0 / math.sqrt(Dh)

    x = x_ref[...]                                                    # (B*T, F)

    # HierarchicalFeatureProcessor (dropout = identity in eval)
    h = jnp.maximum(
        jnp.dot(x, fp1_w_ref[...], preferred_element_type=jnp.float32)
        + fp1_b_ref[...], 0.0)
    h = jnp.maximum(
        jnp.dot(h, fp2_w_ref[...], preferred_element_type=jnp.float32)
        + fp2_b_ref[...], 0.0)

    # input projection + positional encoding
    h = jnp.dot(h, proj_w_ref[...], preferred_element_type=jnp.float32) + proj_b_ref[...]
    pe = pe_ref[...]                                                  # (T, D)
    h = h + jnp.concatenate([pe] * B, axis=0)                         # tile PE per batch

    # ---- 3x post-norm TransformerEncoderLayer (fully unrolled, mask=None) ----
    for l in range(NUM_LAYERS):
        q_all = jnp.dot(h, wqkv_ref[l, 0], preferred_element_type=jnp.float32) + bqkv_ref[l, 0]
        k_all = jnp.dot(h, wqkv_ref[l, 1], preferred_element_type=jnp.float32) + bqkv_ref[l, 1]
        v_all = jnp.dot(h, wqkv_ref[l, 2], preferred_element_type=jnp.float32) + bqkv_ref[l, 2]

        # heads are contiguous Dh-column slices -> pure static slicing, no transposes
        batch_rows = []
        for b in range(B):
            r0 = b * T
            heads = []
            for hd in range(H):
                c0 = hd * Dh
                q = q_all[r0:r0 + T, c0:c0 + Dh]                      # (T, Dh)
                k = k_all[r0:r0 + T, c0:c0 + Dh]
                v = v_all[r0:r0 + T, c0:c0 + Dh]
                s = lax.dot_general(q, k, (((1,), (1,)), ((), ())),
                                    preferred_element_type=jnp.float32) * scale
                m = jnp.max(s, axis=-1, keepdims=True)
                e = jnp.exp(s - m)
                p = e * pl.reciprocal(jnp.sum(e, axis=-1, keepdims=True), approx=True)
                heads.append(jnp.dot(p, v, preferred_element_type=jnp.float32))
            batch_rows.append(jnp.concatenate(heads, axis=1))         # (T, D)
        attn = jnp.concatenate(batch_rows, axis=0)                    # (B*T, D)

        sa = jnp.dot(attn, wout_ref[l], preferred_element_type=jnp.float32) + bout_ref[l]
        h = _layer_norm(h + sa, ln1_g_ref[l], ln1_b_ref[l])

        ff = jnp.maximum(
            jnp.dot(h, wff1_ref[l], preferred_element_type=jnp.float32) + bff1_ref[l], 0.0)
        ff = jnp.dot(ff, wff2_ref[l], preferred_element_type=jnp.float32) + bff2_ref[l]
        h = _layer_norm(h + ff, ln2_g_ref[l], ln2_b_ref[l])

    # ---- attention pooling over time (softmax over T, per batch) ----
    aw = attn_w_ref[...]                                              # (1, D)
    ab = attn_b_ref[...]                                              # (1, 1)
    pooled_rows = []
    for b in range(B):
        h_b = h[b * T:(b + 1) * T, :]                                 # (T, D)
        lg = lax.dot_general(aw, h_b, (((1,), (1,)), ((), ())),
                             preferred_element_type=jnp.float32) + ab  # (1, T)
        m = jnp.max(lg, axis=-1, keepdims=True)
        e = jnp.exp(lg - m)
        s = e / jnp.sum(e, axis=-1, keepdims=True)                    # exact softmax
        scores_ref[b] = s
        pooled_rows.append(jnp.dot(s, h_b, preferred_element_type=jnp.float32))  # (1, D)
    pooled = jnp.concatenate(pooled_rows, axis=0)                     # (B, D)

    # ---- decoder MLP (dropout = identity) ----
    d = _gelu_exact(jnp.dot(pooled, dec1_w_ref[...], preferred_element_type=jnp.float32)
                    + dec1_b_ref[...])
    d = _gelu_exact(jnp.dot(d, dec2_w_ref[...], preferred_element_type=jnp.float32)
                    + dec2_b_ref[...])
    out_ref[...] = (jnp.dot(d, dec3_w_ref[...], preferred_element_type=jnp.float32)
                    + dec3_b_ref[...])


# ------------------------------ wrapper --------------------------------

def improved_transformer_forward(x, params):
    B, T, F = x.shape

    x2d = x.reshape(B * T, F)
    inputs = (
        x2d,
        params["fp1_w"], params["fp1_b"],
        params["fp2_w"], params["fp2_b"],
        params["proj_w"], params["proj_b"],
        params["pe"][:T],
        params["wqkv"], params["bqkv"],
        params["wout"], params["bout"],
        params["ln1_g"], params["ln1_b"],
        params["wff1"], params["bff1"],
        params["wff2"], params["bff2"],
        params["ln2_g"], params["ln2_b"],
        params["attn_w"], params["attn_b"],
        params["dec1_w"], params["dec1_b"],
        params["dec2_w"], params["dec2_b"],
        params["dec3_w"], params["dec3_b"],
    )

    def full_spec(a):
        nd = a.ndim
        return pl.BlockSpec(a.shape, lambda i, _nd=nd: (0,) * _nd)

    out, scores_lane = pl.pallas_call(
        functools.partial(_fused_forward_kernel, batch=B, time_steps=T),
        out_shape=(jax.ShapeDtypeStruct((B, 1), jnp.float32),
                   jax.ShapeDtypeStruct((B, 1, T), jnp.float32)),
        grid=(1,),
        in_specs=[full_spec(a) for a in inputs],
        out_specs=(pl.BlockSpec((B, 1), lambda i: (0, 0)),
                   pl.BlockSpec((B, 1, T), lambda i: (0, 0, 0))),
        compiler_params=pltpu.CompilerParams(
            dimension_semantics=("arbitrary",)),
    )(*inputs)

    # lane-major (B, 1, T) kernel output -> module's (B, T, 1) layout
    scores = jnp.transpose(scores_lane, (0, 2, 1))
    return out, scores


# ------------------------------ parameters ----------------------------------

def _dense_init(key, fan_in, fan_out, scale=0.05):
    return scale * jax.random.normal(key, (fan_in, fan_out), dtype=jnp.float32)


def make_positional_encoding(time_steps, d_model):
    position = jnp.arange(time_steps, dtype=jnp.float32)[:, None]
    div_term = jnp.exp(jnp.arange(0, d_model, 2, dtype=jnp.float32)
                       * (-math.log(10000.0) / d_model))
    pe = jnp.zeros((time_steps, d_model), dtype=jnp.float32)
    pe = pe.at[:, 0::2].set(jnp.sin(position * div_term))
    pe = pe.at[:, 1::2].set(jnp.cos(position * div_term))
    return pe


def init_params(key):
    keys = iter(jax.random.split(key, 64))
    D, F, FF, FF2 = D_MODEL, INPUT_DIM, FF_DIM, FF_DIM // 2
    T, L = TIME_STEPS, NUM_LAYERS
    params = {
        "fp1_w": _dense_init(next(keys), F, D), "fp1_b": jnp.zeros((1, D), jnp.float32),
        "fp2_w": _dense_init(next(keys), D, D), "fp2_b": jnp.zeros((1, D), jnp.float32),
        "proj_w": _dense_init(next(keys), D, D), "proj_b": jnp.zeros((1, D), jnp.float32),
        "pe": make_positional_encoding(T, D),
        # NOTE: wqkv[l, j] is the (in -> out) matrix of {q,k,v}[j]; when importing from
        # PyTorch MultiheadAttention.in_proj_weight (shape (3D, D)), use
        # in_proj_weight[j*D:(j+1)*D, :].T. Heads are contiguous Dh-column blocks.
        "wqkv": jnp.stack([jnp.stack([_dense_init(next(keys), D, D) for _ in range(3)])
                           for _ in range(L)]),
        "bqkv": jnp.zeros((L, 3, 1, D), jnp.float32),
        "wout": jnp.stack([_dense_init(next(keys), D, D) for _ in range(L)]),
        "bout": jnp.zeros((L, 1, D), jnp.float32),
        "ln1_g": jnp.ones((L, 1, D), jnp.float32), "ln1_b": jnp.zeros((L, 1, D), jnp.float32),
        "wff1": jnp.stack([_dense_init(next(keys), D, FF) for _ in range(L)]),
        "bff1": jnp.zeros((L, 1, FF), jnp.float32),
        "wff2": jnp.stack([_dense_init(next(keys), FF, D) for _ in range(L)]),
        "bff2": jnp.zeros((L, 1, D), jnp.float32),
        "ln2_g": jnp.ones((L, 1, D), jnp.float32), "ln2_b": jnp.zeros((L, 1, D), jnp.float32),
        # attention-pool weight stored as a row vector (== PyTorch Linear(D,1).weight)
        "attn_w": _dense_init(next(keys), 1, D),
        "attn_b": jnp.zeros((1, 1), jnp.float32),
        "dec1_w": _dense_init(next(keys), D, FF), "dec1_b": jnp.zeros((1, FF), jnp.float32),
        "dec2_w": _dense_init(next(keys), FF, FF2), "dec2_b": jnp.zeros((1, FF2), jnp.float32),
        "dec3_w": _dense_init(next(keys), FF2, 1), "dec3_b": jnp.zeros((1, 1), jnp.float32),
    }
    return params


if __name__ == "__main__":
    key = jax.random.PRNGKey(0)
    pkey, xkey = jax.random.split(key)
    params = init_params(pkey)

    B, T, F = 2, TIME_STEPS, INPUT_DIM
    x = jax.random.normal(xkey, (B, T, F), dtype=jnp.float32)

    fwd = jax.jit(improved_transformer_forward)
    out, scores = fwd(x, params)
    jax.block_until_ready((out, scores))

    assert out.shape == (B, 1), out.shape
    assert scores.shape == (B, T, 1), scores.shape
    # attention scores are a softmax over time -> sum to 1 per batch
    assert bool(jnp.all(jnp.abs(jnp.sum(scores, axis=1) - 1.0) < 1e-4))
    print("KERNEL_OK")
</pallas_src>

<mosaic_0001>
module attributes {stable_mosaic.version = 11 : i64} {
  func.func @_fused_forward_kernel(%arg0: i32, %arg1: memref<14x8xf32, #tpu.memory_space<vmem>>, %arg2: memref<8x64xf32, #tpu.memory_space<vmem>>, %arg3: memref<1x64xf32, #tpu.memory_space<vmem>>, %arg4: memref<64x64xf32, #tpu.memory_space<vmem>>, %arg5: memref<1x64xf32, #tpu.memory_space<vmem>>, %arg6: memref<64x64xf32, #tpu.memory_space<vmem>>, %arg7: memref<1x64xf32, #tpu.memory_space<vmem>>, %arg8: memref<7x64xf32, #tpu.memory_space<vmem>>, %arg9: memref<3x3x64x64xf32, #tpu.memory_space<vmem>>, %arg10: memref<3x3x1x64xf32, #tpu.memory_space<vmem>>, %arg11: memref<3x64x64xf32, #tpu.memory_space<vmem>>, %arg12: memref<3x1x64xf32, #tpu.memory_space<vmem>>, %arg13: memref<3x1x64xf32, #tpu.memory_space<vmem>>, %arg14: memref<3x1x64xf32, #tpu.memory_space<vmem>>, %arg15: memref<3x64x256xf32, #tpu.memory_space<vmem>>, %arg16: memref<3x1x256xf32, #tpu.memory_space<vmem>>, %arg17: memref<3x256x64xf32, #tpu.memory_space<vmem>>, %arg18: memref<3x1x64xf32, #tpu.memory_space<vmem>>, %arg19: memref<3x1x64xf32, #tpu.memory_space<vmem>>, %arg20: memref<3x1x64xf32, #tpu.memory_space<vmem>>, %arg21: memref<1x64xf32, #tpu.memory_space<vmem>>, %arg22: memref<1x1xf32, #tpu.memory_space<vmem>>, %arg23: memref<64x256xf32, #tpu.memory_space<vmem>>, %arg24: memref<1x256xf32, #tpu.memory_space<vmem>>, %arg25: memref<256x128xf32, #tpu.memory_space<vmem>>, %arg26: memref<1x128xf32, #tpu.memory_space<vmem>>, %arg27: memref<128x1xf32, #tpu.memory_space<vmem>>, %arg28: memref<1x1xf32, #tpu.memory_space<vmem>>, %arg29: memref<2x1xf32, #tpu.memory_space<vmem>>, %arg30: memref<2x1x7xf32, #tpu.memory_space<vmem>>) attributes {dimension_semantics = [#tpu.dimension_semantics<arbitrary>], iteration_bounds = array<i64: 1>, scalar_prefetch = 0 : i64, scratch_operands = 0 : i64, tpu.core_type = #tpu.core_type<tc>, window_params = [{pipeline_mode = #tpu.pipeline_mode<synchronous>, transform_indices = @transform_0, window_bounds = array<i64: 14, 8>}, {pipeline_mode = #tpu.pipeline_mode<synchronous>, transform_indices = @transform_1, window_bounds = array<i64: 8, 64>}, {pipeline_mode = #tpu.pipeline_mode<synchronous>, transform_indices = @transform_2, window_bounds = array<i64: 1, 64>}, {pipeline_mode = #tpu.pipeline_mode<synchronous>, transform_indices = @transform_3, window_bounds = array<i64: 64, 64>}, {pipeline_mode = #tpu.pipeline_mode<synchronous>, transform_indices = @transform_4, window_bounds = array<i64: 1, 64>}, {pipeline_mode = #tpu.pipeline_mode<synchronous>, transform_indices = @transform_5, window_bounds = array<i64: 64, 64>}, {pipeline_mode = #tpu.pipeline_mode<synchronous>, transform_indices = @transform_6, window_bounds = array<i64: 1, 64>}, {pipeline_mode = #tpu.pipeline_mode<synchronous>, transform_indices = @transform_7, window_bounds = array<i64: 7, 64>}, {pipeline_mode = #tpu.pipeline_mode<synchronous>, transform_indices = @transform_8, window_bounds = array<i64: 3, 3, 64, 64>}, {pipeline_mode = #tpu.pipeline_mode<synchronous>, transform_indices = @transform_9, window_bounds = array<i64: 3, 3, 1, 64>}, {pipeline_mode = #tpu.pipeline_mode<synchronous>, transform_indices = @transform_10, window_bounds = array<i64: 3, 64, 64>}, {pipeline_mode = #tpu.pipeline_mode<synchronous>, transform_indices = @transform_11, window_bounds = array<i64: 3, 1, 64>}, {pipeline_mode = #tpu.pipeline_mode<synchronous>, transform_indices = @transform_12, window_bounds = array<i64: 3, 1, 64>}, {pipeline_mode = #tpu.pipeline_mode<synchronous>, transform_indices = @transform_13, window_bounds = array<i64: 3, 1, 64>}, {pipeline_mode = #tpu.pipeline_mode<synchronous>, transform_indices = @transform_14, window_bounds = array<i64: 3, 64, 256>}, {pipeline_mode = #tpu.pipeline_mode<synchronous>, transform_indices = @transform_15, window_bounds = array<i64: 3, 1, 256>}, {pipeline_mode = #tpu.pipeline_mode<synchronous>, transform_indices = @transform_16, window_bounds = array<i64: 3, 256, 64>}, {pipeline_mode = #tpu.pipeline_mode<synchronous>, transform_indices = @transform_17, window_bounds = array<i64: 3, 1, 64>}, {pipeline_mode = #tpu.pipeline_mode<synchronous>, transform_indices = @transform_18, window_bounds = array<i64: 3, 1, 64>}, {pipeline_mode = #tpu.pipeline_mode<synchronous>, transform_indices = @transform_19, window_bounds = array<i64: 3, 1, 64>}, {pipeline_mode = #tpu.pipeline_mode<synchronous>, transform_indices = @transform_20, window_bounds = array<i64: 1, 64>}, {pipeline_mode = #tpu.pipeline_mode<synchronous>, transform_indices = @transform_21, window_bounds = array<i64: 1, 1>}, {pipeline_mode = #tpu.pipeline_mode<synchronous>, transform_indices = @transform_22, window_bounds = array<i64: 64, 256>}, {pipeline_mode = #tpu.pipeline_mode<synchronous>, transform_indices = @transform_23, window_bounds = array<i64: 1, 256>}, {pipeline_mode = #tpu.pipeline_mode<synchronous>, transform_indices = @transform_24, window_bounds = array<i64: 256, 128>}, {pipeline_mode = #tpu.pipeline_mode<synchronous>, transform_indices = @transform_25, window_bounds = array<i64: 1, 128>}, {pipeline_mode = #tpu.pipeline_mode<synchronous>, transform_indices = @transform_26, window_bounds = array<i64: 128, 1>}, {pipeline_mode = #tpu.pipeline_mode<synchronous>, transform_indices = @transform_27, window_bounds = array<i64: 1, 1>}, {pipeline_mode = #tpu.pipeline_mode<synchronous>, transform_indices = @transform_28, window_bounds = array<i64: 2, 1>}, {pipeline_mode = #tpu.pipeline_mode<synchronous>, transform_indices = @transform_29, window_bounds = array<i64: 2, 1, 7>}]} {
    %c0 = arith.constant 0 : index
    %c0_0 = arith.constant 0 : index
    %0 = vector.load %arg1[%c0, %c0_0] : memref<14x8xf32, #tpu.memory_space<vmem>>, vector<14x8xf32>
    %c0_1 = arith.constant 0 : index
    %c0_2 = arith.constant 0 : index
    %1 = vector.load %arg2[%c0_1, %c0_2] : memref<8x64xf32, #tpu.memory_space<vmem>>, vector<8x64xf32>
    %cst = arith.constant dense<0.000000e+00> : vector<14x64xf32>
    %2 = tpu.matmul %0, %1, %cst {dimension_numbers = #tpu.dot_dimension_numbers<[1], [0], [0], [1], [0, 0, 1, 1], [], []>} : vector<14x8xf32>, vector<8x64xf32>, vector<14x64xf32> -> vector<14x64xf32>
    %c0_3 = arith.constant 0 : index
    %c0_4 = arith.constant 0 : index
    %3 = vector.load %arg3[%c0_3, %c0_4] : memref<1x64xf32, #tpu.memory_space<vmem>>, vector<1x64xf32>
    %4 = vector.broadcast %3 : vector<1x64xf32> to vector<14x64xf32>
    %5 = arith.addf %2, %4 : vector<14x64xf32>
    %cst_5 = arith.constant 0.000000e+00 : f32
    %6 = vector.broadcast %cst_5 : f32 to vector<14x64xf32>
    %7 = arith.maximumf %5, %6 : vector<14x64xf32>
    %c0_6 = arith.constant 0 : index
    %c0_7 = arith.constant 0 : index
    %8 = vector.load %arg4[%c0_6, %c0_7] : memref<64x64xf32, #tpu.memory_space<vmem>>, vector<64x64xf32>
    %cst_8 = arith.constant dense<0.000000e+00> : vector<14x64xf32>
    %9 = tpu.matmul %7, %8, %cst_8 {dimension_numbers = #tpu.dot_dimension_numbers<[1], [0], [0], [1], [0, 0, 1, 1], [], []>} : vector<14x64xf32>, vector<64x64xf32>, vector<14x64xf32> -> vector<14x64xf32>
    %c0_9 = arith.constant 0 : index
    %c0_10 = arith.constant 0 : index
    %10 = vector.load %arg5[%c0_9, %c0_10] : memref<1x64xf32, #tpu.memory_space<vmem>>, vector<1x64xf32>
    %11 = vector.broadcast %10 : vector<1x64xf32> to vector<14x64xf32>
    %12 = arith.addf %9, %11 : vector<14x64xf32>
    %cst_11 = arith.constant 0.000000e+00 : f32
    %13 = vector.broadcast %cst_11 : f32 to vector<14x64xf32>
    %14 = arith.maximumf %12, %13 : vector<14x64xf32>
    %c0_12 = arith.constant 0 : index
    %c0_13 = arith.constant 0 : index
    %15 = vector.load %arg6[%c0_12, %c0_13] : memref<64x64xf32, #tpu.memory_space<vmem>>, vector<64x64xf32>
    %cst_14 = arith.constant dense<0.000000e+00> : vector<14x64xf32>
    %16 = tpu.matmul %14, %15, %cst_14 {dimension_numbers = #tpu.dot_dimension_numbers<[1], [0], [0], [1], [0, 0, 1, 1], [], []>} : vector<14x64xf32>, vector<64x64xf32>, vector<14x64xf32> -> vector<14x64xf32>
    %c0_15 = arith.constant 0 : index
    %c0_16 = arith.constant 0 : index
    %17 = vector.load %arg7[%c0_15, %c0_16] : memref<1x64xf32, #tpu.memory_space<vmem>>, vector<1x64xf32>
    %18 = vector.broadcast %17 : vector<1x64xf32> to vector<14x64xf32>
    %19 = arith.addf %16, %18 : vector<14x64xf32>
    %c0_17 = arith.constant 0 : index
    %c0_18 = arith.constant 0 : index
    %20 = vector.load %arg8[%c0_17, %c0_18] : memref<7x64xf32, #tpu.memory_space<vmem>>, vector<7x64xf32>
    %21 = tpu.concatenate %20, %20 in 0 : vector<7x64xf32>, vector<7x64xf32> -> vector<14x64xf32>
    %22 = arith.addf %19, %21 : vector<14x64xf32>
    %c0_19 = arith.constant 0 : index
    %c0_20 = arith.constant 0 : index
    %c0_21 = arith.constant 0 : index
    %c0_22 = arith.constant 0 : index
    %23 = vector.load %arg9[%c0_19, %c0_20, %c0_21, %c0_22] : memref<3x3x64x64xf32, #tpu.memory_space<vmem>>, vector<1x1x64x64xf32>
    %24 = vector.shape_cast %23 : vector<1x1x64x64xf32> to vector<64x64xf32>
    %cst_23 = arith.constant dense<0.000000e+00> : vector<14x64xf32>
    %25 = tpu.matmul %22, %24, %cst_23 {dimension_numbers = #tpu.dot_dimension_numbers<[1], [0], [0], [1], [0, 0, 1, 1], [], []>} : vector<14x64xf32>, vector<64x64xf32>, vector<14x64xf32> -> vector<14x64xf32>
    %c0_24 = arith.constant 0 : index
    %c0_25 = arith.constant 0 : index
    %c0_26 = arith.constant 0 : index
    %c0_27 = arith.constant 0 : index
    %26 = vector.load %arg10[%c0_24, %c0_25, %c0_26, %c0_27] : memref<3x3x1x64xf32, #tpu.memory_space<vmem>>, vector<1x1x1x64xf32>
    %27 = vector.shape_cast %26 : vector<1x1x1x64xf32> to vector<1x64xf32>
    %28 = vector.broadcast %27 : vector<1x64xf32> to vector<14x64xf32>
    %29 = arith.addf %25, %28 : vector<14x64xf32>
    %c0_28 = arith.constant 0 : index
    %c1 = arith.constant 1 : index
    %c0_29 = arith.constant 0 : index
    %c0_30 = arith.constant 0 : index
    %30 = vector.load %arg9[%c0_28, %c1, %c0_29, %c0_30] : memref<3x3x64x64xf32, #tpu.memory_space<vmem>>, vector<1x1x64x64xf32>
    %31 = vector.shape_cast %30 : vector<1x1x64x64xf32> to vector<64x64xf32>
    %cst_31 = arith.constant dense<0.000000e+00> : vector<14x64xf32>
    %32 = tpu.matmul %22, %31, %cst_31 {dimension_numbers = #tpu.dot_dimension_numbers<[1], [0], [0], [1], [0, 0, 1, 1], [], []>} : vector<14x64xf32>, vector<64x64xf32>, vector<14x64xf32> -> vector<14x64xf32>
    %c0_32 = arith.constant 0 : index
    %c1_33 = arith.constant 1 : index
    %c0_34 = arith.constant 0 : index
    %c0_35 = arith.constant 0 : index
    %33 = vector.load %arg10[%c0_32, %c1_33, %c0_34, %c0_35] : memref<3x3x1x64xf32, #tpu.memory_space<vmem>>, vector<1x1x1x64xf32>
    %34 = vector.shape_cast %33 : vector<1x1x1x64xf32> to vector<1x64xf32>
    %35 = vector.broadcast %34 : vector<1x64xf32> to vector<14x64xf32>
    %36 = arith.addf %32, %35 : vector<14x64xf32>
    %c0_36 = arith.constant 0 : index
    %c2 = arith.constant 2 : index
    %c0_37 = arith.constant 0 : index
    %c0_38 = arith.constant 0 : index
    %37 = vector.load %arg9[%c0_36, %c2, %c0_37, %c0_38] : memref<3x3x64x64xf32, #tpu.memory_space<vmem>>, vector<1x1x64x64xf32>
    %38 = vector.shape_cast %37 : vector<1x1x64x64xf32> to vector<64x64xf32>
    %cst_39 = arith.constant dense<0.000000e+00> : vector<14x64xf32>
    %39 = tpu.matmul %22, %38, %cst_39 {dimension_numbers = #tpu.dot_dimension_numbers<[1], [0], [0], [1], [0, 0, 1, 1], [], []>} : vector<14x64xf32>, vector<64x64xf32>, vector<14x64xf32> -> vector<14x64xf32>
    %c0_40 = arith.constant 0 : index
    %c2_41 = arith.constant 2 : index
    %c0_42 = arith.constant 0 : index
    %c0_43 = arith.constant 0 : index
    %40 = vector.load %arg10[%c0_40, %c2_41, %c0_42, %c0_43] : memref<3x3x1x64xf32, #tpu.memory_space<vmem>>, vector<1x1x1x64xf32>
    %41 = vector.shape_cast %40 : vector<1x1x1x64xf32> to vector<1x64xf32>
    %42 = vector.broadcast %41 : vector<1x64xf32> to vector<14x64xf32>
    %43 = arith.addf %39, %42 : vector<14x64xf32>
    %44 = vector.extract_strided_slice %29 {offsets = [0, 0], sizes = [7, 16], strides = [1, 1]} : vector<14x64xf32> to vector<7x16xf32>
    %45 = vector.extract_strided_slice %36 {offsets = [0, 0], sizes = [7, 16], strides = [1, 1]} : vector<14x64xf32> to vector<7x16xf32>
    %46 = vector.extract_strided_slice %43 {offsets = [0, 0], sizes = [7, 16], strides = [1, 1]} : vector<14x64xf32> to vector<7x16xf32>
    %cst_44 = arith.constant dense<0.000000e+00> : vector<7x7xf32>
    %47 = tpu.matmul %44, %45, %cst_44 {dimension_numbers = #tpu.dot_dimension_numbers<[1], [1], [0], [0], [0, 0, 1, 0], [], []>} : vector<7x16xf32>, vector<7x16xf32>, vector<7x7xf32> -> vector<7x7xf32>
    %cst_45 = arith.constant 2.500000e-01 : f32
    %48 = vector.broadcast %cst_45 : f32 to vector<7x7xf32>
    %49 = arith.mulf %47, %48 : vector<7x7xf32>
    %cst_46 = arith.constant dense<0xFF800000> : vector<7xf32>
    %50 = vector.multi_reduction <maximumf>, %49, %cst_46 [1] : vector<7x7xf32> to vector<7xf32>
    %51 = vector.shape_cast %50 : vector<7xf32> to vector<7x1xf32>
    %52 = vector.broadcast %51 : vector<7x1xf32> to vector<7x7xf32>
    %53 = arith.subf %49, %52 : vector<7x7xf32>
    %54 = math.exp %53 : vector<7x7xf32>
    %cst_47 = arith.constant dense<0.000000e+00> : vector<7xf32>
    %55 = vector.multi_reduction <add>, %54, %cst_47 [1] : vector<7x7xf32> to vector<7xf32>
    %56 = vector.shape_cast %55 : vector<7xf32> to vector<7x1xf32>
    %57 = tpu.reciprocal %56 {approx = true} : vector<7x1xf32> -> vector<7x1xf32>
    %58 = vector.broadcast %57 : vector<7x1xf32> to vector<7x7xf32>
    %59 = arith.mulf %54, %58 : vector<7x7xf32>
    %cst_48 = arith.constant dense<0.000000e+00> : vector<7x16xf32>
    %60 = tpu.matmul %59, %46, %cst_48 {dimension_numbers = #tpu.dot_dimension_numbers<[1], [0], [0], [1], [0, 0, 1, 1], [], []>} : vector<7x7xf32>, vector<7x16xf32>, vector<7x16xf32> -> vector<7x16xf32>
    %61 = vector.extract_strided_slice %29 {offsets = [0, 16], sizes = [7, 16], strides = [1, 1]} : vector<14x64xf32> to vector<7x16xf32>
    %62 = vector.extract_strided_slice %36 {offsets = [0, 16], sizes = [7, 16], strides = [1, 1]} : vector<14x64xf32> to vector<7x16xf32>
    %63 = vector.extract_strided_slice %43 {offsets = [0, 16], sizes = [7, 16], strides = [1, 1]} : vector<14x64xf32> to vector<7x16xf32>
    %cst_49 = arith.constant dense<0.000000e+00> : vector<7x7xf32>
    %64 = tpu.matmul %61, %62, %cst_49 {dimension_numbers = #tpu.dot_dimension_numbers<[1], [1], [0], [0], [0, 0, 1, 0], [], []>} : vector<7x16xf32>, vector<7x16xf32>, vector<7x7xf32> -> vector<7x7xf32>
    %cst_50 = arith.constant 2.500000e-01 : f32
    %65 = vector.broadcast %cst_50 : f32 to vector<7x7xf32>
    %66 = arith.mulf %64, %65 : vector<7x7xf32>
    %cst_51 = arith.constant dense<0xFF800000> : vector<7xf32>
    %67 = vector.multi_reduction <maximumf>, %66, %cst_51 [1] : vector<7x7xf32> to vector<7xf32>
    %68 = vector.shape_cast %67 : vector<7xf32> to vector<7x1xf32>
    %69 = vector.broadcast %68 : vector<7x1xf32> to vector<7x7xf32>
    %70 = arith.subf %66, %69 : vector<7x7xf32>
    %71 = math.exp %70 : vector<7x7xf32>
    %cst_52 = arith.constant dense<0.000000e+00> : vector<7xf32>
    %72 = vector.multi_reduction <add>, %71, %cst_52 [1] : vector<7x7xf32> to vector<7xf32>
    %73 = vector.shape_cast %72 : vector<7xf32> to vector<7x1xf32>
    %74 = tpu.reciprocal %73 {approx = true} : vector<7x1xf32> -> vector<7x1xf32>
    %75 = vector.broadcast %74 : vector<7x1xf32> to vector<7x7xf32>
    %76 = arith.mulf %71, %75 : vector<7x7xf32>
    %cst_53 = arith.constant dense<0.000000e+00> : vector<7x16xf32>
    %77 = tpu.matmul %76, %63, %cst_53 {dimension_numbers = #tpu.dot_dimension_numbers<[1], [0], [0], [1], [0, 0, 1, 1], [], []>} : vector<7x7xf32>, vector<7x16xf32>, vector<7x16xf32> -> vector<7x16xf32>
    %78 = vector.extract_strided_slice %29 {offsets = [0, 32], sizes = [7, 16], strides = [1, 1]} : vector<14x64xf32> to vector<7x16xf32>
    %79 = vector.extract_strided_slice %36 {offsets = [0, 32], sizes = [7, 16], strides = [1, 1]} : vector<14x64xf32> to vector<7x16xf32>
    %80 = vector.extract_strided_slice %43 {offsets = [0, 32], sizes = [7, 16], strides = [1, 1]} : vector<14x64xf32> to vector<7x16xf32>
    %cst_54 = arith.constant dense<0.000000e+00> : vector<7x7xf32>
    %81 = tpu.matmul %78, %79, %cst_54 {dimension_numbers = #tpu.dot_dimension_numbers<[1], [1], [0], [0], [0, 0, 1, 0], [], []>} : vector<7x16xf32>, vector<7x16xf32>, vector<7x7xf32> -> vector<7x7xf32>
    %cst_55 = arith.constant 2.500000e-01 : f32
    %82 = vector.broadcast %cst_55 : f32 to vector<7x7xf32>
    %83 = arith.mulf %81, %82 : vector<7x7xf32>
    %cst_56 = arith.constant dense<0xFF800000> : vector<7xf32>
    %84 = vector.multi_reduction <maximumf>, %83, %cst_56 [1] : vector<7x7xf32> to vector<7xf32>
    %85 = vector.shape_cast %84 : vector<7xf32> to vector<7x1xf32>
    %86 = vector.broadcast %85 : vector<7x1xf32> to vector<7x7xf32>
    %87 = arith.subf %83, %86 : vector<7x7xf32>
    %88 = math.exp %87 : vector<7x7xf32>
    %cst_57 = arith.constant dense<0.000000e+00> : vector<7xf32>
    %89 = vector.multi_reduction <add>, %88, %cst_57 [1] : vector<7x7xf32> to vector<7xf32>
    %90 = vector.shape_cast %89 : vector<7xf32> to vector<7x1xf32>
    %91 = tpu.reciprocal %90 {approx = true} : vector<7x1xf32> -> vector<7x1xf32>
    %92 = vector.broadcast %91 : vector<7x1xf32> to vector<7x7xf32>
    %93 = arith.mulf %88, %92 : vector<7x7xf32>
    %cst_58 = arith.constant dense<0.000000e+00> : vector<7x16xf32>
    %94 = tpu.matmul %93, %80, %cst_58 {dimension_numbers = #tpu.dot_dimension_numbers<[1], [0], [0], [1], [0, 0, 1, 1], [], []>} : vector<7x7xf32>, vector<7x16xf32>, vector<7x16xf32> -> vector<7x16xf32>
    %95 = vector.extract_strided_slice %29 {offsets = [0, 48], sizes = [7, 16], strides = [1, 1]} : vector<14x64xf32> to vector<7x16xf32>
    %96 = vector.extract_strided_slice %36 {offsets = [0, 48], sizes = [7, 16], strides = [1, 1]} : vector<14x64xf32> to vector<7x16xf32>
    %97 = vector.extract_strided_slice %43 {offsets = [0, 48], sizes = [7, 16], strides = [1, 1]} : vector<14x64xf32> to vector<7x16xf32>
    %cst_59 = arith.constant dense<0.000000e+00> : vector<7x7xf32>
    %98 = tpu.matmul %95, %96, %cst_59 {dimension_numbers = #tpu.dot_dimension_numbers<[1], [1], [0], [0], [0, 0, 1, 0], [], []>} : vector<7x16xf32>, vector<7x16xf32>, vector<7x7xf32> -> vector<7x7xf32>
    %cst_60 = arith.constant 2.500000e-01 : f32
    %99 = vector.broadcast %cst_60 : f32 to vector<7x7xf32>
    %100 = arith.mulf %98, %99 : vector<7x7xf32>
    %cst_61 = arith.constant dense<0xFF800000> : vector<7xf32>
    %101 = vector.multi_reduction <maximumf>, %100, %cst_61 [1] : vector<7x7xf32> to vector<7xf32>
    %102 = vector.shape_cast %101 : vector<7xf32> to vector<7x1xf32>
    %103 = vector.broadcast %102 : vector<7x1xf32> to vector<7x7xf32>
    %104 = arith.subf %100, %103 : vector<7x7xf32>
    %105 = math.exp %104 : vector<7x7xf32>
    %cst_62 = arith.constant dense<0.000000e+00> : vector<7xf32>
    %106 = vector.multi_reduction <add>, %105, %cst_62 [1] : vector<7x7xf32> to vector<7xf32>
    %107 = vector.shape_cast %106 : vector<7xf32> to vector<7x1xf32>
    %108 = tpu.reciprocal %107 {approx = true} : vector<7x1xf32> -> vector<7x1xf32>
    %109 = vector.broadcast %108 : vector<7x1xf32> to vector<7x7xf32>
    %110 = arith.mulf %105, %109 : vector<7x7xf32>
    %cst_63 = arith.constant dense<0.000000e+00> : vector<7x16xf32>
    %111 = tpu.matmul %110, %97, %cst_63 {dimension_numbers = #tpu.dot_dimension_numbers<[1], [0], [0], [1], [0, 0, 1, 1], [], []>} : vector<7x7xf32>, vector<7x16xf32>, vector<7x16xf32> -> vector<7x16xf32>
    %112 = tpu.concatenate %60, %77, %94, %111 in 1 : vector<7x16xf32>, vector<7x16xf32>, vector<7x16xf32>, vector<7x16xf32> -> vector<7x64xf32>
    %113 = vector.extract_strided_slice %29 {offsets = [7, 0], sizes = [7, 16], strides = [1, 1]} : vector<14x64xf32> to vector<7x16xf32>
    %114 = vector.extract_strided_slice %36 {offsets = [7, 0], sizes = [7, 16], strides = [1, 1]} : vector<14x64xf32> to vector<7x16xf32>
    %115 = vector.extract_strided_slice %43 {offsets = [7, 0], sizes = [7, 16], strides = [1, 1]} : vector<14x64xf32> to vector<7x16xf32>
    %cst_64 = arith.constant dense<0.000000e+00> : vector<7x7xf32>
    %116 = tpu.matmul %113, %114, %cst_64 {dimension_numbers = #tpu.dot_dimension_numbers<[1], [1], [0], [0], [0, 0, 1, 0], [], []>} : vector<7x16xf32>, vector<7x16xf32>, vector<7x7xf32> -> vector<7x7xf32>
    %cst_65 = arith.constant 2.500000e-01 : f32
    %117 = vector.broadcast %cst_65 : f32 to vector<7x7xf32>
    %118 = arith.mulf %116, %117 : vector<7x7xf32>
    %cst_66 = arith.constant dense<0xFF800000> : vector<7xf32>
    %119 = vector.multi_reduction <maximumf>, %118, %cst_66 [1] : vector<7x7xf32> to vector<7xf32>
    %120 = vector.shape_cast %119 : vector<7xf32> to vector<7x1xf32>
    %121 = vector.broadcast %120 : vector<7x1xf32> to vector<7x7xf32>
    %122 = arith.subf %118, %121 : vector<7x7xf32>
    %123 = math.exp %122 : vector<7x7xf32>
    %cst_67 = arith.constant dense<0.000000e+00> : vector<7xf32>
    %124 = vector.multi_reduction <add>, %123, %cst_67 [1] : vector<7x7xf32> to vector<7xf32>
    %125 = vector.shape_cast %124 : vector<7xf32> to vector<7x1xf32>
    %126 = tpu.reciprocal %125 {approx = true} : vector<7x1xf32> -> vector<7x1xf32>
    %127 = vector.broadcast %126 : vector<7x1xf32> to vector<7x7xf32>
    %128 = arith.mulf %123, %127 : vector<7x7xf32>
    %cst_68 = arith.constant dense<0.000000e+00> : vector<7x16xf32>
    %129 = tpu.matmul %128, %115, %cst_68 {dimension_numbers = #tpu.dot_dimension_numbers<[1], [0], [0], [1], [0, 0, 1, 1], [], []>} : vector<7x7xf32>, vector<7x16xf32>, vector<7x16xf32> -> vector<7x16xf32>
    %130 = vector.extract_strided_slice %29 {offsets = [7, 16], sizes = [7, 16], strides = [1, 1]} : vector<14x64xf32> to vector<7x16xf32>
    %131 = vector.extract_strided_slice %36 {offsets = [7, 16], sizes = [7, 16], strides = [1, 1]} : vector<14x64xf32> to vector<7x16xf32>
    %132 = vector.extract_strided_slice %43 {offsets = [7, 16], sizes = [7, 16], strides = [1, 1]} : vector<14x64xf32> to vector<7x16xf32>
    %cst_69 = arith.constant dense<0.000000e+00> : vector<7x7xf32>
    %133 = tpu.matmul %130, %131, %cst_69 {dimension_numbers = #tpu.dot_dimension_numbers<[1], [1], [0], [0], [0, 0, 1, 0], [], []>} : vector<7x16xf32>, vector<7x16xf32>, vector<7x7xf32> -> vector<7x7xf32>
    %cst_70 = arith.constant 2.500000e-01 : f32
    %134 = vector.broadcast %cst_70 : f32 to vector<7x7xf32>
    %135 = arith.mulf %133, %134 : vector<7x7xf32>
    %cst_71 = arith.constant dense<0xFF800000> : vector<7xf32>
    %136 = vector.multi_reduction <maximumf>, %135, %cst_71 [1] : vector<7x7xf32> to vector<7xf32>
    %137 = vector.shape_cast %136 : vector<7xf32> to vector<7x1xf32>
    %138 = vector.broadcast %137 : vector<7x1xf32> to vector<7x7xf32>
    %139 = arith.subf %135, %138 : vector<7x7xf32>
    %140 = math.exp %139 : vector<7x7xf32>
    %cst_72 = arith.constant dense<0.000000e+00> : vector<7xf32>
    %141 = vector.multi_reduction <add>, %140, %cst_72 [1] : vector<7x7xf32> to vector<7xf32>
    %142 = vector.shape_cast %141 : vector<7xf32> to vector<7x1xf32>
    %143 = tpu.reciprocal %142 {approx = true} : vector<7x1xf32> -> vector<7x1xf32>
    %144 = vector.broadcast %143 : vector<7x1xf32> to vector<7x7xf32>
    %145 = arith.mulf %140, %144 : vector<7x7xf32>
    %cst_73 = arith.constant dense<0.000000e+00> : vector<7x16xf32>
    %146 = tpu.matmul %145, %132, %cst_73 {dimension_numbers = #tpu.dot_dimension_numbers<[1], [0], [0], [1], [0, 0, 1, 1], [], []>} : vector<7x7xf32>, vector<7x16xf32>, vector<7x16xf32> -> vector<7x16xf32>
    %147 = vector.extract_strided_slice %29 {offsets = [7, 32], sizes = [7, 16], strides = [1, 1]} : vector<14x64xf32> to vector<7x16xf32>
    %148 = vector.extract_strided_slice %36 {offsets = [7, 32], sizes = [7, 16], strides = [1, 1]} : vector<14x64xf32> to vector<7x16xf32>
    %149 = vector.extract_strided_slice %43 {offsets = [7, 32], sizes = [7, 16], strides = [1, 1]} : vector<14x64xf32> to vector<7x16xf32>
    %cst_74 = arith.constant dense<0.000000e+00> : vector<7x7xf32>
    %150 = tpu.matmul %147, %148, %cst_74 {dimension_numbers = #tpu.dot_dimension_numbers<[1], [1], [0], [0], [0, 0, 1, 0], [], []>} : vector<7x16xf32>, vector<7x16xf32>, vector<7x7xf32> -> vector<7x7xf32>
    %cst_75 = arith.constant 2.500000e-01 : f32
    %151 = vector.broadcast %cst_75 : f32 to vector<7x7xf32>
    %152 = arith.mulf %150, %151 : vector<7x7xf32>
    %cst_76 = arith.constant dense<0xFF800000> : vector<7xf32>
    %153 = vector.multi_reduction <maximumf>, %152, %cst_76 [1] : vector<7x7xf32> to vector<7xf32>
    %154 = vector.shape_cast %153 : vector<7xf32> to vector<7x1xf32>
    %155 = vector.broadcast %154 : vector<7x1xf32> to vector<7x7xf32>
    %156 = arith.subf %152, %155 : vector<7x7xf32>
    %157 = math.exp %156 : vector<7x7xf32>
    %cst_77 = arith.constant dense<0.000000e+00> : vector<7xf32>
    %158 = vector.multi_reduction <add>, %157, %cst_77 [1] : vector<7x7xf32> to vector<7xf32>
    %159 = vector.shape_cast %158 : vector<7xf32> to vector<7x1xf32>
    %160 = tpu.reciprocal %159 {approx = true} : vector<7x1xf32> -> vector<7x1xf32>
    %161 = vector.broadcast %160 : vector<7x1xf32> to vector<7x7xf32>
    %162 = arith.mulf %157, %161 : vector<7x7xf32>
    %cst_78 = arith.constant dense<0.000000e+00> : vector<7x16xf32>
    %163 = tpu.matmul %162, %149, %cst_78 {dimension_numbers = #tpu.dot_dimension_numbers<[1], [0], [0], [1], [0, 0, 1, 1], [], []>} : vector<7x7xf32>, vector<7x16xf32>, vector<7x16xf32> -> vector<7x16xf32>
    %164 = vector.extract_strided_slice %29 {offsets = [7, 48], sizes = [7, 16], strides = [1, 1]} : vector<14x64xf32> to vector<7x16xf32>
    %165 = vector.extract_strided_slice %36 {offsets = [7, 48], sizes = [7, 16], strides = [1, 1]} : vector<14x64xf32> to vector<7x16xf32>
    %166 = vector.extract_strided_slice %43 {offsets = [7, 48], sizes = [7, 16], strides = [1, 1]} : vector<14x64xf32> to vector<7x16xf32>
    %cst_79 = arith.constant dense<0.000000e+00> : vector<7x7xf32>
    %167 = tpu.matmul %164, %165, %cst_79 {dimension_numbers = #tpu.dot_dimension_numbers<[1], [1], [0], [0], [0, 0, 1, 0], [], []>} : vector<7x16xf32>, vector<7x16xf32>, vector<7x7xf32> -> vector<7x7xf32>
    %cst_80 = arith.constant 2.500000e-01 : f32
    %168 = vector.broadcast %cst_80 : f32 to vector<7x7xf32>
    %169 = arith.mulf %167, %168 : vector<7x7xf32>
    %cst_81 = arith.constant dense<0xFF800000> : vector<7xf32>
    %170 = vector.multi_reduction <maximumf>, %169, %cst_81 [1] : vector<7x7xf32> to vector<7xf32>
    %171 = vector.shape_cast %170 : vector<7xf32> to vector<7x1xf32>
    %172 = vector.broadcast %171 : vector<7x1xf32> to vector<7x7xf32>
    %173 = arith.subf %169, %172 : vector<7x7xf32>
    %174 = math.exp %173 : vector<7x7xf32>
    %cst_82 = arith.constant dense<0.000000e+00> : vector<7xf32>
    %175 = vector.multi_reduction <add>, %174, %cst_82 [1] : vector<7x7xf32> to vector<7xf32>
    %176 = vector.shape_cast %175 : vector<7xf32> to vector<7x1xf32>
    %177 = tpu.reciprocal %176 {approx = true} : vector<7x1xf32> -> vector<7x1xf32>
    %178 = vector.broadcast %177 : vector<7x1xf32> to vector<7x7xf32>
    %179 = arith.mulf %174, %178 : vector<7x7xf32>
    %cst_83 = arith.constant dense<0.000000e+00> : vector<7x16xf32>
    %180 = tpu.matmul %179, %166, %cst_83 {dimension_numbers = #tpu.dot_dimension_numbers<[1], [0], [0], [1], [0, 0, 1, 1], [], []>} : vector<7x7xf32>, vector<7x16xf32>, vector<7x16xf32> -> vector<7x16xf32>
    %181 = tpu.concatenate %129, %146, %163, %180 in 1 : vector<7x16xf32>, vector<7x16xf32>, vector<7x16xf32>, vector<7x16xf32> -> vector<7x64xf32>
    %182 = tpu.concatenate %112, %181 in 0 : vector<7x64xf32>, vector<7x64xf32> -> vector<14x64xf32>
    %c0_84 = arith.constant 0 : index
    %c0_85 = arith.constant 0 : index
    %c0_86 = arith.constant 0 : index
    %183 = vector.load %arg11[%c0_84, %c0_85, %c0_86] : memref<3x64x64xf32, #tpu.memory_space<vmem>>, vector<1x64x64xf32>
    %184 = vector.shape_cast %183 : vector<1x64x64xf32> to vector<64x64xf32>
    %cst_87 = arith.constant dense<0.000000e+00> : vector<14x64xf32>
    %185 = tpu.matmul %182, %184, %cst_87 {dimension_numbers = #tpu.dot_dimension_numbers<[1], [0], [0], [1], [0, 0, 1, 1], [], []>} : vector<14x64xf32>, vector<64x64xf32>, vector<14x64xf32> -> vector<14x64xf32>
    %c0_88 = arith.constant 0 : index
    %c0_89 = arith.constant 0 : index
    %c0_90 = arith.constant 0 : index
    %186 = vector.load %arg12[%c0_88, %c0_89, %c0_90] : memref<3x1x64xf32, #tpu.memory_space<vmem>>, vector<1x1x64xf32>
    %187 = vector.shape_cast %186 : vector<1x1x64xf32> to vector<1x64xf32>
    %188 = vector.broadcast %187 : vector<1x64xf32> to vector<14x64xf32>
    %189 = arith.addf %185, %188 : vector<14x64xf32>
    %190 = arith.addf %22, %189 : vector<14x64xf32>
    %c0_91 = arith.constant 0 : index
    %c0_92 = arith.constant 0 : index
    %c0_93 = arith.constant 0 : index
    %191 = vector.load %arg13[%c0_91, %c0_92, %c0_93] : memref<3x1x64xf32, #tpu.memory_space<vmem>>, vector<1x1x64xf32>
    %192 = vector.shape_cast %191 : vector<1x1x64xf32> to vector<1x64xf32>
    %c0_94 = arith.constant 0 : index
    %c0_95 = arith.constant 0 : index
    %c0_96 = arith.constant 0 : index
    %193 = vector.load %arg14[%c0_94, %c0_95, %c0_96] : memref<3x1x64xf32, #tpu.memory_space<vmem>>, vector<1x1x64xf32>
    %194 = vector.shape_cast %193 : vector<1x1x64xf32> to vector<1x64xf32>
    %cst_97 = arith.constant dense<0.000000e+00> : vector<14xf32>
    %195 = vector.multi_reduction <add>, %190, %cst_97 [1] : vector<14x64xf32> to vector<14xf32>
    %196 = vector.shape_cast %195 : vector<14xf32> to vector<14x1xf32>
    %cst_98 = arith.constant 6.400000e+01 : f32
    %197 = vector.broadcast %cst_98 : f32 to vector<14x1xf32>
    %198 = arith.divf %196, %197 : vector<14x1xf32>
    %199 = vector.broadcast %198 : vector<14x1xf32> to vector<14x64xf32>
    %200 = arith.subf %190, %199 : vector<14x64xf32>
    %201 = arith.mulf %200, %200 : vector<14x64xf32>
    %cst_99 = arith.constant dense<0.000000e+00> : vector<14xf32>
    %202 = vector.multi_reduction <add>, %201, %cst_99 [1] : vector<14x64xf32> to vector<14xf32>
    %203 = vector.shape_cast %202 : vector<14xf32> to vector<14x1xf32>
    %cst_100 = arith.constant 6.400000e+01 : f32
    %204 = vector.broadcast %cst_100 : f32 to vector<14x1xf32>
    %205 = arith.divf %203, %204 : vector<14x1xf32>
    %206 = vector.broadcast %198 : vector<14x1xf32> to vector<14x64xf32>
    %207 = arith.subf %190, %206 : vector<14x64xf32>
    %cst_101 = arith.constant 9.99999974E-6 : f32
    %208 = vector.broadcast %cst_101 : f32 to vector<14x1xf32>
    %209 = arith.addf %205, %208 : vector<14x1xf32>
    %210 = math.rsqrt %209 : vector<14x1xf32>
    %211 = vector.broadcast %210 : vector<14x1xf32> to vector<14x64xf32>
    %212 = arith.mulf %207, %211 : vector<14x64xf32>
    %213 = vector.broadcast %192 : vector<1x64xf32> to vector<14x64xf32>
    %214 = arith.mulf %212, %213 : vector<14x64xf32>
    %215 = vector.broadcast %194 : vector<1x64xf32> to vector<14x64xf32>
    %216 = arith.addf %214, %215 : vector<14x64xf32>
    %c0_102 = arith.constant 0 : index
    %c0_103 = arith.constant 0 : index
    %c0_104 = arith.constant 0 : index
    %217 = vector.load %arg15[%c0_102, %c0_103, %c0_104] : memref<3x64x256xf32, #tpu.memory_space<vmem>>, vector<1x64x256xf32>
    %218 = vector.shape_cast %217 : vector<1x64x256xf32> to vector<64x256xf32>
    %cst_105 = arith.constant dense<0.000000e+00> : vector<14x256xf32>
    %219 = tpu.matmul %216, %218, %cst_105 {dimension_numbers = #tpu.dot_dimension_numbers<[1], [0], [0], [1], [0, 0, 1, 1], [], []>} : vector<14x64xf32>, vector<64x256xf32>, vector<14x256xf32> -> vector<14x256xf32>
    %c0_106 = arith.constant 0 : index
    %c0_107 = arith.constant 0 : index
    %c0_108 = arith.constant 0 : index
    %220 = vector.load %arg16[%c0_106, %c0_107, %c0_108] : memref<3x1x256xf32, #tpu.memory_space<vmem>>, vector<1x1x256xf32>
    %221 = vector.shape_cast %220 : vector<1x1x256xf32> to vector<1x256xf32>
    %222 = vector.broadcast %221 : vector<1x256xf32> to vector<14x256xf32>
    %223 = arith.addf %219, %222 : vector<14x256xf32>
    %cst_109 = arith.constant 0.000000e+00 : f32
    %224 = vector.broadcast %cst_109 : f32 to vector<14x256xf32>
    %225 = arith.maximumf %223, %224 : vector<14x256xf32>
    %c0_110 = arith.constant 0 : index
    %c0_111 = arith.constant 0 : index
    %c0_112 = arith.constant 0 : index
    %226 = vector.load %arg17[%c0_110, %c0_111, %c0_112] : memref<3x256x64xf32, #tpu.memory_space<vmem>>, vector<1x256x64xf32>
    %227 = vector.shape_cast %226 : vector<1x256x64xf32> to vector<256x64xf32>
    %cst_113 = arith.constant dense<0.000000e+00> : vector<14x64xf32>
    %228 = tpu.matmul %225, %227, %cst_113 {dimension_numbers = #tpu.dot_dimension_numbers<[1], [0], [0], [1], [0, 0, 1, 1], [], []>} : vector<14x256xf32>, vector<256x64xf32>, vector<14x64xf32> -> vector<14x64xf32>
    %c0_114 = arith.constant 0 : index
    %c0_115 = arith.constant 0 : index
    %c0_116 = arith.constant 0 : index
    %229 = vector.load %arg18[%c0_114, %c0_115, %c0_116] : memref<3x1x64xf32, #tpu.memory_space<vmem>>, vector<1x1x64xf32>
    %230 = vector.shape_cast %229 : vector<1x1x64xf32> to vector<1x64xf32>
    %231 = vector.broadcast %230 : vector<1x64xf32> to vector<14x64xf32>
    %232 = arith.addf %228, %231 : vector<14x64xf32>
    %233 = arith.addf %216, %232 : vector<14x64xf32>
    %c0_117 = arith.constant 0 : index
    %c0_118 = arith.constant 0 : index
    %c0_119 = arith.constant 0 : index
    %234 = vector.load %arg19[%c0_117, %c0_118, %c0_119] : memref<3x1x64xf32, #tpu.memory_space<vmem>>, vector<1x1x64xf32>
    %235 = vector.shape_cast %234 : vector<1x1x64xf32> to vector<1x64xf32>
    %c0_120 = arith.constant 0 : index
    %c0_121 = arith.constant 0 : index
    %c0_122 = arith.constant 0 : index
    %236 = vector.load %arg20[%c0_120, %c0_121, %c0_122] : memref<3x1x64xf32, #tpu.memory_space<vmem>>, vector<1x1x64xf32>
    %237 = vector.shape_cast %236 : vector<1x1x64xf32> to vector<1x64xf32>
    %cst_123 = arith.constant dense<0.000000e+00> : vector<14xf32>
    %238 = vector.multi_reduction <add>, %233, %cst_123 [1] : vector<14x64xf32> to vector<14xf32>
    %239 = vector.shape_cast %238 : vector<14xf32> to vector<14x1xf32>
    %cst_124 = arith.constant 6.400000e+01 : f32
    %240 = vector.broadcast %cst_124 : f32 to vector<14x1xf32>
    %241 = arith.divf %239, %240 : vector<14x1xf32>
    %242 = vector.broadcast %241 : vector<14x1xf32> to vector<14x64xf32>
    %243 = arith.subf %233, %242 : vector<14x64xf32>
    %244 = arith.mulf %243, %243 : vector<14x64xf32>
    %cst_125 = arith.constant dense<0.000000e+00> : vector<14xf32>
    %245 = vector.multi_reduction <add>, %244, %cst_125 [1] : vector<14x64xf32> to vector<14xf32>
    %246 = vector.shape_cast %245 : vector<14xf32> to vector<14x1xf32>
    %cst_126 = arith.constant 6.400000e+01 : f32
    %247 = vector.broadcast %cst_126 : f32 to vector<14x1xf32>
    %248 = arith.divf %246, %247 : vector<14x1xf32>
    %249 = vector.broadcast %241 : vector<14x1xf32> to vector<14x64xf32>
    %250 = arith.subf %233, %249 : vector<14x64xf32>
    %cst_127 = arith.constant 9.99999974E-6 : f32
    %251 = vector.broadcast %cst_127 : f32 to vector<14x1xf32>
    %252 = arith.addf %248, %251 : vector<14x1xf32>
    %253 = math.rsqrt %252 : vector<14x1xf32>
    %254 = vector.broadcast %253 : vector<14x1xf32> to vector<14x64xf32>
    %255 = arith.mulf %250, %254 : vector<14x64xf32>
    %256 = vector.broadcast %235 : vector<1x64xf32> to vector<14x64xf32>
    %257 = arith.mulf %255, %256 : vector<14x64xf32>
    %258 = vector.broadcast %237 : vector<1x64xf32> to vector<14x64xf32>
    %259 = arith.addf %257, %258 : vector<14x64xf32>
    %c1_128 = arith.constant 1 : index
    %c0_129 = arith.constant 0 : index
    %c0_130 = arith.constant 0 : index
    %c0_131 = arith.constant 0 : index
    %260 = vector.load %arg9[%c1_128, %c0_129, %c0_130, %c0_131] : memref<3x3x64x64xf32, #tpu.memory_space<vmem>>, vector<1x1x64x64xf32>
    %261 = vector.shape_cast %260 : vector<1x1x64x64xf32> to vector<64x64xf32>
    %cst_132 = arith.constant dense<0.000000e+00> : vector<14x64xf32>
    %262 = tpu.matmul %259, %261, %cst_132 {dimension_numbers = #tpu.dot_dimension_numbers<[1], [0], [0], [1], [0, 0, 1, 1], [], []>} : vector<14x64xf32>, vector<64x64xf32>, vector<14x64xf32> -> vector<14x64xf32>
    %c1_133 = arith.constant 1 : index
    %c0_134 = arith.constant 0 : index
    %c0_135 = arith.constant 0 : index
    %c0_136 = arith.constant 0 : index
    %263 = vector.load %arg10[%c1_133, %c0_134, %c0_135, %c0_136] : memref<3x3x1x64xf32, #tpu.memory_space<vmem>>, vector<1x1x1x64xf32>
    %264 = vector.shape_cast %263 : vector<1x1x1x64xf32> to vector<1x64xf32>
    %265 = vector.broadcast %264 : vector<1x64xf32> to vector<14x64xf32>
    %266 = arith.addf %262, %265 : vector<14x64xf32>
    %c1_137 = arith.constant 1 : index
    %c1_138 = arith.constant 1 : index
    %c0_139 = arith.constant 0 : index
    %c0_140 = arith.constant 0 : index
    %267 = vector.load %arg9[%c1_137, %c1_138, %c0_139, %c0_140] : memref<3x3x64x64xf32, #tpu.memory_space<vmem>>, vector<1x1x64x64xf32>
    %268 = vector.shape_cast %267 : vector<1x1x64x64xf32> to vector<64x64xf32>
    %cst_141 = arith.constant dense<0.000000e+00> : vector<14x64xf32>
    %269 = tpu.matmul %259, %268, %cst_141 {dimension_numbers = #tpu.dot_dimension_numbers<[1], [0], [0], [1], [0, 0, 1, 1], [], []>} : vector<14x64xf32>, vector<64x64xf32>, vector<14x64xf32> -> vector<14x64xf32>
    %c1_142 = arith.constant 1 : index
    %c1_143 = arith.constant 1 : index
    %c0_144 = arith.constant 0 : index
    %c0_145 = arith.constant 0 : index
    %270 = vector.load %arg10[%c1_142, %c1_143, %c0_144, %c0_145] : memref<3x3x1x64xf32, #tpu.memory_space<vmem>>, vector<1x1x1x64xf32>
    %271 = vector.shape_cast %270 : vector<1x1x1x64xf32> to vector<1x64xf32>
    %272 = vector.broadcast %271 : vector<1x64xf32> to vector<14x64xf32>
    %273 = arith.addf %269, %272 : vector<14x64xf32>
    %c1_146 = arith.constant 1 : index
    %c2_147 = arith.constant 2 : index
    %c0_148 = arith.constant 0 : index
    %c0_149 = arith.constant 0 : index
    %274 = vector.load %arg9[%c1_146, %c2_147, %c0_148, %c0_149] : memref<3x3x64x64xf32, #tpu.memory_space<vmem>>, vector<1x1x64x64xf32>
    %275 = vector.shape_cast %274 : vector<1x1x64x64xf32> to vector<64x64xf32>
    %cst_150 = arith.constant dense<0.000000e+00> : vector<14x64xf32>
    %276 = tpu.matmul %259, %275, %cst_150 {dimension_numbers = #tpu.dot_dimension_numbers<[1], [0], [0], [1], [0, 0, 1, 1], [], []>} : vector<14x64xf32>, vector<64x64xf32>, vector<14x64xf32> -> vector<14x64xf32>
    %c1_151 = arith.constant 1 : index
    %c2_152 = arith.constant 2 : index
    %c0_153 = arith.constant 0 : index
    %c0_154 = arith.constant 0 : index
    %277 = vector.load %arg10[%c1_151, %c2_152, %c0_153, %c0_154] : memref<3x3x1x64xf32, #tpu.memory_space<vmem>>, vector<1x1x1x64xf32>
    %278 = vector.shape_cast %277 : vector<1x1x1x64xf32> to vector<1x64xf32>
    %279 = vector.broadcast %278 : vector<1x64xf32> to vector<14x64xf32>
    %280 = arith.addf %276, %279 : vector<14x64xf32>
    %281 = vector.extract_strided_slice %266 {offsets = [0, 0], sizes = [7, 16], strides = [1, 1]} : vector<14x64xf32> to vector<7x16xf32>
    %282 = vector.extract_strided_slice %273 {offsets = [0, 0], sizes = [7, 16], strides = [1, 1]} : vector<14x64xf32> to vector<7x16xf32>
    %283 = vector.extract_strided_slice %280 {offsets = [0, 0], sizes = [7, 16], strides = [1, 1]} : vector<14x64xf32> to vector<7x16xf32>
    %cst_155 = arith.constant dense<0.000000e+00> : vector<7x7xf32>
    %284 = tpu.matmul %281, %282, %cst_155 {dimension_numbers = #tpu.dot_dimension_numbers<[1], [1], [0], [0], [0, 0, 1, 0], [], []>} : vector<7x16xf32>, vector<7x16xf32>, vector<7x7xf32> -> vector<7x7xf32>
    %cst_156 = arith.constant 2.500000e-01 : f32
    %285 = vector.broadcast %cst_156 : f32 to vector<7x7xf32>
    %286 = arith.mulf %284, %285 : vector<7x7xf32>
    %cst_157 = arith.constant dense<0xFF800000> : vector<7xf32>
    %287 = vector.multi_reduction <maximumf>, %286, %cst_157 [1] : vector<7x7xf32> to vector<7xf32>
    %288 = vector.shape_cast %287 : vector<7xf32> to vector<7x1xf32>
    %289 = vector.broadcast %288 : vector<7x1xf32> to vector<7x7xf32>
    %290 = arith.subf %286, %289 : vector<7x7xf32>
    %291 = math.exp %290 : vector<7x7xf32>
    %cst_158 = arith.constant dense<0.000000e+00> : vector<7xf32>
    %292 = vector.multi_reduction <add>, %291, %cst_158 [1] : vector<7x7xf32> to vector<7xf32>
    %293 = vector.shape_cast %292 : vector<7xf32> to vector<7x1xf32>
    %294 = tpu.reciprocal %293 {approx = true} : vector<7x1xf32> -> vector<7x1xf32>
    %295 = vector.broadcast %294 : vector<7x1xf32> to vector<7x7xf32>
    %296 = arith.mulf %291, %295 : vector<7x7xf32>
    %cst_159 = arith.constant dense<0.000000e+00> : vector<7x16xf32>
    %297 = tpu.matmul %296, %283, %cst_159 {dimension_numbers = #tpu.dot_dimension_numbers<[1], [0], [0], [1], [0, 0, 1, 1], [], []>} : vector<7x7xf32>, vector<7x16xf32>, vector<7x16xf32> -> vector<7x16xf32>
    %298 = vector.extract_strided_slice %266 {offsets = [0, 16], sizes = [7, 16], strides = [1, 1]} : vector<14x64xf32> to vector<7x16xf32>
    %299 = vector.extract_strided_slice %273 {offsets = [0, 16], sizes = [7, 16], strides = [1, 1]} : vector<14x64xf32> to vector<7x16xf32>
    %300 = vector.extract_strided_slice %280 {offsets = [0, 16], sizes = [7, 16], strides = [1, 1]} : vector<14x64xf32> to vector<7x16xf32>
    %cst_160 = arith.constant dense<0.000000e+00> : vector<7x7xf32>
    %301 = tpu.matmul %298, %299, %cst_160 {dimension_numbers = #tpu.dot_dimension_numbers<[1], [1], [0], [0], [0, 0, 1, 0], [], []>} : vector<7x16xf32>, vector<7x16xf32>, vector<7x7xf32> -> vector<7x7xf32>
    %cst_161 = arith.constant 2.500000e-01 : f32
    %302 = vector.broadcast %cst_161 : f32 to vector<7x7xf32>
    %303 = arith.mulf %301, %302 : vector<7x7xf32>
    %cst_162 = arith.constant dense<0xFF800000> : vector<7xf32>
    %304 = vector.multi_reduction <maximumf>, %303, %cst_162 [1] : vector<7x7xf32> to vector<7xf32>
    %305 = vector.shape_cast %304 : vector<7xf32> to vector<7x1xf32>
    %306 = vector.broadcast %305 : vector<7x1xf32> to vector<7x7xf32>
    %307 = arith.subf %303, %306 : vector<7x7xf32>
    %308 = math.exp %307 : vector<7x7xf32>
    %cst_163 = arith.constant dense<0.000000e+00> : vector<7xf32>
    %309 = vector.multi_reduction <add>, %308, %cst_163 [1] : vector<7x7xf32> to vector<7xf32>
    %310 = vector.shape_cast %309 : vector<7xf32> to vector<7x1xf32>
    %311 = tpu.reciprocal %310 {approx = true} : vector<7x1xf32> -> vector<7x1xf32>
    %312 = vector.broadcast %311 : vector<7x1xf32> to vector<7x7xf32>
    %313 = arith.mulf %308, %312 : vector<7x7xf32>
    %cst_164 = arith.constant dense<0.000000e+00> : vector<7x16xf32>
    %314 = tpu.matmul %313, %300, %cst_164 {dimension_numbers = #tpu.dot_dimension_numbers<[1], [0], [0], [1], [0, 0, 1, 1], [], []>} : vector<7x7xf32>, vector<7x16xf32>, vector<7x16xf32> -> vector<7x16xf32>
    %315 = vector.extract_strided_slice %266 {offsets = [0, 32], sizes = [7, 16], strides = [1, 1]} : vector<14x64xf32> to vector<7x16xf32>
    %316 = vector.extract_strided_slice %273 {offsets = [0, 32], sizes = [7, 16], strides = [1, 1]} : vector<14x64xf32> to vector<7x16xf32>
    %317 = vector.extract_strided_slice %280 {offsets = [0, 32], sizes = [7, 16], strides = [1, 1]} : vector<14x64xf32> to vector<7x16xf32>
    %cst_165 = arith.constant dense<0.000000e+00> : vector<7x7xf32>
    %318 = tpu.matmul %315, %316, %cst_165 {dimension_numbers = #tpu.dot_dimension_numbers<[1], [1], [0], [0], [0, 0, 1, 0], [], []>} : vector<7x16xf32>, vector<7x16xf32>, vector<7x7xf32> -> vector<7x7xf32>
    %cst_166 = arith.constant 2.500000e-01 : f32
    %319 = vector.broadcast %cst_166 : f32 to vector<7x7xf32>
    %320 = arith.mulf %318, %319 : vector<7x7xf32>
    %cst_167 = arith.constant dense<0xFF800000> : vector<7xf32>
    %321 = vector.multi_reduction <maximumf>, %320, %cst_167 [1] : vector<7x7xf32> to vector<7xf32>
    %322 = vector.shape_cast %321 : vector<7xf32> to vector<7x1xf32>
    %323 = vector.broadcast %322 : vector<7x1xf32> to vector<7x7xf32>
    %324 = arith.subf %320, %323 : vector<7x7xf32>
    %325 = math.exp %324 : vector<7x7xf32>
    %cst_168 = arith.constant dense<0.000000e+00> : vector<7xf32>
    %326 = vector.multi_reduction <add>, %325, %cst_168 [1] : vector<7x7xf32> to vector<7xf32>
    %327 = vector.shape_cast %326 : vector<7xf32> to vector<7x1xf32>
    %328 = tpu.reciprocal %327 {approx = true} : vector<7x1xf32> -> vector<7x1xf32>
    %329 = vector.broadcast %328 : vector<7x1xf32> to vector<7x7xf32>
    %330 = arith.mulf %325, %329 : vector<7x7xf32>
    %cst_169 = arith.constant dense<0.000000e+00> : vector<7x16xf32>
    %331 = tpu.matmul %330, %317, %cst_169 {dimension_numbers = #tpu.dot_dimension_numbers<[1], [0], [0], [1], [0, 0, 1, 1], [], []>} : vector<7x7xf32>, vector<7x16xf32>, vector<7x16xf32> -> vector<7x16xf32>
    %332 = vector.extract_strided_slice %266 {offsets = [0, 48], sizes = [7, 16], strides = [1, 1]} : vector<14x64xf32> to vector<7x16xf32>
    %333 = vector.extract_strided_slice %273 {offsets = [0, 48], sizes = [7, 16], strides = [1, 1]} : vector<14x64xf32> to vector<7x16xf32>
    %334 = vector.extract_strided_slice %280 {offsets = [0, 48], sizes = [7, 16], strides = [1, 1]} : vector<14x64xf32> to vector<7x16xf32>
    %cst_170 = arith.constant dense<0.000000e+00> : vector<7x7xf32>
    %335 = tpu.matmul %332, %333, %cst_170 {dimension_numbers = #tpu.dot_dimension_numbers<[1], [1], [0], [0], [0, 0, 1, 0], [], []>} : vector<7x16xf32>, vector<7x16xf32>, vector<7x7xf32> -> vector<7x7xf32>
    %cst_171 = arith.constant 2.500000e-01 : f32
    %336 = vector.broadcast %cst_171 : f32 to vector<7x7xf32>
    %337 = arith.mulf %335, %336 : vector<7x7xf32>
    %cst_172 = arith.constant dense<0xFF800000> : vector<7xf32>
    %338 = vector.multi_reduction <maximumf>, %337, %cst_172 [1] : vector<7x7xf32> to vector<7xf32>
    %339 = vector.shape_cast %338 : vector<7xf32> to vector<7x1xf32>
    %340 = vector.broadcast %339 : vector<7x1xf32> to vector<7x7xf32>
    %341 = arith.subf %337, %340 : vector<7x7xf32>
    %342 = math.exp %341 : vector<7x7xf32>
    %cst_173 = arith.constant dense<0.000000e+00> : vector<7xf32>
    %343 = vector.multi_reduction <add>, %342, %cst_173 [1] : vector<7x7xf32> to vector<7xf32>
    %344 = vector.shape_cast %343 : vector<7xf32> to vector<7x1xf32>
    %345 = tpu.reciprocal %344 {approx = true} : vector<7x1xf32> -> vector<7x1xf32>
    %346 = vector.broadcast %345 : vector<7x1xf32> to vector<7x7xf32>
    %347 = arith.mulf %342, %346 : vector<7x7xf32>
    %cst_174 = arith.constant dense<0.000000e+00> : vector<7x16xf32>
    %348 = tpu.matmul %347, %334, %cst_174 {dimension_numbers = #tpu.dot_dimension_numbers<[1], [0], [0], [1], [0, 0, 1, 1], [], []>} : vector<7x7xf32>, vector<7x16xf32>, vector<7x16xf32> -> vector<7x16xf32>
    %349 = tpu.concatenate %297, %314, %331, %348 in 1 : vector<7x16xf32>, vector<7x16xf32>, vector<7x16xf32>, vector<7x16xf32> -> vector<7x64xf32>
    %350 = vector.extract_strided_slice %266 {offsets = [7, 0], sizes = [7, 16], strides = [1, 1]} : vector<14x64xf32> to vector<7x16xf32>
    %351 = vector.extract_strided_slice %273 {offsets = [7, 0], sizes = [7, 16], strides = [1, 1]} : vector<14x64xf32> to vector<7x16xf32>
    %352 = vector.extract_strided_slice %280 {offsets = [7, 0], sizes = [7, 16], strides = [1, 1]} : vector<14x64xf32> to vector<7x16xf32>
    %cst_175 = arith.constant dense<0.000000e+00> : vector<7x7xf32>
    %353 = tpu.matmul %350, %351, %cst_175 {dimension_numbers = #tpu.dot_dimension_numbers<[1], [1], [0], [0], [0, 0, 1, 0], [], []>} : vector<7x16xf32>, vector<7x16xf32>, vector<7x7xf32> -> vector<7x7xf32>
    %cst_176 = arith.constant 2.500000e-01 : f32
    %354 = vector.broadcast %cst_176 : f32 to vector<7x7xf32>
    %355 = arith.mulf %353, %354 : vector<7x7xf32>
    %cst_177 = arith.constant dense<0xFF800000> : vector<7xf32>
    %356 = vector.multi_reduction <maximumf>, %355, %cst_177 [1] : vector<7x7xf32> to vector<7xf32>
    %357 = vector.shape_cast %356 : vector<7xf32> to vector<7x1xf32>
    %358 = vector.broadcast %357 : vector<7x1xf32> to vector<7x7xf32>
    %359 = arith.subf %355, %358 : vector<7x7xf32>
    %360 = math.exp %359 : vector<7x7xf32>
    %cst_178 = arith.constant dense<0.000000e+00> : vector<7xf32>
    %361 = vector.multi_reduction <add>, %360, %cst_178 [1] : vector<7x7xf32> to vector<7xf32>
    %362 = vector.shape_cast %361 : vector<7xf32> to vector<7x1xf32>
    %363 = tpu.reciprocal %362 {approx = true} : vector<7x1xf32> -> vector<7x1xf32>
    %364 = vector.broadcast %363 : vector<7x1xf32> to vector<7x7xf32>
    %365 = arith.mulf %360, %364 : vector<7x7xf32>
    %cst_179 = arith.constant dense<0.000000e+00> : vector<7x16xf32>
    %366 = tpu.matmul %365, %352, %cst_179 {dimension_numbers = #tpu.dot_dimension_numbers<[1], [0], [0], [1], [0, 0, 1, 1], [], []>} : vector<7x7xf32>, vector<7x16xf32>, vector<7x16xf32> -> vector<7x16xf32>
    %367 = vector.extract_strided_slice %266 {offsets = [7, 16], sizes = [7, 16], strides = [1, 1]} : vector<14x64xf32> to vector<7x16xf32>
    %368 = vector.extract_strided_slice %273 {offsets = [7, 16], sizes = [7, 16], strides = [1, 1]} : vector<14x64xf32> to vector<7x16xf32>
    %369 = vector.extract_strided_slice %280 {offsets = [7, 16], sizes = [7, 16], strides = [1, 1]} : vector<14x64xf32> to vector<7x16xf32>
    %cst_180 = arith.constant dense<0.000000e+00> : vector<7x7xf32>
    %370 = tpu.matmul %367, %368, %cst_180 {dimension_numbers = #tpu.dot_dimension_numbers<[1], [1], [0], [0], [0, 0, 1, 0], [], []>} : vector<7x16xf32>, vector<7x16xf32>, vector<7x7xf32> -> vector<7x7xf32>
    %cst_181 = arith.constant 2.500000e-01 : f32
    %371 = vector.broadcast %cst_181 : f32 to vector<7x7xf32>
    %372 = arith.mulf %370, %371 : vector<7x7xf32>
    %cst_182 = arith.constant dense<0xFF800000> : vector<7xf32>
    %373 = vector.multi_reduction <maximumf>, %372, %cst_182 [1] : vector<7x7xf32> to vector<7xf32>
    %374 = vector.shape_cast %373 : vector<7xf32> to vector<7x1xf32>
    %375 = vector.broadcast %374 : vector<7x1xf32> to vector<7x7xf32>
    %376 = arith.subf %372, %375 : vector<7x7xf32>
    %377 = math.exp %376 : vector<7x7xf32>
    %cst_183 = arith.constant dense<0.000000e+00> : vector<7xf32>
    %378 = vector.multi_reduction <add>, %377, %cst_183 [1] : vector<7x7xf32> to vector<7xf32>
    %379 = vector.shape_cast %378 : vector<7xf32> to vector<7x1xf32>
    %380 = tpu.reciprocal %379 {approx = true} : vector<7x1xf32> -> vector<7x1xf32>
    %381 = vector.broadcast %380 : vector<7x1xf32> to vector<7x7xf32>
    %382 = arith.mulf %377, %381 : vector<7x7xf32>
    %cst_184 = arith.constant dense<0.000000e+00> : vector<7x16xf32>
    %383 = tpu.matmul %382, %369, %cst_184 {dimension_numbers = #tpu.dot_dimension_numbers<[1], [0], [0], [1], [0, 0, 1, 1], [], []>} : vector<7x7xf32>, vector<7x16xf32>, vector<7x16xf32> -> vector<7x16xf32>
    %384 = vector.extract_strided_slice %266 {offsets = [7, 32], sizes = [7, 16], strides = [1, 1]} : vector<14x64xf32> to vector<7x16xf32>
    %385 = vector.extract_strided_slice %273 {offsets = [7, 32], sizes = [7, 16], strides = [1, 1]} : vector<14x64xf32> to vector<7x16xf32>
    %386 = vector.extract_strided_slice %280 {offsets = [7, 32], sizes = [7, 16], strides = [1, 1]} : vector<14x64xf32> to vector<7x16xf32>
    %cst_185 = arith.constant dense<0.000000e+00> : vector<7x7xf32>
    %387 = tpu.matmul %384, %385, %cst_185 {dimension_numbers = #tpu.dot_dimension_numbers<[1], [1], [0], [0], [0, 0, 1, 0], [], []>} : vector<7x16xf32>, vector<7x16xf32>, vector<7x7xf32> -> vector<7x7xf32>
    %cst_186 = arith.constant 2.500000e-01 : f32
    %388 = vector.broadcast %cst_186 : f32 to vector<7x7xf32>
    %389 = arith.mulf %387, %388 : vector<7x7xf32>
    %cst_187 = arith.constant dense<0xFF800000> : vector<7xf32>
    %390 = vector.multi_reduction <maximumf>, %389, %cst_187 [1] : vector<7x7xf32> to vector<7xf32>
    %391 = vector.shape_cast %390 : vector<7xf32> to vector<7x1xf32>
    %392 = vector.broadcast %391 : vector<7x1xf32> to vector<7x7xf32>
    %393 = arith.subf %389, %392 : vector<7x7xf32>
    %394 = math.exp %393 : vector<7x7xf32>
    %cst_188 = arith.constant dense<0.000000e+00> : vector<7xf32>
    %395 = vector.multi_reduction <add>, %394, %cst_188 [1] : vector<7x7xf32> to vector<7xf32>
    %396 = vector.shape_cast %395 : vector<7xf32> to vector<7x1xf32>
    %397 = tpu.reciprocal %396 {approx = true} : vector<7x1xf32> -> vector<7x1xf32>
    %398 = vector.broadcast %397 : vector<7x1xf32> to vector<7x7xf32>
    %399 = arith.mulf %394, %398 : vector<7x7xf32>
    %cst_189 = arith.constant dense<0.000000e+00> : vector<7x16xf32>
    %400 = tpu.matmul %399, %386, %cst_189 {dimension_numbers = #tpu.dot_dimension_numbers<[1], [0], [0], [1], [0, 0, 1, 1], [], []>} : vector<7x7xf32>, vector<7x16xf32>, vector<7x16xf32> -> vector<7x16xf32>
    %401 = vector.extract_strided_slice %266 {offsets = [7, 48], sizes = [7, 16], strides = [1, 1]} : vector<14x64xf32> to vector<7x16xf32>
    %402 = vector.extract_strided_slice %273 {offsets = [7, 48], sizes = [7, 16], strides = [1, 1]} : vector<14x64xf32> to vector<7x16xf32>
    %403 = vector.extract_strided_slice %280 {offsets = [7, 48], sizes = [7, 16], strides = [1, 1]} : vector<14x64xf32> to vector<7x16xf32>
    %cst_190 = arith.constant dense<0.000000e+00> : vector<7x7xf32>
    %404 = tpu.matmul %401, %402, %cst_190 {dimension_numbers = #tpu.dot_dimension_numbers<[1], [1], [0], [0], [0, 0, 1, 0], [], []>} : vector<7x16xf32>, vector<7x16xf32>, vector<7x7xf32> -> vector<7x7xf32>
    %cst_191 = arith.constant 2.500000e-01 : f32
    %405 = vector.broadcast %cst_191 : f32 to vector<7x7xf32>
    %406 = arith.mulf %404, %405 : vector<7x7xf32>
    %cst_192 = arith.constant dense<0xFF800000> : vector<7xf32>
    %407 = vector.multi_reduction <maximumf>, %406, %cst_192 [1] : vector<7x7xf32> to vector<7xf32>
    %408 = vector.shape_cast %407 : vector<7xf32> to vector<7x1xf32>
    %409 = vector.broadcast %408 : vector<7x1xf32> to vector<7x7xf32>
    %410 = arith.subf %406, %409 : vector<7x7xf32>
    %411 = math.exp %410 : vector<7x7xf32>
    %cst_193 = arith.constant dense<0.000000e+00> : vector<7xf32>
    %412 = vector.multi_reduction <add>, %411, %cst_193 [1] : vector<7x7xf32> to vector<7xf32>
    %413 = vector.shape_cast %412 : vector<7xf32> to vector<7x1xf32>
    %414 = tpu.reciprocal %413 {approx = true} : vector<7x1xf32> -> vector<7x1xf32>
    %415 = vector.broadcast %414 : vector<7x1xf32> to vector<7x7xf32>
    %416 = arith.mulf %411, %415 : vector<7x7xf32>
    %cst_194 = arith.constant dense<0.000000e+00> : vector<7x16xf32>
    %417 = tpu.matmul %416, %403, %cst_194 {dimension_numbers = #tpu.dot_dimension_numbers<[1], [0], [0], [1], [0, 0, 1, 1], [], []>} : vector<7x7xf32>, vector<7x16xf32>, vector<7x16xf32> -> vector<7x16xf32>
    %418 = tpu.concatenate %366, %383, %400, %417 in 1 : vector<7x16xf32>, vector<7x16xf32>, vector<7x16xf32>, vector<7x16xf32> -> vector<7x64xf32>
    %419 = tpu.concatenate %349, %418 in 0 : vector<7x64xf32>, vector<7x64xf32> -> vector<14x64xf32>
    %c1_195 = arith.constant 1 : index
    %c0_196 = arith.constant 0 : index
    %c0_197 = arith.constant 0 : index
    %420 = vector.load %arg11[%c1_195, %c0_196, %c0_197] : memref<3x64x64xf32, #tpu.memory_space<vmem>>, vector<1x64x64xf32>
    %421 = vector.shape_cast %420 : vector<1x64x64xf32> to vector<64x64xf32>
    %cst_198 = arith.constant dense<0.000000e+00> : vector<14x64xf32>
    %422 = tpu.matmul %419, %421, %cst_198 {dimension_numbers = #tpu.dot_dimension_numbers<[1], [0], [0], [1], [0, 0, 1, 1], [], []>} : vector<14x64xf32>, vector<64x64xf32>, vector<14x64xf32> -> vector<14x64xf32>
    %c1_199 = arith.constant 1 : index
    %c0_200 = arith.constant 0 : index
    %c0_201 = arith.constant 0 : index
    %423 = vector.load %arg12[%c1_199, %c0_200, %c0_201] : memref<3x1x64xf32, #tpu.memory_space<vmem>>, vector<1x1x64xf32>
    %424 = vector.shape_cast %423 : vector<1x1x64xf32> to vector<1x64xf32>
    %425 = vector.broadcast %424 : vector<1x64xf32> to vector<14x64xf32>
    %426 = arith.addf %422, %425 : vector<14x64xf32>
    %427 = arith.addf %259, %426 : vector<14x64xf32>
    %c1_202 = arith.constant 1 : index
    %c0_203 = arith.constant 0 : index
    %c0_204 = arith.constant 0 : index
    %428 = vector.load %arg13[%c1_202, %c0_203, %c0_204] : memref<3x1x64xf32, #tpu.memory_space<vmem>>, vector<1x1x64xf32>
    %429 = vector.shape_cast %428 : vector<1x1x64xf32> to vector<1x64xf32>
    %c1_205 = arith.constant 1 : index
    %c0_206 = arith.constant 0 : index
    %c0_207 = arith.constant 0 : index
    %430 = vector.load %arg14[%c1_205, %c0_206, %c0_207] : memref<3x1x64xf32, #tpu.memory_space<vmem>>, vector<1x1x64xf32>
    %431 = vector.shape_cast %430 : vector<1x1x64xf32> to vector<1x64xf32>
    %cst_208 = arith.constant dense<0.000000e+00> : vector<14xf32>
    %432 = vector.multi_reduction <add>, %427, %cst_208 [1] : vector<14x64xf32> to vector<14xf32>
    %433 = vector.shape_cast %432 : vector<14xf32> to vector<14x1xf32>
    %cst_209 = arith.constant 6.400000e+01 : f32
    %434 = vector.broadcast %cst_209 : f32 to vector<14x1xf32>
    %435 = arith.divf %433, %434 : vector<14x1xf32>
    %436 = vector.broadcast %435 : vector<14x1xf32> to vector<14x64xf32>
    %437 = arith.subf %427, %436 : vector<14x64xf32>
    %438 = arith.mulf %437, %437 : vector<14x64xf32>
    %cst_210 = arith.constant dense<0.000000e+00> : vector<14xf32>
    %439 = vector.multi_reduction <add>, %438, %cst_210 [1] : vector<14x64xf32> to vector<14xf32>
    %440 = vector.shape_cast %439 : vector<14xf32> to vector<14x1xf32>
    %cst_211 = arith.constant 6.400000e+01 : f32
    %441 = vector.broadcast %cst_211 : f32 to vector<14x1xf32>
    %442 = arith.divf %440, %441 : vector<14x1xf32>
    %443 = vector.broadcast %435 : vector<14x1xf32> to vector<14x64xf32>
    %444 = arith.subf %427, %443 : vector<14x64xf32>
    %cst_212 = arith.constant 9.99999974E-6 : f32
    %445 = vector.broadcast %cst_212 : f32 to vector<14x1xf32>
    %446 = arith.addf %442, %445 : vector<14x1xf32>
    %447 = math.rsqrt %446 : vector<14x1xf32>
    %448 = vector.broadcast %447 : vector<14x1xf32> to vector<14x64xf32>
    %449 = arith.mulf %444, %448 : vector<14x64xf32>
    %450 = vector.broadcast %429 : vector<1x64xf32> to vector<14x64xf32>
    %451 = arith.mulf %449, %450 : vector<14x64xf32>
    %452 = vector.broadcast %431 : vector<1x64xf32> to vector<14x64xf32>
    %453 = arith.addf %451, %452 : vector<14x64xf32>
    %c1_213 = arith.constant 1 : index
    %c0_214 = arith.constant 0 : index
    %c0_215 = arith.constant 0 : index
    %454 = vector.load %arg15[%c1_213, %c0_214, %c0_215] : memref<3x64x256xf32, #tpu.memory_space<vmem>>, vector<1x64x256xf32>
    %455 = vector.shape_cast %454 : vector<1x64x256xf32> to vector<64x256xf32>
    %cst_216 = arith.constant dense<0.000000e+00> : vector<14x256xf32>
    %456 = tpu.matmul %453, %455, %cst_216 {dimension_numbers = #tpu.dot_dimension_numbers<[1], [0], [0], [1], [0, 0, 1, 1], [], []>} : vector<14x64xf32>, vector<64x256xf32>, vector<14x256xf32> -> vector<14x256xf32>
    %c1_217 = arith.constant 1 : index
    %c0_218 = arith.constant 0 : index
    %c0_219 = arith.constant 0 : index
    %457 = vector.load %arg16[%c1_217, %c0_218, %c0_219] : memref<3x1x256xf32, #tpu.memory_space<vmem>>, vector<1x1x256xf32>
    %458 = vector.shape_cast %457 : vector<1x1x256xf32> to vector<1x256xf32>
    %459 = vector.broadcast %458 : vector<1x256xf32> to vector<14x256xf32>
    %460 = arith.addf %456, %459 : vector<14x256xf32>
    %cst_220 = arith.constant 0.000000e+00 : f32
    %461 = vector.broadcast %cst_220 : f32 to vector<14x256xf32>
    %462 = arith.maximumf %460, %461 : vector<14x256xf32>
    %c1_221 = arith.constant 1 : index
    %c0_222 = arith.constant 0 : index
    %c0_223 = arith.constant 0 : index
    %463 = vector.load %arg17[%c1_221, %c0_222, %c0_223] : memref<3x256x64xf32, #tpu.memory_space<vmem>>, vector<1x256x64xf32>
    %464 = vector.shape_cast %463 : vector<1x256x64xf32> to vector<256x64xf32>
    %cst_224 = arith.constant dense<0.000000e+00> : vector<14x64xf32>
    %465 = tpu.matmul %462, %464, %cst_224 {dimension_numbers = #tpu.dot_dimension_numbers<[1], [0], [0], [1], [0, 0, 1, 1], [], []>} : vector<14x256xf32>, vector<256x64xf32>, vector<14x64xf32> -> vector<14x64xf32>
    %c1_225 = arith.constant 1 : index
    %c0_226 = arith.constant 0 : index
    %c0_227 = arith.constant 0 : index
    %466 = vector.load %arg18[%c1_225, %c0_226, %c0_227] : memref<3x1x64xf32, #tpu.memory_space<vmem>>, vector<1x1x64xf32>
    %467 = vector.shape_cast %466 : vector<1x1x64xf32> to vector<1x64xf32>
    %468 = vector.broadcast %467 : vector<1x64xf32> to vector<14x64xf32>
    %469 = arith.addf %465, %468 : vector<14x64xf32>
    %470 = arith.addf %453, %469 : vector<14x64xf32>
    %c1_228 = arith.constant 1 : index
    %c0_229 = arith.constant 0 : index
    %c0_230 = arith.constant 0 : index
    %471 = vector.load %arg19[%c1_228, %c0_229, %c0_230] : memref<3x1x64xf32, #tpu.memory_space<vmem>>, vector<1x1x64xf32>
    %472 = vector.shape_cast %471 : vector<1x1x64xf32> to vector<1x64xf32>
    %c1_231 = arith.constant 1 : index
    %c0_232 = arith.constant 0 : index
    %c0_233 = arith.constant 0 : index
    %473 = vector.load %arg20[%c1_231, %c0_232, %c0_233] : memref<3x1x64xf32, #tpu.memory_space<vmem>>, vector<1x1x64xf32>
    %474 = vector.shape_cast %473 : vector<1x1x64xf32> to vector<1x64xf32>
    %cst_234 = arith.constant dense<0.000000e+00> : vector<14xf32>
    %475 = vector.multi_reduction <add>, %470, %cst_234 [1] : vector<14x64xf32> to vector<14xf32>
    %476 = vector.shape_cast %475 : vector<14xf32> to vector<14x1xf32>
    %cst_235 = arith.constant 6.400000e+01 : f32
    %477 = vector.broadcast %cst_235 : f32 to vector<14x1xf32>
    %478 = arith.divf %476, %477 : vector<14x1xf32>
    %479 = vector.broadcast %478 : vector<14x1xf32> to vector<14x64xf32>
    %480 = arith.subf %470, %479 : vector<14x64xf32>
    %481 = arith.mulf %480, %480 : vector<14x64xf32>
    %cst_236 = arith.constant dense<0.000000e+00> : vector<14xf32>
    %482 = vector.multi_reduction <add>, %481, %cst_236 [1] : vector<14x64xf32> to vector<14xf32>
    %483 = vector.shape_cast %482 : vector<14xf32> to vector<14x1xf32>
    %cst_237 = arith.constant 6.400000e+01 : f32
    %484 = vector.broadcast %cst_237 : f32 to vector<14x1xf32>
    %485 = arith.divf %483, %484 : vector<14x1xf32>
    %486 = vector.broadcast %478 : vector<14x1xf32> to vector<14x64xf32>
    %487 = arith.subf %470, %486 : vector<14x64xf32>
    %cst_238 = arith.constant 9.99999974E-6 : f32
    %488 = vector.broadcast %cst_238 : f32 to vector<14x1xf32>
    %489 = arith.addf %485, %488 : vector<14x1xf32>
    %490 = math.rsqrt %489 : vector<14x1xf32>
    %491 = vector.broadcast %490 : vector<14x1xf32> to vector<14x64xf32>
    %492 = arith.mulf %487, %491 : vector<14x64xf32>
    %493 = vector.broadcast %472 : vector<1x64xf32> to vector<14x64xf32>
    %494 = arith.mulf %492, %493 : vector<14x64xf32>
    %495 = vector.broadcast %474 : vector<1x64xf32> to vector<14x64xf32>
    %496 = arith.addf %494, %495 : vector<14x64xf32>
    %c2_239 = arith.constant 2 : index
    %c0_240 = arith.constant 0 : index
    %c0_241 = arith.constant 0 : index
    %c0_242 = arith.constant 0 : index
    %497 = vector.load %arg9[%c2_239, %c0_240, %c0_241, %c0_242] : memref<3x3x64x64xf32, #tpu.memory_space<vmem>>, vector<1x1x64x64xf32>
    %498 = vector.shape_cast %497 : vector<1x1x64x64xf32> to vector<64x64xf32>
    %cst_243 = arith.constant dense<0.000000e+00> : vector<14x64xf32>
    %499 = tpu.matmul %496, %498, %cst_243 {dimension_numbers = #tpu.dot_dimension_numbers<[1], [0], [0], [1], [0, 0, 1, 1], [], []>} : vector<14x64xf32>, vector<64x64xf32>, vector<14x64xf32> -> vector<14x64xf32>
    %c2_244 = arith.constant 2 : index
    %c0_245 = arith.constant 0 : index
    %c0_246 = arith.constant 0 : index
    %c0_247 = arith.constant 0 : index
    %500 = vector.load %arg10[%c2_244, %c0_245, %c0_246, %c0_247] : memref<3x3x1x64xf32, #tpu.memory_space<vmem>>, vector<1x1x1x64xf32>
    %501 = vector.shape_cast %500 : vector<1x1x1x64xf32> to vector<1x64xf32>
    %502 = vector.broadcast %501 : vector<1x64xf32> to vector<14x64xf32>
    %503 = arith.addf %499, %502 : vector<14x64xf32>
    %c2_248 = arith.constant 2 : index
    %c1_249 = arith.constant 1 : index
    %c0_250 = arith.constant 0 : index
    %c0_251 = arith.constant 0 : index
    %504 = vector.load %arg9[%c2_248, %c1_249, %c0_250, %c0_251] : memref<3x3x64x64xf32, #tpu.memory_space<vmem>>, vector<1x1x64x64xf32>
    %505 = vector.shape_cast %504 : vector<1x1x64x64xf32> to vector<64x64xf32>
    %cst_252 = arith.constant dense<0.000000e+00> : vector<14x64xf32>
    %506 = tpu.matmul %496, %505, %cst_252 {dimension_numbers = #tpu.dot_dimension_numbers<[1], [0], [0], [1], [0, 0, 1, 1], [], []>} : vector<14x64xf32>, vector<64x64xf32>, vector<14x64xf32> -> vector<14x64xf32>
    %c2_253 = arith.constant 2 : index
    %c1_254 = arith.constant 1 : index
    %c0_255 = arith.constant 0 : index
    %c0_256 = arith.constant 0 : index
    %507 = vector.load %arg10[%c2_253, %c1_254, %c0_255, %c0_256] : memref<3x3x1x64xf32, #tpu.memory_space<vmem>>, vector<1x1x1x64xf32>
    %508 = vector.shape_cast %507 : vector<1x1x1x64xf32> to vector<1x64xf32>
    %509 = vector.broadcast %508 : vector<1x64xf32> to vector<14x64xf32>
    %510 = arith.addf %506, %509 : vector<14x64xf32>
    %c2_257 = arith.constant 2 : index
    %c2_258 = arith.constant 2 : index
    %c0_259 = arith.constant 0 : index
    %c0_260 = arith.constant 0 : index
    %511 = vector.load %arg9[%c2_257, %c2_258, %c0_259, %c0_260] : memref<3x3x64x64xf32, #tpu.memory_space<vmem>>, vector<1x1x64x64xf32>
    %512 = vector.shape_cast %511 : vector<1x1x64x64xf32> to vector<64x64xf32>
    %cst_261 = arith.constant dense<0.000000e+00> : vector<14x64xf32>
    %513 = tpu.matmul %496, %512, %cst_261 {dimension_numbers = #tpu.dot_dimension_numbers<[1], [0], [0], [1], [0, 0, 1, 1], [], []>} : vector<14x64xf32>, vector<64x64xf32>, vector<14x64xf32> -> vector<14x64xf32>
    %c2_262 = arith.constant 2 : index
    %c2_263 = arith.constant 2 : index
    %c0_264 = arith.constant 0 : index
    %c0_265 = arith.constant 0 : index
    %514 = vector.load %arg10[%c2_262, %c2_263, %c0_264, %c0_265] : memref<3x3x1x64xf32, #tpu.memory_space<vmem>>, vector<1x1x1x64xf32>
    %515 = vector.shape_cast %514 : vector<1x1x1x64xf32> to vector<1x64xf32>
    %516 = vector.broadcast %515 : vector<1x64xf32> to vector<14x64xf32>
    %517 = arith.addf %513, %516 : vector<14x64xf32>
    %518 = vector.extract_strided_slice %503 {offsets = [0, 0], sizes = [7, 16], strides = [1, 1]} : vector<14x64xf32> to vector<7x16xf32>
    %519 = vector.extract_strided_slice %510 {offsets = [0, 0], sizes = [7, 16], strides = [1, 1]} : vector<14x64xf32> to vector<7x16xf32>
    %520 = vector.extract_strided_slice %517 {offsets = [0, 0], sizes = [7, 16], strides = [1, 1]} : vector<14x64xf32> to vector<7x16xf32>
    %cst_266 = arith.constant dense<0.000000e+00> : vector<7x7xf32>
    %521 = tpu.matmul %518, %519, %cst_266 {dimension_numbers = #tpu.dot_dimension_numbers<[1], [1], [0], [0], [0, 0, 1, 0], [], []>} : vector<7x16xf32>, vector<7x16xf32>, vector<7x7xf32> -> vector<7x7xf32>
    %cst_267 = arith.constant 2.500000e-01 : f32
    %522 = vector.broadcast %cst_267 : f32 to vector<7x7xf32>
    %523 = arith.mulf %521, %522 : vector<7x7xf32>
    %cst_268 = arith.constant dense<0xFF800000> : vector<7xf32>
    %524 = vector.multi_reduction <maximumf>, %523, %cst_268 [1] : vector<7x7xf32> to vector<7xf32>
    %525 = vector.shape_cast %524 : vector<7xf32> to vector<7x1xf32>
    %526 = vector.broadcast %525 : vector<7x1xf32> to vector<7x7xf32>
    %527 = arith.subf %523, %526 : vector<7x7xf32>
    %528 = math.exp %527 : vector<7x7xf32>
    %cst_269 = arith.constant dense<0.000000e+00> : vector<7xf32>
    %529 = vector.multi_reduction <add>, %528, %cst_269 [1] : vector<7x7xf32> to vector<7xf32>
    %530 = vector.shape_cast %529 : vector<7xf32> to vector<7x1xf32>
    %531 = tpu.reciprocal %530 {approx = true} : vector<7x1xf32> -> vector<7x1xf32>
    %532 = vector.broadcast %531 : vector<7x1xf32> to vector<7x7xf32>
    %533 = arith.mulf %528, %532 : vector<7x7xf32>
    %cst_270 = arith.constant dense<0.000000e+00> : vector<7x16xf32>
    %534 = tpu.matmul %533, %520, %cst_270 {dimension_numbers = #tpu.dot_dimension_numbers<[1], [0], [0], [1], [0, 0, 1, 1], [], []>} : vector<7x7xf32>, vector<7x16xf32>, vector<7x16xf32> -> vector<7x16xf32>
    %535 = vector.extract_strided_slice %503 {offsets = [0, 16], sizes = [7, 16], strides = [1, 1]} : vector<14x64xf32> to vector<7x16xf32>
    %536 = vector.extract_strided_slice %510 {offsets = [0, 16], sizes = [7, 16], strides = [1, 1]} : vector<14x64xf32> to vector<7x16xf32>
    %537 = vector.extract_strided_slice %517 {offsets = [0, 16], sizes = [7, 16], strides = [1, 1]} : vector<14x64xf32> to vector<7x16xf32>
    %cst_271 = arith.constant dense<0.000000e+00> : vector<7x7xf32>
    %538 = tpu.matmul %535, %536, %cst_271 {dimension_numbers = #tpu.dot_dimension_numbers<[1], [1], [0], [0], [0, 0, 1, 0], [], []>} : vector<7x16xf32>, vector<7x16xf32>, vector<7x7xf32> -> vector<7x7xf32>
    %cst_272 = arith.constant 2.500000e-01 : f32
    %539 = vector.broadcast %cst_272 : f32 to vector<7x7xf32>
    %540 = arith.mulf %538, %539 : vector<7x7xf32>
    %cst_273 = arith.constant dense<0xFF800000> : vector<7xf32>
    %541 = vector.multi_reduction <maximumf>, %540, %cst_273 [1] : vector<7x7xf32> to vector<7xf32>
    %542 = vector.shape_cast %541 : vector<7xf32> to vector<7x1xf32>
    %543 = vector.broadcast %542 : vector<7x1xf32> to vector<7x7xf32>
    %544 = arith.subf %540, %543 : vector<7x7xf32>
    %545 = math.exp %544 : vector<7x7xf32>
    %cst_274 = arith.constant dense<0.000000e+00> : vector<7xf32>
    %546 = vector.multi_reduction <add>, %545, %cst_274 [1] : vector<7x7xf32> to vector<7xf32>
    %547 = vector.shape_cast %546 : vector<7xf32> to vector<7x1xf32>
    %548 = tpu.reciprocal %547 {approx = true} : vector<7x1xf32> -> vector<7x1xf32>
    %549 = vector.broadcast %548 : vector<7x1xf32> to vector<7x7xf32>
    %550 = arith.mulf %545, %549 : vector<7x7xf32>
    %cst_275 = arith.constant dense<0.000000e+00> : vector<7x16xf32>
    %551 = tpu.matmul %550, %537, %cst_275 {dimension_numbers = #tpu.dot_dimension_numbers<[1], [0], [0], [1], [0, 0, 1, 1], [], []>} : vector<7x7xf32>, vector<7x16xf32>, vector<7x16xf32> -> vector<7x16xf32>
    %552 = vector.extract_strided_slice %503 {offsets = [0, 32], sizes = [7, 16], strides = [1, 1]} : vector<14x64xf32> to vector<7x16xf32>
    %553 = vector.extract_strided_slice %510 {offsets = [0, 32], sizes = [7, 16], strides = [1, 1]} : vector<14x64xf32> to vector<7x16xf32>
    %554 = vector.extract_strided_slice %517 {offsets = [0, 32], sizes = [7, 16], strides = [1, 1]} : vector<14x64xf32> to vector<7x16xf32>
    %cst_276 = arith.constant dense<0.000000e+00> : vector<7x7xf32>
    %555 = tpu.matmul %552, %553, %cst_276 {dimension_numbers = #tpu.dot_dimension_numbers<[1], [1], [0], [0], [0, 0, 1, 0], [], []>} : vector<7x16xf32>, vector<7x16xf32>, vector<7x7xf32> -> vector<7x7xf32>
    %cst_277 = arith.constant 2.500000e-01 : f32
    %556 = vector.broadcast %cst_277 : f32 to vector<7x7xf32>
    %557 = arith.mulf %555, %556 : vector<7x7xf32>
    %cst_278 = arith.constant dense<0xFF800000> : vector<7xf32>
    %558 = vector.multi_reduction <maximumf>, %557, %cst_278 [1] : vector<7x7xf32> to vector<7xf32>
    %559 = vector.shape_cast %558 : vector<7xf32> to vector<7x1xf32>
    %560 = vector.broadcast %559 : vector<7x1xf32> to vector<7x7xf32>
    %561 = arith.subf %557, %560 : vector<7x7xf32>
    %562 = math.exp %561 : vector<7x7xf32>
    %cst_279 = arith.constant dense<0.000000e+00> : vector<7xf32>
    %563 = vector.multi_reduction <add>, %562, %cst_279 [1] : vector<7x7xf32> to vector<7xf32>
    %564 = vector.shape_cast %563 : vector<7xf32> to vector<7x1xf32>
    %565 = tpu.reciprocal %564 {approx = true} : vector<7x1xf32> -> vector<7x1xf32>
    %566 = vector.broadcast %565 : vector<7x1xf32> to vector<7x7xf32>
    %567 = arith.mulf %562, %566 : vector<7x7xf32>
    %cst_280 = arith.constant dense<0.000000e+00> : vector<7x16xf32>
    %568 = tpu.matmul %567, %554, %cst_280 {dimension_numbers = #tpu.dot_dimension_numbers<[1], [0], [0], [1], [0, 0, 1, 1], [], []>} : vector<7x7xf32>, vector<7x16xf32>, vector<7x16xf32> -> vector<7x16xf32>
    %569 = vector.extract_strided_slice %503 {offsets = [0, 48], sizes = [7, 16], strides = [1, 1]} : vector<14x64xf32> to vector<7x16xf32>
    %570 = vector.extract_strided_slice %510 {offsets = [0, 48], sizes = [7, 16], strides = [1, 1]} : vector<14x64xf32> to vector<7x16xf32>
    %571 = vector.extract_strided_slice %517 {offsets = [0, 48], sizes = [7, 16], strides = [1, 1]} : vector<14x64xf32> to vector<7x16xf32>
    %cst_281 = arith.constant dense<0.000000e+00> : vector<7x7xf32>
    %572 = tpu.matmul %569, %570, %cst_281 {dimension_numbers = #tpu.dot_dimension_numbers<[1], [1], [0], [0], [0, 0, 1, 0], [], []>} : vector<7x16xf32>, vector<7x16xf32>, vector<7x7xf32> -> vector<7x7xf32>
    %cst_282 = arith.constant 2.500000e-01 : f32
    %573 = vector.broadcast %cst_282 : f32 to vector<7x7xf32>
    %574 = arith.mulf %572, %573 : vector<7x7xf32>
    %cst_283 = arith.constant dense<0xFF800000> : vector<7xf32>
    %575 = vector.multi_reduction <maximumf>, %574, %cst_283 [1] : vector<7x7xf32> to vector<7xf32>
    %576 = vector.shape_cast %575 : vector<7xf32> to vector<7x1xf32>
    %577 = vector.broadcast %576 : vector<7x1xf32> to vector<7x7xf32>
    %578 = arith.subf %574, %577 : vector<7x7xf32>
    %579 = math.exp %578 : vector<7x7xf32>
    %cst_284 = arith.constant dense<0.000000e+00> : vector<7xf32>
    %580 = vector.multi_reduction <add>, %579, %cst_284 [1] : vector<7x7xf32> to vector<7xf32>
    %581 = vector.shape_cast %580 : vector<7xf32> to vector<7x1xf32>
    %582 = tpu.reciprocal %581 {approx = true} : vector<7x1xf32> -> vector<7x1xf32>
    %583 = vector.broadcast %582 : vector<7x1xf32> to vector<7x7xf32>
    %584 = arith.mulf %579, %583 : vector<7x7xf32>
    %cst_285 = arith.constant dense<0.000000e+00> : vector<7x16xf32>
    %585 = tpu.matmul %584, %571, %cst_285 {dimension_numbers = #tpu.dot_dimension_numbers<[1], [0], [0], [1], [0, 0, 1, 1], [], []>} : vector<7x7xf32>, vector<7x16xf32>, vector<7x16xf32> -> vector<7x16xf32>
    %586 = tpu.concatenate %534, %551, %568, %585 in 1 : vector<7x16xf32>, vector<7x16xf32>, vector<7x16xf32>, vector<7x16xf32> -> vector<7x64xf32>
    %587 = vector.extract_strided_slice %503 {offsets = [7, 0], sizes = [7, 16], strides = [1, 1]} : vector<14x64xf32> to vector<7x16xf32>
    %588 = vector.extract_strided_slice %510 {offsets = [7, 0], sizes = [7, 16], strides = [1, 1]} : vector<14x64xf32> to vector<7x16xf32>
    %589 = vector.extract_strided_slice %517 {offsets = [7, 0], sizes = [7, 16], strides = [1, 1]} : vector<14x64xf32> to vector<7x16xf32>
    %cst_286 = arith.constant dense<0.000000e+00> : vector<7x7xf32>
    %590 = tpu.matmul %587, %588, %cst_286 {dimension_numbers = #tpu.dot_dimension_numbers<[1], [1], [0], [0], [0, 0, 1, 0], [], []>} : vector<7x16xf32>, vector<7x16xf32>, vector<7x7xf32> -> vector<7x7xf32>
    %cst_287 = arith.constant 2.500000e-01 : f32
    %591 = vector.broadcast %cst_287 : f32 to vector<7x7xf32>
    %592 = arith.mulf %590, %591 : vector<7x7xf32>
    %cst_288 = arith.constant dense<0xFF800000> : vector<7xf32>
    %593 = vector.multi_reduction <maximumf>, %592, %cst_288 [1] : vector<7x7xf32> to vector<7xf32>
    %594 = vector.shape_cast %593 : vector<7xf32> to vector<7x1xf32>
    %595 = vector.broadcast %594 : vector<7x1xf32> to vector<7x7xf32>
    %596 = arith.subf %592, %595 : vector<7x7xf32>
    %597 = math.exp %596 : vector<7x7xf32>
    %cst_289 = arith.constant dense<0.000000e+00> : vector<7xf32>
    %598 = vector.multi_reduction <add>, %597, %cst_289 [1] : vector<7x7xf32> to vector<7xf32>
    %599 = vector.shape_cast %598 : vector<7xf32> to vector<7x1xf32>
    %600 = tpu.reciprocal %599 {approx = true} : vector<7x1xf32> -> vector<7x1xf32>
    %601 = vector.broadcast %600 : vector<7x1xf32> to vector<7x7xf32>
    %602 = arith.mulf %597, %601 : vector<7x7xf32>
    %cst_290 = arith.constant dense<0.000000e+00> : vector<7x16xf32>
    %603 = tpu.matmul %602, %589, %cst_290 {dimension_numbers = #tpu.dot_dimension_numbers<[1], [0], [0], [1], [0, 0, 1, 1], [], []>} : vector<7x7xf32>, vector<7x16xf32>, vector<7x16xf32> -> vector<7x16xf32>
    %604 = vector.extract_strided_slice %503 {offsets = [7, 16], sizes = [7, 16], strides = [1, 1]} : vector<14x64xf32> to vector<7x16xf32>
    %605 = vector.extract_strided_slice %510 {offsets = [7, 16], sizes = [7, 16], strides = [1, 1]} : vector<14x64xf32> to vector<7x16xf32>
    %606 = vector.extract_strided_slice %517 {offsets = [7, 16], sizes = [7, 16], strides = [1, 1]} : vector<14x64xf32> to vector<7x16xf32>
    %cst_291 = arith.constant dense<0.000000e+00> : vector<7x7xf32>
    %607 = tpu.matmul %604, %605, %cst_291 {dimension_numbers = #tpu.dot_dimension_numbers<[1], [1], [0], [0], [0, 0, 1, 0], [], []>} : vector<7x16xf32>, vector<7x16xf32>, vector<7x7xf32> -> vector<7x7xf32>
    %cst_292 = arith.constant 2.500000e-01 : f32
    %608 = vector.broadcast %cst_292 : f32 to vector<7x7xf32>
    %609 = arith.mulf %607, %608 : vector<7x7xf32>
    %cst_293 = arith.constant dense<0xFF800000> : vector<7xf32>
    %610 = vector.multi_reduction <maximumf>, %609, %cst_293 [1] : vector<7x7xf32> to vector<7xf32>
    %611 = vector.shape_cast %610 : vector<7xf32> to vector<7x1xf32>
    %612 = vector.broadcast %611 : vector<7x1xf32> to vector<7x7xf32>
    %613 = arith.subf %609, %612 : vector<7x7xf32>
    %614 = math.exp %613 : vector<7x7xf32>
    %cst_294 = arith.constant dense<0.000000e+00> : vector<7xf32>
    %615 = vector.multi_reduction <add>, %614, %cst_294 [1] : vector<7x7xf32> to vector<7xf32>
    %616 = vector.shape_cast %615 : vector<7xf32> to vector<7x1xf32>
    %617 = tpu.reciprocal %616 {approx = true} : vector<7x1xf32> -> vector<7x1xf32>
    %618 = vector.broadcast %617 : vector<7x1xf32> to vector<7x7xf32>
    %619 = arith.mulf %614, %618 : vector<7x7xf32>
    %cst_295 = arith.constant dense<0.000000e+00> : vector<7x16xf32>
    %620 = tpu.matmul %619, %606, %cst_295 {dimension_numbers = #tpu.dot_dimension_numbers<[1], [0], [0], [1], [0, 0, 1, 1], [], []>} : vector<7x7xf32>, vector<7x16xf32>, vector<7x16xf32> -> vector<7x16xf32>
    %621 = vector.extract_strided_slice %503 {offsets = [7, 32], sizes = [7, 16], strides = [1, 1]} : vector<14x64xf32> to vector<7x16xf32>
    %622 = vector.extract_strided_slice %510 {offsets = [7, 32], sizes = [7, 16], strides = [1, 1]} : vector<14x64xf32> to vector<7x16xf32>
    %623 = vector.extract_strided_slice %517 {offsets = [7, 32], sizes = [7, 16], strides = [1, 1]} : vector<14x64xf32> to vector<7x16xf32>
    %cst_296 = arith.constant dense<0.000000e+00> : vector<7x7xf32>
    %624 = tpu.matmul %621, %622, %cst_296 {dimension_numbers = #tpu.dot_dimension_numbers<[1], [1], [0], [0], [0, 0, 1, 0], [], []>} : vector<7x16xf32>, vector<7x16xf32>, vector<7x7xf32> -> vector<7x7xf32>
    %cst_297 = arith.constant 2.500000e-01 : f32
    %625 = vector.broadcast %cst_297 : f32 to vector<7x7xf32>
    %626 = arith.mulf %624, %625 : vector<7x7xf32>
    %cst_298 = arith.constant dense<0xFF800000> : vector<7xf32>
    %627 = vector.multi_reduction <maximumf>, %626, %cst_298 [1] : vector<7x7xf32> to vector<7xf32>
    %628 = vector.shape_cast %627 : vector<7xf32> to vector<7x1xf32>
    %629 = vector.broadcast %628 : vector<7x1xf32> to vector<7x7xf32>
    %630 = arith.subf %626, %629 : vector<7x7xf32>
    %631 = math.exp %630 : vector<7x7xf32>
    %cst_299 = arith.constant dense<0.000000e+00> : vector<7xf32>
    %632 = vector.multi_reduction <add>, %631, %cst_299 [1] : vector<7x7xf32> to vector<7xf32>
    %633 = vector.shape_cast %632 : vector<7xf32> to vector<7x1xf32>
    %634 = tpu.reciprocal %633 {approx = true} : vector<7x1xf32> -> vector<7x1xf32>
    %635 = vector.broadcast %634 : vector<7x1xf32> to vector<7x7xf32>
    %636 = arith.mulf %631, %635 : vector<7x7xf32>
    %cst_300 = arith.constant dense<0.000000e+00> : vector<7x16xf32>
    %637 = tpu.matmul %636, %623, %cst_300 {dimension_numbers = #tpu.dot_dimension_numbers<[1], [0], [0], [1], [0, 0, 1, 1], [], []>} : vector<7x7xf32>, vector<7x16xf32>, vector<7x16xf32> -> vector<7x16xf32>
    %638 = vector.extract_strided_slice %503 {offsets = [7, 48], sizes = [7, 16], strides = [1, 1]} : vector<14x64xf32> to vector<7x16xf32>
    %639 = vector.extract_strided_slice %510 {offsets = [7, 48], sizes = [7, 16], strides = [1, 1]} : vector<14x64xf32> to vector<7x16xf32>
    %640 = vector.extract_strided_slice %517 {offsets = [7, 48], sizes = [7, 16], strides = [1, 1]} : vector<14x64xf32> to vector<7x16xf32>
    %cst_301 = arith.constant dense<0.000000e+00> : vector<7x7xf32>
    %641 = tpu.matmul %638, %639, %cst_301 {dimension_numbers = #tpu.dot_dimension_numbers<[1], [1], [0], [0], [0, 0, 1, 0], [], []>} : vector<7x16xf32>, vector<7x16xf32>, vector<7x7xf32> -> vector<7x7xf32>
    %cst_302 = arith.constant 2.500000e-01 : f32
    %642 = vector.broadcast %cst_302 : f32 to vector<7x7xf32>
    %643 = arith.mulf %641, %642 : vector<7x7xf32>
    %cst_303 = arith.constant dense<0xFF800000> : vector<7xf32>
    %644 = vector.multi_reduction <maximumf>, %643, %cst_303 [1] : vector<7x7xf32> to vector<7xf32>
    %645 = vector.shape_cast %644 : vector<7xf32> to vector<7x1xf32>
    %646 = vector.broadcast %645 : vector<7x1xf32> to vector<7x7xf32>
    %647 = arith.subf %643, %646 : vector<7x7xf32>
    %648 = math.exp %647 : vector<7x7xf32>
    %cst_304 = arith.constant dense<0.000000e+00> : vector<7xf32>
    %649 = vector.multi_reduction <add>, %648, %cst_304 [1] : vector<7x7xf32> to vector<7xf32>
    %650 = vector.shape_cast %649 : vector<7xf32> to vector<7x1xf32>
    %651 = tpu.reciprocal %650 {approx = true} : vector<7x1xf32> -> vector<7x1xf32>
    %652 = vector.broadcast %651 : vector<7x1xf32> to vector<7x7xf32>
    %653 = arith.mulf %648, %652 : vector<7x7xf32>
    %cst_305 = arith.constant dense<0.000000e+00> : vector<7x16xf32>
    %654 = tpu.matmul %653, %640, %cst_305 {dimension_numbers = #tpu.dot_dimension_numbers<[1], [0], [0], [1], [0, 0, 1, 1], [], []>} : vector<7x7xf32>, vector<7x16xf32>, vector<7x16xf32> -> vector<7x16xf32>
    %655 = tpu.concatenate %603, %620, %637, %654 in 1 : vector<7x16xf32>, vector<7x16xf32>, vector<7x16xf32>, vector<7x16xf32> -> vector<7x64xf32>
    %656 = tpu.concatenate %586, %655 in 0 : vector<7x64xf32>, vector<7x64xf32> -> vector<14x64xf32>
    %c2_306 = arith.constant 2 : index
    %c0_307 = arith.constant 0 : index
    %c0_308 = arith.constant 0 : index
    %657 = vector.load %arg11[%c2_306, %c0_307, %c0_308] : memref<3x64x64xf32, #tpu.memory_space<vmem>>, vector<1x64x64xf32>
    %658 = vector.shape_cast %657 : vector<1x64x64xf32> to vector<64x64xf32>
    %cst_309 = arith.constant dense<0.000000e+00> : vector<14x64xf32>
    %659 = tpu.matmul %656, %658, %cst_309 {dimension_numbers = #tpu.dot_dimension_numbers<[1], [0], [0], [1], [0, 0, 1, 1], [], []>} : vector<14x64xf32>, vector<64x64xf32>, vector<14x64xf32> -> vector<14x64xf32>
    %c2_310 = arith.constant 2 : index
    %c0_311 = arith.constant 0 : index
    %c0_312 = arith.constant 0 : index
    %660 = vector.load %arg12[%c2_310, %c0_311, %c0_312] : memref<3x1x64xf32, #tpu.memory_space<vmem>>, vector<1x1x64xf32>
    %661 = vector.shape_cast %660 : vector<1x1x64xf32> to vector<1x64xf32>
    %662 = vector.broadcast %661 : vector<1x64xf32> to vector<14x64xf32>
    %663 = arith.addf %659, %662 : vector<14x64xf32>
    %664 = arith.addf %496, %663 : vector<14x64xf32>
    %c2_313 = arith.constant 2 : index
    %c0_314 = arith.constant 0 : index
    %c0_315 = arith.constant 0 : index
    %665 = vector.load %arg13[%c2_313, %c0_314, %c0_315] : memref<3x1x64xf32, #tpu.memory_space<vmem>>, vector<1x1x64xf32>
    %666 = vector.shape_cast %665 : vector<1x1x64xf32> to vector<1x64xf32>
    %c2_316 = arith.constant 2 : index
    %c0_317 = arith.constant 0 : index
    %c0_318 = arith.constant 0 : index
    %667 = vector.load %arg14[%c2_316, %c0_317, %c0_318] : memref<3x1x64xf32, #tpu.memory_space<vmem>>, vector<1x1x64xf32>
    %668 = vector.shape_cast %667 : vector<1x1x64xf32> to vector<1x64xf32>
    %cst_319 = arith.constant dense<0.000000e+00> : vector<14xf32>
    %669 = vector.multi_reduction <add>, %664, %cst_319 [1] : vector<14x64xf32> to vector<14xf32>
    %670 = vector.shape_cast %669 : vector<14xf32> to vector<14x1xf32>
    %cst_320 = arith.constant 6.400000e+01 : f32
    %671 = vector.broadcast %cst_320 : f32 to vector<14x1xf32>
    %672 = arith.divf %670, %671 : vector<14x1xf32>
    %673 = vector.broadcast %672 : vector<14x1xf32> to vector<14x64xf32>
    %674 = arith.subf %664, %673 : vector<14x64xf32>
    %675 = arith.mulf %674, %674 : vector<14x64xf32>
    %cst_321 = arith.constant dense<0.000000e+00> : vector<14xf32>
    %676 = vector.multi_reduction <add>, %675, %cst_321 [1] : vector<14x64xf32> to vector<14xf32>
    %677 = vector.shape_cast %676 : vector<14xf32> to vector<14x1xf32>
    %cst_322 = arith.constant 6.400000e+01 : f32
    %678 = vector.broadcast %cst_322 : f32 to vector<14x1xf32>
    %679 = arith.divf %677, %678 : vector<14x1xf32>
    %680 = vector.broadcast %672 : vector<14x1xf32> to vector<14x64xf32>
    %681 = arith.subf %664, %680 : vector<14x64xf32>
    %cst_323 = arith.constant 9.99999974E-6 : f32
    %682 = vector.broadcast %cst_323 : f32 to vector<14x1xf32>
    %683 = arith.addf %679, %682 : vector<14x1xf32>
    %684 = math.rsqrt %683 : vector<14x1xf32>
    %685 = vector.broadcast %684 : vector<14x1xf32> to vector<14x64xf32>
    %686 = arith.mulf %681, %685 : vector<14x64xf32>
    %687 = vector.broadcast %666 : vector<1x64xf32> to vector<14x64xf32>
    %688 = arith.mulf %686, %687 : vector<14x64xf32>
    %689 = vector.broadcast %668 : vector<1x64xf32> to vector<14x64xf32>
    %690 = arith.addf %688, %689 : vector<14x64xf32>
    %c2_324 = arith.constant 2 : index
    %c0_325 = arith.constant 0 : index
    %c0_326 = arith.constant 0 : index
    %691 = vector.load %arg15[%c2_324, %c0_325, %c0_326] : memref<3x64x256xf32, #tpu.memory_space<vmem>>, vector<1x64x256xf32>
    %692 = vector.shape_cast %691 : vector<1x64x256xf32> to vector<64x256xf32>
    %cst_327 = arith.constant dense<0.000000e+00> : vector<14x256xf32>
    %693 = tpu.matmul %690, %692, %cst_327 {dimension_numbers = #tpu.dot_dimension_numbers<[1], [0], [0], [1], [0, 0, 1, 1], [], []>} : vector<14x64xf32>, vector<64x256xf32>, vector<14x256xf32> -> vector<14x256xf32>
    %c2_328 = arith.constant 2 : index
    %c0_329 = arith.constant 0 : index
    %c0_330 = arith.constant 0 : index
    %694 = vector.load %arg16[%c2_328, %c0_329, %c0_330] : memref<3x1x256xf32, #tpu.memory_space<vmem>>, vector<1x1x256xf32>
    %695 = vector.shape_cast %694 : vector<1x1x256xf32> to vector<1x256xf32>
    %696 = vector.broadcast %695 : vector<1x256xf32> to vector<14x256xf32>
    %697 = arith.addf %693, %696 : vector<14x256xf32>
    %cst_331 = arith.constant 0.000000e+00 : f32
    %698 = vector.broadcast %cst_331 : f32 to vector<14x256xf32>
    %699 = arith.maximumf %697, %698 : vector<14x256xf32>
    %c2_332 = arith.constant 2 : index
    %c0_333 = arith.constant 0 : index
    %c0_334 = arith.constant 0 : index
    %700 = vector.load %arg17[%c2_332, %c0_333, %c0_334] : memref<3x256x64xf32, #tpu.memory_space<vmem>>, vector<1x256x64xf32>
    %701 = vector.shape_cast %700 : vector<1x256x64xf32> to vector<256x64xf32>
    %cst_335 = arith.constant dense<0.000000e+00> : vector<14x64xf32>
    %702 = tpu.matmul %699, %701, %cst_335 {dimension_numbers = #tpu.dot_dimension_numbers<[1], [0], [0], [1], [0, 0, 1, 1], [], []>} : vector<14x256xf32>, vector<256x64xf32>, vector<14x64xf32> -> vector<14x64xf32>
    %c2_336 = arith.constant 2 : index
    %c0_337 = arith.constant 0 : index
    %c0_338 = arith.constant 0 : index
    %703 = vector.load %arg18[%c2_336, %c0_337, %c0_338] : memref<3x1x64xf32, #tpu.memory_space<vmem>>, vector<1x1x64xf32>
    %704 = vector.shape_cast %703 : vector<1x1x64xf32> to vector<1x64xf32>
    %705 = vector.broadcast %704 : vector<1x64xf32> to vector<14x64xf32>
    %706 = arith.addf %702, %705 : vector<14x64xf32>
    %707 = arith.addf %690, %706 : vector<14x64xf32>
    %c2_339 = arith.constant 2 : index
    %c0_340 = arith.constant 0 : index
    %c0_341 = arith.constant 0 : index
    %708 = vector.load %arg19[%c2_339, %c0_340, %c0_341] : memref<3x1x64xf32, #tpu.memory_space<vmem>>, vector<1x1x64xf32>
    %709 = vector.shape_cast %708 : vector<1x1x64xf32> to vector<1x64xf32>
    %c2_342 = arith.constant 2 : index
    %c0_343 = arith.constant 0 : index
    %c0_344 = arith.constant 0 : index
    %710 = vector.load %arg20[%c2_342, %c0_343, %c0_344] : memref<3x1x64xf32, #tpu.memory_space<vmem>>, vector<1x1x64xf32>
    %711 = vector.shape_cast %710 : vector<1x1x64xf32> to vector<1x64xf32>
    %cst_345 = arith.constant dense<0.000000e+00> : vector<14xf32>
    %712 = vector.multi_reduction <add>, %707, %cst_345 [1] : vector<14x64xf32> to vector<14xf32>
    %713 = vector.shape_cast %712 : vector<14xf32> to vector<14x1xf32>
    %cst_346 = arith.constant 6.400000e+01 : f32
    %714 = vector.broadcast %cst_346 : f32 to vector<14x1xf32>
    %715 = arith.divf %713, %714 : vector<14x1xf32>
    %716 = vector.broadcast %715 : vector<14x1xf32> to vector<14x64xf32>
    %717 = arith.subf %707, %716 : vector<14x64xf32>
    %718 = arith.mulf %717, %717 : vector<14x64xf32>
    %cst_347 = arith.constant dense<0.000000e+00> : vector<14xf32>
    %719 = vector.multi_reduction <add>, %718, %cst_347 [1] : vector<14x64xf32> to vector<14xf32>
    %720 = vector.shape_cast %719 : vector<14xf32> to vector<14x1xf32>
    %cst_348 = arith.constant 6.400000e+01 : f32
    %721 = vector.broadcast %cst_348 : f32 to vector<14x1xf32>
    %722 = arith.divf %720, %721 : vector<14x1xf32>
    %723 = vector.broadcast %715 : vector<14x1xf32> to vector<14x64xf32>
    %724 = arith.subf %707, %723 : vector<14x64xf32>
    %cst_349 = arith.constant 9.99999974E-6 : f32
    %725 = vector.broadcast %cst_349 : f32 to vector<14x1xf32>
    %726 = arith.addf %722, %725 : vector<14x1xf32>
    %727 = math.rsqrt %726 : vector<14x1xf32>
    %728 = vector.broadcast %727 : vector<14x1xf32> to vector<14x64xf32>
    %729 = arith.mulf %724, %728 : vector<14x64xf32>
    %730 = vector.broadcast %709 : vector<1x64xf32> to vector<14x64xf32>
    %731 = arith.mulf %729, %730 : vector<14x64xf32>
    %732 = vector.broadcast %711 : vector<1x64xf32> to vector<14x64xf32>
    %733 = arith.addf %731, %732 : vector<14x64xf32>
    %c0_350 = arith.constant 0 : index
    %c0_351 = arith.constant 0 : index
    %734 = vector.load %arg21[%c0_350, %c0_351] : memref<1x64xf32, #tpu.memory_space<vmem>>, vector<1x64xf32>
    %c0_352 = arith.constant 0 : index
    %c0_353 = arith.constant 0 : index
    %735 = vector.load %arg22[%c0_352, %c0_353] : memref<1x1xf32, #tpu.memory_space<vmem>>, vector<1x1xf32>
    %736 = vector.extract_strided_slice %733 {offsets = [0, 0], sizes = [7, 64], strides = [1, 1]} : vector<14x64xf32> to vector<7x64xf32>
    %cst_354 = arith.constant dense<0.000000e+00> : vector<1x7xf32>
    %737 = tpu.matmul %734, %736, %cst_354 {dimension_numbers = #tpu.dot_dimension_numbers<[1], [1], [0], [0], [0, 0, 1, 0], [], []>} : vector<1x64xf32>, vector<7x64xf32>, vector<1x7xf32> -> vector<1x7xf32>
    %738 = vector.broadcast %735 : vector<1x1xf32> to vector<1x7xf32>
    %739 = arith.addf %737, %738 : vector<1x7xf32>
    %cst_355 = arith.constant dense<0xFF800000> : vector<1xf32>
    %740 = vector.multi_reduction <maximumf>, %739, %cst_355 [1] : vector<1x7xf32> to vector<1xf32>
    %741 = vector.shape_cast %740 : vector<1xf32> to vector<1x1xf32>
    %742 = vector.broadcast %741 : vector<1x1xf32> to vector<1x7xf32>
    %743 = arith.subf %739, %742 : vector<1x7xf32>
    %744 = math.exp %743 : vector<1x7xf32>
    %cst_356 = arith.constant dense<0.000000e+00> : vector<1xf32>
    %745 = vector.multi_reduction <add>, %744, %cst_356 [1] : vector<1x7xf32> to vector<1xf32>
    %746 = vector.shape_cast %745 : vector<1xf32> to vector<1x1xf32>
    %747 = vector.broadcast %746 : vector<1x1xf32> to vector<1x7xf32>
    %748 = arith.divf %744, %747 : vector<1x7xf32>
    %c0_357 = arith.constant 0 : index
    %c0_358 = arith.constant 0 : index
    %c0_359 = arith.constant 0 : index
    %749 = vector.load %arg30[%c0_357, %c0_358, %c0_359] : memref<2x1x7xf32, #tpu.memory_space<vmem>>, vector<1x1x7xf32>
    %750 = vector.shape_cast %749 : vector<1x1x7xf32> to vector<1x7xf32>
    %751 = vector.shape_cast %748 : vector<1x7xf32> to vector<1x1x7xf32>
    tpu.vector_store %arg30[%c0_357, %c0_358, %c0_359], %751 {strides = array<i32>} : memref<2x1x7xf32, #tpu.memory_space<vmem>>, vector<1x1x7xf32>,
    %cst_360 = arith.constant dense<0.000000e+00> : vector<1x64xf32>
    %752 = tpu.matmul %748, %736, %cst_360 {dimension_numbers = #tpu.dot_dimension_numbers<[1], [0], [0], [1], [0, 0, 1, 1], [], []>} : vector<1x7xf32>, vector<7x64xf32>, vector<1x64xf32> -> vector<1x64xf32>
    %753 = vector.extract_strided_slice %733 {offsets = [7, 0], sizes = [7, 64], strides = [1, 1]} : vector<14x64xf32> to vector<7x64xf32>
    %cst_361 = arith.constant dense<0.000000e+00> : vector<1x7xf32>
    %754 = tpu.matmul %734, %753, %cst_361 {dimension_numbers = #tpu.dot_dimension_numbers<[1], [1], [0], [0], [0, 0, 1, 0], [], []>} : vector<1x64xf32>, vector<7x64xf32>, vector<1x7xf32> -> vector<1x7xf32>
    %755 = vector.broadcast %735 : vector<1x1xf32> to vector<1x7xf32>
    %756 = arith.addf %754, %755 : vector<1x7xf32>
    %cst_362 = arith.constant dense<0xFF800000> : vector<1xf32>
    %757 = vector.multi_reduction <maximumf>, %756, %cst_362 [1] : vector<1x7xf32> to vector<1xf32>
    %758 = vector.shape_cast %757 : vector<1xf32> to vector<1x1xf32>
    %759 = vector.broadcast %758 : vector<1x1xf32> to vector<1x7xf32>
    %760 = arith.subf %756, %759 : vector<1x7xf32>
    %761 = math.exp %760 : vector<1x7xf32>
    %cst_363 = arith.constant dense<0.000000e+00> : vector<1xf32>
    %762 = vector.multi_reduction <add>, %761, %cst_363 [1] : vector<1x7xf32> to vector<1xf32>
    %763 = vector.shape_cast %762 : vector<1xf32> to vector<1x1xf32>
    %764 = vector.broadcast %763 : vector<1x1xf32> to vector<1x7xf32>
    %765 = arith.divf %761, %764 : vector<1x7xf32>
    %c1_364 = arith.constant 1 : index
    %c0_365 = arith.constant 0 : index
    %c0_366 = arith.constant 0 : index
    %766 = vector.load %arg30[%c1_364, %c0_365, %c0_366] : memref<2x1x7xf32, #tpu.memory_space<vmem>>, vector<1x1x7xf32>
    %767 = vector.shape_cast %766 : vector<1x1x7xf32> to vector<1x7xf32>
    %768 = vector.shape_cast %765 : vector<1x7xf32> to vector<1x1x7xf32>
    tpu.vector_store %arg30[%c1_364, %c0_365, %c0_366], %768 {strides = array<i32>} : memref<2x1x7xf32, #tpu.memory_space<vmem>>, vector<1x1x7xf32>,
    %cst_367 = arith.constant dense<0.000000e+00> : vector<1x64xf32>
    %769 = tpu.matmul %765, %753, %cst_367 {dimension_numbers = #tpu.dot_dimension_numbers<[1], [0], [0], [1], [0, 0, 1, 1], [], []>} : vector<1x7xf32>, vector<7x64xf32>, vector<1x64xf32> -> vector<1x64xf32>
    %770 = tpu.concatenate %752, %769 in 0 : vector<1x64xf32>, vector<1x64xf32> -> vector<2x64xf32>
    %c0_368 = arith.constant 0 : index
    %c0_369 = arith.constant 0 : index
    %771 = vector.load %arg23[%c0_368, %c0_369] : memref<64x256xf32, #tpu.memory_space<vmem>>, vector<64x256xf32>
    %cst_370 = arith.constant dense<0.000000e+00> : vector<2x256xf32>
    %772 = tpu.matmul %770, %771, %cst_370 {dimension_numbers = #tpu.dot_dimension_numbers<[1], [0], [0], [1], [0, 0, 1, 1], [], []>} : vector<2x64xf32>, vector<64x256xf32>, vector<2x256xf32> -> vector<2x256xf32>
    %c0_371 = arith.constant 0 : index
    %c0_372 = arith.constant 0 : index
    %773 = vector.load %arg24[%c0_371, %c0_372] : memref<1x256xf32, #tpu.memory_space<vmem>>, vector<1x256xf32>
    %774 = vector.broadcast %773 : vector<1x256xf32> to vector<2x256xf32>
    %775 = arith.addf %772, %774 : vector<2x256xf32>
    %cst_373 = arith.constant 5.000000e-01 : f32
    %776 = vector.broadcast %cst_373 : f32 to vector<2x256xf32>
    %777 = arith.mulf %776, %775 : vector<2x256xf32>
    %cst_374 = arith.constant 0.707106769 : f32
    %778 = vector.broadcast %cst_374 : f32 to vector<2x256xf32>
    %779 = arith.mulf %775, %778 : vector<2x256xf32>
    %780 = math.erf %779 : vector<2x256xf32>
    %cst_375 = arith.constant 1.000000e+00 : f32
    %781 = vector.broadcast %cst_375 : f32 to vector<2x256xf32>
    %782 = arith.addf %781, %780 : vector<2x256xf32>
    %783 = arith.mulf %777, %782 : vector<2x256xf32>
    %c0_376 = arith.constant 0 : index
    %c0_377 = arith.constant 0 : index
    %784 = vector.load %arg25[%c0_376, %c0_377] : memref<256x128xf32, #tpu.memory_space<vmem>>, vector<256x128xf32>
    %cst_378 = arith.constant dense<0.000000e+00> : vector<2x128xf32>
    %785 = tpu.matmul %783, %784, %cst_378 {dimension_numbers = #tpu.dot_dimension_numbers<[1], [0], [0], [1], [0, 0, 1, 1], [], []>} : vector<2x256xf32>, vector<256x128xf32>, vector<2x128xf32> -> vector<2x128xf32>
    %c0_379 = arith.constant 0 : index
    %c0_380 = arith.constant 0 : index
    %786 = vector.load %arg26[%c0_379, %c0_380] : memref<1x128xf32, #tpu.memory_space<vmem>>, vector<1x128xf32>
    %787 = vector.broadcast %786 : vector<1x128xf32> to vector<2x128xf32>
    %788 = arith.addf %785, %787 : vector<2x128xf32>
    %cst_381 = arith.constant 5.000000e-01 : f32
    %789 = vector.broadcast %cst_381 : f32 to vector<2x128xf32>
    %790 = arith.mulf %789, %788 : vector<2x128xf32>
    %cst_382 = arith.constant 0.707106769 : f32
    %791 = vector.broadcast %cst_382 : f32 to vector<2x128xf32>
    %792 = arith.mulf %788, %791 : vector<2x128xf32>
    %793 = math.erf %792 : vector<2x128xf32>
    %cst_383 = arith.constant 1.000000e+00 : f32
    %794 = vector.broadcast %cst_383 : f32 to vector<2x128xf32>
    %795 = arith.addf %794, %793 : vector<2x128xf32>
    %796 = arith.mulf %790, %795 : vector<2x128xf32>
    %c0_384 = arith.constant 0 : index
    %c0_385 = arith.constant 0 : index
    %797 = vector.load %arg27[%c0_384, %c0_385] : memref<128x1xf32, #tpu.memory_space<vmem>>, vector<128x1xf32>
    %cst_386 = arith.constant dense<0.000000e+00> : vector<2x1xf32>
    %798 = tpu.matmul %796, %797, %cst_386 {dimension_numbers = #tpu.dot_dimension_numbers<[1], [0], [0], [1], [0, 0, 1, 1], [], []>} : vector<2x128xf32>, vector<128x1xf32>, vector<2x1xf32> -> vector<2x1xf32>
    %c0_387 = arith.constant 0 : index
    %c0_388 = arith.constant 0 : index
    %799 = vector.load %arg28[%c0_387, %c0_388] : memref<1x1xf32, #tpu.memory_space<vmem>>, vector<1x1xf32>
    %800 = vector.broadcast %799 : vector<1x1xf32> to vector<2x1xf32>
    %801 = arith.addf %798, %800 : vector<2x1xf32>
    %c0_389 = arith.constant 0 : index
    %c0_390 = arith.constant 0 : index
    %802 = vector.load %arg29[%c0_389, %c0_390] : memref<2x1xf32, #tpu.memory_space<vmem>>, vector<2x1xf32>
    tpu.vector_store %arg29[%c0_389, %c0_390], %801 {strides = array<i32>} : memref<2x1xf32, #tpu.memory_space<vmem>>, vector<2x1xf32>,
    return
  }
  func.func @transform_0(%arg0: i32) -> (i32, i32) {
    %c0_i32 = arith.constant 0 : i32
    %c0_i32_0 = arith.constant 0 : i32
    %c0_i32_1 = arith.constant 0 : i32
    return %c0_i32, %c0_i32_0 : i32, i32
  }
  func.func @transform_1(%arg0: i32) -> (i32, i32) {
    %c0_i32 = arith.constant 0 : i32
    %c0_i32_0 = arith.constant 0 : i32
    %c0_i32_1 = arith.constant 0 : i32
    return %c0_i32, %c0_i32_0 : i32, i32
  }
  func.func @transform_2(%arg0: i32) -> (i32, i32) {
    %c0_i32 = arith.constant 0 : i32
    %c0_i32_0 = arith.constant 0 : i32
    %c0_i32_1 = arith.constant 0 : i32
    return %c0_i32, %c0_i32_0 : i32, i32
  }
  func.func @transform_3(%arg0: i32) -> (i32, i32) {
    %c0_i32 = arith.constant 0 : i32
    %c0_i32_0 = arith.constant 0 : i32
    %c0_i32_1 = arith.constant 0 : i32
    return %c0_i32, %c0_i32_0 : i32, i32
  }
  func.func @transform_4(%arg0: i32) -> (i32, i32) {
    %c0_i32 = arith.constant 0 : i32
    %c0_i32_0 = arith.constant 0 : i32
    %c0_i32_1 = arith.constant 0 : i32
    return %c0_i32, %c0_i32_0 : i32, i32
  }
  func.func @transform_5(%arg0: i32) -> (i32, i32) {
    %c0_i32 = arith.constant 0 : i32
    %c0_i32_0 = arith.constant 0 : i32
    %c0_i32_1 = arith.constant 0 : i32
    return %c0_i32, %c0_i32_0 : i32, i32
  }
  func.func @transform_6(%arg0: i32) -> (i32, i32) {
    %c0_i32 = arith.constant 0 : i32
    %c0_i32_0 = arith.constant 0 : i32
    %c0_i32_1 = arith.constant 0 : i32
    return %c0_i32, %c0_i32_0 : i32, i32
  }
  func.func @transform_7(%arg0: i32) -> (i32, i32) {
    %c0_i32 = arith.constant 0 : i32
    %c0_i32_0 = arith.constant 0 : i32
    %c0_i32_1 = arith.constant 0 : i32
    return %c0_i32, %c0_i32_0 : i32, i32
  }
  func.func @transform_8(%arg0: i32) -> (i32, i32, i32, i32) {
    %c0_i32 = arith.constant 0 : i32
    %c0_i32_0 = arith.constant 0 : i32
    %c0_i32_1 = arith.constant 0 : i32
    %c0_i32_2 = arith.constant 0 : i32
    %c0_i32_3 = arith.constant 0 : i32
    return %c0_i32, %c0_i32_0, %c0_i32_1, %c0_i32_2 : i32, i32, i32, i32
  }
  func.func @transform_9(%arg0: i32) -> (i32, i32, i32, i32) {
    %c0_i32 = arith.constant 0 : i32
    %c0_i32_0 = arith.constant 0 : i32
    %c0_i32_1 = arith.constant 0 : i32
    %c0_i32_2 = arith.constant 0 : i32
    %c0_i32_3 = arith.constant 0 : i32
    return %c0_i32, %c0_i32_0, %c0_i32_1, %c0_i32_2 : i32, i32, i32, i32
  }
  func.func @transform_10(%arg0: i32) -> (i32, i32, i32) {
    %c0_i32 = arith.constant 0 : i32
    %c0_i32_0 = arith.constant 0 : i32
    %c0_i32_1 = arith.constant 0 : i32
    %c0_i32_2 = arith.constant 0 : i32
    return %c0_i32, %c0_i32_0, %c0_i32_1 : i32, i32, i32
  }
  func.func @transform_11(%arg0: i32) -> (i32, i32, i32) {
    %c0_i32 = arith.constant 0 : i32
    %c0_i32_0 = arith.constant 0 : i32
    %c0_i32_1 = arith.constant 0 : i32
    %c0_i32_2 = arith.constant 0 : i32
    return %c0_i32, %c0_i32_0, %c0_i32_1 : i32, i32, i32
  }
  func.func @transform_12(%arg0: i32) -> (i32, i32, i32) {
    %c0_i32 = arith.constant 0 : i32
    %c0_i32_0 = arith.constant 0 : i32
    %c0_i32_1 = arith.constant 0 : i32
    %c0_i32_2 = arith.constant 0 : i32
    return %c0_i32, %c0_i32_0, %c0_i32_1 : i32, i32, i32
  }
  func.func @transform_13(%arg0: i32) -> (i32, i32, i32) {
    %c0_i32 = arith.constant 0 : i32
    %c0_i32_0 = arith.constant 0 : i32
    %c0_i32_1 = arith.constant 0 : i32
    %c0_i32_2 = arith.constant 0 : i32
    return %c0_i32, %c0_i32_0, %c0_i32_1 : i32, i32, i32
  }
  func.func @transform_14(%arg0: i32) -> (i32, i32, i32) {
    %c0_i32 = arith.constant 0 : i32
    %c0_i32_0 = arith.constant 0 : i32
    %c0_i32_1 = arith.constant 0 : i32
    %c0_i32_2 = arith.constant 0 : i32
    return %c0_i32, %c0_i32_0, %c0_i32_1 : i32, i32, i32
  }
  func.func @transform_15(%arg0: i32) -> (i32, i32, i32) {
    %c0_i32 = arith.constant 0 : i32
    %c0_i32_0 = arith.constant 0 : i32
    %c0_i32_1 = arith.constant 0 : i32
    %c0_i32_2 = arith.constant 0 : i32
    return %c0_i32, %c0_i32_0, %c0_i32_1 : i32, i32, i32
  }
  func.func @transform_16(%arg0: i32) -> (i32, i32, i32) {
    %c0_i32 = arith.constant 0 : i32
    %c0_i32_0 = arith.constant 0 : i32
    %c0_i32_1 = arith.constant 0 : i32
    %c0_i32_2 = arith.constant 0 : i32
    return %c0_i32, %c0_i32_0, %c0_i32_1 : i32, i32, i32
  }
  func.func @transform_17(%arg0: i32) -> (i32, i32, i32) {
    %c0_i32 = arith.constant 0 : i32
    %c0_i32_0 = arith.constant 0 : i32
    %c0_i32_1 = arith.constant 0 : i32
    %c0_i32_2 = arith.constant 0 : i32
    return %c0_i32, %c0_i32_0, %c0_i32_1 : i32, i32, i32
  }
  func.func @transform_18(%arg0: i32) -> (i32, i32, i32) {
    %c0_i32 = arith.constant 0 : i32
    %c0_i32_0 = arith.constant 0 : i32
    %c0_i32_1 = arith.constant 0 : i32
    %c0_i32_2 = arith.constant 0 : i32
    return %c0_i32, %c0_i32_0, %c0_i32_1 : i32, i32, i32
  }
  func.func @transform_19(%arg0: i32) -> (i32, i32, i32) {
    %c0_i32 = arith.constant 0 : i32
    %c0_i32_0 = arith.constant 0 : i32
    %c0_i32_1 = arith.constant 0 : i32
    %c0_i32_2 = arith.constant 0 : i32
    return %c0_i32, %c0_i32_0, %c0_i32_1 : i32, i32, i32
  }
  func.func @transform_20(%arg0: i32) -> (i32, i32) {
    %c0_i32 = arith.constant 0 : i32
    %c0_i32_0 = arith.constant 0 : i32
    %c0_i32_1 = arith.constant 0 : i32
    return %c0_i32, %c0_i32_0 : i32, i32
  }
  func.func @transform_21(%arg0: i32) -> (i32, i32) {
    %c0_i32 = arith.constant 0 : i32
    %c0_i32_0 = arith.constant 0 : i32
    %c0_i32_1 = arith.constant 0 : i32
    return %c0_i32, %c0_i32_0 : i32, i32
  }
  func.func @transform_22(%arg0: i32) -> (i32, i32) {
    %c0_i32 = arith.constant 0 : i32
    %c0_i32_0 = arith.constant 0 : i32
    %c0_i32_1 = arith.constant 0 : i32
    return %c0_i32, %c0_i32_0 : i32, i32
  }
  func.func @transform_23(%arg0: i32) -> (i32, i32) {
    %c0_i32 = arith.constant 0 : i32
    %c0_i32_0 = arith.constant 0 : i32
    %c0_i32_1 = arith.constant 0 : i32
    return %c0_i32, %c0_i32_0 : i32, i32
  }
  func.func @transform_24(%arg0: i32) -> (i32, i32) {
    %c0_i32 = arith.constant 0 : i32
    %c0_i32_0 = arith.constant 0 : i32
    %c0_i32_1 = arith.constant 0 : i32
    return %c0_i32, %c0_i32_0 : i32, i32
  }
  func.func @transform_25(%arg0: i32) -> (i32, i32) {
    %c0_i32 = arith.constant 0 : i32
    %c0_i32_0 = arith.constant 0 : i32
    %c0_i32_1 = arith.constant 0 : i32
    return %c0_i32, %c0_i32_0 : i32, i32
  }
  func.func @transform_26(%arg0: i32) -> (i32, i32) {
    %c0_i32 = arith.constant 0 : i32
    %c0_i32_0 = arith.constant 0 : i32
    %c0_i32_1 = arith.constant 0 : i32
    return %c0_i32, %c0_i32_0 : i32, i32
  }
  func.func @transform_27(%arg0: i32) -> (i32, i32) {
    %c0_i32 = arith.constant 0 : i32
    %c0_i32_0 = arith.constant 0 : i32
    %c0_i32_1 = arith.constant 0 : i32
    return %c0_i32, %c0_i32_0 : i32, i32
  }
  func.func @transform_28(%arg0: i32) -> (i32, i32) {
    %c0_i32 = arith.constant 0 : i32
    %c0_i32_0 = arith.constant 0 : i32
    %c0_i32_1 = arith.constant 0 : i32
    return %c0_i32, %c0_i32_0 : i32, i32
  }
  func.func @transform_29(%arg0: i32) -> (i32, i32, i32) {
    %c0_i32 = arith.constant 0 : i32
    %c0_i32_0 = arith.constant 0 : i32
    %c0_i32_1 = arith.constant 0 : i32
    %c0_i32_2 = arith.constant 0 : i32
    return %c0_i32, %c0_i32_0, %c0_i32_1 : i32, i32, i32
  }
}

</mosaic_0001>

<llo_original>
// kernel: improved_transformer_forward.1
$region0: #{improved_transformer_forward.1}
  #allocation0 [shape = 'u32[]', space=smem, size = 0x4, offset = 0x4, fixed_abs, tag = 'smem constant byte address 0x4 - core index']
  #allocation1 [shape = 'u32[144,128]{1,0:T(1,128)}', space=vmem, size = 0x12000, scoped, tag = 'internal scratch']
  #allocation2 [shape = 'f32[1,1]{1,0:T(1,128)S(1)}', space=vmem, size = 0x200, scoped, tag = 'scoped memory for improved_transformer_forward.1']
  #allocation3 [shape = 'f32[1,1]{1,0:T(1,128)S(1)}', space=vmem, size = 0x200, scoped, tag = 'scoped memory for improved_transformer_forward.1']
  %s0 = inlined_call_operand.smem [shape: u32[30], index: -1, kind: input, shape index: {}]
  %s1 = sld [smem:[%s0]]
  %s2 = scalar_lea.smem %s0, 1
  %s3 = sld [smem:[%s2]]
  %s4 = scalar_lea.smem %s0, 2
  %s5 = sld [smem:[%s4]]
  %s6 = scalar_lea.smem %s0, 3
  %s7 = sld [smem:[%s6]]
  %s8 = scalar_lea.smem %s0, 4
  %s9 = sld [smem:[%s8]]
  %s10 = scalar_lea.smem %s0, 5
  %s11 = sld [smem:[%s10]]
  %s12 = scalar_lea.smem %s0, 6
  %s13 = sld [smem:[%s12]]
  %s14 = scalar_lea.smem %s0, 7
  %s15 = sld [smem:[%s14]]
  %s16 = scalar_lea.smem %s0, 8
  %s17 = sld [smem:[%s16]]
  %s18 = scalar_lea.smem %s0, 9
  %s19 = sld [smem:[%s18]]
  %s20 = scalar_lea.smem %s0, 10
  %s21 = sld [smem:[%s20]]
  %s22 = scalar_lea.smem %s0, 11
  %s23 = sld [smem:[%s22]]
  %s24 = scalar_lea.smem %s0, 12
  %s25 = sld [smem:[%s24]]
  %s26 = scalar_lea.smem %s0, 13
  %s27 = sld [smem:[%s26]]
  %s28 = scalar_lea.smem %s0, 14
  %s29 = sld [smem:[%s28]]
  %s30 = scalar_lea.smem %s0, 15
  %s31 = sld [smem:[%s30]]
  %s32 = scalar_lea.smem %s0, 16
  %s33 = sld [smem:[%s32]]
  %s34 = scalar_lea.smem %s0, 17
  %s35 = sld [smem:[%s34]]
  %s36 = scalar_lea.smem %s0, 18
  %s37 = sld [smem:[%s36]]
  %s38 = scalar_lea.smem %s0, 19
  %s39 = sld [smem:[%s38]]
  %s40 = scalar_lea.smem %s0, 20
  %s41 = sld [smem:[%s40]]
  %s42 = scalar_lea.smem %s0, 21
  %s43 = sld [smem:[%s42]]
  %s44 = scalar_lea.smem %s0, 22
  %s45 = sld [smem:[%s44]]
  %s46 = scalar_lea.smem %s0, 23
  %s47 = sld [smem:[%s46]]
  %s48 = scalar_lea.smem %s0, 24
  %s49 = sld [smem:[%s48]]
  %s50 = scalar_lea.smem %s0, 25
  %s51 = sld [smem:[%s50]]
  %s52 = scalar_lea.smem %s0, 26
  %s53 = sld [smem:[%s52]]
  %s54 = scalar_lea.smem %s0, 27
  %s55 = sld [smem:[%s54]]
  %s56 = scalar_lea.smem %s0, 28
  %s57 = sld [smem:[%s56]]
  %s58 = scalar_lea.smem %s0, 29
  %s59 = sld [smem:[%s58]]
  %60 = xla_tuple %s57, %s59
  %s61 = sld [smem:[#allocation0]]
  $region198: #{improved_transformer_forward.1} parent=0
    _
  %s63 = ssub.s32 1, %s61
  %s64 = scalar_select 0, %s63, %s61
  %v65 = vstv %s43
  %66 = vst [vmem:[#allocation2] sm:$0x1] %v65
  %v67 = vstv %s55
  %68 = vst [vmem:[#allocation3] sm:$0x1] %v67
  $region1: #{improved_transformer_forward.1} parent=0
    #allocation4 [shape = 'u8[4096]{0}', space=vmem, size = 0x1000, scoped, tag = 'input window, operand 1, single buffered']
    #allocation5 [shape = 's32[1]{0}', space=sflag, size = 0x4, scoped, tag = 'scoped memory for improved_transformer_forward.1']
    #allocation6 [shape = 's32[1]{0}', space=sflag, size = 0x4, scoped, tag = 'scoped memory for improved_transformer_forward.1']
    #allocation7 [shape = 'u8[32768]{0}', space=vmem, size = 0x8000, scoped, tag = 'input window, operand 3, single buffered']
    #allocation8 [shape = 's32[1]{0}', space=sflag, size = 0x4, scoped, tag = 'scoped memory for improved_transformer_forward.1']
    #allocation9 [shape = 'u8[512]{0}', space=vmem, size = 0x400, scoped, tag = 'input window, operand 4, single buffered']
    #allocation10 [shape = 'u8[32768]{0}', space=vmem, size = 0x8000, scoped, tag = 'input window, operand 5, single buffered']
    #allocation11 [shape = 's32[1]{0}', space=sflag, size = 0x4, scoped, tag = 'scoped memory for improved_transformer_forward.1']
    #allocation12 [shape = 'u8[512]{0}', space=vmem, size = 0x400, scoped, tag = 'input window, operand 6, single buffered']
    #allocation13 [shape = 'u8[4096]{0}', space=vmem, size = 0x1000, scoped, tag = 'input window, operand 7, single buffered']
    #allocation14 [shape = 's32[1]{0}', space=sflag, size = 0x4, scoped, tag = 'scoped memory for improved_transformer_forward.1']
    #allocation15 [shape = 'u8[1536]{0}', space=vmem, size = 0x800, scoped, tag = 'input window, operand 11, single buffered']
    #allocation16 [shape = 'u8[1536]{0}', space=vmem, size = 0x800, scoped, tag = 'input window, operand 12, single buffered']
    #allocation17 [shape = 's32[1]{0}', space=sflag, size = 0x4, scoped, tag = 'scoped memory for improved_transformer_forward.1']
    #allocation18 [shape = 'u8[1536]{0}', space=vmem, size = 0x800, scoped, tag = 'input window, operand 13, single buffered']
    #allocation19 [shape = 'u8[3072]{0}', space=vmem, size = 0xc00, scoped, tag = 'input window, operand 15, single buffered']
    #allocation20 [shape = 's32[1]{0}', space=sflag, size = 0x4, scoped, tag = 'scoped memory for improved_transformer_forward.1']
    #allocation21 [shape = 'u8[1536]{0}', space=vmem, size = 0x800, scoped, tag = 'input window, operand 17, single buffered']
    #allocation22 [shape = 'u8[1536]{0}', space=vmem, size = 0x800, scoped, tag = 'input window, operand 18, single buffered']
    #allocation23 [shape = 's32[1]{0}', space=sflag, size = 0x4, scoped, tag = 'scoped memory for improved_transformer_forward.1']
    #allocation24 [shape = 'u8[1536]{0}', space=vmem, size = 0x800, scoped, tag = 'input window, operand 19, single buffered']
    #allocation25 [shape = 'u8[512]{0}', space=vmem, size = 0x400, scoped, tag = 'input window, operand 20, single buffered']
    #allocation26 [shape = 's32[1]{0}', space=sflag, size = 0x4, scoped, tag = 'scoped memory for improved_transformer_forward.1']
    #allocation27 [shape = 'u8[65536]{0}', space=vmem, size = 0x10000, scoped, tag = 'input window, operand 22, single buffered']
    #allocation28 [shape = 'u8[1024]{0}', space=vmem, size = 0x400, scoped, tag = 'input window, operand 23, single buffered']
    #allocation29 [shape = 's32[1]{0}', space=sflag, size = 0x4, scoped, tag = 'scoped memory for improved_transformer_forward.1']
    #allocation30 [shape = 'u8[512]{0}', space=vmem, size = 0x400, scoped, tag = 'input window, operand 25, single buffered']
    #allocation31 [shape = 'u8[1024]{0}', space=vmem, size = 0x400, scoped, tag = 'output window, operand 1, single buffered']
    %69 = vsyncpa [#allocation5], 0
    %70 = vsyncpa [#allocation8], 0
    %71 = vsyncpa [#allocation11], 0
    %72 = vsyncpa [#allocation14], 0
    %73 = vsyncpa [#allocation17], 0
    %74 = vsyncpa [#allocation20], 0
    %75 = vsyncpa [#allocation23], 0
    %76 = vsyncpa [#allocation26], 0
    %77 = vsyncpa [#allocation29], 0
    %78 = vsyncpa [#allocation6], 0
    // Predicated region
    $region2: #{improved_transformer_forward.1} parent=1 // pred_check
      _
    $region3: #{improved_transformer_forward.1} parent=1 // pred_check_branch
      %80 = sbr.rel (0) target = $region5
    $region4: #{improved_transformer_forward.1} parent=1 // pred_region
      _
    $region5: #{improved_transformer_forward.1} parent=1 // pred_fallthru
      _
    // Predicated region
    $region6: #{improved_transformer_forward.1} parent=1 // pred_check
      _
    $region7: #{improved_transformer_forward.1} parent=1 // pred_check_branch
      %82 = sbr.rel (0) target = $region9
    $region8: #{improved_transformer_forward.1} parent=1 // pred_region
      %s84 = ssub.s32 128, 128
      %85 = vsyncadd [#allocation5], %s84
      %s87 = sshll.u32 [#allocation4], 4
      %s88 = int_to_ptr.vmem [resolvable:$true] %s87
      %90 = dma.hbm_to_vmem [thread:$0]  %s3, 128, %s88, [#allocation5]
    $region9: #{improved_transformer_forward.1} parent=1 // pred_fallthru
      _
    // Predicated region
    $region10: #{improved_transformer_forward.1} parent=1 // pred_check
      _
    $region11: #{improved_transformer_forward.1} parent=1 // pred_check_branch
      %92 = sbr.rel (0) target = $region13
    $region12: #{improved_transformer_forward.1} parent=1 // pred_region
      _
    $region13: #{improved_transformer_forward.1} parent=1 // pred_fallthru
      _
    // Predicated region
    $region14: #{improved_transformer_forward.1} parent=1 // pred_check
      _
    $region15: #{improved_transformer_forward.1} parent=1 // pred_check_branch
      %94 = sbr.rel (0) target = $region17
    $region16: #{improved_transformer_forward.1} parent=1 // pred_region
      %s96 = ssub.s32 1024, 1024
      %97 = vsyncadd [#allocation8], %s96
      %s98 = sshll.u32 [#allocation7], 4
      %s99 = int_to_ptr.vmem [resolvable:$true] %s98
      %104 = dma.hbm_to_vmem [thread:$0]  %s7, 1024, %s99, [#allocation8], 128, 128, 8
    $region17: #{improved_transformer_forward.1} parent=1 // pred_fallthru
      _
    // Predicated region
    $region18: #{improved_transformer_forward.1} parent=1 // pred_check
      _
    $region19: #{improved_transformer_forward.1} parent=1 // pred_check_branch
      %106 = sbr.rel (0) target = $region21
    $region20: #{improved_transformer_forward.1} parent=1 // pred_region
      %s108 = ssub.s32 16, 16
      %109 = vsyncadd [#allocation8], %s108
      %s111 = sshll.u32 [#allocation9], 4
      %s112 = int_to_ptr.vmem [resolvable:$true] %s111
      %114 = dma.hbm_to_vmem [thread:$0]  %s9, 16, %s112, [#allocation8]
    $region21: #{improved_transformer_forward.1} parent=1 // pred_fallthru
      _
    // Predicated region
    $region22: #{improved_transformer_forward.1} parent=1 // pred_check
      _
    $region23: #{improved_transformer_forward.1} parent=1 // pred_check_branch
      %116 = sbr.rel (0) target = $region25
    $region24: #{improved_transformer_forward.1} parent=1 // pred_region
      %s118 = ssub.s32 1024, 1024
      %119 = vsyncadd [#allocation11], %s118
      %s120 = sshll.u32 [#allocation10], 4
      %s121 = int_to_ptr.vmem [resolvable:$true] %s120
      %126 = dma.hbm_to_vmem [thread:$0]  %s11, 1024, %s121, [#allocation11], 128, 128, 8
    $region25: #{improved_transformer_forward.1} parent=1 // pred_fallthru
      _
    // Predicated region
    $region26: #{improved_transformer_forward.1} parent=1 // pred_check
      _
    $region27: #{improved_transformer_forward.1} parent=1 // pred_check_branch
      %128 = sbr.rel (0) target = $region29
    $region28: #{improved_transformer_forward.1} parent=1 // pred_region
      %s130 = ssub.s32 16, 16
      %131 = vsyncadd [#allocation11], %s130
      %s133 = sshll.u32 [#allocation12], 4
      %s134 = int_to_ptr.vmem [resolvable:$true] %s133
      %136 = dma.hbm_to_vmem [thread:$0]  %s13, 16, %s134, [#allocation11]
    $region29: #{improved_transformer_forward.1} parent=1 // pred_fallthru
      _
    // Predicated region
    $region30: #{improved_transformer_forward.1} parent=1 // pred_check
      _
    $region31: #{improved_transformer_forward.1} parent=1 // pred_check_branch
      %138 = sbr.rel (0) target = $region33
    $region32: #{improved_transformer_forward.1} parent=1 // pred_region
      %s140 = ssub.s32 128, 128
      %141 = vsyncadd [#allocation14], %s140
      %s143 = sshll.u32 [#allocation13], 4
      %s144 = int_to_ptr.vmem [resolvable:$true] %s143
      %146 = dma.hbm_to_vmem [thread:$0]  %s15, 128, %s144, [#allocation14]
    $region33: #{improved_transformer_forward.1} parent=1 // pred_fallthru
      _
    // Predicated region
    $region34: #{improved_transformer_forward.1} parent=1 // pred_check
      _
    $region35: #{improved_transformer_forward.1} parent=1 // pred_check_branch
      %148 = sbr.rel (0) target = $region37
    $region36: #{improved_transformer_forward.1} parent=1 // pred_region
      _
    $region37: #{improved_transformer_forward.1} parent=1 // pred_fallthru
      _
    // Predicated region
    $region38: #{improved_transformer_forward.1} parent=1 // pred_check
      _
    $region39: #{improved_transformer_forward.1} parent=1 // pred_check_branch
      %150 = sbr.rel (0) target = $region41
    $region40: #{improved_transformer_forward.1} parent=1 // pred_region
      _
    $region41: #{improved_transformer_forward.1} parent=1 // pred_fallthru
      _
    // Predicated region
    $region42: #{improved_transformer_forward.1} parent=1 // pred_check
      _
    $region43: #{improved_transformer_forward.1} parent=1 // pred_check_branch
      %152 = sbr.rel (0) target = $region45
    $region44: #{improved_transformer_forward.1} parent=1 // pred_region
      _
    $region45: #{improved_transformer_forward.1} parent=1 // pred_fallthru
      _
    // Predicated region
    $region46: #{improved_transformer_forward.1} parent=1 // pred_check
      _
    $region47: #{improved_transformer_forward.1} parent=1 // pred_check_branch
      %154 = sbr.rel (0) target = $region49
    $region48: #{improved_transformer_forward.1} parent=1 // pred_region
      %s156 = ssub.s32 48, 48
      %157 = vsyncadd [#allocation14], %s156
      %s158 = sshll.u32 [#allocation15], 4
      %s159 = int_to_ptr.vmem [resolvable:$true] %s158
      %164 = dma.hbm_to_vmem [thread:$0]  %s23, 48, %s159, [#allocation14], 16, 16, 1
    $region49: #{improved_transformer_forward.1} parent=1 // pred_fallthru
      _
    // Predicated region
    $region50: #{improved_transformer_forward.1} parent=1 // pred_check
      _
    $region51: #{improved_transformer_forward.1} parent=1 // pred_check_branch
      %166 = sbr.rel (0) target = $region53
    $region52: #{improved_transformer_forward.1} parent=1 // pred_region
      %s168 = ssub.s32 48, 48
      %169 = vsyncadd [#allocation17], %s168
      %s170 = sshll.u32 [#allocation16], 4
      %s171 = int_to_ptr.vmem [resolvable:$true] %s170
      %176 = dma.hbm_to_vmem [thread:$0]  %s25, 48, %s171, [#allocation17], 16, 16, 1
    $region53: #{improved_transformer_forward.1} parent=1 // pred_fallthru
      _
    // Predicated region
    $region54: #{improved_transformer_forward.1} parent=1 // pred_check
      _
    $region55: #{improved_transformer_forward.1} parent=1 // pred_check_branch
      %178 = sbr.rel (0) target = $region57
    $region56: #{improved_transformer_forward.1} parent=1 // pred_region
      %s180 = ssub.s32 48, 48
      %181 = vsyncadd [#allocation17], %s180
      %s182 = sshll.u32 [#allocation18], 4
      %s183 = int_to_ptr.vmem [resolvable:$true] %s182
      %188 = dma.hbm_to_vmem [thread:$0]  %s27, 48, %s183, [#allocation17], 16, 16, 1
    $region57: #{improved_transformer_forward.1} parent=1 // pred_fallthru
      _
    // Predicated region
    $region58: #{improved_transformer_forward.1} parent=1 // pred_check
      _
    $region59: #{improved_transformer_forward.1} parent=1 // pred_check_branch
      %190 = sbr.rel (0) target = $region61
    $region60: #{improved_transformer_forward.1} parent=1 // pred_region
      _
    $region61: #{improved_transformer_forward.1} parent=1 // pred_fallthru
      _
    // Predicated region
    $region62: #{improved_transformer_forward.1} parent=1 // pred_check
      _
    $region63: #{improved_transformer_forward.1} parent=1 // pred_check_branch
      %192 = sbr.rel (0) target = $region65
    $region64: #{improved_transformer_forward.1} parent=1 // pred_region
      %s194 = ssub.s32 96, 96
      %195 = vsyncadd [#allocation20], %s194
      %s196 = sshll.u32 [#allocation19], 4
      %s197 = int_to_ptr.vmem [resolvable:$true] %s196
      %202 = dma.hbm_to_vmem [thread:$0]  %s31, 96, %s197, [#allocation20], 32, 32, 2
    $region65: #{improved_transformer_forward.1} parent=1 // pred_fallthru
      _
    // Predicated region
    $region66: #{improved_transformer_forward.1} parent=1 // pred_check
      _
    $region67: #{improved_transformer_forward.1} parent=1 // pred_check_branch
      %204 = sbr.rel (0) target = $region69
    $region68: #{improved_transformer_forward.1} parent=1 // pred_region
      _
    $region69: #{improved_transformer_forward.1} parent=1 // pred_fallthru
      _
    // Predicated region
    $region70: #{improved_transformer_forward.1} parent=1 // pred_check
      _
    $region71: #{improved_transformer_forward.1} parent=1 // pred_check_branch
      %206 = sbr.rel (0) target = $region73
    $region72: #{improved_transformer_forward.1} parent=1 // pred_region
      %s208 = ssub.s32 48, 48
      %209 = vsyncadd [#allocation20], %s208
      %s210 = sshll.u32 [#allocation21], 4
      %s211 = int_to_ptr.vmem [resolvable:$true] %s210
      %216 = dma.hbm_to_vmem [thread:$0]  %s35, 48, %s211, [#allocation20], 16, 16, 1
    $region73: #{improved_transformer_forward.1} parent=1 // pred_fallthru
      _
    // Predicated region
    $region74: #{improved_transformer_forward.1} parent=1 // pred_check
      _
    $region75: #{improved_transformer_forward.1} parent=1 // pred_check_branch
      %218 = sbr.rel (0) target = $region77
    $region76: #{improved_transformer_forward.1} parent=1 // pred_region
      %s220 = ssub.s32 48, 48
      %221 = vsyncadd [#allocation23], %s220
      %s222 = sshll.u32 [#allocation22], 4
      %s223 = int_to_ptr.vmem [resolvable:$true] %s222
      %228 = dma.hbm_to_vmem [thread:$0]  %s37, 48, %s223, [#allocation23], 16, 16, 1
    $region77: #{improved_transformer_forward.1} parent=1 // pred_fallthru
      _
    // Predicated region
    $region78: #{improved_transformer_forward.1} parent=1 // pred_check
      _
    $region79: #{improved_transformer_forward.1} parent=1 // pred_check_branch
      %230 = sbr.rel (0) target = $region81
    $region80: #{improved_transformer_forward.1} parent=1 // pred_region
      %s232 = ssub.s32 48, 48
      %233 = vsyncadd [#allocation23], %s232
      %s234 = sshll.u32 [#allocation24], 4
      %s235 = int_to_ptr.vmem [resolvable:$true] %s234
      %240 = dma.hbm_to_vmem [thread:$0]  %s39, 48, %s235, [#allocation23], 16, 16, 1
    $region81: #{improved_transformer_forward.1} parent=1 // pred_fallthru
      _
    // Predicated region
    $region82: #{improved_transformer_forward.1} parent=1 // pred_check
      _
    $region83: #{improved_transformer_forward.1} parent=1 // pred_check_branch
      %242 = sbr.rel (0) target = $region85
    $region84: #{improved_transformer_forward.1} parent=1 // pred_region
      %s244 = ssub.s32 16, 16
      %245 = vsyncadd [#allocation26], %s244
      %s247 = sshll.u32 [#allocation25], 4
      %s248 = int_to_ptr.vmem [resolvable:$true] %s247
      %250 = dma.hbm_to_vmem [thread:$0]  %s41, 16, %s248, [#allocation26]
    $region85: #{improved_transformer_forward.1} parent=1 // pred_fallthru
      _
    // Predicated region
    $region86: #{improved_transformer_forward.1} parent=1 // pred_check
      _
    $region87: #{improved_transformer_forward.1} parent=1 // pred_check_branch
      %252 = sbr.rel (0) target = $region89
    $region88: #{improved_transformer_forward.1} parent=1 // pred_region
      _
    $region89: #{improved_transformer_forward.1} parent=1 // pred_fallthru
      _
    // Predicated region
    $region90: #{improved_transformer_forward.1} parent=1 // pred_check
      _
    $region91: #{improved_transformer_forward.1} parent=1 // pred_check_branch
      %254 = sbr.rel (0) target = $region93
    $region92: #{improved_transformer_forward.1} parent=1 // pred_region
      %s256 = ssub.s32 2048, 2048
      %257 = vsyncadd [#allocation26], %s256
      %s258 = sshll.u32 [#allocation27], 4
      %s259 = int_to_ptr.vmem [resolvable:$true] %s258
      %264 = dma.hbm_to_vmem [thread:$0]  %s45, 2048, %s259, [#allocation26], 256, 256, 16
    $region93: #{improved_transformer_forward.1} parent=1 // pred_fallthru
      _
    // Predicated region
    $region94: #{improved_transformer_forward.1} parent=1 // pred_check
      _
    $region95: #{improved_transformer_forward.1} parent=1 // pred_check_branch
      %266 = sbr.rel (0) target = $region97
    $region96: #{improved_transformer_forward.1} parent=1 // pred_region
      %s268 = ssub.s32 32, 32
      %269 = vsyncadd [#allocation29], %s268
      %s271 = sshll.u32 [#allocation28], 4
      %s272 = int_to_ptr.vmem [resolvable:$true] %s271
      %274 = dma.hbm_to_vmem [thread:$0]  %s47, 32, %s272, [#allocation29]
    $region97: #{improved_transformer_forward.1} parent=1 // pred_fallthru
      _
    // Predicated region
    $region98: #{improved_transformer_forward.1} parent=1 // pred_check
      _
    $region99: #{improved_transformer_forward.1} parent=1 // pred_check_branch
      %276 = sbr.rel (0) target = $region101
    $region100: #{improved_transformer_forward.1} parent=1 // pred_region
      _
    $region101: #{improved_transformer_forward.1} parent=1 // pred_fallthru
      _
    // Predicated region
    $region102: #{improved_transformer_forward.1} parent=1 // pred_check
      _
    $region103: #{improved_transformer_forward.1} parent=1 // pred_check_branch
      %278 = sbr.rel (0) target = $region105
    $region104: #{improved_transformer_forward.1} parent=1 // pred_region
      %s280 = ssub.s32 16, 16
      %281 = vsyncadd [#allocation29], %s280
      %s283 = sshll.u32 [#allocation30], 4
      %s284 = int_to_ptr.vmem [resolvable:$true] %s283
      %286 = dma.hbm_to_vmem [thread:$0]  %s51, 16, %s284, [#allocation29]
    $region105: #{improved_transformer_forward.1} parent=1 // pred_fallthru
      _
    // Predicated region
    $region106: #{improved_transformer_forward.1} parent=1 // pred_check
      _
    $region107: #{improved_transformer_forward.1} parent=1 // pred_check_branch
      %288 = sbr.rel (0) target = $region109
    $region108: #{improved_transformer_forward.1} parent=1 // pred_region
      _
    $region109: #{improved_transformer_forward.1} parent=1 // pred_fallthru
      _
    // Predicated region
    $region110: #{improved_transformer_forward.1} parent=1 // pred_check
      _
    $region111: #{improved_transformer_forward.1} parent=1 // pred_check_branch
      %290 = sbr.rel (0) target = $region113
    $region112: #{improved_transformer_forward.1} parent=1 // pred_region
      _
    $region113: #{improved_transformer_forward.1} parent=1 // pred_fallthru
      _
    // Predicated region
    $region114: #{improved_transformer_forward.1} parent=1 // pred_check
      _
    $region115: #{improved_transformer_forward.1} parent=1 // pred_check_branch
      %292 = sbr.rel (0) target = $region117
    $region116: #{improved_transformer_forward.1} parent=1 // pred_region
      %293 = dma.done [#allocation5], 128
    $region117: #{improved_transformer_forward.1} parent=1 // pred_fallthru
      _
    // Predicated region
    $region118: #{improved_transformer_forward.1} parent=1 // pred_check
      _
    $region119: #{improved_transformer_forward.1} parent=1 // pred_check_branch
      %295 = sbr.rel (0) target = $region121
    $region120: #{improved_transformer_forward.1} parent=1 // pred_region
      %296 = dma.done [#allocation8], 1024
    $region121: #{improved_transformer_forward.1} parent=1 // pred_fallthru
      _
    // Predicated region
    $region122: #{improved_transformer_forward.1} parent=1 // pred_check
      _
    $region123: #{improved_transformer_forward.1} parent=1 // pred_check_branch
      %298 = sbr.rel (0) target = $region125
    $region124: #{improved_transformer_forward.1} parent=1 // pred_region
      %299 = dma.done [#allocation8], 16
    $region125: #{improved_transformer_forward.1} parent=1 // pred_fallthru
      _
    // Predicated region
    $region126: #{improved_transformer_forward.1} parent=1 // pred_check
      _
    $region127: #{improved_transformer_forward.1} parent=1 // pred_check_branch
      %301 = sbr.rel (0) target = $region129
    $region128: #{improved_transformer_forward.1} parent=1 // pred_region
      %302 = dma.done [#allocation11], 1024
    $region129: #{improved_transformer_forward.1} parent=1 // pred_fallthru
      _
    // Predicated region
    $region130: #{improved_transformer_forward.1} parent=1 // pred_check
      _
    $region131: #{improved_transformer_forward.1} parent=1 // pred_check_branch
      %304 = sbr.rel (0) target = $region133
    $region132: #{improved_transformer_forward.1} parent=1 // pred_region
      %305 = dma.done [#allocation11], 16
    $region133: #{improved_transformer_forward.1} parent=1 // pred_fallthru
      _
    // Predicated region
    $region134: #{improved_transformer_forward.1} parent=1 // pred_check
      _
    $region135: #{improved_transformer_forward.1} parent=1 // pred_check_branch
      %307 = sbr.rel (0) target = $region137
    $region136: #{improved_transformer_forward.1} parent=1 // pred_region
      %308 = dma.done [#allocation14], 128
    $region137: #{improved_transformer_forward.1} parent=1 // pred_fallthru
      _
    // Predicated region
    $region138: #{improved_transformer_forward.1} parent=1 // pred_check
      _
    $region139: #{improved_transformer_forward.1} parent=1 // pred_check_branch
      %310 = sbr.rel (0) target = $region141
    $region140: #{improved_transformer_forward.1} parent=1 // pred_region
      %311 = dma.done [#allocation14], 48
    $region141: #{improved_transformer_forward.1} parent=1 // pred_fallthru
      _
    // Predicated region
    $region142: #{improved_transformer_forward.1} parent=1 // pred_check
      _
    $region143: #{improved_transformer_forward.1} parent=1 // pred_check_branch
      %313 = sbr.rel (0) target = $region145
    $region144: #{improved_transformer_forward.1} parent=1 // pred_region
      %314 = dma.done [#allocation17], 48
    $region145: #{improved_transformer_forward.1} parent=1 // pred_fallthru
      _
    // Predicated region
    $region146: #{improved_transformer_forward.1} parent=1 // pred_check
      _
    $region147: #{improved_transformer_forward.1} parent=1 // pred_check_branch
      %316 = sbr.rel (0) target = $region149
    $region148: #{improved_transformer_forward.1} parent=1 // pred_region
      %317 = dma.done [#allocation17], 48
    $region149: #{improved_transformer_forward.1} parent=1 // pred_fallthru
      _
    // Predicated region
    $region150: #{improved_transformer_forward.1} parent=1 // pred_check
      _
    $region151: #{improved_transformer_forward.1} parent=1 // pred_check_branch
      %319 = sbr.rel (0) target = $region153
    $region152: #{improved_transformer_forward.1} parent=1 // pred_region
      %320 = dma.done [#allocation20], 96
    $region153: #{improved_transformer_forward.1} parent=1 // pred_fallthru
      _
    // Predicated region
    $region154: #{improved_transformer_forward.1} parent=1 // pred_check
      _
    $region155: #{improved_transformer_forward.1} parent=1 // pred_check_branch
      %322 = sbr.rel (0) target = $region157
    $region156: #{improved_transformer_forward.1} parent=1 // pred_region
      %323 = dma.done [#allocation20], 48
    $region157: #{improved_transformer_forward.1} parent=1 // pred_fallthru
      _
    // Predicated region
    $region158: #{improved_transformer_forward.1} parent=1 // pred_check
      _
    $region159: #{improved_transformer_forward.1} parent=1 // pred_check_branch
      %325 = sbr.rel (0) target = $region161
    $region160: #{improved_transformer_forward.1} parent=1 // pred_region
      %326 = dma.done [#allocation23], 48
    $region161: #{improved_transformer_forward.1} parent=1 // pred_fallthru
      _
    // Predicated region
    $region162: #{improved_transformer_forward.1} parent=1 // pred_check
      _
    $region163: #{improved_transformer_forward.1} parent=1 // pred_check_branch
      %328 = sbr.rel (0) target = $region165
    $region164: #{improved_transformer_forward.1} parent=1 // pred_region
      %329 = dma.done [#allocation23], 48
    $region165: #{improved_transformer_forward.1} parent=1 // pred_fallthru
      _
    // Predicated region
    $region166: #{improved_transformer_forward.1} parent=1 // pred_check
      _
    $region167: #{improved_transformer_forward.1} parent=1 // pred_check_branch
      %331 = sbr.rel (0) target = $region169
    $region168: #{improved_transformer_forward.1} parent=1 // pred_region
      %332 = dma.done [#allocation26], 16
    $region169: #{improved_transformer_forward.1} parent=1 // pred_fallthru
      _
    // Predicated region
    $region170: #{improved_transformer_forward.1} parent=1 // pred_check
      _
    $region171: #{improved_transformer_forward.1} parent=1 // pred_check_branch
      %334 = sbr.rel (0) target = $region173
    $region172: #{improved_transformer_forward.1} parent=1 // pred_region
      %335 = dma.done [#allocation26], 2048
    $region173: #{improved_transformer_forward.1} parent=1 // pred_fallthru
      _
    // Predicated region
    $region174: #{improved_transformer_forward.1} parent=1 // pred_check
      _
    $region175: #{improved_transformer_forward.1} parent=1 // pred_check_branch
      %337 = sbr.rel (0) target = $region177
    $region176: #{improved_transformer_forward.1} parent=1 // pred_region
      %338 = dma.done [#allocation29], 32
    $region177: #{improved_transformer_forward.1} parent=1 // pred_fallthru
      _
    // Predicated region
    $region178: #{improved_transformer_forward.1} parent=1 // pred_check
      _
    $region179: #{improved_transformer_forward.1} parent=1 // pred_check_branch
      %340 = sbr.rel (0) target = $region181
    $region180: #{improved_transformer_forward.1} parent=1 // pred_region
      %341 = dma.done [#allocation29], 16
    $region181: #{improved_transformer_forward.1} parent=1 // pred_fallthru
      _
    %v342 = vld [vmem:[%s1] sm:$0xff]
    %v343 = vld [vmem:[%s1 + $0x8] sm:$0x3f]
    %v344 = vld [vmem:[#allocation4] sm:$0xff]
    %v345 = vld [vmem:[%s5] sm:$0x1]
    %v347 = vlaneseq
    %v348 = vshrl.u32 %v347, 7
    %v349 = vsub.s32 0, %v348
    %v350 = vrot.slane %v345, %v349
    %vm352 = vcmask 64512
    %v354 = vsel %vm352, %v342, 0
    %v357 = vsel %vm352, %v343, 0
    %359 = vmatprep.subr.mxu0 0.0
    %360 = vmatpush1.msra.mxu0 %v344
    %361 = vmatprep.subr.mxu0 0.0
    %362 = vmatpush1.msra.mxu0 0.0
    %363 = vmatprep.subr.mxu0 0.0
    %364 = vmatpush1.msra.mxu0 0.0
    %365 = vmatprep.subr.mxu0 0.0
    %366 = vmatpush1.msra.mxu0 0.0
    %367 = vmatprep.subr.mxu0 0.0
    %368 = vmatpush1.msra.mxu0 0.0
    %369 = vmatprep.subr.mxu0 0.0
    %370 = vmatpush1.msra.mxu0 0.0
    %371 = vmatprep.subr.mxu0 0.0
    %372 = vmatpush1.msra.mxu0 0.0
    %373 = vmatprep.subr.mxu0 0.0
    %374 = vmatpush1.msra.mxu0 0.0
    %375 = vmatprep.subr.mxu0 0.0
    %376 = vmatpush1.msra.mxu0 0.0
    %377 = vmatprep.subr.mxu0 0.0
    %378 = vmatpush1.msra.mxu0 0.0
    %379 = vmatprep.subr.mxu0 0.0
    %380 = vmatpush1.msra.mxu0 0.0
    %381 = vmatprep.subr.mxu0 0.0
    %382 = vmatpush1.msra.mxu0 0.0
    %383 = vmatprep.subr.mxu0 0.0
    %384 = vmatpush1.msra.mxu0 0.0
    %385 = vmatprep.subr.mxu0 0.0
    %386 = vmatpush1.msra.mxu0 0.0
    %387 = vmatprep.subr.mxu0 0.0
    %388 = vmatpush1.msra.mxu0 0.0
    %389 = vmatprep.subr.mxu0 0.0
    %390 = vmatpush1.msra.mxu0 0.0
    %391 = vmatprep.subr.mxu0 0.0
    %392 = vmatpush1.msra.mxu0 0.0
    %393 = vmatprep.subr.mxu0 0.0
    %394 = vmatpush1.msra.mxu0 0.0
    %395 = vmatprep.subr.mxu0 0.0
    %396 = vmatpush1.msra.mxu0 0.0
    %397 = vmatprep.subr.mxu0 0.0
    %398 = vmatpush1.msra.mxu0 0.0
    %399 = vmatprep.subr.mxu0 0.0
    %400 = vmatpush1.msra.mxu0 0.0
    %401 = vmatprep.subr.mxu0 0.0
    %402 = vmatpush1.msra.mxu0 0.0
    %403 = vmatprep.subr.mxu0 0.0
    %404 = vmatpush1.msra.mxu0 0.0
    %405 = vmatprep.subr.mxu0 0.0
    %406 = vmatpush1.msra.mxu0 0.0
    %407 = vmatprep.subr.mxu0 0.0
    %408 = vmatpush1.msra.mxu0 0.0
    %409 = vmatprep.subr.mxu0 0.0
    %410 = vmatpush1.msra.mxu0 0.0
    %411 = vmatprep.subr.mxu0 0.0
    %412 = vmatpush1.msra.mxu0 0.0
    %413 = vmatprep.subr.mxu0 0.0
    %414 = vmatpush1.msra.mxu0 0.0
    %415 = vmatprep.subr.mxu0 0.0
    %416 = vmatpush1.msra.mxu0 0.0
    %417 = vmatprep.subr.mxu0 0.0
    %418 = vmatpush1.msra.mxu0 0.0
    %419 = vmatprep.subr.mxu0 0.0
    %420 = vmatpush1.msra.mxu0 0.0
    %421 = vmatprep.subr.mxu0 0.0
    %422 = vmatpush1.msra.mxu0 0.0
    %423 = vmatprep.mubr.f32.mxu0 0.0
    %424 = vmatmul.mubr.f32.gmra.mrb[0].mxu0 %v354
    %v425 = vpop.f32.mrb[0].mxu0
    %v426 = vadd.f32 %v350, %v425
    %v427 = vpop.f32.mrb[0].mxu0
    %428 = vmatprep.mubr.f32.mxu0 0.0
    %429 = vmatmul.mubr.f32.gmra.mrb[0].mxu0 %v357
    %v430 = vpop.f32.mrb[0].mxu0
    %v431 = vadd.f32 %v350, %v430
    %v432 = vpop.f32.mrb[0].mxu0
    %433 = vdwg.mxu0
    %v434 = vmax.f32 %v426, 0.0
    %v435 = vmax.f32 %v431, 0.0
    %v436 = vld [vmem:[#allocation7] sm:$0xff]
    %v437 = vld [vmem:[#allocation7 + $0x8] sm:$0xff]
    %v438 = vld [vmem:[#allocation7 + $0x10] sm:$0xff]
    %v439 = vld [vmem:[#allocation7 + $0x18] sm:$0xff]
    %v440 = vld [vmem:[#allocation7 + $0x20] sm:$0xff]
    %v441 = vld [vmem:[#allocation7 + $0x28] sm:$0xff]
    %v442 = vld [vmem:[#allocation7 + $0x30] sm:$0xff]
    %v443 = vld [vmem:[#allocation7 + $0x38] sm:$0xff]
    %v444 = vld [vmem:[#allocation9] sm:$0x1]
    %v446 = vlaneseq
    %v447 = vshrl.u32 %v446, 7
    %v448 = vsub.s32 0, %v447
    %v449 = vrot.slane %v444, %v448
    %vm451 = vcmask 523264
    %v453 = vsel %vm451, %v434, 0
    %v456 = vsel %vm451, %v435, 0
    %458 = vmatprep.subr.mxu0 0.0
    %459 = vmatpush1.msra.mxu0 %v436
    %460 = vmatprep.subr.mxu0 0.0
    %461 = vmatpush1.msra.mxu0 %v437
    %462 = vmatprep.subr.mxu0 0.0
    %463 = vmatpush1.msra.mxu0 %v438
    %464 = vmatprep.subr.mxu0 0.0
    %465 = vmatpush1.msra.mxu0 %v439
    %466 = vmatprep.subr.mxu0 0.0
    %467 = vmatpush1.msra.mxu0 %v440
    %468 = vmatprep.subr.mxu0 0.0
    %469 = vmatpush1.msra.mxu0 %v441
    %470 = vmatprep.subr.mxu0 0.0
    %471 = vmatpush1.msra.mxu0 %v442
    %472 = vmatprep.subr.mxu0 0.0
    %473 = vmatpush1.msra.mxu0 %v443
    %474 = vmatprep.subr.mxu0 0.0
    %475 = vmatpush1.msra.mxu0 0.0
    %476 = vmatprep.subr.mxu0 0.0
    %477 = vmatpush1.msra.mxu0 0.0
    %478 = vmatprep.subr.mxu0 0.0
    %479 = vmatpush1.msra.mxu0 0.0
    %480 = vmatprep.subr.mxu0 0.0
    %481 = vmatpush1.msra.mxu0 0.0
    %482 = vmatprep.subr.mxu0 0.0
    %483 = vmatpush1.msra.mxu0 0.0
    %484 = vmatprep.subr.mxu0 0.0
    %485 = vmatpush1.msra.mxu0 0.0
    %486 = vmatprep.subr.mxu0 0.0
    %487 = vmatpush1.msra.mxu0 0.0
    %488 = vmatprep.subr.mxu0 0.0
    %489 = vmatpush1.msra.mxu0 0.0
    %490 = vmatprep.subr.mxu0 0.0
    %491 = vmatpush1.msra.mxu0 0.0
    %492 = vmatprep.subr.mxu0 0.0
    %493 = vmatpush1.msra.mxu0 0.0
    %494 = vmatprep.subr.mxu0 0.0
    %495 = vmatpush1.msra.mxu0 0.0
    %496 = vmatprep.subr.mxu0 0.0
    %497 = vmatpush1.msra.mxu0 0.0
    %498 = vmatprep.subr.mxu0 0.0
    %499 = vmatpush1.msra.mxu0 0.0
    %500 = vmatprep.subr.mxu0 0.0
    %501 = vmatpush1.msra.mxu0 0.0
    %502 = vmatprep.subr.mxu0 0.0
    %503 = vmatpush1.msra.mxu0 0.0
    %504 = vmatprep.subr.mxu0 0.0
    %505 = vmatpush1.msra.mxu0 0.0
    %506 = vmatprep.subr.mxu0 0.0
    %507 = vmatpush1.msra.mxu0 0.0
    %508 = vmatprep.subr.mxu0 0.0
    %509 = vmatpush1.msra.mxu0 0.0
    %510 = vmatprep.subr.mxu0 0.0
    %511 = vmatpush1.msra.mxu0 0.0
    %512 = vmatprep.subr.mxu0 0.0
    %513 = vmatpush1.msra.mxu0 0.0
    %514 = vmatprep.subr.mxu0 0.0
    %515 = vmatpush1.msra.mxu0 0.0
    %516 = vmatprep.subr.mxu0 0.0
    %517 = vmatpush1.msra.mxu0 0.0
    %518 = vmatprep.subr.mxu0 0.0
    %519 = vmatpush1.msra.mxu0 0.0
    %520 = vmatprep.subr.mxu0 0.0
    %521 = vmatpush1.msra.mxu0 0.0
    %522 = vmatprep.mubr.f32.mxu0 0.0
    %523 = vmatmul.mubr.f32.gmra.mrb[0].mxu0 %v453
    %v524 = vpop.f32.mrb[0].mxu0
    %v525 = vadd.f32 %v449, %v524
    %v526 = vpop.f32.mrb[0].mxu0
    %527 = vmatprep.mubr.f32.mxu0 0.0
    %528 = vmatmul.mubr.f32.gmra.mrb[0].mxu0 %v456
    %v529 = vpop.f32.mrb[0].mxu0
    %v530 = vadd.f32 %v449, %v529
    %v531 = vpop.f32.mrb[0].mxu0
    %532 = vdwg.mxu0
    %v533 = vmax.f32 %v525, 0.0
    %v534 = vmax.f32 %v530, 0.0
    %v535 = vld [vmem:[#allocation10] sm:$0xff]
    %v536 = vld [vmem:[#allocation10 + $0x8] sm:$0xff]
    %v537 = vld [vmem:[#allocation10 + $0x10] sm:$0xff]
    %v538 = vld [vmem:[#allocation10 + $0x18] sm:$0xff]
    %v539 = vld [vmem:[#allocation10 + $0x20] sm:$0xff]
    %v540 = vld [vmem:[#allocation10 + $0x28] sm:$0xff]
    %v541 = vld [vmem:[#allocation10 + $0x30] sm:$0xff]
    %v542 = vld [vmem:[#allocation10 + $0x38] sm:$0xff]
    %v543 = vld [vmem:[#allocation12] sm:$0x1]
    %v545 = vlaneseq
    %v546 = vshrl.u32 %v545, 7
    %v547 = vsub.s32 0, %v546
    %v548 = vrot.slane %v543, %v547
    %v551 = vsel %vm451, %v533, 0
    %v554 = vsel %vm451, %v534, 0
    %556 = vmatprep.subr.mxu0 0.0
    %557 = vmatpush1.msra.mxu0 %v535
    %558 = vmatprep.subr.mxu0 0.0
    %559 = vmatpush1.msra.mxu0 %v536
    %560 = vmatprep.subr.mxu0 0.0
    %561 = vmatpush1.msra.mxu0 %v537
    %562 = vmatprep.subr.mxu0 0.0
    %563 = vmatpush1.msra.mxu0 %v538
    %564 = vmatprep.subr.mxu0 0.0
    %565 = vmatpush1.msra.mxu0 %v539
    %566 = vmatprep.subr.mxu0 0.0
    %567 = vmatpush1.msra.mxu0 %v540
    %568 = vmatprep.subr.mxu0 0.0
    %569 = vmatpush1.msra.mxu0 %v541
    %570 = vmatprep.subr.mxu0 0.0
    %571 = vmatpush1.msra.mxu0 %v542
    %572 = vmatprep.subr.mxu0 0.0
    %573 = vmatpush1.msra.mxu0 0.0
    %574 = vmatprep.subr.mxu0 0.0
    %575 = vmatpush1.msra.mxu0 0.0
    %576 = vmatprep.subr.mxu0 0.0
    %577 = vmatpush1.msra.mxu0 0.0
    %578 = vmatprep.subr.mxu0 0.0
    %579 = vmatpush1.msra.mxu0 0.0
    %580 = vmatprep.subr.mxu0 0.0
    %581 = vmatpush1.msra.mxu0 0.0
    %582 = vmatprep.subr.mxu0 0.0
    %583 = vmatpush1.msra.mxu0 0.0
    %584 = vmatprep.subr.mxu0 0.0
    %585 = vmatpush1.msra.mxu0 0.0
    %586 = vmatprep.subr.mxu0 0.0
    %587 = vmatpush1.msra.mxu0 0.0
    %588 = vmatprep.subr.mxu0 0.0
    %589 = vmatpush1.msra.mxu0 0.0
    %590 = vmatprep.subr.mxu0 0.0
    %591 = vmatpush1.msra.mxu0 0.0
    %592 = vmatprep.subr.mxu0 0.0
    %593 = vmatpush1.msra.mxu0 0.0
    %594 = vmatprep.subr.mxu0 0.0
    %595 = vmatpush1.msra.mxu0 0.0
    %596 = vmatprep.subr.mxu0 0.0
    %597 = vmatpush1.msra.mxu0 0.0
    %598 = vmatprep.subr.mxu0 0.0
    %599 = vmatpush1.msra.mxu0 0.0
    %600 = vmatprep.subr.mxu0 0.0
    %601 = vmatpush1.msra.mxu0 0.0
    %602 = vmatprep.subr.mxu0 0.0
    %603 = vmatpush1.msra.mxu0 0.0
    %604 = vmatprep.subr.mxu0 0.0
    %605 = vmatpush1.msra.mxu0 0.0
    %606 = vmatprep.subr.mxu0 0.0
    %607 = vmatpush1.msra.mxu0 0.0
    %608 = vmatprep.subr.mxu0 0.0
    %609 = vmatpush1.msra.mxu0 0.0
    %610 = vmatprep.subr.mxu0 0.0
    %611 = vmatpush1.msra.mxu0 0.0
    %612 = vmatprep.subr.mxu0 0.0
    %613 = vmatpush1.msra.mxu0 0.0
    %614 = vmatprep.subr.mxu0 0.0
    %615 = vmatpush1.msra.mxu0 0.0
    %616 = vmatprep.subr.mxu0 0.0
    %617 = vmatpush1.msra.mxu0 0.0
    %618 = vmatprep.subr.mxu0 0.0
    %619 = vmatpush1.msra.mxu0 0.0
    %620 = vmatprep.mubr.f32.mxu0 0.0
    %621 = vmatmul.mubr.f32.gmra.mrb[0].mxu0 %v551
    %v622 = vpop.f32.mrb[0].mxu0
    %v623 = vadd.f32 %v548, %v622
    %v624 = vpop.f32.mrb[0].mxu0
    %625 = vmatprep.mubr.f32.mxu0 0.0
    %626 = vmatmul.mubr.f32.gmra.mrb[0].mxu0 %v554
    %v627 = vpop.f32.mrb[0].mxu0
    %v628 = vadd.f32 %v548, %v627
    %v629 = vpop.f32.mrb[0].mxu0
    %630 = vdwg.mxu0
    %v631 = vld [vmem:[#allocation13] sm:$0x7f]
    %v633 = vrot.slane %v631, 1
    %vm635 = vcmask 1046528
    %v636 = vsel %vm635, %v631, %v633
    %v637 = vadd.f32 %v623, %v636
    %v638 = vadd.f32 %v628, %v633
    %v639 = vld [vmem:[%s17] sm:$0xff]
    %v640 = vld [vmem:[%s17 + $0x8] sm:$0xff]
    %v641 = vld [vmem:[%s17 + $0x10] sm:$0xff]
    %v642 = vld [vmem:[%s17 + $0x18] sm:$0xff]
    %v643 = vld [vmem:[%s17 + $0x20] sm:$0xff]
    %v644 = vld [vmem:[%s17 + $0x28] sm:$0xff]
    %v645 = vld [vmem:[%s17 + $0x30] sm:$0xff]
    %v646 = vld [vmem:[%s17 + $0x38] sm:$0xff]
    %v647 = vld [vmem:[%s19] sm:$0x1]
    %v649 = vlaneseq
    %v650 = vshrl.u32 %v649, 7
    %v651 = vsub.s32 0, %v650
    %v652 = vrot.slane %v647, %v651
    %v655 = vsel %vm451, %v637, 0
    %v658 = vsel %vm451, %v638, 0
    %660 = vmatprep.subr.mxu0 0.0
    %661 = vmatpush1.msra.mxu0 %v639
    %662 = vmatprep.subr.mxu0 0.0
    %663 = vmatpush1.msra.mxu0 %v640
    %664 = vmatprep.subr.mxu0 0.0
    %665 = vmatpush1.msra.mxu0 %v641
    %666 = vmatprep.subr.mxu0 0.0
    %667 = vmatpush1.msra.mxu0 %v642
    %668 = vmatprep.subr.mxu0 0.0
    %669 = vmatpush1.msra.mxu0 %v643
    %670 = vmatprep.subr.mxu0 0.0
    %671 = vmatpush1.msra.mxu0 %v644
    %672 = vmatprep.subr.mxu0 0.0
    %673 = vmatpush1.msra.mxu0 %v645
    %674 = vmatprep.subr.mxu0 0.0
    %675 = vmatpush1.msra.mxu0 %v646
    %676 = vmatprep.subr.mxu0 0.0
    %677 = vmatpush1.msra.mxu0 0.0
    %678 = vmatprep.subr.mxu0 0.0
    %679 = vmatpush1.msra.mxu0 0.0
    %680 = vmatprep.subr.mxu0 0.0
    %681 = vmatpush1.msra.mxu0 0.0
    %682 = vmatprep.subr.mxu0 0.0
    %683 = vmatpush1.msra.mxu0 0.0
    %684 = vmatprep.subr.mxu0 0.0
    %685 = vmatpush1.msra.mxu0 0.0
    %686 = vmatprep.subr.mxu0 0.0
    %687 = vmatpush1.msra.mxu0 0.0
    %688 = vmatprep.subr.mxu0 0.0
    %689 = vmatpush1.msra.mxu0 0.0
    %690 = vmatprep.subr.mxu0 0.0
    %691 = vmatpush1.msra.mxu0 0.0
    %692 = vmatprep.subr.mxu0 0.0
    %693 = vmatpush1.msra.mxu0 0.0
    %694 = vmatprep.subr.mxu0 0.0
    %695 = vmatpush1.msra.mxu0 0.0
    %696 = vmatprep.subr.mxu0 0.0
    %697 = vmatpush1.msra.mxu0 0.0
    %698 = vmatprep.subr.mxu0 0.0
    %699 = vmatpush1.msra.mxu0 0.0
    %700 = vmatprep.subr.mxu0 0.0
    %701 = vmatpush1.msra.mxu0 0.0
    %702 = vmatprep.subr.mxu0 0.0
    %703 = vmatpush1.msra.mxu0 0.0
    %704 = vmatprep.subr.mxu0 0.0
    %705 = vmatpush1.msra.mxu0 0.0
    %706 = vmatprep.subr.mxu0 0.0
    %707 = vmatpush1.msra.mxu0 0.0
    %708 = vmatprep.subr.mxu0 0.0
    %709 = vmatpush1.msra.mxu0 0.0
    %710 = vmatprep.subr.mxu0 0.0
    %711 = vmatpush1.msra.mxu0 0.0
    %712 = vmatprep.subr.mxu0 0.0
    %713 = vmatpush1.msra.mxu0 0.0
    %714 = vmatprep.subr.mxu0 0.0
    %715 = vmatpush1.msra.mxu0 0.0
    %716 = vmatprep.subr.mxu0 0.0
    %717 = vmatpush1.msra.mxu0 0.0
    %718 = vmatprep.subr.mxu0 0.0
    %719 = vmatpush1.msra.mxu0 0.0
    %720 = vmatprep.subr.mxu0 0.0
    %721 = vmatpush1.msra.mxu0 0.0
    %722 = vmatprep.subr.mxu0 0.0
    %723 = vmatpush1.msra.mxu0 0.0
    %724 = vmatprep.mubr.f32.mxu0 0.0
    %725 = vmatmul.mubr.f32.gmra.mrb[0].mxu0 %v655
    %v726 = vpop.f32.mrb[0].mxu0
    %v727 = vadd.f32 %v652, %v726
    %v728 = vpop.f32.mrb[0].mxu0
    %729 = vmatprep.mubr.f32.mxu0 0.0
    %730 = vmatmul.mubr.f32.gmra.mrb[0].mxu0 %v658
    %v731 = vpop.f32.mrb[0].mxu0
    %v732 = vadd.f32 %v652, %v731
    %v733 = vpop.f32.mrb[0].mxu0
    %734 = vdwg.mxu0
    %s735 = scalar_lea.vmem %s17, 64
    %v736 = vld [vmem:[%s735] sm:$0xff]
    %v737 = vld [vmem:[%s735 + $0x8] sm:$0xff]
    %v738 = vld [vmem:[%s735 + $0x10] sm:$0xff]
    %v739 = vld [vmem:[%s735 + $0x18] sm:$0xff]
    %v740 = vld [vmem:[%s735 + $0x20] sm:$0xff]
    %v741 = vld [vmem:[%s735 + $0x28] sm:$0xff]
    %v742 = vld [vmem:[%s735 + $0x30] sm:$0xff]
    %v743 = vld [vmem:[%s735 + $0x38] sm:$0xff]
    %s744 = scalar_lea.vmem %s19, 1
    %v745 = vld [vmem:[%s744] sm:$0x1]
    %v747 = vlaneseq
    %v748 = vshrl.u32 %v747, 7
    %v749 = vsub.s32 0, %v748
    %v750 = vrot.slane %v745, %v749
    %752 = vmatprep.subr.mxu0 0.0
    %753 = vmatpush1.msra.mxu0 %v736
    %754 = vmatprep.subr.mxu0 0.0
    %755 = vmatpush1.msra.mxu0 %v737
    %756 = vmatprep.subr.mxu0 0.0
    %757 = vmatpush1.msra.mxu0 %v738
    %758 = vmatprep.subr.mxu0 0.0
    %759 = vmatpush1.msra.mxu0 %v739
    %760 = vmatprep.subr.mxu0 0.0
    %761 = vmatpush1.msra.mxu0 %v740
    %762 = vmatprep.subr.mxu0 0.0
    %763 = vmatpush1.msra.mxu0 %v741
    %764 = vmatprep.subr.mxu0 0.0
    %765 = vmatpush1.msra.mxu0 %v742
    %766 = vmatprep.subr.mxu0 0.0
    %767 = vmatpush1.msra.mxu0 %v743
    %768 = vmatprep.subr.mxu0 0.0
    %769 = vmatpush1.msra.mxu0 0.0
    %770 = vmatprep.subr.mxu0 0.0
    %771 = vmatpush1.msra.mxu0 0.0
    %772 = vmatprep.subr.mxu0 0.0
    %773 = vmatpush1.msra.mxu0 0.0
    %774 = vmatprep.subr.mxu0 0.0
    %775 = vmatpush1.msra.mxu0 0.0
    %776 = vmatprep.subr.mxu0 0.0
    %777 = vmatpush1.msra.mxu0 0.0
    %778 = vmatprep.subr.mxu0 0.0
    %779 = vmatpush1.msra.mxu0 0.0
    %780 = vmatprep.subr.mxu0 0.0
    %781 = vmatpush1.msra.mxu0 0.0
    %782 = vmatprep.subr.mxu0 0.0
    %783 = vmatpush1.msra.mxu0 0.0
    %784 = vmatprep.subr.mxu0 0.0
    %785 = vmatpush1.msra.mxu0 0.0
    %786 = vmatprep.subr.mxu0 0.0
    %787 = vmatpush1.msra.mxu0 0.0
    %788 = vmatprep.subr.mxu0 0.0
    %789 = vmatpush1.msra.mxu0 0.0
    %790 = vmatprep.subr.mxu0 0.0
    %791 = vmatpush1.msra.mxu0 0.0
    %792 = vmatprep.subr.mxu0 0.0
    %793 = vmatpush1.msra.mxu0 0.0
    %794 = vmatprep.subr.mxu0 0.0
    %795 = vmatpush1.msra.mxu0 0.0
    %796 = vmatprep.subr.mxu0 0.0
    %797 = vmatpush1.msra.mxu0 0.0
    %798 = vmatprep.subr.mxu0 0.0
    %799 = vmatpush1.msra.mxu0 0.0
    %800 = vmatprep.subr.mxu0 0.0
    %801 = vmatpush1.msra.mxu0 0.0
    %802 = vmatprep.subr.mxu0 0.0
    %803 = vmatpush1.msra.mxu0 0.0
    %804 = vmatprep.subr.mxu0 0.0
    %805 = vmatpush1.msra.mxu0 0.0
    %806 = vmatprep.subr.mxu0 0.0
    %807 = vmatpush1.msra.mxu0 0.0
    %808 = vmatprep.subr.mxu0 0.0
    %809 = vmatpush1.msra.mxu0 0.0
    %810 = vmatprep.subr.mxu0 0.0
    %811 = vmatpush1.msra.mxu0 0.0
    %812 = vmatprep.subr.mxu0 0.0
    %813 = vmatpush1.msra.mxu0 0.0
    %814 = vmatprep.subr.mxu0 0.0
    %815 = vmatpush1.msra.mxu0 0.0
    %816 = vmatprep.mubr.f32.mxu0 0.0
    %817 = vmatmul.mubr.f32.gmra.mrb[0].mxu0 %v655
    %v818 = vpop.f32.mrb[0].mxu0
    %v819 = vadd.f32 %v750, %v818
    %v820 = vpop.f32.mrb[0].mxu0
    %821 = vmatprep.mubr.f32.mxu0 0.0
    %822 = vmatmul.mubr.f32.gmra.mrb[0].mxu0 %v658
    %v823 = vpop.f32.mrb[0].mxu0
    %v824 = vadd.f32 %v750, %v823
    %v825 = vpop.f32.mrb[0].mxu0
    %826 = vdwg.mxu0
    %s827 = scalar_lea.vmem %s17, 128
    %v828 = vld [vmem:[%s827] sm:$0xff]
    %v829 = vld [vmem:[%s827 + $0x8] sm:$0xff]
    %v830 = vld [vmem:[%s827 + $0x10] sm:$0xff]
    %v831 = vld [vmem:[%s827 + $0x18] sm:$0xff]
    %v832 = vld [vmem:[%s827 + $0x20] sm:$0xff]
    %v833 = vld [vmem:[%s827 + $0x28] sm:$0xff]
    %v834 = vld [vmem:[%s827 + $0x30] sm:$0xff]
    %v835 = vld [vmem:[%s827 + $0x38] sm:$0xff]
    %s836 = scalar_lea.vmem %s19, 2
    %v837 = vld [vmem:[%s836] sm:$0x1]
    %v839 = vlaneseq
    %v840 = vshrl.u32 %v839, 7
    %v841 = vsub.s32 0, %v840
    %v842 = vrot.slane %v837, %v841
    %844 = vmatprep.subr.mxu0 0.0
    %845 = vmatpush1.msra.mxu0 %v828
    %846 = vmatprep.subr.mxu0 0.0
    %847 = vmatpush1.msra.mxu0 %v829
    %848 = vmatprep.subr.mxu0 0.0
    %849 = vmatpush1.msra.mxu0 %v830
    %850 = vmatprep.subr.mxu0 0.0
    %851 = vmatpush1.msra.mxu0 %v831
    %852 = vmatprep.subr.mxu0 0.0
    %853 = vmatpush1.msra.mxu0 %v832
    %854 = vmatprep.subr.mxu0 0.0
    %855 = vmatpush1.msra.mxu0 %v833
    %856 = vmatprep.subr.mxu0 0.0
    %857 = vmatpush1.msra.mxu0 %v834
    %858 = vmatprep.subr.mxu0 0.0
    %859 = vmatpush1.msra.mxu0 %v835
    %860 = vmatprep.subr.mxu0 0.0
    %861 = vmatpush1.msra.mxu0 0.0
    %862 = vmatprep.subr.mxu0 0.0
    %863 = vmatpush1.msra.mxu0 0.0
    %864 = vmatprep.subr.mxu0 0.0
    %865 = vmatpush1.msra.mxu0 0.0
    %866 = vmatprep.subr.mxu0 0.0
    %867 = vmatpush1.msra.mxu0 0.0
    %868 = vmatprep.subr.mxu0 0.0
    %869 = vmatpush1.msra.mxu0 0.0
    %870 = vmatprep.subr.mxu0 0.0
    %871 = vmatpush1.msra.mxu0 0.0
    %872 = vmatprep.subr.mxu0 0.0
    %873 = vmatpush1.msra.mxu0 0.0
    %874 = vmatprep.subr.mxu0 0.0
    %875 = vmatpush1.msra.mxu0 0.0
    %876 = vmatprep.subr.mxu0 0.0
    %877 = vmatpush1.msra.mxu0 0.0
    %878 = vmatprep.subr.mxu0 0.0
    %879 = vmatpush1.msra.mxu0 0.0
    %880 = vmatprep.subr.mxu0 0.0
    %881 = vmatpush1.msra.mxu0 0.0
    %882 = vmatprep.subr.mxu0 0.0
    %883 = vmatpush1.msra.mxu0 0.0
    %884 = vmatprep.subr.mxu0 0.0
    %885 = vmatpush1.msra.mxu0 0.0
    %886 = vmatprep.subr.mxu0 0.0
    %887 = vmatpush1.msra.mxu0 0.0
    %888 = vmatprep.subr.mxu0 0.0
    %889 = vmatpush1.msra.mxu0 0.0
    %890 = vmatprep.subr.mxu0 0.0
    %891 = vmatpush1.msra.mxu0 0.0
    %892 = vmatprep.subr.mxu0 0.0
    %893 = vmatpush1.msra.mxu0 0.0
    %894 = vmatprep.subr.mxu0 0.0
    %895 = vmatpush1.msra.mxu0 0.0
    %896 = vmatprep.subr.mxu0 0.0
    %897 = vmatpush1.msra.mxu0 0.0
    %898 = vmatprep.subr.mxu0 0.0
    %899 = vmatpush1.msra.mxu0 0.0
    %900 = vmatprep.subr.mxu0 0.0
    %901 = vmatpush1.msra.mxu0 0.0
    %902 = vmatprep.subr.mxu0 0.0
    %903 = vmatpush1.msra.mxu0 0.0
    %904 = vmatprep.subr.mxu0 0.0
    %905 = vmatpush1.msra.mxu0 0.0
    %906 = vmatprep.subr.mxu0 0.0
    %907 = vmatpush1.msra.mxu0 0.0
    %908 = vmatprep.mubr.f32.mxu0 0.0
    %909 = vmatmul.mubr.f32.gmra.mrb[0].mxu0 %v655
    %v910 = vpop.f32.mrb[0].mxu0
    %v911 = vadd.f32 %v842, %v910
    %v912 = vpop.f32.mrb[0].mxu0
    %913 = vmatprep.mubr.f32.mxu0 0.0
    %914 = vmatmul.mubr.f32.gmra.mrb[0].mxu0 %v658
    %v915 = vpop.f32.mrb[0].mxu0
    %v916 = vadd.f32 %v842, %v915
    %v917 = vpop.f32.mrb[0].mxu0
    %918 = vdwg.mxu0
    %vm919 = vcmask 130048
    %v921 = vsel %vm919, %v727, 0
    %v924 = vsel %vm919, %v819, 0
    %926 = vmatprep.subr.mxu0 0.0
    %927 = vmatpush1.xpose.msra.mxu0 %v924
    %928 = vmatprep.subr.mxu0 0.0
    %929 = vmatpush1.xpose.msra.mxu0 0.0
    %930 = vmatprep.subr.mxu0 0.0
    %931 = vmatpush1.xpose.msra.mxu0 0.0
    %932 = vmatprep.subr.mxu0 0.0
    %933 = vmatpush1.xpose.msra.mxu0 0.0
    %934 = vmatprep.subr.mxu0 0.0
    %935 = vmatpush1.xpose.msra.mxu0 0.0
    %936 = vmatprep.subr.mxu0 0.0
    %937 = vmatpush1.xpose.msra.mxu0 0.0
    %938 = vmatprep.subr.mxu0 0.0
    %939 = vmatpush1.xpose.msra.mxu0 0.0
    %940 = vmatprep.subr.mxu0 0.0
    %941 = vmatpush1.xpose.msra.mxu0 0.0
    %942 = vmatprep.subr.mxu0 0.0
    %943 = vmatpush1.xpose.msra.mxu0 0.0
    %944 = vmatprep.subr.mxu0 0.0
    %945 = vmatpush1.xpose.msra.mxu0 0.0
    %946 = vmatprep.subr.mxu0 0.0
    %947 = vmatpush1.xpose.msra.mxu0 0.0
    %948 = vmatprep.subr.mxu0 0.0
    %949 = vmatpush1.xpose.msra.mxu0 0.0
    %950 = vmatprep.subr.mxu0 0.0
    %951 = vmatpush1.xpose.msra.mxu0 0.0
    %952 = vmatprep.subr.mxu0 0.0
    %953 = vmatpush1.xpose.msra.mxu0 0.0
    %954 = vmatprep.subr.mxu0 0.0
    %955 = vmatpush1.xpose.msra.mxu0 0.0
    %956 = vmatprep.subr.mxu0 0.0
    %957 = vmatpush1.xpose.msra.mxu0 0.0
    %958 = vmatprep.subr.mxu0 0.0
    %959 = vmatpush1.xpose.msra.mxu0 0.0
    %960 = vmatprep.subr.mxu0 0.0
    %961 = vmatpush1.xpose.msra.mxu0 0.0
    %962 = vmatprep.subr.mxu0 0.0
    %963 = vmatpush1.xpose.msra.mxu0 0.0
    %964 = vmatprep.subr.mxu0 0.0
    %965 = vmatpush1.xpose.msra.mxu0 0.0
    %966 = vmatprep.subr.mxu0 0.0
    %967 = vmatpush1.xpose.msra.mxu0 0.0
    %968 = vmatprep.subr.mxu0 0.0
    %969 = vmatpush1.xpose.msra.mxu0 0.0
    %970 = vmatprep.subr.mxu0 0.0
    %971 = vmatpush1.xpose.msra.mxu0 0.0
    %972 = vmatprep.subr.mxu0 0.0
    %973 = vmatpush1.xpose.msra.mxu0 0.0
    %974 = vmatprep.subr.mxu0 0.0
    %975 = vmatpush1.xpose.msra.mxu0 0.0
    %976 = vmatprep.subr.mxu0 0.0
    %977 = vmatpush1.xpose.msra.mxu0 0.0
    %978 = vmatprep.subr.mxu0 0.0
    %979 = vmatpush1.xpose.msra.mxu0 0.0
    %980 = vmatprep.subr.mxu0 0.0
    %981 = vmatpush1.xpose.msra.mxu0 0.0
    %982 = vmatprep.subr.mxu0 0.0
    %983 = vmatpush1.xpose.msra.mxu0 0.0
    %984 = vmatprep.subr.mxu0 0.0
    %985 = vmatpush1.xpose.msra.mxu0 0.0
    %986 = vmatprep.subr.mxu0 0.0
    %987 = vmatpush1.xpose.msra.mxu0 0.0
    %988 = vmatprep.subr.mxu0 0.0
    %989 = vmatpush1.xpose.msra.mxu0 0.0
    %990 = vmatprep.mubr.f32.mxu0 0.0
    %991 = vmatmul.mubr.f32.gmra.mrb[0].mxu0 %v921
    %v992 = vpop.f32.mrb[0].mxu0
    %v993 = vadd.f32 0.0, %v992
    %v994 = vpop.f32.mrb[0].mxu0
    %995 = vdwg.mxu0
    %v996 = vmul.f32 %v993, 0.25
    %vm997 = vcmask 55296
    %v998 = vsel %vm997, %v996, -inf
    %999 = vmax.xlane.f32.xlu0 %v998
    %v1000 = vpop.xlane.xlu0 %999
    %v1001 = vsub.f32 %v996, %v1000
    %v1002 = vmul.f32 %v1001, 1.442695
    %v1003 = vpow.pop %v1002
    %v1004 = vsel %vm997, %v1003, 0.0
    %1005 = vadd.xlane.f32.xlu0 %v1004
    %v1006 = vpop.xlane.xlu0 %1005
    %v1007 = vrcp.pop %v1006
    %v1008 = vmul.f32 %v1003, %v1007
    %vm1009 = vcmask 56320
    %v1011 = vsel %vm1009, %v1008, 0
    %v1014 = vsel %vm635, %v911, 0
    %1016 = vmatprep.subr.mxu0 0.0
    %1017 = vmatpush1.msra.mxu0 %v1014
    %1018 = vmatprep.subr.mxu0 0.0
    %1019 = vmatpush1.msra.mxu0 0.0
    %1020 = vmatprep.subr.mxu0 0.0
    %1021 = vmatpush1.msra.mxu0 0.0
    %1022 = vmatprep.subr.mxu0 0.0
    %1023 = vmatpush1.msra.mxu0 0.0
    %1024 = vmatprep.subr.mxu0 0.0
    %1025 = vmatpush1.msra.mxu0 0.0
    %1026 = vmatprep.subr.mxu0 0.0
    %1027 = vmatpush1.msra.mxu0 0.0
    %1028 = vmatprep.subr.mxu0 0.0
    %1029 = vmatpush1.msra.mxu0 0.0
    %1030 = vmatprep.subr.mxu0 0.0
    %1031 = vmatpush1.msra.mxu0 0.0
    %1032 = vmatprep.subr.mxu0 0.0
    %1033 = vmatpush1.msra.mxu0 0.0
    %1034 = vmatprep.subr.mxu0 0.0
    %1035 = vmatpush1.msra.mxu0 0.0
    %1036 = vmatprep.subr.mxu0 0.0
    %1037 = vmatpush1.msra.mxu0 0.0
    %1038 = vmatprep.subr.mxu0 0.0
    %1039 = vmatpush1.msra.mxu0 0.0
    %1040 = vmatprep.subr.mxu0 0.0
    %1041 = vmatpush1.msra.mxu0 0.0
    %1042 = vmatprep.subr.mxu0 0.0
    %1043 = vmatpush1.msra.mxu0 0.0
    %1044 = vmatprep.subr.mxu0 0.0
    %1045 = vmatpush1.msra.mxu0 0.0
    %1046 = vmatprep.subr.mxu0 0.0
    %1047 = vmatpush1.msra.mxu0 0.0
    %1048 = vmatprep.subr.mxu0 0.0
    %1049 = vmatpush1.msra.mxu0 0.0
    %1050 = vmatprep.subr.mxu0 0.0
    %1051 = vmatpush1.msra.mxu0 0.0
    %1052 = vmatprep.subr.mxu0 0.0
    %1053 = vmatpush1.msra.mxu0 0.0
    %1054 = vmatprep.subr.mxu0 0.0
    %1055 = vmatpush1.msra.mxu0 0.0
    %1056 = vmatprep.subr.mxu0 0.0
    %1057 = vmatpush1.msra.mxu0 0.0
    %1058 = vmatprep.subr.mxu0 0.0
    %1059 = vmatpush1.msra.mxu0 0.0
    %1060 = vmatprep.subr.mxu0 0.0
    %1061 = vmatpush1.msra.mxu0 0.0
    %1062 = vmatprep.subr.mxu0 0.0
    %1063 = vmatpush1.msra.mxu0 0.0
    %1064 = vmatprep.subr.mxu0 0.0
    %1065 = vmatpush1.msra.mxu0 0.0
    %1066 = vmatprep.subr.mxu0 0.0
    %1067 = vmatpush1.msra.mxu0 0.0
    %1068 = vmatprep.subr.mxu0 0.0
    %1069 = vmatpush1.msra.mxu0 0.0
    %1070 = vmatprep.subr.mxu0 0.0
    %1071 = vmatpush1.msra.mxu0 0.0
    %1072 = vmatprep.subr.mxu0 0.0
    %1073 = vmatpush1.msra.mxu0 0.0
    %1074 = vmatprep.subr.mxu0 0.0
    %1075 = vmatpush1.msra.mxu0 0.0
    %1076 = vmatprep.subr.mxu0 0.0
    %1077 = vmatpush1.msra.mxu0 0.0
    %1078 = vmatprep.subr.mxu0 0.0
    %1079 = vmatpush1.msra.mxu0 0.0
    %1080 = vmatprep.mubr.f32.mxu0 0.0
    %1081 = vmatmul.mubr.f32.gmra.mrb[0].mxu0 %v1011
    %v1082 = vpop.f32.mrb[0].mxu0
    %v1083 = vadd.f32 0.0, %v1082
    %v1084 = vpop.f32.mrb[0].mxu0
    %1085 = vdwg.mxu0
    %1086 = vrot.lane.b32.xlu0 %v727, 112
    %v1087 = vpop.permute.xlu0 %1086
    %1088 = vrot.lane.b32.xlu0 %v819, 112
    %v1089 = vpop.permute.xlu0 %1088
    %v1090 = vsel %vm919, %v1087, 0
    %v1092 = vsel %vm919, %v1089, 0
    %1094 = vmatprep.subr.mxu0 0.0
    %1095 = vmatpush1.xpose.msra.mxu0 %v1092
    %1096 = vmatprep.subr.mxu0 0.0
    %1097 = vmatpush1.xpose.msra.mxu0 0.0
    %1098 = vmatprep.subr.mxu0 0.0
    %1099 = vmatpush1.xpose.msra.mxu0 0.0
    %1100 = vmatprep.subr.mxu0 0.0
    %1101 = vmatpush1.xpose.msra.mxu0 0.0
    %1102 = vmatprep.subr.mxu0 0.0
    %1103 = vmatpush1.xpose.msra.mxu0 0.0
    %1104 = vmatprep.subr.mxu0 0.0
    %1105 = vmatpush1.xpose.msra.mxu0 0.0
    %1106 = vmatprep.subr.mxu0 0.0
    %1107 = vmatpush1.xpose.msra.mxu0 0.0
    %1108 = vmatprep.subr.mxu0 0.0
    %1109 = vmatpush1.xpose.msra.mxu0 0.0
    %1110 = vmatprep.subr.mxu0 0.0
    %1111 = vmatpush1.xpose.msra.mxu0 0.0
    %1112 = vmatprep.subr.mxu0 0.0
    %1113 = vmatpush1.xpose.msra.mxu0 0.0
    %1114 = vmatprep.subr.mxu0 0.0
    %1115 = vmatpush1.xpose.msra.mxu0 0.0
    %1116 = vmatprep.subr.mxu0 0.0
    %1117 = vmatpush1.xpose.msra.mxu0 0.0
    %1118 = vmatprep.subr.mxu0 0.0
    %1119 = vmatpush1.xpose.msra.mxu0 0.0
    %1120 = vmatprep.subr.mxu0 0.0
    %1121 = vmatpush1.xpose.msra.mxu0 0.0
    %1122 = vmatprep.subr.mxu0 0.0
    %1123 = vmatpush1.xpose.msra.mxu0 0.0
    %1124 = vmatprep.subr.mxu0 0.0
    %1125 = vmatpush1.xpose.msra.mxu0 0.0
    %1126 = vmatprep.subr.mxu0 0.0
    %1127 = vmatpush1.xpose.msra.mxu0 0.0
    %1128 = vmatprep.subr.mxu0 0.0
    %1129 = vmatpush1.xpose.msra.mxu0 0.0
    %1130 = vmatprep.subr.mxu0 0.0
    %1131 = vmatpush1.xpose.msra.mxu0 0.0
    %1132 = vmatprep.subr.mxu0 0.0
    %1133 = vmatpush1.xpose.msra.mxu0 0.0
    %1134 = vmatprep.subr.mxu0 0.0
    %1135 = vmatpush1.xpose.msra.mxu0 0.0
    %1136 = vmatprep.subr.mxu0 0.0
    %1137 = vmatpush1.xpose.msra.mxu0 0.0
    %1138 = vmatprep.subr.mxu0 0.0
    %1139 = vmatpush1.xpose.msra.mxu0 0.0
    %1140 = vmatprep.subr.mxu0 0.0
    %1141 = vmatpush1.xpose.msra.mxu0 0.0
    %1142 = vmatprep.subr.mxu0 0.0
    %1143 = vmatpush1.xpose.msra.mxu0 0.0
    %1144 = vmatprep.subr.mxu0 0.0
    %1145 = vmatpush1.xpose.msra.mxu0 0.0
    %1146 = vmatprep.subr.mxu0 0.0
    %1147 = vmatpush1.xpose.msra.mxu0 0.0
    %1148 = vmatprep.subr.mxu0 0.0
    %1149 = vmatpush1.xpose.msra.mxu0 0.0
    %1150 = vmatprep.subr.mxu0 0.0
    %1151 = vmatpush1.xpose.msra.mxu0 0.0
    %1152 = vmatprep.subr.mxu0 0.0
    %1153 = vmatpush1.xpose.msra.mxu0 0.0
    %1154 = vmatprep.subr.mxu0 0.0
    %1155 = vmatpush1.xpose.msra.mxu0 0.0
    %1156 = vmatprep.subr.mxu0 0.0
    %1157 = vmatpush1.xpose.msra.mxu0 0.0
    %1158 = vmatprep.mubr.f32.mxu0 0.0
    %1159 = vmatmul.mubr.f32.gmra.mrb[0].mxu0 %v1090
    %v1160 = vpop.f32.mrb[0].mxu0
    %v1161 = vadd.f32 0.0, %v1160
    %v1162 = vpop.f32.mrb[0].mxu0
    %1163 = vdwg.mxu0
    %v1164 = vmul.f32 %v1161, 0.25
    %v1165 = vsel %vm997, %v1164, -inf
    %1166 = vmax.xlane.f32.xlu0 %v1165
    %v1167 = vpop.xlane.xlu0 %1166
    %v1168 = vsub.f32 %v1164, %v1167
    %v1169 = vmul.f32 %v1168, 1.442695
    %v1170 = vpow.pop %v1169
    %v1171 = vsel %vm997, %v1170, 0.0
    %1172 = vadd.xlane.f32.xlu0 %v1171
    %v1173 = vpop.xlane.xlu0 %1172
    %v1174 = vrcp.pop %v1173
    %v1175 = vmul.f32 %v1170, %v1174
    %1176 = vrot.lane.b32.xlu0 %v911, 112
    %v1177 = vpop.permute.xlu0 %1176
    %v1179 = vsel %vm1009, %v1175, 0
    %v1181 = vsel %vm635, %v1177, 0
    %1183 = vmatprep.subr.mxu0 0.0
    %1184 = vmatpush1.msra.mxu0 %v1181
    %1185 = vmatprep.subr.mxu0 0.0
    %1186 = vmatpush1.msra.mxu0 0.0
    %1187 = vmatprep.subr.mxu0 0.0
    %1188 = vmatpush1.msra.mxu0 0.0
    %1189 = vmatprep.subr.mxu0 0.0
    %1190 = vmatpush1.msra.mxu0 0.0
    %1191 = vmatprep.subr.mxu0 0.0
    %1192 = vmatpush1.msra.mxu0 0.0
    %1193 = vmatprep.subr.mxu0 0.0
    %1194 = vmatpush1.msra.mxu0 0.0
    %1195 = vmatprep.subr.mxu0 0.0
    %1196 = vmatpush1.msra.mxu0 0.0
    %1197 = vmatprep.subr.mxu0 0.0
    %1198 = vmatpush1.msra.mxu0 0.0
    %1199 = vmatprep.subr.mxu0 0.0
    %1200 = vmatpush1.msra.mxu0 0.0
    %1201 = vmatprep.subr.mxu0 0.0
    %1202 = vmatpush1.msra.mxu0 0.0
    %1203 = vmatprep.subr.mxu0 0.0
    %1204 = vmatpush1.msra.mxu0 0.0
    %1205 = vmatprep.subr.mxu0 0.0
    %1206 = vmatpush1.msra.mxu0 0.0
    %1207 = vmatprep.subr.mxu0 0.0
    %1208 = vmatpush1.msra.mxu0 0.0
    %1209 = vmatprep.subr.mxu0 0.0
    %1210 = vmatpush1.msra.mxu0 0.0
    %1211 = vmatprep.subr.mxu0 0.0
    %1212 = vmatpush1.msra.mxu0 0.0
    %1213 = vmatprep.subr.mxu0 0.0
    %1214 = vmatpush1.msra.mxu0 0.0
    %1215 = vmatprep.subr.mxu0 0.0
    %1216 = vmatpush1.msra.mxu0 0.0
    %1217 = vmatprep.subr.mxu0 0.0
    %1218 = vmatpush1.msra.mxu0 0.0
    %1219 = vmatprep.subr.mxu0 0.0
    %1220 = vmatpush1.msra.mxu0 0.0
    %1221 = vmatprep.subr.mxu0 0.0
    %1222 = vmatpush1.msra.mxu0 0.0
    %1223 = vmatprep.subr.mxu0 0.0
    %1224 = vmatpush1.msra.mxu0 0.0
    %1225 = vmatprep.subr.mxu0 0.0
    %1226 = vmatpush1.msra.mxu0 0.0
    %1227 = vmatprep.subr.mxu0 0.0
    %1228 = vmatpush1.msra.mxu0 0.0
    %1229 = vmatprep.subr.mxu0 0.0
    %1230 = vmatpush1.msra.mxu0 0.0
    %1231 = vmatprep.subr.mxu0 0.0
    %1232 = vmatpush1.msra.mxu0 0.0
    %1233 = vmatprep.subr.mxu0 0.0
    %1234 = vmatpush1.msra.mxu0 0.0
    %1235 = vmatprep.subr.mxu0 0.0
    %1236 = vmatpush1.msra.mxu0 0.0
    %1237 = vmatprep.subr.mxu0 0.0
    %1238 = vmatpush1.msra.mxu0 0.0
    %1239 = vmatprep.subr.mxu0 0.0
    %1240 = vmatpush1.msra.mxu0 0.0
    %1241 = vmatprep.subr.mxu0 0.0
    %1242 = vmatpush1.msra.mxu0 0.0
    %1243 = vmatprep.subr.mxu0 0.0
    %1244 = vmatpush1.msra.mxu0 0.0
    %1245 = vmatprep.subr.mxu0 0.0
    %1246 = vmatpush1.msra.mxu0 0.0
    %1247 = vmatprep.mubr.f32.mxu0 0.0
    %1248 = vmatmul.mubr.f32.gmra.mrb[0].mxu0 %v1179
    %v1249 = vpop.f32.mrb[0].mxu0
    %v1250 = vadd.f32 0.0, %v1249
    %v1251 = vpop.f32.mrb[0].mxu0
    %1252 = vdwg.mxu0
    %1253 = vrot.lane.b32.xlu0 %v727, 96
    %v1254 = vpop.permute.xlu0 %1253
    %1255 = vrot.lane.b32.xlu0 %v819, 96
    %v1256 = vpop.permute.xlu0 %1255
    %v1257 = vsel %vm919, %v1254, 0
    %v1259 = vsel %vm919, %v1256, 0
    %1261 = vmatprep.subr.mxu0 0.0
    %1262 = vmatpush1.xpose.msra.mxu0 %v1259
    %1263 = vmatprep.subr.mxu0 0.0
    %1264 = vmatpush1.xpose.msra.mxu0 0.0
    %1265 = vmatprep.subr.mxu0 0.0
    %1266 = vmatpush1.xpose.msra.mxu0 0.0
    %1267 = vmatprep.subr.mxu0 0.0
    %1268 = vmatpush1.xpose.msra.mxu0 0.0
    %1269 = vmatprep.subr.mxu0 0.0
    %1270 = vmatpush1.xpose.msra.mxu0 0.0
    %1271 = vmatprep.subr.mxu0 0.0
    %1272 = vmatpush1.xpose.msra.mxu0 0.0
    %1273 = vmatprep.subr.mxu0 0.0
    %1274 = vmatpush1.xpose.msra.mxu0 0.0
    %1275 = vmatprep.subr.mxu0 0.0
    %1276 = vmatpush1.xpose.msra.mxu0 0.0
    %1277 = vmatprep.subr.mxu0 0.0
    %1278 = vmatpush1.xpose.msra.mxu0 0.0
    %1279 = vmatprep.subr.mxu0 0.0
    %1280 = vmatpush1.xpose.msra.mxu0 0.0
    %1281 = vmatprep.subr.mxu0 0.0
    %1282 = vmatpush1.xpose.msra.mxu0 0.0
    %1283 = vmatprep.subr.mxu0 0.0
    %1284 = vmatpush1.xpose.msra.mxu0 0.0
    %1285 = vmatprep.subr.mxu0 0.0
    %1286 = vmatpush1.xpose.msra.mxu0 0.0
    %1287 = vmatprep.subr.mxu0 0.0
    %1288 = vmatpush1.xpose.msra.mxu0 0.0
    %1289 = vmatprep.subr.mxu0 0.0
    %1290 = vmatpush1.xpose.msra.mxu0 0.0
    %1291 = vmatprep.subr.mxu0 0.0
    %1292 = vmatpush1.xpose.msra.mxu0 0.0
    %1293 = vmatprep.subr.mxu0 0.0
    %1294 = vmatpush1.xpose.msra.mxu0 0.0
    %1295 = vmatprep.subr.mxu0 0.0
    %1296 = vmatpush1.xpose.msra.mxu0 0.0
    %1297 = vmatprep.subr.mxu0 0.0
    %1298 = vmatpush1.xpose.msra.mxu0 0.0
    %1299 = vmatprep.subr.mxu0 0.0
    %1300 = vmatpush1.xpose.msra.mxu0 0.0
    %1301 = vmatprep.subr.mxu0 0.0
    %1302 = vmatpush1.xpose.msra.mxu0 0.0
    %1303 = vmatprep.subr.mxu0 0.0
    %1304 = vmatpush1.xpose.msra.mxu0 0.0
    %1305 = vmatprep.subr.mxu0 0.0
    %1306 = vmatpush1.xpose.msra.mxu0 0.0
    %1307 = vmatprep.subr.mxu0 0.0
    %1308 = vmatpush1.xpose.msra.mxu0 0.0
    %1309 = vmatprep.subr.mxu0 0.0
    %1310 = vmatpush1.xpose.msra.mxu0 0.0
    %1311 = vmatprep.subr.mxu0 0.0
    %1312 = vmatpush1.xpose.msra.mxu0 0.0
    %1313 = vmatprep.subr.mxu0 0.0
    %1314 = vmatpush1.xpose.msra.mxu0 0.0
    %1315 = vmatprep.subr.mxu0 0.0
    %1316 = vmatpush1.xpose.msra.mxu0 0.0
    %1317 = vmatprep.subr.mxu0 0.0
    %1318 = vmatpush1.xpose.msra.mxu0 0.0
    %1319 = vmatprep.subr.mxu0 0.0
    %1320 = vmatpush1.xpose.msra.mxu0 0.0
    %1321 = vmatprep.subr.mxu0 0.0
    %1322 = vmatpush1.xpose.msra.mxu0 0.0
    %1323 = vmatprep.subr.mxu0 0.0
    %1324 = vmatpush1.xpose.msra.mxu0 0.0
    %1325 = vmatprep.mubr.f32.mxu0 0.0
    %1326 = vmatmul.mubr.f32.gmra.mrb[0].mxu0 %v1257
    %v1327 = vpop.f32.mrb[0].mxu0
    %v1328 = vadd.f32 0.0, %v1327
    %v1329 = vpop.f32.mrb[0].mxu0
    %1330 = vdwg.mxu0
    %v1331 = vmul.f32 %v1328, 0.25
    %v1332 = vsel %vm997, %v1331, -inf
    %1333 = vmax.xlane.f32.xlu0 %v1332
    %v1334 = vpop.xlane.xlu0 %1333
    %v1335 = vsub.f32 %v1331, %v1334
    %v1336 = vmul.f32 %v1335, 1.442695
    %v1337 = vpow.pop %v1336
    %v1338 = vsel %vm997, %v1337, 0.0
    %1339 = vadd.xlane.f32.xlu0 %v1338
    %v1340 = vpop.xlane.xlu0 %1339
    %v1341 = vrcp.pop %v1340
    %v1342 = vmul.f32 %v1337, %v1341
    %1343 = vrot.lane.b32.xlu0 %v911, 96
    %v1344 = vpop.permute.xlu0 %1343
    %v1346 = vsel %vm1009, %v1342, 0
    %v1348 = vsel %vm635, %v1344, 0
    %1350 = vmatprep.subr.mxu0 0.0
    %1351 = vmatpush1.msra.mxu0 %v1348
    %1352 = vmatprep.subr.mxu0 0.0
    %1353 = vmatpush1.msra.mxu0 0.0
    %1354 = vmatprep.subr.mxu0 0.0
    %1355 = vmatpush1.msra.mxu0 0.0
    %1356 = vmatprep.subr.mxu0 0.0
    %1357 = vmatpush1.msra.mxu0 0.0
    %1358 = vmatprep.subr.mxu0 0.0
    %1359 = vmatpush1.msra.mxu0 0.0
    %1360 = vmatprep.subr.mxu0 0.0
    %1361 = vmatpush1.msra.mxu0 0.0
    %1362 = vmatprep.subr.mxu0 0.0
    %1363 = vmatpush1.msra.mxu0 0.0
    %1364 = vmatprep.subr.mxu0 0.0
    %1365 = vmatpush1.msra.mxu0 0.0
    %1366 = vmatprep.subr.mxu0 0.0
    %1367 = vmatpush1.msra.mxu0 0.0
    %1368 = vmatprep.subr.mxu0 0.0
    %1369 = vmatpush1.msra.mxu0 0.0
    %1370 = vmatprep.subr.mxu0 0.0
    %1371 = vmatpush1.msra.mxu0 0.0
    %1372 = vmatprep.subr.mxu0 0.0
    %1373 = vmatpush1.msra.mxu0 0.0
    %1374 = vmatprep.subr.mxu0 0.0
    %1375 = vmatpush1.msra.mxu0 0.0
    %1376 = vmatprep.subr.mxu0 0.0
    %1377 = vmatpush1.msra.mxu0 0.0
    %1378 = vmatprep.subr.mxu0 0.0
    %1379 = vmatpush1.msra.mxu0 0.0
    %1380 = vmatprep.subr.mxu0 0.0
    %1381 = vmatpush1.msra.mxu0 0.0
    %1382 = vmatprep.subr.mxu0 0.0
    %1383 = vmatpush1.msra.mxu0 0.0
    %1384 = vmatprep.subr.mxu0 0.0
    %1385 = vmatpush1.msra.mxu0 0.0
    %1386 = vmatprep.subr.mxu0 0.0
    %1387 = vmatpush1.msra.mxu0 0.0
    %1388 = vmatprep.subr.mxu0 0.0
    %1389 = vmatpush1.msra.mxu0 0.0
    %1390 = vmatprep.subr.mxu0 0.0
    %1391 = vmatpush1.msra.mxu0 0.0
    %1392 = vmatprep.subr.mxu0 0.0
    %1393 = vmatpush1.msra.mxu0 0.0
    %1394 = vmatprep.subr.mxu0 0.0
    %1395 = vmatpush1.msra.mxu0 0.0
    %1396 = vmatprep.subr.mxu0 0.0
    %1397 = vmatpush1.msra.mxu0 0.0
    %1398 = vmatprep.subr.mxu0 0.0
    %1399 = vmatpush1.msra.mxu0 0.0
    %1400 = vmatprep.subr.mxu0 0.0
    %1401 = vmatpush1.msra.mxu0 0.0
    %1402 = vmatprep.subr.mxu0 0.0
    %1403 = vmatpush1.msra.mxu0 0.0
    %1404 = vmatprep.subr.mxu0 0.0
    %1405 = vmatpush1.msra.mxu0 0.0
    %1406 = vmatprep.subr.mxu0 0.0
    %1407 = vmatpush1.msra.mxu0 0.0
    %1408 = vmatprep.subr.mxu0 0.0
    %1409 = vmatpush1.msra.mxu0 0.0
    %1410 = vmatprep.subr.mxu0 0.0
    %1411 = vmatpush1.msra.mxu0 0.0
    %1412 = vmatprep.subr.mxu0 0.0
    %1413 = vmatpush1.msra.mxu0 0.0
    %1414 = vmatprep.mubr.f32.mxu0 0.0
    %1415 = vmatmul.mubr.f32.gmra.mrb[0].mxu0 %v1346
    %v1416 = vpop.f32.mrb[0].mxu0
    %v1417 = vadd.f32 0.0, %v1416
    %v1418 = vpop.f32.mrb[0].mxu0
    %1419 = vdwg.mxu0
    %1420 = vrot.lane.b32.xlu0 %v727, 80
    %v1421 = vpop.permute.xlu0 %1420
    %1422 = vrot.lane.b32.xlu0 %v819, 80
    %v1423 = vpop.permute.xlu0 %1422
    %v1424 = vsel %vm919, %v1421, 0
    %v1426 = vsel %vm919, %v1423, 0
    %1428 = vmatprep.subr.mxu0 0.0
    %1429 = vmatpush1.xpose.msra.mxu0 %v1426
    %1430 = vmatprep.subr.mxu0 0.0
    %1431 = vmatpush1.xpose.msra.mxu0 0.0
    %1432 = vmatprep.subr.mxu0 0.0
    %1433 = vmatpush1.xpose.msra.mxu0 0.0
    %1434 = vmatprep.subr.mxu0 0.0
    %1435 = vmatpush1.xpose.msra.mxu0 0.0
    %1436 = vmatprep.subr.mxu0 0.0
    %1437 = vmatpush1.xpose.msra.mxu0 0.0
    %1438 = vmatprep.subr.mxu0 0.0
    %1439 = vmatpush1.xpose.msra.mxu0 0.0
    %1440 = vmatprep.subr.mxu0 0.0
    %1441 = vmatpush1.xpose.msra.mxu0 0.0
    %1442 = vmatprep.subr.mxu0 0.0
    %1443 = vmatpush1.xpose.msra.mxu0 0.0
    %1444 = vmatprep.subr.mxu0 0.0
    %1445 = vmatpush1.xpose.msra.mxu0 0.0
    %1446 = vmatprep.subr.mxu0 0.0
    %1447 = vmatpush1.xpose.msra.mxu0 0.0
    %1448 = vmatprep.subr.mxu0 0.0
    %1449 = vmatpush1.xpose.msra.mxu0 0.0
    %1450 = vmatprep.subr.mxu0 0.0
    %1451 = vmatpush1.xpose.msra.mxu0 0.0
    %1452 = vmatprep.subr.mxu0 0.0
    %1453 = vmatpush1.xpose.msra.mxu0 0.0
    %1454 = vmatprep.subr.mxu0 0.0
    %1455 = vmatpush1.xpose.msra.mxu0 0.0
    %1456 = vmatprep.subr.mxu0 0.0
    %1457 = vmatpush1.xpose.msra.mxu0 0.0
    %1458 = vmatprep.subr.mxu0 0.0
    %1459 = vmatpush1.xpose.msra.mxu0 0.0
    %1460 = vmatprep.subr.mxu0 0.0
    %1461 = vmatpush1.xpose.msra.mxu0 0.0
    %1462 = vmatprep.subr.mxu0 0.0
    %1463 = vmatpush1.xpose.msra.mxu0 0.0
    %1464 = vmatprep.subr.mxu0 0.0
    %1465 = vmatpush1.xpose.msra.mxu0 0.0
    %1466 = vmatprep.subr.mxu0 0.0
    %1467 = vmatpush1.xpose.msra.mxu0 0.0
    %1468 = vmatprep.subr.mxu0 0.0
    %1469 = vmatpush1.xpose.msra.mxu0 0.0
    %1470 = vmatprep.subr.mxu0 0.0
    %1471 = vmatpush1.xpose.msra.mxu0 0.0
    %1472 = vmatprep.subr.mxu0 0.0
    %1473 = vmatpush1.xpose.msra.mxu0 0.0
    %1474 = vmatprep.subr.mxu0 0.0
    %1475 = vmatpush1.xpose.msra.mxu0 0.0
    %1476 = vmatprep.subr.mxu0 0.0
    %1477 = vmatpush1.xpose.msra.mxu0 0.0
    %1478 = vmatprep.subr.mxu0 0.0
    %1479 = vmatpush1.xpose.msra.mxu0 0.0
    %1480 = vmatprep.subr.mxu0 0.0
    %1481 = vmatpush1.xpose.msra.mxu0 0.0
    %1482 = vmatprep.subr.mxu0 0.0
    %1483 = vmatpush1.xpose.msra.mxu0 0.0
    %1484 = vmatprep.subr.mxu0 0.0
    %1485 = vmatpush1.xpose.msra.mxu0 0.0
    %1486 = vmatprep.subr.mxu0 0.0
    %1487 = vmatpush1.xpose.msra.mxu0 0.0
    %1488 = vmatprep.subr.mxu0 0.0
    %1489 = vmatpush1.xpose.msra.mxu0 0.0
    %1490 = vmatprep.subr.mxu0 0.0
    %1491 = vmatpush1.xpose.msra.mxu0 0.0
    %1492 = vmatprep.mubr.f32.mxu0 0.0
    %1493 = vmatmul.mubr.f32.gmra.mrb[0].mxu0 %v1424
    %v1494 = vpop.f32.mrb[0].mxu0
    %v1495 = vadd.f32 0.0, %v1494
    %v1496 = vpop.f32.mrb[0].mxu0
    %1497 = vdwg.mxu0
    %v1498 = vmul.f32 %v1495, 0.25
    %v1499 = vsel %vm997, %v1498, -inf
    %1500 = vmax.xlane.f32.xlu0 %v1499
    %v1501 = vpop.xlane.xlu0 %1500
    %v1502 = vsub.f32 %v1498, %v1501
    %v1503 = vmul.f32 %v1502, 1.442695
    %v1504 = vpow.pop %v1503
    %v1505 = vsel %vm997, %v1504, 0.0
    %1506 = vadd.xlane.f32.xlu0 %v1505
    %v1507 = vpop.xlane.xlu0 %1506
    %v1508 = vrcp.pop %v1507
    %v1509 = vmul.f32 %v1504, %v1508
    %1510 = vrot.lane.b32.xlu0 %v911, 80
    %v1511 = vpop.permute.xlu0 %1510
    %v1513 = vsel %vm1009, %v1509, 0
    %v1515 = vsel %vm635, %v1511, 0
    %1517 = vmatprep.subr.mxu0 0.0
    %1518 = vmatpush1.msra.mxu0 %v1515
    %1519 = vmatprep.subr.mxu0 0.0
    %1520 = vmatpush1.msra.mxu0 0.0
    %1521 = vmatprep.subr.mxu0 0.0
    %1522 = vmatpush1.msra.mxu0 0.0
    %1523 = vmatprep.subr.mxu0 0.0
    %1524 = vmatpush1.msra.mxu0 0.0
    %1525 = vmatprep.subr.mxu0 0.0
    %1526 = vmatpush1.msra.mxu0 0.0
    %1527 = vmatprep.subr.mxu0 0.0
    %1528 = vmatpush1.msra.mxu0 0.0
    %1529 = vmatprep.subr.mxu0 0.0
    %1530 = vmatpush1.msra.mxu0 0.0
    %1531 = vmatprep.subr.mxu0 0.0
    %1532 = vmatpush1.msra.mxu0 0.0
    %1533 = vmatprep.subr.mxu0 0.0
    %1534 = vmatpush1.msra.mxu0 0.0
    %1535 = vmatprep.subr.mxu0 0.0
    %1536 = vmatpush1.msra.mxu0 0.0
    %1537 = vmatprep.subr.mxu0 0.0
    %1538 = vmatpush1.msra.mxu0 0.0
    %1539 = vmatprep.subr.mxu0 0.0
    %1540 = vmatpush1.msra.mxu0 0.0
    %1541 = vmatprep.subr.mxu0 0.0
    %1542 = vmatpush1.msra.mxu0 0.0
    %1543 = vmatprep.subr.mxu0 0.0
    %1544 = vmatpush1.msra.mxu0 0.0
    %1545 = vmatprep.subr.mxu0 0.0
    %1546 = vmatpush1.msra.mxu0 0.0
    %1547 = vmatprep.subr.mxu0 0.0
    %1548 = vmatpush1.msra.mxu0 0.0
    %1549 = vmatprep.subr.mxu0 0.0
    %1550 = vmatpush1.msra.mxu0 0.0
    %1551 = vmatprep.subr.mxu0 0.0
    %1552 = vmatpush1.msra.mxu0 0.0
    %1553 = vmatprep.subr.mxu0 0.0
    %1554 = vmatpush1.msra.mxu0 0.0
    %1555 = vmatprep.subr.mxu0 0.0
    %1556 = vmatpush1.msra.mxu0 0.0
    %1557 = vmatprep.subr.mxu0 0.0
    %1558 = vmatpush1.msra.mxu0 0.0
    %1559 = vmatprep.subr.mxu0 0.0
    %1560 = vmatpush1.msra.mxu0 0.0
    %1561 = vmatprep.subr.mxu0 0.0
    %1562 = vmatpush1.msra.mxu0 0.0
    %1563 = vmatprep.subr.mxu0 0.0
    %1564 = vmatpush1.msra.mxu0 0.0
    %1565 = vmatprep.subr.mxu0 0.0
    %1566 = vmatpush1.msra.mxu0 0.0
    %1567 = vmatprep.subr.mxu0 0.0
    %1568 = vmatpush1.msra.mxu0 0.0
    %1569 = vmatprep.subr.mxu0 0.0
    %1570 = vmatpush1.msra.mxu0 0.0
    %1571 = vmatprep.subr.mxu0 0.0
    %1572 = vmatpush1.msra.mxu0 0.0
    %1573 = vmatprep.subr.mxu0 0.0
    %1574 = vmatpush1.msra.mxu0 0.0
    %1575 = vmatprep.subr.mxu0 0.0
    %1576 = vmatpush1.msra.mxu0 0.0
    %1577 = vmatprep.subr.mxu0 0.0
    %1578 = vmatpush1.msra.mxu0 0.0
    %1579 = vmatprep.subr.mxu0 0.0
    %1580 = vmatpush1.msra.mxu0 0.0
    %1581 = vmatprep.mubr.f32.mxu0 0.0
    %1582 = vmatmul.mubr.f32.gmra.mrb[0].mxu0 %v1513
    %v1583 = vpop.f32.mrb[0].mxu0
    %v1584 = vadd.f32 0.0, %v1583
    %v1585 = vpop.f32.mrb[0].mxu0
    %1586 = vdwg.mxu0
    %1588 = vrot.lane.b32.xlu0 %v1250, 16
    %v1589 = vpop.permute.xlu0 %1588
    %1592 = vrot.lane.b32.xlu0 %v1417, 32
    %v1593 = vpop.permute.xlu0 %1592
    %1596 = vrot.lane.b32.xlu0 %v1584, 48
    %v1597 = vpop.permute.xlu0 %1596
    %v1599 = vsel %vm919, %v1083, %v1589
    %vm1600 = vcmask 261120
    %v1601 = vsel %vm1600, %v1599, %v1593
    %vm1602 = vcmask 392192
    %v1603 = vsel %vm1602, %v1601, %v1597
    %vm1605 = vcmask 1040384
    %v1606 = vrot.slane %v727, 7
    %v1607 = vrot.slane %v732, 7
    %v1608 = vsel %vm1605, %v1606, %v1607
    %v1610 = vrot.slane %v819, 7
    %v1611 = vrot.slane %v824, 7
    %v1612 = vsel %vm1605, %v1610, %v1611
    %v1613 = vsel %vm919, %v1608, 0
    %v1615 = vsel %vm919, %v1612, 0
    %1617 = vmatprep.subr.mxu0 0.0
    %1618 = vmatpush1.xpose.msra.mxu0 %v1615
    %1619 = vmatprep.subr.mxu0 0.0
    %1620 = vmatpush1.xpose.msra.mxu0 0.0
    %1621 = vmatprep.subr.mxu0 0.0
    %1622 = vmatpush1.xpose.msra.mxu0 0.0
    %1623 = vmatprep.subr.mxu0 0.0
    %1624 = vmatpush1.xpose.msra.mxu0 0.0
    %1625 = vmatprep.subr.mxu0 0.0
    %1626 = vmatpush1.xpose.msra.mxu0 0.0
    %1627 = vmatprep.subr.mxu0 0.0
    %1628 = vmatpush1.xpose.msra.mxu0 0.0
    %1629 = vmatprep.subr.mxu0 0.0
    %1630 = vmatpush1.xpose.msra.mxu0 0.0
    %1631 = vmatprep.subr.mxu0 0.0
    %1632 = vmatpush1.xpose.msra.mxu0 0.0
    %1633 = vmatprep.subr.mxu0 0.0
    %1634 = vmatpush1.xpose.msra.mxu0 0.0
    %1635 = vmatprep.subr.mxu0 0.0
    %1636 = vmatpush1.xpose.msra.mxu0 0.0
    %1637 = vmatprep.subr.mxu0 0.0
    %1638 = vmatpush1.xpose.msra.mxu0 0.0
    %1639 = vmatprep.subr.mxu0 0.0
    %1640 = vmatpush1.xpose.msra.mxu0 0.0
    %1641 = vmatprep.subr.mxu0 0.0
    %1642 = vmatpush1.xpose.msra.mxu0 0.0
    %1643 = vmatprep.subr.mxu0 0.0
    %1644 = vmatpush1.xpose.msra.mxu0 0.0
    %1645 = vmatprep.subr.mxu0 0.0
    %1646 = vmatpush1.xpose.msra.mxu0 0.0
    %1647 = vmatprep.subr.mxu0 0.0
    %1648 = vmatpush1.xpose.msra.mxu0 0.0
    %1649 = vmatprep.subr.mxu0 0.0
    %1650 = vmatpush1.xpose.msra.mxu0 0.0
    %1651 = vmatprep.subr.mxu0 0.0
    %1652 = vmatpush1.xpose.msra.mxu0 0.0
    %1653 = vmatprep.subr.mxu0 0.0
    %1654 = vmatpush1.xpose.msra.mxu0 0.0
    %1655 = vmatprep.subr.mxu0 0.0
    %1656 = vmatpush1.xpose.msra.mxu0 0.0
    %1657 = vmatprep.subr.mxu0 0.0
    %1658 = vmatpush1.xpose.msra.mxu0 0.0
    %1659 = vmatprep.subr.mxu0 0.0
    %1660 = vmatpush1.xpose.msra.mxu0 0.0
    %1661 = vmatprep.subr.mxu0 0.0
    %1662 = vmatpush1.xpose.msra.mxu0 0.0
    %1663 = vmatprep.subr.mxu0 0.0
    %1664 = vmatpush1.xpose.msra.mxu0 0.0
    %1665 = vmatprep.subr.mxu0 0.0
    %1666 = vmatpush1.xpose.msra.mxu0 0.0
    %1667 = vmatprep.subr.mxu0 0.0
    %1668 = vmatpush1.xpose.msra.mxu0 0.0
    %1669 = vmatprep.subr.mxu0 0.0
    %1670 = vmatpush1.xpose.msra.mxu0 0.0
    %1671 = vmatprep.subr.mxu0 0.0
    %1672 = vmatpush1.xpose.msra.mxu0 0.0
    %1673 = vmatprep.subr.mxu0 0.0
    %1674 = vmatpush1.xpose.msra.mxu0 0.0
    %1675 = vmatprep.subr.mxu0 0.0
    %1676 = vmatpush1.xpose.msra.mxu0 0.0
    %1677 = vmatprep.subr.mxu0 0.0
    %1678 = vmatpush1.xpose.msra.mxu0 0.0
    %1679 = vmatprep.subr.mxu0 0.0
    %1680 = vmatpush1.xpose.msra.mxu0 0.0
    %1681 = vmatprep.mubr.f32.mxu0 0.0
    %1682 = vmatmul.mubr.f32.gmra.mrb[0].mxu0 %v1613
    %v1683 = vpop.f32.mrb[0].mxu0
    %v1684 = vadd.f32 0.0, %v1683
    %v1685 = vpop.f32.mrb[0].mxu0
    %1686 = vdwg.mxu0
    %v1687 = vmul.f32 %v1684, 0.25
    %v1688 = vsel %vm997, %v1687, -inf
    %1689 = vmax.xlane.f32.xlu0 %v1688
    %v1690 = vpop.xlane.xlu0 %1689
    %v1691 = vsub.f32 %v1687, %v1690
    %v1692 = vmul.f32 %v1691, 1.442695
    %v1693 = vpow.pop %v1692
    %v1694 = vsel %vm997, %v1693, 0.0
    %1695 = vadd.xlane.f32.xlu0 %v1694
    %v1696 = vpop.xlane.xlu0 %1695
    %v1697 = vrcp.pop %v1696
    %v1698 = vmul.f32 %v1693, %v1697
    %v1700 = vrot.slane %v911, 7
    %v1701 = vrot.slane %v916, 7
    %v1702 = vsel %vm1605, %v1700, %v1701
    %v1704 = vsel %vm1009, %v1698, 0
    %v1706 = vsel %vm635, %v1702, 0
    %1708 = vmatprep.subr.mxu0 0.0
    %1709 = vmatpush1.msra.mxu0 %v1706
    %1710 = vmatprep.subr.mxu0 0.0
    %1711 = vmatpush1.msra.mxu0 0.0
    %1712 = vmatprep.subr.mxu0 0.0
    %1713 = vmatpush1.msra.mxu0 0.0
    %1714 = vmatprep.subr.mxu0 0.0
    %1715 = vmatpush1.msra.mxu0 0.0
    %1716 = vmatprep.subr.mxu0 0.0
    %1717 = vmatpush1.msra.mxu0 0.0
    %1718 = vmatprep.subr.mxu0 0.0
    %1719 = vmatpush1.msra.mxu0 0.0
    %1720 = vmatprep.subr.mxu0 0.0
    %1721 = vmatpush1.msra.mxu0 0.0
    %1722 = vmatprep.subr.mxu0 0.0
    %1723 = vmatpush1.msra.mxu0 0.0
    %1724 = vmatprep.subr.mxu0 0.0
    %1725 = vmatpush1.msra.mxu0 0.0
    %1726 = vmatprep.subr.mxu0 0.0
    %1727 = vmatpush1.msra.mxu0 0.0
    %1728 = vmatprep.subr.mxu0 0.0
    %1729 = vmatpush1.msra.mxu0 0.0
    %1730 = vmatprep.subr.mxu0 0.0
    %1731 = vmatpush1.msra.mxu0 0.0
    %1732 = vmatprep.subr.mxu0 0.0
    %1733 = vmatpush1.msra.mxu0 0.0
    %1734 = vmatprep.subr.mxu0 0.0
    %1735 = vmatpush1.msra.mxu0 0.0
    %1736 = vmatprep.subr.mxu0 0.0
    %1737 = vmatpush1.msra.mxu0 0.0
    %1738 = vmatprep.subr.mxu0 0.0
    %1739 = vmatpush1.msra.mxu0 0.0
    %1740 = vmatprep.subr.mxu0 0.0
    %1741 = vmatpush1.msra.mxu0 0.0
    %1742 = vmatprep.subr.mxu0 0.0
    %1743 = vmatpush1.msra.mxu0 0.0
    %1744 = vmatprep.subr.mxu0 0.0
    %1745 = vmatpush1.msra.mxu0 0.0
    %1746 = vmatprep.subr.mxu0 0.0
    %1747 = vmatpush1.msra.mxu0 0.0
    %1748 = vmatprep.subr.mxu0 0.0
    %1749 = vmatpush1.msra.mxu0 0.0
    %1750 = vmatprep.subr.mxu0 0.0
    %1751 = vmatpush1.msra.mxu0 0.0
    %1752 = vmatprep.subr.mxu0 0.0
    %1753 = vmatpush1.msra.mxu0 0.0
    %1754 = vmatprep.subr.mxu0 0.0
    %1755 = vmatpush1.msra.mxu0 0.0
    %1756 = vmatprep.subr.mxu0 0.0
    %1757 = vmatpush1.msra.mxu0 0.0
    %1758 = vmatprep.subr.mxu0 0.0
    %1759 = vmatpush1.msra.mxu0 0.0
    %1760 = vmatprep.subr.mxu0 0.0
    %1761 = vmatpush1.msra.mxu0 0.0
    %1762 = vmatprep.subr.mxu0 0.0
    %1763 = vmatpush1.msra.mxu0 0.0
    %1764 = vmatprep.subr.mxu0 0.0
    %1765 = vmatpush1.msra.mxu0 0.0
    %1766 = vmatprep.subr.mxu0 0.0
    %1767 = vmatpush1.msra.mxu0 0.0
    %1768 = vmatprep.subr.mxu0 0.0
    %1769 = vmatpush1.msra.mxu0 0.0
    %1770 = vmatprep.subr.mxu0 0.0
    %1771 = vmatpush1.msra.mxu0 0.0
    %1772 = vmatprep.mubr.f32.mxu0 0.0
    %1773 = vmatmul.mubr.f32.gmra.mrb[0].mxu0 %v1704
    %v1774 = vpop.f32.mrb[0].mxu0
    %v1775 = vadd.f32 0.0, %v1774
    %v1776 = vpop.f32.mrb[0].mxu0
    %1777 = vdwg.mxu0
    %1778 = vrot.lane.b32.xlu0 %v1608, 112
    %v1779 = vpop.permute.xlu0 %1778
    %1780 = vrot.lane.b32.xlu0 %v1612, 112
    %v1781 = vpop.permute.xlu0 %1780
    %v1782 = vsel %vm919, %v1779, 0
    %v1784 = vsel %vm919, %v1781, 0
    %1786 = vmatprep.subr.mxu0 0.0
    %1787 = vmatpush1.xpose.msra.mxu0 %v1784
    %1788 = vmatprep.subr.mxu0 0.0
    %1789 = vmatpush1.xpose.msra.mxu0 0.0
    %1790 = vmatprep.subr.mxu0 0.0
    %1791 = vmatpush1.xpose.msra.mxu0 0.0
    %1792 = vmatprep.subr.mxu0 0.0
    %1793 = vmatpush1.xpose.msra.mxu0 0.0
    %1794 = vmatprep.subr.mxu0 0.0
    %1795 = vmatpush1.xpose.msra.mxu0 0.0
    %1796 = vmatprep.subr.mxu0 0.0
    %1797 = vmatpush1.xpose.msra.mxu0 0.0
    %1798 = vmatprep.subr.mxu0 0.0
    %1799 = vmatpush1.xpose.msra.mxu0 0.0
    %1800 = vmatprep.subr.mxu0 0.0
    %1801 = vmatpush1.xpose.msra.mxu0 0.0
    %1802 = vmatprep.subr.mxu0 0.0
    %1803 = vmatpush1.xpose.msra.mxu0 0.0
    %1804 = vmatprep.subr.mxu0 0.0
    %1805 = vmatpush1.xpose.msra.mxu0 0.0
    %1806 = vmatprep.subr.mxu0 0.0
    %1807 = vmatpush1.xpose.msra.mxu0 0.0
    %1808 = vmatprep.subr.mxu0 0.0
    %1809 = vmatpush1.xpose.msra.mxu0 0.0
    %1810 = vmatprep.subr.mxu0 0.0
    %1811 = vmatpush1.xpose.msra.mxu0 0.0
    %1812 = vmatprep.subr.mxu0 0.0
    %1813 = vmatpush1.xpose.msra.mxu0 0.0
    %1814 = vmatprep.subr.mxu0 0.0
    %1815 = vmatpush1.xpose.msra.mxu0 0.0
    %1816 = vmatprep.subr.mxu0 0.0
    %1817 = vmatpush1.xpose.msra.mxu0 0.0
    %1818 = vmatprep.subr.mxu0 0.0
    %1819 = vmatpush1.xpose.msra.mxu0 0.0
    %1820 = vmatprep.subr.mxu0 0.0
    %1821 = vmatpush1.xpose.msra.mxu0 0.0
    %1822 = vmatprep.subr.mxu0 0.0
    %1823 = vmatpush1.xpose.msra.mxu0 0.0
    %1824 = vmatprep.subr.mxu0 0.0
    %1825 = vmatpush1.xpose.msra.mxu0 0.0
    %1826 = vmatprep.subr.mxu0 0.0
    %1827 = vmatpush1.xpose.msra.mxu0 0.0
    %1828 = vmatprep.subr.mxu0 0.0
    %1829 = vmatpush1.xpose.msra.mxu0 0.0
    %1830 = vmatprep.subr.mxu0 0.0
    %1831 = vmatpush1.xpose.msra.mxu0 0.0
    %1832 = vmatprep.subr.mxu0 0.0
    %1833 = vmatpush1.xpose.msra.mxu0 0.0
    %1834 = vmatprep.subr.mxu0 0.0
    %1835 = vmatpush1.xpose.msra.mxu0 0.0
    %1836 = vmatprep.subr.mxu0 0.0
    %1837 = vmatpush1.xpose.msra.mxu0 0.0
    %1838 = vmatprep.subr.mxu0 0.0
    %1839 = vmatpush1.xpose.msra.mxu0 0.0
    %1840 = vmatprep.subr.mxu0 0.0
    %1841 = vmatpush1.xpose.msra.mxu0 0.0
    %1842 = vmatprep.subr.mxu0 0.0
    %1843 = vmatpush1.xpose.msra.mxu0 0.0
    %1844 = vmatprep.subr.mxu0 0.0
    %1845 = vmatpush1.xpose.msra.mxu0 0.0
    %1846 = vmatprep.subr.mxu0 0.0
    %1847 = vmatpush1.xpose.msra.mxu0 0.0
    %1848 = vmatprep.subr.mxu0 0.0
    %1849 = vmatpush1.xpose.msra.mxu0 0.0
    %1850 = vmatprep.mubr.f32.mxu0 0.0
    %1851 = vmatmul.mubr.f32.gmra.mrb[0].mxu0 %v1782
    %v1852 = vpop.f32.mrb[0].mxu0
    %v1853 = vadd.f32 0.0, %v1852
    %v1854 = vpop.f32.mrb[0].mxu0
    %1855 = vdwg.mxu0
    %v1856 = vmul.f32 %v1853, 0.25
    %v1857 = vsel %vm997, %v1856, -inf
    %1858 = vmax.xlane.f32.xlu0 %v1857
    %v1859 = vpop.xlane.xlu0 %1858
    %v1860 = vsub.f32 %v1856, %v1859
    %v1861 = vmul.f32 %v1860, 1.442695
    %v1862 = vpow.pop %v1861
    %v1863 = vsel %vm997, %v1862, 0.0
    %1864 = vadd.xlane.f32.xlu0 %v1863
    %v1865 = vpop.xlane.xlu0 %1864
    %v1866 = vrcp.pop %v1865
    %v1867 = vmul.f32 %v1862, %v1866
    %1868 = vrot.lane.b32.xlu0 %v1702, 112
    %v1869 = vpop.permute.xlu0 %1868
    %v1871 = vsel %vm1009, %v1867, 0
    %v1873 = vsel %vm635, %v1869, 0
    %1875 = vmatprep.subr.mxu0 0.0
    %1876 = vmatpush1.msra.mxu0 %v1873
    %1877 = vmatprep.subr.mxu0 0.0
    %1878 = vmatpush1.msra.mxu0 0.0
    %1879 = vmatprep.subr.mxu0 0.0
    %1880 = vmatpush1.msra.mxu0 0.0
    %1881 = vmatprep.subr.mxu0 0.0
    %1882 = vmatpush1.msra.mxu0 0.0
    %1883 = vmatprep.subr.mxu0 0.0
    %1884 = vmatpush1.msra.mxu0 0.0
    %1885 = vmatprep.subr.mxu0 0.0
    %1886 = vmatpush1.msra.mxu0 0.0
    %1887 = vmatprep.subr.mxu0 0.0
    %1888 = vmatpush1.msra.mxu0 0.0
    %1889 = vmatprep.subr.mxu0 0.0
    %1890 = vmatpush1.msra.mxu0 0.0
    %1891 = vmatprep.subr.mxu0 0.0
    %1892 = vmatpush1.msra.mxu0 0.0
    %1893 = vmatprep.subr.mxu0 0.0
    %1894 = vmatpush1.msra.mxu0 0.0
    %1895 = vmatprep.subr.mxu0 0.0
    %1896 = vmatpush1.msra.mxu0 0.0
    %1897 = vmatprep.subr.mxu0 0.0
    %1898 = vmatpush1.msra.mxu0 0.0
    %1899 = vmatprep.subr.mxu0 0.0
    %1900 = vmatpush1.msra.mxu0 0.0
    %1901 = vmatprep.subr.mxu0 0.0
    %1902 = vmatpush1.msra.mxu0 0.0
    %1903 = vmatprep.subr.mxu0 0.0
    %1904 = vmatpush1.msra.mxu0 0.0
    %1905 = vmatprep.subr.mxu0 0.0
    %1906 = vmatpush1.msra.mxu0 0.0
    %1907 = vmatprep.subr.mxu0 0.0
    %1908 = vmatpush1.msra.mxu0 0.0
    %1909 = vmatprep.subr.mxu0 0.0
    %1910 = vmatpush1.msra.mxu0 0.0
    %1911 = vmatprep.subr.mxu0 0.0
    %1912 = vmatpush1.msra.mxu0 0.0
    %1913 = vmatprep.subr.mxu0 0.0
    %1914 = vmatpush1.msra.mxu0 0.0
    %1915 = vmatprep.subr.mxu0 0.0
    %1916 = vmatpush1.msra.mxu0 0.0
    %1917 = vmatprep.subr.mxu0 0.0
    %1918 = vmatpush1.msra.mxu0 0.0
    %1919 = vmatprep.subr.mxu0 0.0
    %1920 = vmatpush1.msra.mxu0 0.0
    %1921 = vmatprep.subr.mxu0 0.0
    %1922 = vmatpush1.msra.mxu0 0.0
    %1923 = vmatprep.subr.mxu0 0.0
    %1924 = vmatpush1.msra.mxu0 0.0
    %1925 = vmatprep.subr.mxu0 0.0
    %1926 = vmatpush1.msra.mxu0 0.0
    %1927 = vmatprep.subr.mxu0 0.0
    %1928 = vmatpush1.msra.mxu0 0.0
    %1929 = vmatprep.subr.mxu0 0.0
    %1930 = vmatpush1.msra.mxu0 0.0
    %1931 = vmatprep.subr.mxu0 0.0
    %1932 = vmatpush1.msra.mxu0 0.0
    %1933 = vmatprep.subr.mxu0 0.0
    %1934 = vmatpush1.msra.mxu0 0.0
    %1935 = vmatprep.subr.mxu0 0.0
    %1936 = vmatpush1.msra.mxu0 0.0
    %1937 = vmatprep.subr.mxu0 0.0
    %1938 = vmatpush1.msra.mxu0 0.0
    %1939 = vmatprep.mubr.f32.mxu0 0.0
    %1940 = vmatmul.mubr.f32.gmra.mrb[0].mxu0 %v1871
    %v1941 = vpop.f32.mrb[0].mxu0
    %v1942 = vadd.f32 0.0, %v1941
    %v1943 = vpop.f32.mrb[0].mxu0
    %1944 = vdwg.mxu0
    %1945 = vrot.lane.b32.xlu0 %v1608, 96
    %v1946 = vpop.permute.xlu0 %1945
    %1947 = vrot.lane.b32.xlu0 %v1612, 96
    %v1948 = vpop.permute.xlu0 %1947
    %v1949 = vsel %vm919, %v1946, 0
    %v1951 = vsel %vm919, %v1948, 0
    %1953 = vmatprep.subr.mxu0 0.0
    %1954 = vmatpush1.xpose.msra.mxu0 %v1951
    %1955 = vmatprep.subr.mxu0 0.0
    %1956 = vmatpush1.xpose.msra.mxu0 0.0
    %1957 = vmatprep.subr.mxu0 0.0
    %1958 = vmatpush1.xpose.msra.mxu0 0.0
    %1959 = vmatprep.subr.mxu0 0.0
    %1960 = vmatpush1.xpose.msra.mxu0 0.0
    %1961 = vmatprep.subr.mxu0 0.0
    %1962 = vmatpush1.xpose.msra.mxu0 0.0
    %1963 = vmatprep.subr.mxu0 0.0
    %1964 = vmatpush1.xpose.msra.mxu0 0.0
    %1965 = vmatprep.subr.mxu0 0.0
    %1966 = vmatpush1.xpose.msra.mxu0 0.0
    %1967 = vmatprep.subr.mxu0 0.0
    %1968 = vmatpush1.xpose.msra.mxu0 0.0
    %1969 = vmatprep.subr.mxu0 0.0
    %1970 = vmatpush1.xpose.msra.mxu0 0.0
    %1971 = vmatprep.subr.mxu0 0.0
    %1972 = vmatpush1.xpose.msra.mxu0 0.0
    %1973 = vmatprep.subr.mxu0 0.0
    %1974 = vmatpush1.xpose.msra.mxu0 0.0
    %1975 = vmatprep.subr.mxu0 0.0
    %1976 = vmatpush1.xpose.msra.mxu0 0.0
    %1977 = vmatprep.subr.mxu0 0.0
    %1978 = vmatpush1.xpose.msra.mxu0 0.0
    %1979 = vmatprep.subr.mxu0 0.0
    %1980 = vmatpush1.xpose.msra.mxu0 0.0
    %1981 = vmatprep.subr.mxu0 0.0
    %1982 = vmatpush1.xpose.msra.mxu0 0.0
    %1983 = vmatprep.subr.mxu0 0.0
    %1984 = vmatpush1.xpose.msra.mxu0 0.0
    %1985 = vmatprep.subr.mxu0 0.0
    %1986 = vmatpush1.xpose.msra.mxu0 0.0
    %1987 = vmatprep.subr.mxu0 0.0
    %1988 = vmatpush1.xpose.msra.mxu0 0.0
    %1989 = vmatprep.subr.mxu0 0.0
    %1990 = vmatpush1.xpose.msra.mxu0 0.0
    %1991 = vmatprep.subr.mxu0 0.0
    %1992 = vmatpush1.xpose.msra.mxu0 0.0
    %1993 = vmatprep.subr.mxu0 0.0
    %1994 = vmatpush1.xpose.msra.mxu0 0.0
    %1995 = vmatprep.subr.mxu0 0.0
    %1996 = vmatpush1.xpose.msra.mxu0 0.0
    %1997 = vmatprep.subr.mxu0 0.0
    %1998 = vmatpush1.xpose.msra.mxu0 0.0
    %1999 = vmatprep.subr.mxu0 0.0
    %2000 = vmatpush1.xpose.msra.mxu0 0.0
    %2001 = vmatprep.subr.mxu0 0.0
    %2002 = vmatpush1.xpose.msra.mxu0 0.0
    %2003 = vmatprep.subr.mxu0 0.0
    %2004 = vmatpush1.xpose.msra.mxu0 0.0
    %2005 = vmatprep.subr.mxu0 0.0
    %2006 = vmatpush1.xpose.msra.mxu0 0.0
    %2007 = vmatprep.subr.mxu0 0.0
    %2008 = vmatpush1.xpose.msra.mxu0 0.0
    %2009 = vmatprep.subr.mxu0 0.0
    %2010 = vmatpush1.xpose.msra.mxu0 0.0
    %2011 = vmatprep.subr.mxu0 0.0
    %2012 = vmatpush1.xpose.msra.mxu0 0.0
    %2013 = vmatprep.subr.mxu0 0.0
    %2014 = vmatpush1.xpose.msra.mxu0 0.0
    %2015 = vmatprep.subr.mxu0 0.0
    %2016 = vmatpush1.xpose.msra.mxu0 0.0
    %2017 = vmatprep.mubr.f32.mxu0 0.0
    %2018 = vmatmul.mubr.f32.gmra.mrb[0].mxu0 %v1949
    %v2019 = vpop.f32.mrb[0].mxu0
    %v2020 = vadd.f32 0.0, %v2019
    %v2021 = vpop.f32.mrb[0].mxu0
    %2022 = vdwg.mxu0
    %v2023 = vmul.f32 %v2020, 0.25
    %v2024 = vsel %vm997, %v2023, -inf
    %2025 = vmax.xlane.f32.xlu0 %v2024
    %v2026 = vpop.xlane.xlu0 %2025
    %v2027 = vsub.f32 %v2023, %v2026
    %v2028 = vmul.f32 %v2027, 1.442695
    %v2029 = vpow.pop %v2028
    %v2030 = vsel %vm997, %v2029, 0.0
    %2031 = vadd.xlane.f32.xlu0 %v2030
    %v2032 = vpop.xlane.xlu0 %2031
    %v2033 = vrcp.pop %v2032
    %v2034 = vmul.f32 %v2029, %v2033
    %2035 = vrot.lane.b32.xlu0 %v1702, 96
    %v2036 = vpop.permute.xlu0 %2035
    %v2038 = vsel %vm1009, %v2034, 0
    %v2040 = vsel %vm635, %v2036, 0
    %2042 = vmatprep.subr.mxu0 0.0
    %2043 = vmatpush1.msra.mxu0 %v2040
    %2044 = vmatprep.subr.mxu0 0.0
    %2045 = vmatpush1.msra.mxu0 0.0
    %2046 = vmatprep.subr.mxu0 0.0
    %2047 = vmatpush1.msra.mxu0 0.0
    %2048 = vmatprep.subr.mxu0 0.0
    %2049 = vmatpush1.msra.mxu0 0.0
    %2050 = vmatprep.subr.mxu0 0.0
    %2051 = vmatpush1.msra.mxu0 0.0
    %2052 = vmatprep.subr.mxu0 0.0
    %2053 = vmatpush1.msra.mxu0 0.0
    %2054 = vmatprep.subr.mxu0 0.0
    %2055 = vmatpush1.msra.mxu0 0.0
    %2056 = vmatprep.subr.mxu0 0.0
    %2057 = vmatpush1.msra.mxu0 0.0
    %2058 = vmatprep.subr.mxu0 0.0
    %2059 = vmatpush1.msra.mxu0 0.0
    %2060 = vmatprep.subr.mxu0 0.0
    %2061 = vmatpush1.msra.mxu0 0.0
    %2062 = vmatprep.subr.mxu0 0.0
    %2063 = vmatpush1.msra.mxu0 0.0
    %2064 = vmatprep.subr.mxu0 0.0
    %2065 = vmatpush1.msra.mxu0 0.0
    %2066 = vmatprep.subr.mxu0 0.0
    %2067 = vmatpush1.msra.mxu0 0.0
    %2068 = vmatprep.subr.mxu0 0.0
    %2069 = vmatpush1.msra.mxu0 0.0
    %2070 = vmatprep.subr.mxu0 0.0
    %2071 = vmatpush1.msra.mxu0 0.0
    %2072 = vmatprep.subr.mxu0 0.0
    %2073 = vmatpush1.msra.mxu0 0.0
    %2074 = vmatprep.subr.mxu0 0.0
    %2075 = vmatpush1.msra.mxu0 0.0
    %2076 = vmatprep.subr.mxu0 0.0
    %2077 = vmatpush1.msra.mxu0 0.0
    %2078 = vmatprep.subr.mxu0 0.0
    %2079 = vmatpush1.msra.mxu0 0.0
    %2080 = vmatprep.subr.mxu0 0.0
    %2081 = vmatpush1.msra.mxu0 0.0
    %2082 = vmatprep.subr.mxu0 0.0
    %2083 = vmatpush1.msra.mxu0 0.0
    %2084 = vmatprep.subr.mxu0 0.0
    %2085 = vmatpush1.msra.mxu0 0.0
    %2086 = vmatprep.subr.mxu0 0.0
    %2087 = vmatpush1.msra.mxu0 0.0
    %2088 = vmatprep.subr.mxu0 0.0
    %2089 = vmatpush1.msra.mxu0 0.0
    %2090 = vmatprep.subr.mxu0 0.0
    %2091 = vmatpush1.msra.mxu0 0.0
    %2092 = vmatprep.subr.mxu0 0.0
    %2093 = vmatpush1.msra.mxu0 0.0
    %2094 = vmatprep.subr.mxu0 0.0
    %2095 = vmatpush1.msra.mxu0 0.0
    %2096 = vmatprep.subr.mxu0 0.0
    %2097 = vmatpush1.msra.mxu0 0.0
    %2098 = vmatprep.subr.mxu0 0.0
    %2099 = vmatpush1.msra.mxu0 0.0
    %2100 = vmatprep.subr.mxu0 0.0
    %2101 = vmatpush1.msra.mxu0 0.0
    %2102 = vmatprep.subr.mxu0 0.0
    %2103 = vmatpush1.msra.mxu0 0.0
    %2104 = vmatprep.subr.mxu0 0.0
    %2105 = vmatpush1.msra.mxu0 0.0
    %2106 = vmatprep.mubr.f32.mxu0 0.0
    %2107 = vmatmul.mubr.f32.gmra.mrb[0].mxu0 %v2038
    %v2108 = vpop.f32.mrb[0].mxu0
    %v2109 = vadd.f32 0.0, %v2108
    %v2110 = vpop.f32.mrb[0].mxu0
    %2111 = vdwg.mxu0
    %2112 = vrot.lane.b32.xlu0 %v1608, 80
    %v2113 = vpop.permute.xlu0 %2112
    %2114 = vrot.lane.b32.xlu0 %v1612, 80
    %v2115 = vpop.permute.xlu0 %2114
    %v2116 = vsel %vm919, %v2113, 0
    %v2118 = vsel %vm919, %v2115, 0
    %2120 = vmatprep.subr.mxu0 0.0
    %2121 = vmatpush1.xpose.msra.mxu0 %v2118
    %2122 = vmatprep.subr.mxu0 0.0
    %2123 = vmatpush1.xpose.msra.mxu0 0.0
    %2124 = vmatprep.subr.mxu0 0.0
    %2125 = vmatpush1.xpose.msra.mxu0 0.0
    %2126 = vmatprep.subr.mxu0 0.0
    %2127 = vmatpush1.xpose.msra.mxu0 0.0
    %2128 = vmatprep.subr.mxu0 0.0
    %2129 = vmatpush1.xpose.msra.mxu0 0.0
    %2130 = vmatprep.subr.mxu0 0.0
    %2131 = vmatpush1.xpose.msra.mxu0 0.0
    %2132 = vmatprep.subr.mxu0 0.0
    %2133 = vmatpush1.xpose.msra.mxu0 0.0
    %2134 = vmatprep.subr.mxu0 0.0
    %2135 = vmatpush1.xpose.msra.mxu0 0.0
    %2136 = vmatprep.subr.mxu0 0.0
    %2137 = vmatpush1.xpose.msra.mxu0 0.0
    %2138 = vmatprep.subr.mxu0 0.0
    %2139 = vmatpush1.xpose.msra.mxu0 0.0
    %2140 = vmatprep.subr.mxu0 0.0
    %2141 = vmatpush1.xpose.msra.mxu0 0.0
    %2142 = vmatprep.subr.mxu0 0.0
    %2143 = vmatpush1.xpose.msra.mxu0 0.0
    %2144 = vmatprep.subr.mxu0 0.0
    %2145 = vmatpush1.xpose.msra.mxu0 0.0
    %2146 = vmatprep.subr.mxu0 0.0
    %2147 = vmatpush1.xpose.msra.mxu0 0.0
    %2148 = vmatprep.subr.mxu0 0.0
    %2149 = vmatpush1.xpose.msra.mxu0 0.0
    %2150 = vmatprep.subr.mxu0 0.0
    %2151 = vmatpush1.xpose.msra.mxu0 0.0
    %2152 = vmatprep.subr.mxu0 0.0
    %2153 = vmatpush1.xpose.msra.mxu0 0.0
    %2154 = vmatprep.subr.mxu0 0.0
    %2155 = vmatpush1.xpose.msra.mxu0 0.0
    %2156 = vmatprep.subr.mxu0 0.0
    %2157 = vmatpush1.xpose.msra.mxu0 0.0
    %2158 = vmatprep.subr.mxu0 0.0
    %2159 = vmatpush1.xpose.msra.mxu0 0.0
    %2160 = vmatprep.subr.mxu0 0.0
    %2161 = vmatpush1.xpose.msra.mxu0 0.0
    %2162 = vmatprep.subr.mxu0 0.0
    %2163 = vmatpush1.xpose.msra.mxu0 0.0
    %2164 = vmatprep.subr.mxu0 0.0
    %2165 = vmatpush1.xpose.msra.mxu0 0.0
    %2166 = vmatprep.subr.mxu0 0.0
    %2167 = vmatpush1.xpose.msra.mxu0 0.0
    %2168 = vmatprep.subr.mxu0 0.0
    %2169 = vmatpush1.xpose.msra.mxu0 0.0
    %2170 = vmatprep.subr.mxu0 0.0
    %2171 = vmatpush1.xpose.msra.mxu0 0.0
    %2172 = vmatprep.subr.mxu0 0.0
    %2173 = vmatpush1.xpose.msra.mxu0 0.0
    %2174 = vmatprep.subr.mxu0 0.0
    %2175 = vmatpush1.xpose.msra.mxu0 0.0
    %2176 = vmatprep.subr.mxu0 0.0
    %2177 = vmatpush1.xpose.msra.mxu0 0.0
    %2178 = vmatprep.subr.mxu0 0.0
    %2179 = vmatpush1.xpose.msra.mxu0 0.0
    %2180 = vmatprep.subr.mxu0 0.0
    %2181 = vmatpush1.xpose.msra.mxu0 0.0
    %2182 = vmatprep.subr.mxu0 0.0
    %2183 = vmatpush1.xpose.msra.mxu0 0.0
    %2184 = vmatprep.mubr.f32.mxu0 0.0
    %2185 = vmatmul.mubr.f32.gmra.mrb[0].mxu0 %v2116
    %v2186 = vpop.f32.mrb[0].mxu0
    %v2187 = vadd.f32 0.0, %v2186
    %v2188 = vpop.f32.mrb[0].mxu0
    %2189 = vdwg.mxu0
    %v2190 = vmul.f32 %v2187, 0.25
    %v2191 = vsel %vm997, %v2190, -inf
    %2192 = vmax.xlane.f32.xlu0 %v2191
    %v2193 = vpop.xlane.xlu0 %2192
    %v2194 = vsub.f32 %v2190, %v2193
    %v2195 = vmul.f32 %v2194, 1.442695
    %v2196 = vpow.pop %v2195
    %v2197 = vsel %vm997, %v2196, 0.0
    %2198 = vadd.xlane.f32.xlu0 %v2197
    %v2199 = vpop.xlane.xlu0 %2198
    %v2200 = vrcp.pop %v2199
    %v2201 = vmul.f32 %v2196, %v2200
    %2202 = vrot.lane.b32.xlu0 %v1702, 80
    %v2203 = vpop.permute.xlu0 %2202
    %v2205 = vsel %vm1009, %v2201, 0
    %v2207 = vsel %vm635, %v2203, 0
    %2209 = vmatprep.subr.mxu0 0.0
    %2210 = vmatpush1.msra.mxu0 %v2207
    %2211 = vmatprep.subr.mxu0 0.0
    %2212 = vmatpush1.msra.mxu0 0.0
    %2213 = vmatprep.subr.mxu0 0.0
    %2214 = vmatpush1.msra.mxu0 0.0
    %2215 = vmatprep.subr.mxu0 0.0
    %2216 = vmatpush1.msra.mxu0 0.0
    %2217 = vmatprep.subr.mxu0 0.0
    %2218 = vmatpush1.msra.mxu0 0.0
    %2219 = vmatprep.subr.mxu0 0.0
    %2220 = vmatpush1.msra.mxu0 0.0
    %2221 = vmatprep.subr.mxu0 0.0
    %2222 = vmatpush1.msra.mxu0 0.0
    %2223 = vmatprep.subr.mxu0 0.0
    %2224 = vmatpush1.msra.mxu0 0.0
    %2225 = vmatprep.subr.mxu0 0.0
    %2226 = vmatpush1.msra.mxu0 0.0
    %2227 = vmatprep.subr.mxu0 0.0
    %2228 = vmatpush1.msra.mxu0 0.0
    %2229 = vmatprep.subr.mxu0 0.0
    %2230 = vmatpush1.msra.mxu0 0.0
    %2231 = vmatprep.subr.mxu0 0.0
    %2232 = vmatpush1.msra.mxu0 0.0
    %2233 = vmatprep.subr.mxu0 0.0
    %2234 = vmatpush1.msra.mxu0 0.0
    %2235 = vmatprep.subr.mxu0 0.0
    %2236 = vmatpush1.msra.mxu0 0.0
    %2237 = vmatprep.subr.mxu0 0.0
    %2238 = vmatpush1.msra.mxu0 0.0
    %2239 = vmatprep.subr.mxu0 0.0
    %2240 = vmatpush1.msra.mxu0 0.0
    %2241 = vmatprep.subr.mxu0 0.0
    %2242 = vmatpush1.msra.mxu0 0.0
    %2243 = vmatprep.subr.mxu0 0.0
    %2244 = vmatpush1.msra.mxu0 0.0
    %2245 = vmatprep.subr.mxu0 0.0
    %2246 = vmatpush1.msra.mxu0 0.0
    %2247 = vmatprep.subr.mxu0 0.0
    %2248 = vmatpush1.msra.mxu0 0.0
    %2249 = vmatprep.subr.mxu0 0.0
    %2250 = vmatpush1.msra.mxu0 0.0
    %2251 = vmatprep.subr.mxu0 0.0
    %2252 = vmatpush1.msra.mxu0 0.0
    %2253 = vmatprep.subr.mxu0 0.0
    %2254 = vmatpush1.msra.mxu0 0.0
    %2255 = vmatprep.subr.mxu0 0.0
    %2256 = vmatpush1.msra.mxu0 0.0
    %2257 = vmatprep.subr.mxu0 0.0
    %2258 = vmatpush1.msra.mxu0 0.0
    %2259 = vmatprep.subr.mxu0 0.0
    %2260 = vmatpush1.msra.mxu0 0.0
    %2261 = vmatprep.subr.mxu0 0.0
    %2262 = vmatpush1.msra.mxu0 0.0
    %2263 = vmatprep.subr.mxu0 0.0
    %2264 = vmatpush1.msra.mxu0 0.0
    %2265 = vmatprep.subr.mxu0 0.0
    %2266 = vmatpush1.msra.mxu0 0.0
    %2267 = vmatprep.subr.mxu0 0.0
    %2268 = vmatpush1.msra.mxu0 0.0
    %2269 = vmatprep.subr.mxu0 0.0
    %2270 = vmatpush1.msra.mxu0 0.0
    %2271 = vmatprep.subr.mxu0 0.0
    %2272 = vmatpush1.msra.mxu0 0.0
    %2273 = vmatprep.mubr.f32.mxu0 0.0
    %2274 = vmatmul.mubr.f32.gmra.mrb[0].mxu0 %v2205
    %v2275 = vpop.f32.mrb[0].mxu0
    %v2276 = vadd.f32 0.0, %v2275
    %v2277 = vpop.f32.mrb[0].mxu0
    %2278 = vdwg.mxu0
    %2280 = vrot.lane.b32.xlu0 %v1942, 16
    %v2281 = vpop.permute.xlu0 %2280
    %2284 = vrot.lane.b32.xlu0 %v2109, 32
    %v2285 = vpop.permute.xlu0 %2284
    %2288 = vrot.lane.b32.xlu0 %v2276, 48
    %v2289 = vpop.permute.xlu0 %2288
    %v2291 = vsel %vm919, %v1775, %v2281
    %v2292 = vsel %vm1600, %v2291, %v2285
    %v2293 = vsel %vm1602, %v2292, %v2289
    %v2295 = vrot.slane %v2293, 1
    %v2297 = vsel %vm635, %v1603, %v2295
    %v2298 = vld [vmem:[%s21] sm:$0xff]
    %v2299 = vld [vmem:[%s21 + $0x8] sm:$0xff]
    %v2300 = vld [vmem:[%s21 + $0x10] sm:$0xff]
    %v2301 = vld [vmem:[%s21 + $0x18] sm:$0xff]
    %v2302 = vld [vmem:[%s21 + $0x20] sm:$0xff]
    %v2303 = vld [vmem:[%s21 + $0x28] sm:$0xff]
    %v2304 = vld [vmem:[%s21 + $0x30] sm:$0xff]
    %v2305 = vld [vmem:[%s21 + $0x38] sm:$0xff]
    %v2306 = vld [vmem:[#allocation15] sm:$0x1]
    %v2308 = vlaneseq
    %v2309 = vshrl.u32 %v2308, 7
    %v2310 = vsub.s32 0, %v2309
    %v2311 = vrot.slane %v2306, %v2310
    %v2314 = vsel %vm451, %v2297, 0
    %v2316 = vsel %vm451, %v2295, 0
    %2318 = vmatprep.subr.mxu0 0.0
    %2319 = vmatpush1.msra.mxu0 %v2298
    %2320 = vmatprep.subr.mxu0 0.0
    %2321 = vmatpush1.msra.mxu0 %v2299
    %2322 = vmatprep.subr.mxu0 0.0
    %2323 = vmatpush1.msra.mxu0 %v2300
    %2324 = vmatprep.subr.mxu0 0.0
    %2325 = vmatpush1.msra.mxu0 %v2301
    %2326 = vmatprep.subr.mxu0 0.0
    %2327 = vmatpush1.msra.mxu0 %v2302
    %2328 = vmatprep.subr.mxu0 0.0
    %2329 = vmatpush1.msra.mxu0 %v2303
    %2330 = vmatprep.subr.mxu0 0.0
    %2331 = vmatpush1.msra.mxu0 %v2304
    %2332 = vmatprep.subr.mxu0 0.0
    %2333 = vmatpush1.msra.mxu0 %v2305
    %2334 = vmatprep.subr.mxu0 0.0
    %2335 = vmatpush1.msra.mxu0 0.0
    %2336 = vmatprep.subr.mxu0 0.0
    %2337 = vmatpush1.msra.mxu0 0.0
    %2338 = vmatprep.subr.mxu0 0.0
    %2339 = vmatpush1.msra.mxu0 0.0
    %2340 = vmatprep.subr.mxu0 0.0
    %2341 = vmatpush1.msra.mxu0 0.0
    %2342 = vmatprep.subr.mxu0 0.0
    %2343 = vmatpush1.msra.mxu0 0.0
    %2344 = vmatprep.subr.mxu0 0.0
    %2345 = vmatpush1.msra.mxu0 0.0
    %2346 = vmatprep.subr.mxu0 0.0
    %2347 = vmatpush1.msra.mxu0 0.0
    %2348 = vmatprep.subr.mxu0 0.0
    %2349 = vmatpush1.msra.mxu0 0.0
    %2350 = vmatprep.subr.mxu0 0.0
    %2351 = vmatpush1.msra.mxu0 0.0
    %2352 = vmatprep.subr.mxu0 0.0
    %2353 = vmatpush1.msra.mxu0 0.0
    %2354 = vmatprep.subr.mxu0 0.0
    %2355 = vmatpush1.msra.mxu0 0.0
    %2356 = vmatprep.subr.mxu0 0.0
    %2357 = vmatpush1.msra.mxu0 0.0
    %2358 = vmatprep.subr.mxu0 0.0
    %2359 = vmatpush1.msra.mxu0 0.0
    %2360 = vmatprep.subr.mxu0 0.0
    %2361 = vmatpush1.msra.mxu0 0.0
    %2362 = vmatprep.subr.mxu0 0.0
    %2363 = vmatpush1.msra.mxu0 0.0
    %2364 = vmatprep.subr.mxu0 0.0
    %2365 = vmatpush1.msra.mxu0 0.0
    %2366 = vmatprep.subr.mxu0 0.0
    %2367 = vmatpush1.msra.mxu0 0.0
    %2368 = vmatprep.subr.mxu0 0.0
    %2369 = vmatpush1.msra.mxu0 0.0
    %2370 = vmatprep.subr.mxu0 0.0
    %2371 = vmatpush1.msra.mxu0 0.0
    %2372 = vmatprep.subr.mxu0 0.0
    %2373 = vmatpush1.msra.mxu0 0.0
    %2374 = vmatprep.subr.mxu0 0.0
    %2375 = vmatpush1.msra.mxu0 0.0
    %2376 = vmatprep.subr.mxu0 0.0
    %2377 = vmatpush1.msra.mxu0 0.0
    %2378 = vmatprep.subr.mxu0 0.0
    %2379 = vmatpush1.msra.mxu0 0.0
    %2380 = vmatprep.subr.mxu0 0.0
    %2381 = vmatpush1.msra.mxu0 0.0
    %2382 = vmatprep.mubr.f32.mxu0 0.0
    %2383 = vmatmul.mubr.f32.gmra.mrb[0].mxu0 %v2314
    %v2384 = vpop.f32.mrb[0].mxu0
    %v2385 = vadd.f32 %v2311, %v2384
    %v2386 = vpop.f32.mrb[0].mxu0
    %2387 = vmatprep.mubr.f32.mxu0 0.0
    %2388 = vmatmul.mubr.f32.gmra.mrb[0].mxu0 %v2316
    %v2389 = vpop.f32.mrb[0].mxu0
    %v2390 = vadd.f32 %v2311, %v2389
    %v2391 = vpop.f32.mrb[0].mxu0
    %2392 = vdwg.mxu0
    %v2393 = vadd.f32 %v637, %v2385
    %v2394 = vadd.f32 %v638, %v2390
    %v2395 = vld [vmem:[#allocation16] sm:$0x1]
    %v2396 = vld [vmem:[#allocation18] sm:$0x1]
    %v2397 = vsel %vm451, %v2393, 0.0
    %2398 = vadd.xlane.f32.xlu0 %v2397
    %v2399 = vpop.xlane.xlu0 %2398
    %vm2400 = vcmask 521216
    %v2401 = vsel %vm2400, %v2394, 0.0
    %2402 = vadd.xlane.f32.xlu0 %v2401
    %v2403 = vpop.xlane.xlu0 %2402
    %v2404 = vrcp.pop 64.0
    %v2405 = vmul.f32 %v2399, %v2404
    %v2406 = vmul.f32 %v2403, %v2404
    %v2407 = vsub.f32 %v2393, %v2405
    %v2408 = vsub.f32 %v2394, %v2406
    %v2409 = vmul.f32 %v2407, %v2407
    %v2410 = vmul.f32 %v2408, %v2408
    %v2411 = vsel %vm451, %v2409, 0.0
    %2412 = vadd.xlane.f32.xlu0 %v2411
    %v2413 = vpop.xlane.xlu0 %2412
    %v2414 = vsel %vm2400, %v2410, 0.0
    %2415 = vadd.xlane.f32.xlu0 %v2414
    %v2416 = vpop.xlane.xlu0 %2415
    %v2417 = vmul.f32 %v2413, %v2404
    %v2418 = vmul.f32 %v2416, %v2404
    %v2419 = vadd.f32 %v2417, 1e-05
    %v2420 = vadd.f32 %v2418, 1e-05
    %v2421 = vrsqrt.pop %v2419
    %v2422 = vrsqrt.pop %v2420
    %v2423 = vmul.f32 %v2407, %v2421
    %v2424 = vmul.f32 %v2408, %v2422
    %v2426 = vlaneseq
    %v2427 = vshrl.u32 %v2426, 7
    %v2428 = vsub.s32 0, %v2427
    %v2429 = vrot.slane %v2395, %v2428
    %v2431 = vmul.f32 %v2423, %v2429
    %v2432 = vmul.f32 %v2424, %v2429
    %v2434 = vlaneseq
    %v2435 = vshrl.u32 %v2434, 7
    %v2436 = vsub.s32 0, %v2435
    %v2437 = vrot.slane %v2396, %v2436
    %v2439 = vadd.f32 %v2431, %v2437
    %v2440 = vadd.f32 %v2432, %v2437
    %v2441 = vld [vmem:[%s29] sm:$0xff]
    %v2442 = vld [vmem:[%s29 + $0x8] sm:$0xff]
    %v2443 = vld [vmem:[%s29 + $0x10] sm:$0xff]
    %v2444 = vld [vmem:[%s29 + $0x18] sm:$0xff]
    %v2445 = vld [vmem:[%s29 + $0x20] sm:$0xff]
    %v2446 = vld [vmem:[%s29 + $0x28] sm:$0xff]
    %v2447 = vld [vmem:[%s29 + $0x30] sm:$0xff]
    %v2448 = vld [vmem:[%s29 + $0x38] sm:$0xff]
    %v2449 = vld [vmem:[%s29 + $0x40] sm:$0xff]
    %v2450 = vld [vmem:[%s29 + $0x48] sm:$0xff]
    %v2451 = vld [vmem:[%s29 + $0x50] sm:$0xff]
    %v2452 = vld [vmem:[%s29 + $0x58] sm:$0xff]
    %v2453 = vld [vmem:[%s29 + $0x60] sm:$0xff]
    %v2454 = vld [vmem:[%s29 + $0x68] sm:$0xff]
    %v2455 = vld [vmem:[%s29 + $0x70] sm:$0xff]
    %v2456 = vld [vmem:[%s29 + $0x78] sm:$0xff]
    %v2457 = vld [vmem:[#allocation19] sm:$0x3]
    %v2459 = vlaneseq
    %v2460 = vshrl.u32 %v2459, 7
    %v2461 = vsub.s32 0, %v2460
    %v2462 = vrot.slane %v2457, %v2461
    %v2463 = vlaneseq
    %v2464 = vshrl.u32 %v2463, 7
    %v2465 = vsub.s32 1, %v2464
    %v2466 = vrot.slane %v2457, %v2465
    %v2470 = vsel %vm451, %v2439, 0
    %v2473 = vsel %vm451, %v2440, 0
    %2475 = vmatprep.subr.mxu0 %v2442
    %2476 = vmatpush1.msra.mxu0 %v2441
    %2477 = vmatprep.subr.mxu0 %v2444
    %2478 = vmatpush1.msra.mxu0 %v2443
    %2479 = vmatprep.subr.mxu0 %v2446
    %2480 = vmatpush1.msra.mxu0 %v2445
    %2481 = vmatprep.subr.mxu0 %v2448
    %2482 = vmatpush1.msra.mxu0 %v2447
    %2483 = vmatprep.subr.mxu0 %v2450
    %2484 = vmatpush1.msra.mxu0 %v2449
    %2485 = vmatprep.subr.mxu0 %v2452
    %2486 = vmatpush1.msra.mxu0 %v2451
    %2487 = vmatprep.subr.mxu0 %v2454
    %2488 = vmatpush1.msra.mxu0 %v2453
    %2489 = vmatprep.subr.mxu0 %v2456
    %2490 = vmatpush1.msra.mxu0 %v2455
    %2491 = vmatprep.subr.mxu0 0.0
    %2492 = vmatpush1.msra.mxu0 0.0
    %2493 = vmatprep.subr.mxu0 0.0
    %2494 = vmatpush1.msra.mxu0 0.0
    %2495 = vmatprep.subr.mxu0 0.0
    %2496 = vmatpush1.msra.mxu0 0.0
    %2497 = vmatprep.subr.mxu0 0.0
    %2498 = vmatpush1.msra.mxu0 0.0
    %2499 = vmatprep.subr.mxu0 0.0
    %2500 = vmatpush1.msra.mxu0 0.0
    %2501 = vmatprep.subr.mxu0 0.0
    %2502 = vmatpush1.msra.mxu0 0.0
    %2503 = vmatprep.subr.mxu0 0.0
    %2504 = vmatpush1.msra.mxu0 0.0
    %2505 = vmatprep.subr.mxu0 0.0
    %2506 = vmatpush1.msra.mxu0 0.0
    %2507 = vmatprep.subr.mxu0 0.0
    %2508 = vmatpush1.msra.mxu0 0.0
    %2509 = vmatprep.subr.mxu0 0.0
    %2510 = vmatpush1.msra.mxu0 0.0
    %2511 = vmatprep.subr.mxu0 0.0
    %2512 = vmatpush1.msra.mxu0 0.0
    %2513 = vmatprep.subr.mxu0 0.0
    %2514 = vmatpush1.msra.mxu0 0.0
    %2515 = vmatprep.subr.mxu0 0.0
    %2516 = vmatpush1.msra.mxu0 0.0
    %2517 = vmatprep.subr.mxu0 0.0
    %2518 = vmatpush1.msra.mxu0 0.0
    %2519 = vmatprep.subr.mxu0 0.0
    %2520 = vmatpush1.msra.mxu0 0.0
    %2521 = vmatprep.subr.mxu0 0.0
    %2522 = vmatpush1.msra.mxu0 0.0
    %2523 = vmatprep.subr.mxu0 0.0
    %2524 = vmatpush1.msra.mxu0 0.0
    %2525 = vmatprep.subr.mxu0 0.0
    %2526 = vmatpush1.msra.mxu0 0.0
    %2527 = vmatprep.subr.mxu0 0.0
    %2528 = vmatpush1.msra.mxu0 0.0
    %2529 = vmatprep.subr.mxu0 0.0
    %2530 = vmatpush1.msra.mxu0 0.0
    %2531 = vmatprep.subr.mxu0 0.0
    %2532 = vmatpush1.msra.mxu0 0.0
    %2533 = vmatprep.subr.mxu0 0.0
    %2534 = vmatpush1.msra.mxu0 0.0
    %2535 = vmatprep.subr.mxu0 0.0
    %2536 = vmatpush1.msra.mxu0 0.0
    %2537 = vmatprep.subr.mxu0 0.0
    %2538 = vmatpush1.msra.mxu0 0.0
    %2539 = vmatprep.mubr.f32.mxu0 0.0
    %2540 = vmatmul.mubr.f32.gmra.mrb[0].mxu0 %v2470
    %v2541 = vpop.f32.mrb[0].mxu0
    %v2542 = vadd.f32 %v2462, %v2541
    %v2543 = vpop.f32.mrb[0].mxu0
    %v2544 = vadd.f32 %v2466, %v2543
    %2545 = vmatprep.mubr.f32.mxu0 0.0
    %2546 = vmatmul.mubr.f32.gmra.mrb[0].mxu0 %v2473
    %v2547 = vpop.f32.mrb[0].mxu0
    %v2548 = vadd.f32 %v2462, %v2547
    %v2549 = vpop.f32.mrb[0].mxu0
    %v2550 = vadd.f32 %v2466, %v2549
    %2551 = vdwg.mxu0
    %v2552 = vmax.f32 %v2542, 0.0
    %v2553 = vmax.f32 %v2544, 0.0
    %v2554 = vmax.f32 %v2548, 0.0
    %v2555 = vmax.f32 %v2550, 0.0
    %v2556 = vld [vmem:[%s33] sm:$0xff]
    %v2557 = vld [vmem:[%s33 + $0x8] sm:$0xff]
    %v2558 = vld [vmem:[%s33 + $0x10] sm:$0xff]
    %v2559 = vld [vmem:[%s33 + $0x18] sm:$0xff]
    %v2560 = vld [vmem:[%s33 + $0x20] sm:$0xff]
    %v2561 = vld [vmem:[%s33 + $0x28] sm:$0xff]
    %v2562 = vld [vmem:[%s33 + $0x30] sm:$0xff]
    %v2563 = vld [vmem:[%s33 + $0x38] sm:$0xff]
    %v2564 = vld [vmem:[%s33 + $0x40] sm:$0xff]
    %v2565 = vld [vmem:[%s33 + $0x48] sm:$0xff]
    %v2566 = vld [vmem:[%s33 + $0x50] sm:$0xff]
    %v2567 = vld [vmem:[%s33 + $0x58] sm:$0xff]
    %v2568 = vld [vmem:[%s33 + $0x60] sm:$0xff]
    %v2569 = vld [vmem:[%s33 + $0x68] sm:$0xff]
    %v2570 = vld [vmem:[%s33 + $0x70] sm:$0xff]
    %v2571 = vld [vmem:[%s33 + $0x78] sm:$0xff]
    %v2572 = vld [vmem:[%s33 + $0x80] sm:$0xff]
    %v2573 = vld [vmem:[%s33 + $0x88] sm:$0xff]
    %v2574 = vld [vmem:[%s33 + $0x90] sm:$0xff]
    %v2575 = vld [vmem:[%s33 + $0x98] sm:$0xff]
    %v2576 = vld [vmem:[%s33 + $0xa0] sm:$0xff]
    %v2577 = vld [vmem:[%s33 + $0xa8] sm:$0xff]
    %v2578 = vld [vmem:[%s33 + $0xb0] sm:$0xff]
    %v2579 = vld [vmem:[%s33 + $0xb8] sm:$0xff]
    %v2580 = vld [vmem:[%s33 + $0xc0] sm:$0xff]
    %v2581 = vld [vmem:[%s33 + $0xc8] sm:$0xff]
    %v2582 = vld [vmem:[%s33 + $0xd0] sm:$0xff]
    %v2583 = vld [vmem:[%s33 + $0xd8] sm:$0xff]
    %v2584 = vld [vmem:[%s33 + $0xe0] sm:$0xff]
    %v2585 = vld [vmem:[%s33 + $0xe8] sm:$0xff]
    %v2586 = vld [vmem:[%s33 + $0xf0] sm:$0xff]
    %v2587 = vld [vmem:[%s33 + $0xf8] sm:$0xff]
    %v2588 = vld [vmem:[#allocation21] sm:$0x1]
    %v2590 = vlaneseq
    %v2591 = vshrl.u32 %v2590, 7
    %v2592 = vsub.s32 0, %v2591
    %v2593 = vrot.slane %v2588, %v2592
    %2595 = vmatprep.subr.mxu0 0.0
    %2596 = vmatpush1.msra.mxu0 %v2556
    %2597 = vmatprep.subr.mxu0 0.0
    %2598 = vmatpush1.msra.mxu0 %v2557
    %2599 = vmatprep.subr.mxu0 0.0
    %2600 = vmatpush1.msra.mxu0 %v2558
    %2601 = vmatprep.subr.mxu0 0.0
    %2602 = vmatpush1.msra.mxu0 %v2559
    %2603 = vmatprep.subr.mxu0 0.0
    %2604 = vmatpush1.msra.mxu0 %v2560
    %2605 = vmatprep.subr.mxu0 0.0
    %2606 = vmatpush1.msra.mxu0 %v2561
    %2607 = vmatprep.subr.mxu0 0.0
    %2608 = vmatpush1.msra.mxu0 %v2562
    %2609 = vmatprep.subr.mxu0 0.0
    %2610 = vmatpush1.msra.mxu0 %v2563
    %2611 = vmatprep.subr.mxu0 0.0
    %2612 = vmatpush1.msra.mxu0 %v2564
    %2613 = vmatprep.subr.mxu0 0.0
    %2614 = vmatpush1.msra.mxu0 %v2565
    %2615 = vmatprep.subr.mxu0 0.0
    %2616 = vmatpush1.msra.mxu0 %v2566
    %2617 = vmatprep.subr.mxu0 0.0
    %2618 = vmatpush1.msra.mxu0 %v2567
    %2619 = vmatprep.subr.mxu0 0.0
    %2620 = vmatpush1.msra.mxu0 %v2568
    %2621 = vmatprep.subr.mxu0 0.0
    %2622 = vmatpush1.msra.mxu0 %v2569
    %2623 = vmatprep.subr.mxu0 0.0
    %2624 = vmatpush1.msra.mxu0 %v2570
    %2625 = vmatprep.subr.mxu0 0.0
    %2626 = vmatpush1.msra.mxu0 %v2571
    %2627 = vmatprep.subr.mxu0 0.0
    %2628 = vmatpush1.msra.mxu0 %v2572
    %2629 = vmatprep.subr.mxu0 0.0
    %2630 = vmatpush1.msra.mxu0 %v2573
    %2631 = vmatprep.subr.mxu0 0.0
    %2632 = vmatpush1.msra.mxu0 %v2574
    %2633 = vmatprep.subr.mxu0 0.0
    %2634 = vmatpush1.msra.mxu0 %v2575
    %2635 = vmatprep.subr.mxu0 0.0
    %2636 = vmatpush1.msra.mxu0 %v2576
    %2637 = vmatprep.subr.mxu0 0.0
    %2638 = vmatpush1.msra.mxu0 %v2577
    %2639 = vmatprep.subr.mxu0 0.0
    %2640 = vmatpush1.msra.mxu0 %v2578
    %2641 = vmatprep.subr.mxu0 0.0
    %2642 = vmatpush1.msra.mxu0 %v2579
    %2643 = vmatprep.subr.mxu0 0.0
    %2644 = vmatpush1.msra.mxu0 %v2580
    %2645 = vmatprep.subr.mxu0 0.0
    %2646 = vmatpush1.msra.mxu0 %v2581
    %2647 = vmatprep.subr.mxu0 0.0
    %2648 = vmatpush1.msra.mxu0 %v2582
    %2649 = vmatprep.subr.mxu0 0.0
    %2650 = vmatpush1.msra.mxu0 %v2583
    %2651 = vmatprep.subr.mxu0 0.0
    %2652 = vmatpush1.msra.mxu0 %v2584
    %2653 = vmatprep.subr.mxu0 0.0
    %2654 = vmatpush1.msra.mxu0 %v2585
    %2655 = vmatprep.subr.mxu0 0.0
    %2656 = vmatpush1.msra.mxu0 %v2586
    %2657 = vmatprep.subr.mxu0 0.0
    %2658 = vmatpush1.msra.mxu0 %v2587
    %2659 = vmatprep.mubr.f32.mxu0 %v2553
    %2660 = vmatmul.mubr.f32.gmra.mrb[0].mxu0 %v2552
    %v2661 = vpop.f32.mrb[0].mxu0
    %v2662 = vadd.f32 %v2593, %v2661
    %v2663 = vpop.f32.mrb[0].mxu0
    %2664 = vmatprep.mubr.f32.mxu0 %v2555
    %2665 = vmatmul.mubr.f32.gmra.mrb[0].mxu0 %v2554
    %v2666 = vpop.f32.mrb[0].mxu0
    %v2667 = vadd.f32 %v2593, %v2666
    %v2668 = vpop.f32.mrb[0].mxu0
    %2669 = vdwg.mxu0
    %v2670 = vadd.f32 %v2439, %v2662
    %v2671 = vadd.f32 %v2440, %v2667
    %v2672 = vld [vmem:[#allocation22] sm:$0x1]
    %v2673 = vld [vmem:[#allocation24] sm:$0x1]
    %v2674 = vsel %vm451, %v2670, 0.0
    %2675 = vadd.xlane.f32.xlu0 %v2674
    %v2676 = vpop.xlane.xlu0 %2675
    %v2677 = vsel %vm2400, %v2671, 0.0
    %2678 = vadd.xlane.f32.xlu0 %v2677
    %v2679 = vpop.xlane.xlu0 %2678
    %v2680 = vmul.f32 %v2676, %v2404
    %v2681 = vmul.f32 %v2679, %v2404
    %v2682 = vsub.f32 %v2670, %v2680
    %v2683 = vsub.f32 %v2671, %v2681
    %v2684 = vmul.f32 %v2682, %v2682
    %v2685 = vmul.f32 %v2683, %v2683
    %v2686 = vsel %vm451, %v2684, 0.0
    %2687 = vadd.xlane.f32.xlu0 %v2686
    %v2688 = vpop.xlane.xlu0 %2687
    %v2689 = vsel %vm2400, %v2685, 0.0
    %2690 = vadd.xlane.f32.xlu0 %v2689
    %v2691 = vpop.xlane.xlu0 %2690
    %v2692 = vmul.f32 %v2688, %v2404
    %v2693 = vmul.f32 %v2691, %v2404
    %v2694 = vadd.f32 %v2692, 1e-05
    %v2695 = vadd.f32 %v2693, 1e-05
    %v2696 = vrsqrt.pop %v2694
    %v2697 = vrsqrt.pop %v2695
    %v2698 = vmul.f32 %v2682, %v2696
    %v2699 = vmul.f32 %v2683, %v2697
    %v2701 = vlaneseq
    %v2702 = vshrl.u32 %v2701, 7
    %v2703 = vsub.s32 0, %v2702
    %v2704 = vrot.slane %v2672, %v2703
    %v2706 = vmul.f32 %v2698, %v2704
    %v2707 = vmul.f32 %v2699, %v2704
    %v2709 = vlaneseq
    %v2710 = vshrl.u32 %v2709, 7
    %v2711 = vsub.s32 0, %v2710
    %v2712 = vrot.slane %v2673, %v2711
    %v2714 = vadd.f32 %v2706, %v2712
    %v2715 = vadd.f32 %v2707, %v2712
    %s2716 = scalar_lea.vmem %s17, 192
    %v2717 = vld [vmem:[%s2716] sm:$0xff]
    %v2718 = vld [vmem:[%s2716 + $0x8] sm:$0xff]
    %v2719 = vld [vmem:[%s2716 + $0x10] sm:$0xff]
    %v2720 = vld [vmem:[%s2716 + $0x18] sm:$0xff]
    %v2721 = vld [vmem:[%s2716 + $0x20] sm:$0xff]
    %v2722 = vld [vmem:[%s2716 + $0x28] sm:$0xff]
    %v2723 = vld [vmem:[%s2716 + $0x30] sm:$0xff]
    %v2724 = vld [vmem:[%s2716 + $0x38] sm:$0xff]
    %s2725 = scalar_lea.vmem %s19, 3
    %v2726 = vld [vmem:[%s2725] sm:$0x1]
    %v2728 = vlaneseq
    %v2729 = vshrl.u32 %v2728, 7
    %v2730 = vsub.s32 0, %v2729
    %v2731 = vrot.slane %v2726, %v2730
    %v2734 = vsel %vm451, %v2714, 0
    %v2737 = vsel %vm451, %v2715, 0
    %2739 = vmatprep.subr.mxu0 0.0
    %2740 = vmatpush1.msra.mxu0 %v2717
    %2741 = vmatprep.subr.mxu0 0.0
    %2742 = vmatpush1.msra.mxu0 %v2718
    %2743 = vmatprep.subr.mxu0 0.0
    %2744 = vmatpush1.msra.mxu0 %v2719
    %2745 = vmatprep.subr.mxu0 0.0
    %2746 = vmatpush1.msra.mxu0 %v2720
    %2747 = vmatprep.subr.mxu0 0.0
    %2748 = vmatpush1.msra.mxu0 %v2721
    %2749 = vmatprep.subr.mxu0 0.0
    %2750 = vmatpush1.msra.mxu0 %v2722
    %2751 = vmatprep.subr.mxu0 0.0
    %2752 = vmatpush1.msra.mxu0 %v2723
    %2753 = vmatprep.subr.mxu0 0.0
    %2754 = vmatpush1.msra.mxu0 %v2724
    %2755 = vmatprep.subr.mxu0 0.0
    %2756 = vmatpush1.msra.mxu0 0.0
    %2757 = vmatprep.subr.mxu0 0.0
    %2758 = vmatpush1.msra.mxu0 0.0
    %2759 = vmatprep.subr.mxu0 0.0
    %2760 = vmatpush1.msra.mxu0 0.0
    %2761 = vmatprep.subr.mxu0 0.0
    %2762 = vmatpush1.msra.mxu0 0.0
    %2763 = vmatprep.subr.mxu0 0.0
    %2764 = vmatpush1.msra.mxu0 0.0
    %2765 = vmatprep.subr.mxu0 0.0
    %2766 = vmatpush1.msra.mxu0 0.0
    %2767 = vmatprep.subr.mxu0 0.0
    %2768 = vmatpush1.msra.mxu0 0.0
    %2769 = vmatprep.subr.mxu0 0.0
    %2770 = vmatpush1.msra.mxu0 0.0
    %2771 = vmatprep.subr.mxu0 0.0
    %2772 = vmatpush1.msra.mxu0 0.0
    %2773 = vmatprep.subr.mxu0 0.0
    %2774 = vmatpush1.msra.mxu0 0.0
    %2775 = vmatprep.subr.mxu0 0.0
    %2776 = vmatpush1.msra.mxu0 0.0
    %2777 = vmatprep.subr.mxu0 0.0
    %2778 = vmatpush1.msra.mxu0 0.0
    %2779 = vmatprep.subr.mxu0 0.0
    %2780 = vmatpush1.msra.mxu0 0.0
    %2781 = vmatprep.subr.mxu0 0.0
    %2782 = vmatpush1.msra.mxu0 0.0
    %2783 = vmatprep.subr.mxu0 0.0
    %2784 = vmatpush1.msra.mxu0 0.0
    %2785 = vmatprep.subr.mxu0 0.0
    %2786 = vmatpush1.msra.mxu0 0.0
    %2787 = vmatprep.subr.mxu0 0.0
    %2788 = vmatpush1.msra.mxu0 0.0
    %2789 = vmatprep.subr.mxu0 0.0
    %2790 = vmatpush1.msra.mxu0 0.0
    %2791 = vmatprep.subr.mxu0 0.0
    %2792 = vmatpush1.msra.mxu0 0.0
    %2793 = vmatprep.subr.mxu0 0.0
    %2794 = vmatpush1.msra.mxu0 0.0
    %2795 = vmatprep.subr.mxu0 0.0
    %2796 = vmatpush1.msra.mxu0 0.0
    %2797 = vmatprep.subr.mxu0 0.0
    %2798 = vmatpush1.msra.mxu0 0.0
    %2799 = vmatprep.subr.mxu0 0.0
    %2800 = vmatpush1.msra.mxu0 0.0
    %2801 = vmatprep.subr.mxu0 0.0
    %2802 = vmatpush1.msra.mxu0 0.0
    %2803 = vmatprep.mubr.f32.mxu0 0.0
    %2804 = vmatmul.mubr.f32.gmra.mrb[0].mxu0 %v2734
    %v2805 = vpop.f32.mrb[0].mxu0
    %v2806 = vadd.f32 %v2731, %v2805
    %v2807 = vpop.f32.mrb[0].mxu0
    %2808 = vmatprep.mubr.f32.mxu0 0.0
    %2809 = vmatmul.mubr.f32.gmra.mrb[0].mxu0 %v2737
    %v2810 = vpop.f32.mrb[0].mxu0
    %v2811 = vadd.f32 %v2731, %v2810
    %v2812 = vpop.f32.mrb[0].mxu0
    %2813 = vdwg.mxu0
    %s2814 = scalar_lea.vmem %s17, 256
    %v2815 = vld [vmem:[%s2814] sm:$0xff]
    %v2816 = vld [vmem:[%s2814 + $0x8] sm:$0xff]
    %v2817 = vld [vmem:[%s2814 + $0x10] sm:$0xff]
    %v2818 = vld [vmem:[%s2814 + $0x18] sm:$0xff]
    %v2819 = vld [vmem:[%s2814 + $0x20] sm:$0xff]
    %v2820 = vld [vmem:[%s2814 + $0x28] sm:$0xff]
    %v2821 = vld [vmem:[%s2814 + $0x30] sm:$0xff]
    %v2822 = vld [vmem:[%s2814 + $0x38] sm:$0xff]
    %s2823 = scalar_lea.vmem %s19, 4
    %v2824 = vld [vmem:[%s2823] sm:$0x1]
    %v2826 = vlaneseq
    %v2827 = vshrl.u32 %v2826, 7
    %v2828 = vsub.s32 0, %v2827
    %v2829 = vrot.slane %v2824, %v2828
    %2831 = vmatprep.subr.mxu0 0.0
    %2832 = vmatpush1.msra.mxu0 %v2815
    %2833 = vmatprep.subr.mxu0 0.0
    %2834 = vmatpush1.msra.mxu0 %v2816
    %2835 = vmatprep.subr.mxu0 0.0
    %2836 = vmatpush1.msra.mxu0 %v2817
    %2837 = vmatprep.subr.mxu0 0.0
    %2838 = vmatpush1.msra.mxu0 %v2818
    %2839 = vmatprep.subr.mxu0 0.0
    %2840 = vmatpush1.msra.mxu0 %v2819
    %2841 = vmatprep.subr.mxu0 0.0
    %2842 = vmatpush1.msra.mxu0 %v2820
    %2843 = vmatprep.subr.mxu0 0.0
    %2844 = vmatpush1.msra.mxu0 %v2821
    %2845 = vmatprep.subr.mxu0 0.0
    %2846 = vmatpush1.msra.mxu0 %v2822
    %2847 = vmatprep.subr.mxu0 0.0
    %2848 = vmatpush1.msra.mxu0 0.0
    %2849 = vmatprep.subr.mxu0 0.0
    %2850 = vmatpush1.msra.mxu0 0.0
    %2851 = vmatprep.subr.mxu0 0.0
    %2852 = vmatpush1.msra.mxu0 0.0
    %2853 = vmatprep.subr.mxu0 0.0
    %2854 = vmatpush1.msra.mxu0 0.0
    %2855 = vmatprep.subr.mxu0 0.0
    %2856 = vmatpush1.msra.mxu0 0.0
    %2857 = vmatprep.subr.mxu0 0.0
    %2858 = vmatpush1.msra.mxu0 0.0
    %2859 = vmatprep.subr.mxu0 0.0
    %2860 = vmatpush1.msra.mxu0 0.0
    %2861 = vmatprep.subr.mxu0 0.0
    %2862 = vmatpush1.msra.mxu0 0.0
    %2863 = vmatprep.subr.mxu0 0.0
    %2864 = vmatpush1.msra.mxu0 0.0
    %2865 = vmatprep.subr.mxu0 0.0
    %2866 = vmatpush1.msra.mxu0 0.0
    %2867 = vmatprep.subr.mxu0 0.0
    %2868 = vmatpush1.msra.mxu0 0.0
    %2869 = vmatprep.subr.mxu0 0.0
    %2870 = vmatpush1.msra.mxu0 0.0
    %2871 = vmatprep.subr.mxu0 0.0
    %2872 = vmatpush1.msra.mxu0 0.0
    %2873 = vmatprep.subr.mxu0 0.0
    %2874 = vmatpush1.msra.mxu0 0.0
    %2875 = vmatprep.subr.mxu0 0.0
    %2876 = vmatpush1.msra.mxu0 0.0
    %2877 = vmatprep.subr.mxu0 0.0
    %2878 = vmatpush1.msra.mxu0 0.0
    %2879 = vmatprep.subr.mxu0 0.0
    %2880 = vmatpush1.msra.mxu0 0.0
    %2881 = vmatprep.subr.mxu0 0.0
    %2882 = vmatpush1.msra.mxu0 0.0
    %2883 = vmatprep.subr.mxu0 0.0
    %2884 = vmatpush1.msra.mxu0 0.0
    %2885 = vmatprep.subr.mxu0 0.0
    %2886 = vmatpush1.msra.mxu0 0.0
    %2887 = vmatprep.subr.mxu0 0.0
    %2888 = vmatpush1.msra.mxu0 0.0
    %2889 = vmatprep.subr.mxu0 0.0
    %2890 = vmatpush1.msra.mxu0 0.0
    %2891 = vmatprep.subr.mxu0 0.0
    %2892 = vmatpush1.msra.mxu0 0.0
    %2893 = vmatprep.subr.mxu0 0.0
    %2894 = vmatpush1.msra.mxu0 0.0
    %2895 = vmatprep.mubr.f32.mxu0 0.0
    %2896 = vmatmul.mubr.f32.gmra.mrb[0].mxu0 %v2734
    %v2897 = vpop.f32.mrb[0].mxu0
    %v2898 = vadd.f32 %v2829, %v2897
    %v2899 = vpop.f32.mrb[0].mxu0
    %2900 = vmatprep.mubr.f32.mxu0 0.0
    %2901 = vmatmul.mubr.f32.gmra.mrb[0].mxu0 %v2737
    %v2902 = vpop.f32.mrb[0].mxu0
    %v2903 = vadd.f32 %v2829, %v2902
    %v2904 = vpop.f32.mrb[0].mxu0
    %2905 = vdwg.mxu0
    %s2906 = scalar_lea.vmem %s17, 320
    %v2907 = vld [vmem:[%s2906] sm:$0xff]
    %v2908 = vld [vmem:[%s2906 + $0x8] sm:$0xff]
    %v2909 = vld [vmem:[%s2906 + $0x10] sm:$0xff]
    %v2910 = vld [vmem:[%s2906 + $0x18] sm:$0xff]
    %v2911 = vld [vmem:[%s2906 + $0x20] sm:$0xff]
    %v2912 = vld [vmem:[%s2906 + $0x28] sm:$0xff]
    %v2913 = vld [vmem:[%s2906 + $0x30] sm:$0xff]
    %v2914 = vld [vmem:[%s2906 + $0x38] sm:$0xff]
    %s2915 = scalar_lea.vmem %s19, 5
    %v2916 = vld [vmem:[%s2915] sm:$0x1]
    %v2918 = vlaneseq
    %v2919 = vshrl.u32 %v2918, 7
    %v2920 = vsub.s32 0, %v2919
    %v2921 = vrot.slane %v2916, %v2920
    %2923 = vmatprep.subr.mxu0 0.0
    %2924 = vmatpush1.msra.mxu0 %v2907
    %2925 = vmatprep.subr.mxu0 0.0
    %2926 = vmatpush1.msra.mxu0 %v2908
    %2927 = vmatprep.subr.mxu0 0.0
    %2928 = vmatpush1.msra.mxu0 %v2909
    %2929 = vmatprep.subr.mxu0 0.0
    %2930 = vmatpush1.msra.mxu0 %v2910
    %2931 = vmatprep.subr.mxu0 0.0
    %2932 = vmatpush1.msra.mxu0 %v2911
    %2933 = vmatprep.subr.mxu0 0.0
    %2934 = vmatpush1.msra.mxu0 %v2912
    %2935 = vmatprep.subr.mxu0 0.0
    %2936 = vmatpush1.msra.mxu0 %v2913
    %2937 = vmatprep.subr.mxu0 0.0
    %2938 = vmatpush1.msra.mxu0 %v2914
    %2939 = vmatprep.subr.mxu0 0.0
    %2940 = vmatpush1.msra.mxu0 0.0
    %2941 = vmatprep.subr.mxu0 0.0
    %2942 = vmatpush1.msra.mxu0 0.0
    %2943 = vmatprep.subr.mxu0 0.0
    %2944 = vmatpush1.msra.mxu0 0.0
    %2945 = vmatprep.subr.mxu0 0.0
    %2946 = vmatpush1.msra.mxu0 0.0
    %2947 = vmatprep.subr.mxu0 0.0
    %2948 = vmatpush1.msra.mxu0 0.0
    %2949 = vmatprep.subr.mxu0 0.0
    %2950 = vmatpush1.msra.mxu0 0.0
    %2951 = vmatprep.subr.mxu0 0.0
    %2952 = vmatpush1.msra.mxu0 0.0
    %2953 = vmatprep.subr.mxu0 0.0
    %2954 = vmatpush1.msra.mxu0 0.0
    %2955 = vmatprep.subr.mxu0 0.0
    %2956 = vmatpush1.msra.mxu0 0.0
    %2957 = vmatprep.subr.mxu0 0.0
    %2958 = vmatpush1.msra.mxu0 0.0
    %2959 = vmatprep.subr.mxu0 0.0
    %2960 = vmatpush1.msra.mxu0 0.0
    %2961 = vmatprep.subr.mxu0 0.0
    %2962 = vmatpush1.msra.mxu0 0.0
    %2963 = vmatprep.subr.mxu0 0.0
    %2964 = vmatpush1.msra.mxu0 0.0
    %2965 = vmatprep.subr.mxu0 0.0
    %2966 = vmatpush1.msra.mxu0 0.0
    %2967 = vmatprep.subr.mxu0 0.0
    %2968 = vmatpush1.msra.mxu0 0.0
    %2969 = vmatprep.subr.mxu0 0.0
    %2970 = vmatpush1.msra.mxu0 0.0
    %2971 = vmatprep.subr.mxu0 0.0
    %2972 = vmatpush1.msra.mxu0 0.0
    %2973 = vmatprep.subr.mxu0 0.0
    %2974 = vmatpush1.msra.mxu0 0.0
    %2975 = vmatprep.subr.mxu0 0.0
    %2976 = vmatpush1.msra.mxu0 0.0
    %2977 = vmatprep.subr.mxu0 0.0
    %2978 = vmatpush1.msra.mxu0 0.0
    %2979 = vmatprep.subr.mxu0 0.0
    %2980 = vmatpush1.msra.mxu0 0.0
    %2981 = vmatprep.subr.mxu0 0.0
    %2982 = vmatpush1.msra.mxu0 0.0
    %2983 = vmatprep.subr.mxu0 0.0
    %2984 = vmatpush1.msra.mxu0 0.0
    %2985 = vmatprep.subr.mxu0 0.0
    %2986 = vmatpush1.msra.mxu0 0.0
    %2987 = vmatprep.mubr.f32.mxu0 0.0
    %2988 = vmatmul.mubr.f32.gmra.mrb[0].mxu0 %v2734
    %v2989 = vpop.f32.mrb[0].mxu0
    %v2990 = vadd.f32 %v2921, %v2989
    %v2991 = vpop.f32.mrb[0].mxu0
    %2992 = vmatprep.mubr.f32.mxu0 0.0
    %2993 = vmatmul.mubr.f32.gmra.mrb[0].mxu0 %v2737
    %v2994 = vpop.f32.mrb[0].mxu0
    %v2995 = vadd.f32 %v2921, %v2994
    %v2996 = vpop.f32.mrb[0].mxu0
    %2997 = vdwg.mxu0
    %v2999 = vsel %vm919, %v2806, 0
    %v3002 = vsel %vm919, %v2898, 0
    %3004 = vmatprep.subr.mxu0 0.0
    %3005 = vmatpush1.xpose.msra.mxu0 %v3002
    %3006 = vmatprep.subr.mxu0 0.0
    %3007 = vmatpush1.xpose.msra.mxu0 0.0
    %3008 = vmatprep.subr.mxu0 0.0
    %3009 = vmatpush1.xpose.msra.mxu0 0.0
    %3010 = vmatprep.subr.mxu0 0.0
    %3011 = vmatpush1.xpose.msra.mxu0 0.0
    %3012 = vmatprep.subr.mxu0 0.0
    %3013 = vmatpush1.xpose.msra.mxu0 0.0
    %3014 = vmatprep.subr.mxu0 0.0
    %3015 = vmatpush1.xpose.msra.mxu0 0.0
    %3016 = vmatprep.subr.mxu0 0.0
    %3017 = vmatpush1.xpose.msra.mxu0 0.0
    %3018 = vmatprep.subr.mxu0 0.0
    %3019 = vmatpush1.xpose.msra.mxu0 0.0
    %3020 = vmatprep.subr.mxu0 0.0
    %3021 = vmatpush1.xpose.msra.mxu0 0.0
    %3022 = vmatprep.subr.mxu0 0.0
    %3023 = vmatpush1.xpose.msra.mxu0 0.0
    %3024 = vmatprep.subr.mxu0 0.0
    %3025 = vmatpush1.xpose.msra.mxu0 0.0
    %3026 = vmatprep.subr.mxu0 0.0
    %3027 = vmatpush1.xpose.msra.mxu0 0.0
    %3028 = vmatprep.subr.mxu0 0.0
    %3029 = vmatpush1.xpose.msra.mxu0 0.0
    %3030 = vmatprep.subr.mxu0 0.0
    %3031 = vmatpush1.xpose.msra.mxu0 0.0
    %3032 = vmatprep.subr.mxu0 0.0
    %3033 = vmatpush1.xpose.msra.mxu0 0.0
    %3034 = vmatprep.subr.mxu0 0.0
    %3035 = vmatpush1.xpose.msra.mxu0 0.0
    %3036 = vmatprep.subr.mxu0 0.0
    %3037 = vmatpush1.xpose.msra.mxu0 0.0
    %3038 = vmatprep.subr.mxu0 0.0
    %3039 = vmatpush1.xpose.msra.mxu0 0.0
    %3040 = vmatprep.subr.mxu0 0.0
    %3041 = vmatpush1.xpose.msra.mxu0 0.0
    %3042 = vmatprep.subr.mxu0 0.0
    %3043 = vmatpush1.xpose.msra.mxu0 0.0
    %3044 = vmatprep.subr.mxu0 0.0
    %3045 = vmatpush1.xpose.msra.mxu0 0.0
    %3046 = vmatprep.subr.mxu0 0.0
    %3047 = vmatpush1.xpose.msra.mxu0 0.0
    %3048 = vmatprep.subr.mxu0 0.0
    %3049 = vmatpush1.xpose.msra.mxu0 0.0
    %3050 = vmatprep.subr.mxu0 0.0
    %3051 = vmatpush1.xpose.msra.mxu0 0.0
    %3052 = vmatprep.subr.mxu0 0.0
    %3053 = vmatpush1.xpose.msra.mxu0 0.0
    %3054 = vmatprep.subr.mxu0 0.0
    %3055 = vmatpush1.xpose.msra.mxu0 0.0
    %3056 = vmatprep.subr.mxu0 0.0
    %3057 = vmatpush1.xpose.msra.mxu0 0.0
    %3058 = vmatprep.subr.mxu0 0.0
    %3059 = vmatpush1.xpose.msra.mxu0 0.0
    %3060 = vmatprep.subr.mxu0 0.0
    %3061 = vmatpush1.xpose.msra.mxu0 0.0
    %3062 = vmatprep.subr.mxu0 0.0
    %3063 = vmatpush1.xpose.msra.mxu0 0.0
    %3064 = vmatprep.subr.mxu0 0.0
    %3065 = vmatpush1.xpose.msra.mxu0 0.0
    %3066 = vmatprep.subr.mxu0 0.0
    %3067 = vmatpush1.xpose.msra.mxu0 0.0
    %3068 = vmatprep.mubr.f32.mxu0 0.0
    %3069 = vmatmul.mubr.f32.gmra.mrb[0].mxu0 %v2999
    %v3070 = vpop.f32.mrb[0].mxu0
    %v3071 = vadd.f32 0.0, %v3070
    %v3072 = vpop.f32.mrb[0].mxu0
    %3073 = vdwg.mxu0
    %v3074 = vmul.f32 %v3071, 0.25
    %v3075 = vsel %vm997, %v3074, -inf
    %3076 = vmax.xlane.f32.xlu0 %v3075
    %v3077 = vpop.xlane.xlu0 %3076
    %v3078 = vsub.f32 %v3074, %v3077
    %v3079 = vmul.f32 %v3078, 1.442695
    %v3080 = vpow.pop %v3079
    %v3081 = vsel %vm997, %v3080, 0.0
    %3082 = vadd.xlane.f32.xlu0 %v3081
    %v3083 = vpop.xlane.xlu0 %3082
    %v3084 = vrcp.pop %v3083
    %v3085 = vmul.f32 %v3080, %v3084
    %v3087 = vsel %vm1009, %v3085, 0
    %v3090 = vsel %vm635, %v2990, 0
    %3092 = vmatprep.subr.mxu0 0.0
    %3093 = vmatpush1.msra.mxu0 %v3090
    %3094 = vmatprep.subr.mxu0 0.0
    %3095 = vmatpush1.msra.mxu0 0.0
    %3096 = vmatprep.subr.mxu0 0.0
    %3097 = vmatpush1.msra.mxu0 0.0
    %3098 = vmatprep.subr.mxu0 0.0
    %3099 = vmatpush1.msra.mxu0 0.0
    %3100 = vmatprep.subr.mxu0 0.0
    %3101 = vmatpush1.msra.mxu0 0.0
    %3102 = vmatprep.subr.mxu0 0.0
    %3103 = vmatpush1.msra.mxu0 0.0
    %3104 = vmatprep.subr.mxu0 0.0
    %3105 = vmatpush1.msra.mxu0 0.0
    %3106 = vmatprep.subr.mxu0 0.0
    %3107 = vmatpush1.msra.mxu0 0.0
    %3108 = vmatprep.subr.mxu0 0.0
    %3109 = vmatpush1.msra.mxu0 0.0
    %3110 = vmatprep.subr.mxu0 0.0
    %3111 = vmatpush1.msra.mxu0 0.0
    %3112 = vmatprep.subr.mxu0 0.0
    %3113 = vmatpush1.msra.mxu0 0.0
    %3114 = vmatprep.subr.mxu0 0.0
    %3115 = vmatpush1.msra.mxu0 0.0
    %3116 = vmatprep.subr.mxu0 0.0
    %3117 = vmatpush1.msra.mxu0 0.0
    %3118 = vmatprep.subr.mxu0 0.0
    %3119 = vmatpush1.msra.mxu0 0.0
    %3120 = vmatprep.subr.mxu0 0.0
    %3121 = vmatpush1.msra.mxu0 0.0
    %3122 = vmatprep.subr.mxu0 0.0
    %3123 = vmatpush1.msra.mxu0 0.0
    %3124 = vmatprep.subr.mxu0 0.0
    %3125 = vmatpush1.msra.mxu0 0.0
    %3126 = vmatprep.subr.mxu0 0.0
    %3127 = vmatpush1.msra.mxu0 0.0
    %3128 = vmatprep.subr.mxu0 0.0
    %3129 = vmatpush1.msra.mxu0 0.0
    %3130 = vmatprep.subr.mxu0 0.0
    %3131 = vmatpush1.msra.mxu0 0.0
    %3132 = vmatprep.subr.mxu0 0.0
    %3133 = vmatpush1.msra.mxu0 0.0
    %3134 = vmatprep.subr.mxu0 0.0
    %3135 = vmatpush1.msra.mxu0 0.0
    %3136 = vmatprep.subr.mxu0 0.0
    %3137 = vmatpush1.msra.mxu0 0.0
    %3138 = vmatprep.subr.mxu0 0.0
    %3139 = vmatpush1.msra.mxu0 0.0
    %3140 = vmatprep.subr.mxu0 0.0
    %3141 = vmatpush1.msra.mxu0 0.0
    %3142 = vmatprep.subr.mxu0 0.0
    %3143 = vmatpush1.msra.mxu0 0.0
    %3144 = vmatprep.subr.mxu0 0.0
    %3145 = vmatpush1.msra.mxu0 0.0
    %3146 = vmatprep.subr.mxu0 0.0
    %3147 = vmatpush1.msra.mxu0 0.0
    %3148 = vmatprep.subr.mxu0 0.0
    %3149 = vmatpush1.msra.mxu0 0.0
    %3150 = vmatprep.subr.mxu0 0.0
    %3151 = vmatpush1.msra.mxu0 0.0
    %3152 = vmatprep.subr.mxu0 0.0
    %3153 = vmatpush1.msra.mxu0 0.0
    %3154 = vmatprep.subr.mxu0 0.0
    %3155 = vmatpush1.msra.mxu0 0.0
    %3156 = vmatprep.mubr.f32.mxu0 0.0
    %3157 = vmatmul.mubr.f32.gmra.mrb[0].mxu0 %v3087
    %v3158 = vpop.f32.mrb[0].mxu0
    %v3159 = vadd.f32 0.0, %v3158
    %v3160 = vpop.f32.mrb[0].mxu0
    %3161 = vdwg.mxu0
    %3162 = vrot.lane.b32.xlu0 %v2806, 112
    %v3163 = vpop.permute.xlu0 %3162
    %3164 = vrot.lane.b32.xlu0 %v2898, 112
    %v3165 = vpop.permute.xlu0 %3164
    %v3166 = vsel %vm919, %v3163, 0
    %v3168 = vsel %vm919, %v3165, 0
    %3170 = vmatprep.subr.mxu0 0.0
    %3171 = vmatpush1.xpose.msra.mxu0 %v3168
    %3172 = vmatprep.subr.mxu0 0.0
    %3173 = vmatpush1.xpose.msra.mxu0 0.0
    %3174 = vmatprep.subr.mxu0 0.0
    %3175 = vmatpush1.xpose.msra.mxu0 0.0
    %3176 = vmatprep.subr.mxu0 0.0
    %3177 = vmatpush1.xpose.msra.mxu0 0.0
    %3178 = vmatprep.subr.mxu0 0.0
    %3179 = vmatpush1.xpose.msra.mxu0 0.0
    %3180 = vmatprep.subr.mxu0 0.0
    %3181 = vmatpush1.xpose.msra.mxu0 0.0
    %3182 = vmatprep.subr.mxu0 0.0
    %3183 = vmatpush1.xpose.msra.mxu0 0.0
    %3184 = vmatprep.subr.mxu0 0.0
    %3185 = vmatpush1.xpose.msra.mxu0 0.0
    %3186 = vmatprep.subr.mxu0 0.0
    %3187 = vmatpush1.xpose.msra.mxu0 0.0
    %3188 = vmatprep.subr.mxu0 0.0
    %3189 = vmatpush1.xpose.msra.mxu0 0.0
    %3190 = vmatprep.subr.mxu0 0.0
    %3191 = vmatpush1.xpose.msra.mxu0 0.0
    %3192 = vmatprep.subr.mxu0 0.0
    %3193 = vmatpush1.xpose.msra.mxu0 0.0
    %3194 = vmatprep.subr.mxu0 0.0
    %3195 = vmatpush1.xpose.msra.mxu0 0.0
    %3196 = vmatprep.subr.mxu0 0.0
    %3197 = vmatpush1.xpose.msra.mxu0 0.0
    %3198 = vmatprep.subr.mxu0 0.0
    %3199 = vmatpush1.xpose.msra.mxu0 0.0
    %3200 = vmatprep.subr.mxu0 0.0
    %3201 = vmatpush1.xpose.msra.mxu0 0.0
    %3202 = vmatprep.subr.mxu0 0.0
    %3203 = vmatpush1.xpose.msra.mxu0 0.0
    %3204 = vmatprep.subr.mxu0 0.0
    %3205 = vmatpush1.xpose.msra.mxu0 0.0
    %3206 = vmatprep.subr.mxu0 0.0
    %3207 = vmatpush1.xpose.msra.mxu0 0.0
    %3208 = vmatprep.subr.mxu0 0.0
    %3209 = vmatpush1.xpose.msra.mxu0 0.0
    %3210 = vmatprep.subr.mxu0 0.0
    %3211 = vmatpush1.xpose.msra.mxu0 0.0
    %3212 = vmatprep.subr.mxu0 0.0
    %3213 = vmatpush1.xpose.msra.mxu0 0.0
    %3214 = vmatprep.subr.mxu0 0.0
    %3215 = vmatpush1.xpose.msra.mxu0 0.0
    %3216 = vmatprep.subr.mxu0 0.0
    %3217 = vmatpush1.xpose.msra.mxu0 0.0
    %3218 = vmatprep.subr.mxu0 0.0
    %3219 = vmatpush1.xpose.msra.mxu0 0.0
    %3220 = vmatprep.subr.mxu0 0.0
    %3221 = vmatpush1.xpose.msra.mxu0 0.0
    %3222 = vmatprep.subr.mxu0 0.0
    %3223 = vmatpush1.xpose.msra.mxu0 0.0
    %3224 = vmatprep.subr.mxu0 0.0
    %3225 = vmatpush1.xpose.msra.mxu0 0.0
    %3226 = vmatprep.subr.mxu0 0.0
    %3227 = vmatpush1.xpose.msra.mxu0 0.0
    %3228 = vmatprep.subr.mxu0 0.0
    %3229 = vmatpush1.xpose.msra.mxu0 0.0
    %3230 = vmatprep.subr.mxu0 0.0
    %3231 = vmatpush1.xpose.msra.mxu0 0.0
    %3232 = vmatprep.subr.mxu0 0.0
    %3233 = vmatpush1.xpose.msra.mxu0 0.0
    %3234 = vmatprep.mubr.f32.mxu0 0.0
    %3235 = vmatmul.mubr.f32.gmra.mrb[0].mxu0 %v3166
    %v3236 = vpop.f32.mrb[0].mxu0
    %v3237 = vadd.f32 0.0, %v3236
    %v3238 = vpop.f32.mrb[0].mxu0
    %3239 = vdwg.mxu0
    %v3240 = vmul.f32 %v3237, 0.25
    %v3241 = vsel %vm997, %v3240, -inf
    %3242 = vmax.xlane.f32.xlu0 %v3241
    %v3243 = vpop.xlane.xlu0 %3242
    %v3244 = vsub.f32 %v3240, %v3243
    %v3245 = vmul.f32 %v3244, 1.442695
    %v3246 = vpow.pop %v3245
    %v3247 = vsel %vm997, %v3246, 0.0
    %3248 = vadd.xlane.f32.xlu0 %v3247
    %v3249 = vpop.xlane.xlu0 %3248
    %v3250 = vrcp.pop %v3249
    %v3251 = vmul.f32 %v3246, %v3250
    %3252 = vrot.lane.b32.xlu0 %v2990, 112
    %v3253 = vpop.permute.xlu0 %3252
    %v3255 = vsel %vm1009, %v3251, 0
    %v3257 = vsel %vm635, %v3253, 0
    %3259 = vmatprep.subr.mxu0 0.0
    %3260 = vmatpush1.msra.mxu0 %v3257
    %3261 = vmatprep.subr.mxu0 0.0
    %3262 = vmatpush1.msra.mxu0 0.0
    %3263 = vmatprep.subr.mxu0 0.0
    %3264 = vmatpush1.msra.mxu0 0.0
    %3265 = vmatprep.subr.mxu0 0.0
    %3266 = vmatpush1.msra.mxu0 0.0
    %3267 = vmatprep.subr.mxu0 0.0
    %3268 = vmatpush1.msra.mxu0 0.0
    %3269 = vmatprep.subr.mxu0 0.0
    %3270 = vmatpush1.msra.mxu0 0.0
    %3271 = vmatprep.subr.mxu0 0.0
    %3272 = vmatpush1.msra.mxu0 0.0
    %3273 = vmatprep.subr.mxu0 0.0
    %3274 = vmatpush1.msra.mxu0 0.0
    %3275 = vmatprep.subr.mxu0 0.0
    %3276 = vmatpush1.msra.mxu0 0.0
    %3277 = vmatprep.subr.mxu0 0.0
    %3278 = vmatpush1.msra.mxu0 0.0
    %3279 = vmatprep.subr.mxu0 0.0
    %3280 = vmatpush1.msra.mxu0 0.0
    %3281 = vmatprep.subr.mxu0 0.0
    %3282 = vmatpush1.msra.mxu0 0.0
    %3283 = vmatprep.subr.mxu0 0.0
    %3284 = vmatpush1.msra.mxu0 0.0
    %3285 = vmatprep.subr.mxu0 0.0
    %3286 = vmatpush1.msra.mxu0 0.0
    %3287 = vmatprep.subr.mxu0 0.0
    %3288 = vmatpush1.msra.mxu0 0.0
    %3289 = vmatprep.subr.mxu0 0.0
    %3290 = vmatpush1.msra.mxu0 0.0
    %3291 = vmatprep.subr.mxu0 0.0
    %3292 = vmatpush1.msra.mxu0 0.0
    %3293 = vmatprep.subr.mxu0 0.0
    %3294 = vmatpush1.msra.mxu0 0.0
    %3295 = vmatprep.subr.mxu0 0.0
    %3296 = vmatpush1.msra.mxu0 0.0
    %3297 = vmatprep.subr.mxu0 0.0
    %3298 = vmatpush1.msra.mxu0 0.0
    %3299 = vmatprep.subr.mxu0 0.0
    %3300 = vmatpush1.msra.mxu0 0.0
    %3301 = vmatprep.subr.mxu0 0.0
    %3302 = vmatpush1.msra.mxu0 0.0
    %3303 = vmatprep.subr.mxu0 0.0
    %3304 = vmatpush1.msra.mxu0 0.0
    %3305 = vmatprep.subr.mxu0 0.0
    %3306 = vmatpush1.msra.mxu0 0.0
    %3307 = vmatprep.subr.mxu0 0.0
    %3308 = vmatpush1.msra.mxu0 0.0
    %3309 = vmatprep.subr.mxu0 0.0
    %3310 = vmatpush1.msra.mxu0 0.0
    %3311 = vmatprep.subr.mxu0 0.0
    %3312 = vmatpush1.msra.mxu0 0.0
    %3313 = vmatprep.subr.mxu0 0.0
    %3314 = vmatpush1.msra.mxu0 0.0
    %3315 = vmatprep.subr.mxu0 0.0
    %3316 = vmatpush1.msra.mxu0 0.0
    %3317 = vmatprep.subr.mxu0 0.0
    %3318 = vmatpush1.msra.mxu0 0.0
    %3319 = vmatprep.subr.mxu0 0.0
    %3320 = vmatpush1.msra.mxu0 0.0
    %3321 = vmatprep.subr.mxu0 0.0
    %3322 = vmatpush1.msra.mxu0 0.0
    %3323 = vmatprep.mubr.f32.mxu0 0.0
    %3324 = vmatmul.mubr.f32.gmra.mrb[0].mxu0 %v3255
    %v3325 = vpop.f32.mrb[0].mxu0
    %v3326 = vadd.f32 0.0, %v3325
    %v3327 = vpop.f32.mrb[0].mxu0
    %3328 = vdwg.mxu0
    %3329 = vrot.lane.b32.xlu0 %v2806, 96
    %v3330 = vpop.permute.xlu0 %3329
    %3331 = vrot.lane.b32.xlu0 %v2898, 96
    %v3332 = vpop.permute.xlu0 %3331
    %v3333 = vsel %vm919, %v3330, 0
    %v3335 = vsel %vm919, %v3332, 0
    %3337 = vmatprep.subr.mxu0 0.0
    %3338 = vmatpush1.xpose.msra.mxu0 %v3335
    %3339 = vmatprep.subr.mxu0 0.0
    %3340 = vmatpush1.xpose.msra.mxu0 0.0
    %3341 = vmatprep.subr.mxu0 0.0
    %3342 = vmatpush1.xpose.msra.mxu0 0.0
    %3343 = vmatprep.subr.mxu0 0.0
    %3344 = vmatpush1.xpose.msra.mxu0 0.0
    %3345 = vmatprep.subr.mxu0 0.0
    %3346 = vmatpush1.xpose.msra.mxu0 0.0
    %3347 = vmatprep.subr.mxu0 0.0
    %3348 = vmatpush1.xpose.msra.mxu0 0.0
    %3349 = vmatprep.subr.mxu0 0.0
    %3350 = vmatpush1.xpose.msra.mxu0 0.0
    %3351 = vmatprep.subr.mxu0 0.0
    %3352 = vmatpush1.xpose.msra.mxu0 0.0
    %3353 = vmatprep.subr.mxu0 0.0
    %3354 = vmatpush1.xpose.msra.mxu0 0.0
    %3355 = vmatprep.subr.mxu0 0.0
    %3356 = vmatpush1.xpose.msra.mxu0 0.0
    %3357 = vmatprep.subr.mxu0 0.0
    %3358 = vmatpush1.xpose.msra.mxu0 0.0
    %3359 = vmatprep.subr.mxu0 0.0
    %3360 = vmatpush1.xpose.msra.mxu0 0.0
    %3361 = vmatprep.subr.mxu0 0.0
    %3362 = vmatpush1.xpose.msra.mxu0 0.0
    %3363 = vmatprep.subr.mxu0 0.0
    %3364 = vmatpush1.xpose.msra.mxu0 0.0
    %3365 = vmatprep.subr.mxu0 0.0
    %3366 = vmatpush1.xpose.msra.mxu0 0.0
    %3367 = vmatprep.subr.mxu0 0.0
    %3368 = vmatpush1.xpose.msra.mxu0 0.0
    %3369 = vmatprep.subr.mxu0 0.0
    %3370 = vmatpush1.xpose.msra.mxu0 0.0
    %3371 = vmatprep.subr.mxu0 0.0
    %3372 = vmatpush1.xpose.msra.mxu0 0.0
    %3373 = vmatprep.subr.mxu0 0.0
    %3374 = vmatpush1.xpose.msra.mxu0 0.0
    %3375 = vmatprep.subr.mxu0 0.0
    %3376 = vmatpush1.xpose.msra.mxu0 0.0
    %3377 = vmatprep.subr.mxu0 0.0
    %3378 = vmatpush1.xpose.msra.mxu0 0.0
    %3379 = vmatprep.subr.mxu0 0.0
    %3380 = vmatpush1.xpose.msra.mxu0 0.0
    %3381 = vmatprep.subr.mxu0 0.0
    %3382 = vmatpush1.xpose.msra.mxu0 0.0
    %3383 = vmatprep.subr.mxu0 0.0
    %3384 = vmatpush1.xpose.msra.mxu0 0.0
    %3385 = vmatprep.subr.mxu0 0.0
    %3386 = vmatpush1.xpose.msra.mxu0 0.0
    %3387 = vmatprep.subr.mxu0 0.0
    %3388 = vmatpush1.xpose.msra.mxu0 0.0
    %3389 = vmatprep.subr.mxu0 0.0
    %3390 = vmatpush1.xpose.msra.mxu0 0.0
    %3391 = vmatprep.subr.mxu0 0.0
    %3392 = vmatpush1.xpose.msra.mxu0 0.0
    %3393 = vmatprep.subr.mxu0 0.0
    %3394 = vmatpush1.xpose.msra.mxu0 0.0
    %3395 = vmatprep.subr.mxu0 0.0
    %3396 = vmatpush1.xpose.msra.mxu0 0.0
    %3397 = vmatprep.subr.mxu0 0.0
    %3398 = vmatpush1.xpose.msra.mxu0 0.0
    %3399 = vmatprep.subr.mxu0 0.0
    %3400 = vmatpush1.xpose.msra.mxu0 0.0
    %3401 = vmatprep.mubr.f32.mxu0 0.0
    %3402 = vmatmul.mubr.f32.gmra.mrb[0].mxu0 %v3333
    %v3403 = vpop.f32.mrb[0].mxu0
    %v3404 = vadd.f32 0.0, %v3403
    %v3405 = vpop.f32.mrb[0].mxu0
    %3406 = vdwg.mxu0
    %v3407 = vmul.f32 %v3404, 0.25
    %v3408 = vsel %vm997, %v3407, -inf
    %3409 = vmax.xlane.f32.xlu0 %v3408
    %v3410 = vpop.xlane.xlu0 %3409
    %v3411 = vsub.f32 %v3407, %v3410
    %v3412 = vmul.f32 %v3411, 1.442695
    %v3413 = vpow.pop %v3412
    %v3414 = vsel %vm997, %v3413, 0.0
    %3415 = vadd.xlane.f32.xlu0 %v3414
    %v3416 = vpop.xlane.xlu0 %3415
    %v3417 = vrcp.pop %v3416
    %v3418 = vmul.f32 %v3413, %v3417
    %3419 = vrot.lane.b32.xlu0 %v2990, 96
    %v3420 = vpop.permute.xlu0 %3419
    %v3422 = vsel %vm1009, %v3418, 0
    %v3424 = vsel %vm635, %v3420, 0
    %3426 = vmatprep.subr.mxu0 0.0
    %3427 = vmatpush1.msra.mxu0 %v3424
    %3428 = vmatprep.subr.mxu0 0.0
    %3429 = vmatpush1.msra.mxu0 0.0
    %3430 = vmatprep.subr.mxu0 0.0
    %3431 = vmatpush1.msra.mxu0 0.0
    %3432 = vmatprep.subr.mxu0 0.0
    %3433 = vmatpush1.msra.mxu0 0.0
    %3434 = vmatprep.subr.mxu0 0.0
    %3435 = vmatpush1.msra.mxu0 0.0
    %3436 = vmatprep.subr.mxu0 0.0
    %3437 = vmatpush1.msra.mxu0 0.0
    %3438 = vmatprep.subr.mxu0 0.0
    %3439 = vmatpush1.msra.mxu0 0.0
    %3440 = vmatprep.subr.mxu0 0.0
    %3441 = vmatpush1.msra.mxu0 0.0
    %3442 = vmatprep.subr.mxu0 0.0
    %3443 = vmatpush1.msra.mxu0 0.0
    %3444 = vmatprep.subr.mxu0 0.0
    %3445 = vmatpush1.msra.mxu0 0.0
    %3446 = vmatprep.subr.mxu0 0.0
    %3447 = vmatpush1.msra.mxu0 0.0
    %3448 = vmatprep.subr.mxu0 0.0
    %3449 = vmatpush1.msra.mxu0 0.0
    %3450 = vmatprep.subr.mxu0 0.0
    %3451 = vmatpush1.msra.mxu0 0.0
    %3452 = vmatprep.subr.mxu0 0.0
    %3453 = vmatpush1.msra.mxu0 0.0
    %3454 = vmatprep.subr.mxu0 0.0
    %3455 = vmatpush1.msra.mxu0 0.0
    %3456 = vmatprep.subr.mxu0 0.0
    %3457 = vmatpush1.msra.mxu0 0.0
    %3458 = vmatprep.subr.mxu0 0.0
    %3459 = vmatpush1.msra.mxu0 0.0
    %3460 = vmatprep.subr.mxu0 0.0
    %3461 = vmatpush1.msra.mxu0 0.0
    %3462 = vmatprep.subr.mxu0 0.0
    %3463 = vmatpush1.msra.mxu0 0.0
    %3464 = vmatprep.subr.mxu0 0.0
    %3465 = vmatpush1.msra.mxu0 0.0
    %3466 = vmatprep.subr.mxu0 0.0
    %3467 = vmatpush1.msra.mxu0 0.0
    %3468 = vmatprep.subr.mxu0 0.0
    %3469 = vmatpush1.msra.mxu0 0.0
    %3470 = vmatprep.subr.mxu0 0.0
    %3471 = vmatpush1.msra.mxu0 0.0
    %3472 = vmatprep.subr.mxu0 0.0
    %3473 = vmatpush1.msra.mxu0 0.0
    %3474 = vmatprep.subr.mxu0 0.0
    %3475 = vmatpush1.msra.mxu0 0.0
    %3476 = vmatprep.subr.mxu0 0.0
    %3477 = vmatpush1.msra.mxu0 0.0
    %3478 = vmatprep.subr.mxu0 0.0
    %3479 = vmatpush1.msra.mxu0 0.0
    %3480 = vmatprep.subr.mxu0 0.0
    %3481 = vmatpush1.msra.mxu0 0.0
    %3482 = vmatprep.subr.mxu0 0.0
    %3483 = vmatpush1.msra.mxu0 0.0
    %3484 = vmatprep.subr.mxu0 0.0
    %3485 = vmatpush1.msra.mxu0 0.0
    %3486 = vmatprep.subr.mxu0 0.0
    %3487 = vmatpush1.msra.mxu0 0.0
    %3488 = vmatprep.subr.mxu0 0.0
    %3489 = vmatpush1.msra.mxu0 0.0
    %3490 = vmatprep.mubr.f32.mxu0 0.0
    %3491 = vmatmul.mubr.f32.gmra.mrb[0].mxu0 %v3422
    %v3492 = vpop.f32.mrb[0].mxu0
    %v3493 = vadd.f32 0.0, %v3492
    %v3494 = vpop.f32.mrb[0].mxu0
    %3495 = vdwg.mxu0
    %3496 = vrot.lane.b32.xlu0 %v2806, 80
    %v3497 = vpop.permute.xlu0 %3496
    %3498 = vrot.lane.b32.xlu0 %v2898, 80
    %v3499 = vpop.permute.xlu0 %3498
    %v3500 = vsel %vm919, %v3497, 0
    %v3502 = vsel %vm919, %v3499, 0
    %3504 = vmatprep.subr.mxu0 0.0
    %3505 = vmatpush1.xpose.msra.mxu0 %v3502
    %3506 = vmatprep.subr.mxu0 0.0
    %3507 = vmatpush1.xpose.msra.mxu0 0.0
    %3508 = vmatprep.subr.mxu0 0.0
    %3509 = vmatpush1.xpose.msra.mxu0 0.0
    %3510 = vmatprep.subr.mxu0 0.0
    %3511 = vmatpush1.xpose.msra.mxu0 0.0
    %3512 = vmatprep.subr.mxu0 0.0
    %3513 = vmatpush1.xpose.msra.mxu0 0.0
    %3514 = vmatprep.subr.mxu0 0.0
    %3515 = vmatpush1.xpose.msra.mxu0 0.0
    %3516 = vmatprep.subr.mxu0 0.0
    %3517 = vmatpush1.xpose.msra.mxu0 0.0
    %3518 = vmatprep.subr.mxu0 0.0
    %3519 = vmatpush1.xpose.msra.mxu0 0.0
    %3520 = vmatprep.subr.mxu0 0.0
    %3521 = vmatpush1.xpose.msra.mxu0 0.0
    %3522 = vmatprep.subr.mxu0 0.0
    %3523 = vmatpush1.xpose.msra.mxu0 0.0
    %3524 = vmatprep.subr.mxu0 0.0
    %3525 = vmatpush1.xpose.msra.mxu0 0.0
    %3526 = vmatprep.subr.mxu0 0.0
    %3527 = vmatpush1.xpose.msra.mxu0 0.0
    %3528 = vmatprep.subr.mxu0 0.0
    %3529 = vmatpush1.xpose.msra.mxu0 0.0
    %3530 = vmatprep.subr.mxu0 0.0
    %3531 = vmatpush1.xpose.msra.mxu0 0.0
    %3532 = vmatprep.subr.mxu0 0.0
    %3533 = vmatpush1.xpose.msra.mxu0 0.0
    %3534 = vmatprep.subr.mxu0 0.0
    %3535 = vmatpush1.xpose.msra.mxu0 0.0
    %3536 = vmatprep.subr.mxu0 0.0
    %3537 = vmatpush1.xpose.msra.mxu0 0.0
    %3538 = vmatprep.subr.mxu0 0.0
    %3539 = vmatpush1.xpose.msra.mxu0 0.0
    %3540 = vmatprep.subr.mxu0 0.0
    %3541 = vmatpush1.xpose.msra.mxu0 0.0
    %3542 = vmatprep.subr.mxu0 0.0
    %3543 = vmatpush1.xpose.msra.mxu0 0.0
    %3544 = vmatprep.subr.mxu0 0.0
    %3545 = vmatpush1.xpose.msra.mxu0 0.0
    %3546 = vmatprep.subr.mxu0 0.0
    %3547 = vmatpush1.xpose.msra.mxu0 0.0
    %3548 = vmatprep.subr.mxu0 0.0
    %3549 = vmatpush1.xpose.msra.mxu0 0.0
    %3550 = vmatprep.subr.mxu0 0.0
    %3551 = vmatpush1.xpose.msra.mxu0 0.0
    %3552 = vmatprep.subr.mxu0 0.0
    %3553 = vmatpush1.xpose.msra.mxu0 0.0
    %3554 = vmatprep.subr.mxu0 0.0
    %3555 = vmatpush1.xpose.msra.mxu0 0.0
    %3556 = vmatprep.subr.mxu0 0.0
    %3557 = vmatpush1.xpose.msra.mxu0 0.0
    %3558 = vmatprep.subr.mxu0 0.0
    %3559 = vmatpush1.xpose.msra.mxu0 0.0
    %3560 = vmatprep.subr.mxu0 0.0
    %3561 = vmatpush1.xpose.msra.mxu0 0.0
    %3562 = vmatprep.subr.mxu0 0.0
    %3563 = vmatpush1.xpose.msra.mxu0 0.0
    %3564 = vmatprep.subr.mxu0 0.0
    %3565 = vmatpush1.xpose.msra.mxu0 0.0
    %3566 = vmatprep.subr.mxu0 0.0
    %3567 = vmatpush1.xpose.msra.mxu0 0.0
    %3568 = vmatprep.mubr.f32.mxu0 0.0
    %3569 = vmatmul.mubr.f32.gmra.mrb[0].mxu0 %v3500
    %v3570 = vpop.f32.mrb[0].mxu0
    %v3571 = vadd.f32 0.0, %v3570
    %v3572 = vpop.f32.mrb[0].mxu0
    %3573 = vdwg.mxu0
    %v3574 = vmul.f32 %v3571, 0.25
    %v3575 = vsel %vm997, %v3574, -inf
    %3576 = vmax.xlane.f32.xlu0 %v3575
    %v3577 = vpop.xlane.xlu0 %3576
    %v3578 = vsub.f32 %v3574, %v3577
    %v3579 = vmul.f32 %v3578, 1.442695
    %v3580 = vpow.pop %v3579
    %v3581 = vsel %vm997, %v3580, 0.0
    %3582 = vadd.xlane.f32.xlu0 %v3581
    %v3583 = vpop.xlane.xlu0 %3582
    %v3584 = vrcp.pop %v3583
    %v3585 = vmul.f32 %v3580, %v3584
    %3586 = vrot.lane.b32.xlu0 %v2990, 80
    %v3587 = vpop.permute.xlu0 %3586
    %v3589 = vsel %vm1009, %v3585, 0
    %v3591 = vsel %vm635, %v3587, 0
    %3593 = vmatprep.subr.mxu0 0.0
    %3594 = vmatpush1.msra.mxu0 %v3591
    %3595 = vmatprep.subr.mxu0 0.0
    %3596 = vmatpush1.msra.mxu0 0.0
    %3597 = vmatprep.subr.mxu0 0.0
    %3598 = vmatpush1.msra.mxu0 0.0
    %3599 = vmatprep.subr.mxu0 0.0
    %3600 = vmatpush1.msra.mxu0 0.0
    %3601 = vmatprep.subr.mxu0 0.0
    %3602 = vmatpush1.msra.mxu0 0.0
    %3603 = vmatprep.subr.mxu0 0.0
    %3604 = vmatpush1.msra.mxu0 0.0
    %3605 = vmatprep.subr.mxu0 0.0
    %3606 = vmatpush1.msra.mxu0 0.0
    %3607 = vmatprep.subr.mxu0 0.0
    %3608 = vmatpush1.msra.mxu0 0.0
    %3609 = vmatprep.subr.mxu0 0.0
    %3610 = vmatpush1.msra.mxu0 0.0
    %3611 = vmatprep.subr.mxu0 0.0
    %3612 = vmatpush1.msra.mxu0 0.0
    %3613 = vmatprep.subr.mxu0 0.0
    %3614 = vmatpush1.msra.mxu0 0.0
    %3615 = vmatprep.subr.mxu0 0.0
    %3616 = vmatpush1.msra.mxu0 0.0
    %3617 = vmatprep.subr.mxu0 0.0
    %3618 = vmatpush1.msra.mxu0 0.0
    %3619 = vmatprep.subr.mxu0 0.0
    %3620 = vmatpush1.msra.mxu0 0.0
    %3621 = vmatprep.subr.mxu0 0.0
    %3622 = vmatpush1.msra.mxu0 0.0
    %3623 = vmatprep.subr.mxu0 0.0
    %3624 = vmatpush1.msra.mxu0 0.0
    %3625 = vmatprep.subr.mxu0 0.0
    %3626 = vmatpush1.msra.mxu0 0.0
    %3627 = vmatprep.subr.mxu0 0.0
    %3628 = vmatpush1.msra.mxu0 0.0
    %3629 = vmatprep.subr.mxu0 0.0
    %3630 = vmatpush1.msra.mxu0 0.0
    %3631 = vmatprep.subr.mxu0 0.0
    %3632 = vmatpush1.msra.mxu0 0.0
    %3633 = vmatprep.subr.mxu0 0.0
    %3634 = vmatpush1.msra.mxu0 0.0
    %3635 = vmatprep.subr.mxu0 0.0
    %3636 = vmatpush1.msra.mxu0 0.0
    %3637 = vmatprep.subr.mxu0 0.0
    %3638 = vmatpush1.msra.mxu0 0.0
    %3639 = vmatprep.subr.mxu0 0.0
    %3640 = vmatpush1.msra.mxu0 0.0
    %3641 = vmatprep.subr.mxu0 0.0
    %3642 = vmatpush1.msra.mxu0 0.0
    %3643 = vmatprep.subr.mxu0 0.0
    %3644 = vmatpush1.msra.mxu0 0.0
    %3645 = vmatprep.subr.mxu0 0.0
    %3646 = vmatpush1.msra.mxu0 0.0
    %3647 = vmatprep.subr.mxu0 0.0
    %3648 = vmatpush1.msra.mxu0 0.0
    %3649 = vmatprep.subr.mxu0 0.0
    %3650 = vmatpush1.msra.mxu0 0.0
    %3651 = vmatprep.subr.mxu0 0.0
    %3652 = vmatpush1.msra.mxu0 0.0
    %3653 = vmatprep.subr.mxu0 0.0
    %3654 = vmatpush1.msra.mxu0 0.0
    %3655 = vmatprep.subr.mxu0 0.0
    %3656 = vmatpush1.msra.mxu0 0.0
    %3657 = vmatprep.mubr.f32.mxu0 0.0
    %3658 = vmatmul.mubr.f32.gmra.mrb[0].mxu0 %v3589
    %v3659 = vpop.f32.mrb[0].mxu0
    %v3660 = vadd.f32 0.0, %v3659
    %v3661 = vpop.f32.mrb[0].mxu0
    %3662 = vdwg.mxu0
    %3664 = vrot.lane.b32.xlu0 %v3326, 16
    %v3665 = vpop.permute.xlu0 %3664
    %3668 = vrot.lane.b32.xlu0 %v3493, 32
    %v3669 = vpop.permute.xlu0 %3668
    %3672 = vrot.lane.b32.xlu0 %v3660, 48
    %v3673 = vpop.permute.xlu0 %3672
    %v3675 = vsel %vm919, %v3159, %v3665
    %v3676 = vsel %vm1600, %v3675, %v3669
    %v3677 = vsel %vm1602, %v3676, %v3673
    %v3679 = vrot.slane %v2806, 7
    %v3680 = vrot.slane %v2811, 7
    %v3681 = vsel %vm1605, %v3679, %v3680
    %v3683 = vrot.slane %v2898, 7
    %v3684 = vrot.slane %v2903, 7
    %v3685 = vsel %vm1605, %v3683, %v3684
    %v3686 = vsel %vm919, %v3681, 0
    %v3688 = vsel %vm919, %v3685, 0
    %3690 = vmatprep.subr.mxu0 0.0
    %3691 = vmatpush1.xpose.msra.mxu0 %v3688
    %3692 = vmatprep.subr.mxu0 0.0
    %3693 = vmatpush1.xpose.msra.mxu0 0.0
    %3694 = vmatprep.subr.mxu0 0.0
    %3695 = vmatpush1.xpose.msra.mxu0 0.0
    %3696 = vmatprep.subr.mxu0 0.0
    %3697 = vmatpush1.xpose.msra.mxu0 0.0
    %3698 = vmatprep.subr.mxu0 0.0
    %3699 = vmatpush1.xpose.msra.mxu0 0.0
    %3700 = vmatprep.subr.mxu0 0.0
    %3701 = vmatpush1.xpose.msra.mxu0 0.0
    %3702 = vmatprep.subr.mxu0 0.0
    %3703 = vmatpush1.xpose.msra.mxu0 0.0
    %3704 = vmatprep.subr.mxu0 0.0
    %3705 = vmatpush1.xpose.msra.mxu0 0.0
    %3706 = vmatprep.subr.mxu0 0.0
    %3707 = vmatpush1.xpose.msra.mxu0 0.0
    %3708 = vmatprep.subr.mxu0 0.0
    %3709 = vmatpush1.xpose.msra.mxu0 0.0
    %3710 = vmatprep.subr.mxu0 0.0
    %3711 = vmatpush1.xpose.msra.mxu0 0.0
    %3712 = vmatprep.subr.mxu0 0.0
    %3713 = vmatpush1.xpose.msra.mxu0 0.0
    %3714 = vmatprep.subr.mxu0 0.0
    %3715 = vmatpush1.xpose.msra.mxu0 0.0
    %3716 = vmatprep.subr.mxu0 0.0
    %3717 = vmatpush1.xpose.msra.mxu0 0.0
    %3718 = vmatprep.subr.mxu0 0.0
    %3719 = vmatpush1.xpose.msra.mxu0 0.0
    %3720 = vmatprep.subr.mxu0 0.0
    %3721 = vmatpush1.xpose.msra.mxu0 0.0
    %3722 = vmatprep.subr.mxu0 0.0
    %3723 = vmatpush1.xpose.msra.mxu0 0.0
    %3724 = vmatprep.subr.mxu0 0.0
    %3725 = vmatpush1.xpose.msra.mxu0 0.0
    %3726 = vmatprep.subr.mxu0 0.0
    %3727 = vmatpush1.xpose.msra.mxu0 0.0
    %3728 = vmatprep.subr.mxu0 0.0
    %3729 = vmatpush1.xpose.msra.mxu0 0.0
    %3730 = vmatprep.subr.mxu0 0.0
    %3731 = vmatpush1.xpose.msra.mxu0 0.0
    %3732 = vmatprep.subr.mxu0 0.0
    %3733 = vmatpush1.xpose.msra.mxu0 0.0
    %3734 = vmatprep.subr.mxu0 0.0
    %3735 = vmatpush1.xpose.msra.mxu0 0.0
    %3736 = vmatprep.subr.mxu0 0.0
    %3737 = vmatpush1.xpose.msra.mxu0 0.0
    %3738 = vmatprep.subr.mxu0 0.0
    %3739 = vmatpush1.xpose.msra.mxu0 0.0
    %3740 = vmatprep.subr.mxu0 0.0
    %3741 = vmatpush1.xpose.msra.mxu0 0.0
    %3742 = vmatprep.subr.mxu0 0.0
    %3743 = vmatpush1.xpose.msra.mxu0 0.0
    %3744 = vmatprep.subr.mxu0 0.0
    %3745 = vmatpush1.xpose.msra.mxu0 0.0
    %3746 = vmatprep.subr.mxu0 0.0
    %3747 = vmatpush1.xpose.msra.mxu0 0.0
    %3748 = vmatprep.subr.mxu0 0.0
    %3749 = vmatpush1.xpose.msra.mxu0 0.0
    %3750 = vmatprep.subr.mxu0 0.0
    %3751 = vmatpush1.xpose.msra.mxu0 0.0
    %3752 = vmatprep.subr.mxu0 0.0
    %3753 = vmatpush1.xpose.msra.mxu0 0.0
    %3754 = vmatprep.mubr.f32.mxu0 0.0
    %3755 = vmatmul.mubr.f32.gmra.mrb[0].mxu0 %v3686
    %v3756 = vpop.f32.mrb[0].mxu0
    %v3757 = vadd.f32 0.0, %v3756
    %v3758 = vpop.f32.mrb[0].mxu0
    %3759 = vdwg.mxu0
    %v3760 = vmul.f32 %v3757, 0.25
    %v3761 = vsel %vm997, %v3760, -inf
    %3762 = vmax.xlane.f32.xlu0 %v3761
    %v3763 = vpop.xlane.xlu0 %3762
    %v3764 = vsub.f32 %v3760, %v3763
    %v3765 = vmul.f32 %v3764, 1.442695
    %v3766 = vpow.pop %v3765
    %v3767 = vsel %vm997, %v3766, 0.0
    %3768 = vadd.xlane.f32.xlu0 %v3767
    %v3769 = vpop.xlane.xlu0 %3768
    %v3770 = vrcp.pop %v3769
    %v3771 = vmul.f32 %v3766, %v3770
    %v3773 = vrot.slane %v2990, 7
    %v3774 = vrot.slane %v2995, 7
    %v3775 = vsel %vm1605, %v3773, %v3774
    %v3777 = vsel %vm1009, %v3771, 0
    %v3779 = vsel %vm635, %v3775, 0
    %3781 = vmatprep.subr.mxu0 0.0
    %3782 = vmatpush1.msra.mxu0 %v3779
    %3783 = vmatprep.subr.mxu0 0.0
    %3784 = vmatpush1.msra.mxu0 0.0
    %3785 = vmatprep.subr.mxu0 0.0
    %3786 = vmatpush1.msra.mxu0 0.0
    %3787 = vmatprep.subr.mxu0 0.0
    %3788 = vmatpush1.msra.mxu0 0.0
    %3789 = vmatprep.subr.mxu0 0.0
    %3790 = vmatpush1.msra.mxu0 0.0
    %3791 = vmatprep.subr.mxu0 0.0
    %3792 = vmatpush1.msra.mxu0 0.0
    %3793 = vmatprep.subr.mxu0 0.0
    %3794 = vmatpush1.msra.mxu0 0.0
    %3795 = vmatprep.subr.mxu0 0.0
    %3796 = vmatpush1.msra.mxu0 0.0
    %3797 = vmatprep.subr.mxu0 0.0
    %3798 = vmatpush1.msra.mxu0 0.0
    %3799 = vmatprep.subr.mxu0 0.0
    %3800 = vmatpush1.msra.mxu0 0.0
    %3801 = vmatprep.subr.mxu0 0.0
    %3802 = vmatpush1.msra.mxu0 0.0
    %3803 = vmatprep.subr.mxu0 0.0
    %3804 = vmatpush1.msra.mxu0 0.0
    %3805 = vmatprep.subr.mxu0 0.0
    %3806 = vmatpush1.msra.mxu0 0.0
    %3807 = vmatprep.subr.mxu0 0.0
    %3808 = vmatpush1.msra.mxu0 0.0
    %3809 = vmatprep.subr.mxu0 0.0
    %3810 = vmatpush1.msra.mxu0 0.0
    %3811 = vmatprep.subr.mxu0 0.0
    %3812 = vmatpush1.msra.mxu0 0.0
    %3813 = vmatprep.subr.mxu0 0.0
    %3814 = vmatpush1.msra.mxu0 0.0
    %3815 = vmatprep.subr.mxu0 0.0
    %3816 = vmatpush1.msra.mxu0 0.0
    %3817 = vmatprep.subr.mxu0 0.0
    %3818 = vmatpush1.msra.mxu0 0.0
    %3819 = vmatprep.subr.mxu0 0.0
    %3820 = vmatpush1.msra.mxu0 0.0
    %3821 = vmatprep.subr.mxu0 0.0
    %3822 = vmatpush1.msra.mxu0 0.0
    %3823 = vmatprep.subr.mxu0 0.0
    %3824 = vmatpush1.msra.mxu0 0.0
    %3825 = vmatprep.subr.mxu0 0.0
    %3826 = vmatpush1.msra.mxu0 0.0
    %3827 = vmatprep.subr.mxu0 0.0
    %3828 = vmatpush1.msra.mxu0 0.0
    %3829 = vmatprep.subr.mxu0 0.0
    %3830 = vmatpush1.msra.mxu0 0.0
    %3831 = vmatprep.subr.mxu0 0.0
    %3832 = vmatpush1.msra.mxu0 0.0
    %3833 = vmatprep.subr.mxu0 0.0
    %3834 = vmatpush1.msra.mxu0 0.0
    %3835 = vmatprep.subr.mxu0 0.0
    %3836 = vmatpush1.msra.mxu0 0.0
    %3837 = vmatprep.subr.mxu0 0.0
    %3838 = vmatpush1.msra.mxu0 0.0
    %3839 = vmatprep.subr.mxu0 0.0
    %3840 = vmatpush1.msra.mxu0 0.0
    %3841 = vmatprep.subr.mxu0 0.0
    %3842 = vmatpush1.msra.mxu0 0.0
    %3843 = vmatprep.subr.mxu0 0.0
    %3844 = vmatpush1.msra.mxu0 0.0
    %3845 = vmatprep.mubr.f32.mxu0 0.0
    %3846 = vmatmul.mubr.f32.gmra.mrb[0].mxu0 %v3777
    %v3847 = vpop.f32.mrb[0].mxu0
    %v3848 = vadd.f32 0.0, %v3847
    %v3849 = vpop.f32.mrb[0].mxu0
    %3850 = vdwg.mxu0
    %3851 = vrot.lane.b32.xlu0 %v3681, 112
    %v3852 = vpop.permute.xlu0 %3851
    %3853 = vrot.lane.b32.xlu0 %v3685, 112
    %v3854 = vpop.permute.xlu0 %3853
    %v3855 = vsel %vm919, %v3852, 0
    %v3857 = vsel %vm919, %v3854, 0
    %3859 = vmatprep.subr.mxu0 0.0
    %3860 = vmatpush1.xpose.msra.mxu0 %v3857
    %3861 = vmatprep.subr.mxu0 0.0
    %3862 = vmatpush1.xpose.msra.mxu0 0.0
    %3863 = vmatprep.subr.mxu0 0.0
    %3864 = vmatpush1.xpose.msra.mxu0 0.0
    %3865 = vmatprep.subr.mxu0 0.0
    %3866 = vmatpush1.xpose.msra.mxu0 0.0
    %3867 = vmatprep.subr.mxu0 0.0
    %3868 = vmatpush1.xpose.msra.mxu0 0.0
    %3869 = vmatprep.subr.mxu0 0.0
    %3870 = vmatpush1.xpose.msra.mxu0 0.0
    %3871 = vmatprep.subr.mxu0 0.0
    %3872 = vmatpush1.xpose.msra.mxu0 0.0
    %3873 = vmatprep.subr.mxu0 0.0
    %3874 = vmatpush1.xpose.msra.mxu0 0.0
    %3875 = vmatprep.subr.mxu0 0.0
    %3876 = vmatpush1.xpose.msra.mxu0 0.0
    %3877 = vmatprep.subr.mxu0 0.0
    %3878 = vmatpush1.xpose.msra.mxu0 0.0
    %3879 = vmatprep.subr.mxu0 0.0
    %3880 = vmatpush1.xpose.msra.mxu0 0.0
    %3881 = vmatprep.subr.mxu0 0.0
    %3882 = vmatpush1.xpose.msra.mxu0 0.0
    %3883 = vmatprep.subr.mxu0 0.0
    %3884 = vmatpush1.xpose.msra.mxu0 0.0
    %3885 = vmatprep.subr.mxu0 0.0
    %3886 = vmatpush1.xpose.msra.mxu0 0.0
    %3887 = vmatprep.subr.mxu0 0.0
    %3888 = vmatpush1.xpose.msra.mxu0 0.0
    %3889 = vmatprep.subr.mxu0 0.0
    %3890 = vmatpush1.xpose.msra.mxu0 0.0
    %3891 = vmatprep.subr.mxu0 0.0
    %3892 = vmatpush1.xpose.msra.mxu0 0.0
    %3893 = vmatprep.subr.mxu0 0.0
    %3894 = vmatpush1.xpose.msra.mxu0 0.0
    %3895 = vmatprep.subr.mxu0 0.0
    %3896 = vmatpush1.xpose.msra.mxu0 0.0
    %3897 = vmatprep.subr.mxu0 0.0
    %3898 = vmatpush1.xpose.msra.mxu0 0.0
    %3899 = vmatprep.subr.mxu0 0.0
    %3900 = vmatpush1.xpose.msra.mxu0 0.0
    %3901 = vmatprep.subr.mxu0 0.0
    %3902 = vmatpush1.xpose.msra.mxu0 0.0
    %3903 = vmatprep.subr.mxu0 0.0
    %3904 = vmatpush1.xpose.msra.mxu0 0.0
    %3905 = vmatprep.subr.mxu0 0.0
    %3906 = vmatpush1.xpose.msra.mxu0 0.0
    %3907 = vmatprep.subr.mxu0 0.0
    %3908 = vmatpush1.xpose.msra.mxu0 0.0
    %3909 = vmatprep.subr.mxu0 0.0
    %3910 = vmatpush1.xpose.msra.mxu0 0.0
    %3911 = vmatprep.subr.mxu0 0.0
    %3912 = vmatpush1.xpose.msra.mxu0 0.0
    %3913 = vmatprep.subr.mxu0 0.0
    %3914 = vmatpush1.xpose.msra.mxu0 0.0
    %3915 = vmatprep.subr.mxu0 0.0
    %3916 = vmatpush1.xpose.msra.mxu0 0.0
    %3917 = vmatprep.subr.mxu0 0.0
    %3918 = vmatpush1.xpose.msra.mxu0 0.0
    %3919 = vmatprep.subr.mxu0 0.0
    %3920 = vmatpush1.xpose.msra.mxu0 0.0
    %3921 = vmatprep.subr.mxu0 0.0
    %3922 = vmatpush1.xpose.msra.mxu0 0.0
    %3923 = vmatprep.mubr.f32.mxu0 0.0
    %3924 = vmatmul.mubr.f32.gmra.mrb[0].mxu0 %v3855
    %v3925 = vpop.f32.mrb[0].mxu0
    %v3926 = vadd.f32 0.0, %v3925
    %v3927 = vpop.f32.mrb[0].mxu0
    %3928 = vdwg.mxu0
    %v3929 = vmul.f32 %v3926, 0.25
    %v3930 = vsel %vm997, %v3929, -inf
    %3931 = vmax.xlane.f32.xlu0 %v3930
    %v3932 = vpop.xlane.xlu0 %3931
    %v3933 = vsub.f32 %v3929, %v3932
    %v3934 = vmul.f32 %v3933, 1.442695
    %v3935 = vpow.pop %v3934
    %v3936 = vsel %vm997, %v3935, 0.0
    %3937 = vadd.xlane.f32.xlu0 %v3936
    %v3938 = vpop.xlane.xlu0 %3937
    %v3939 = vrcp.pop %v3938
    %v3940 = vmul.f32 %v3935, %v3939
    %3941 = vrot.lane.b32.xlu0 %v3775, 112
    %v3942 = vpop.permute.xlu0 %3941
    %v3944 = vsel %vm1009, %v3940, 0
    %v3946 = vsel %vm635, %v3942, 0
    %3948 = vmatprep.subr.mxu0 0.0
    %3949 = vmatpush1.msra.mxu0 %v3946
    %3950 = vmatprep.subr.mxu0 0.0
    %3951 = vmatpush1.msra.mxu0 0.0
    %3952 = vmatprep.subr.mxu0 0.0
    %3953 = vmatpush1.msra.mxu0 0.0
    %3954 = vmatprep.subr.mxu0 0.0
    %3955 = vmatpush1.msra.mxu0 0.0
    %3956 = vmatprep.subr.mxu0 0.0
    %3957 = vmatpush1.msra.mxu0 0.0
    %3958 = vmatprep.subr.mxu0 0.0
    %3959 = vmatpush1.msra.mxu0 0.0
    %3960 = vmatprep.subr.mxu0 0.0
    %3961 = vmatpush1.msra.mxu0 0.0
    %3962 = vmatprep.subr.mxu0 0.0
    %3963 = vmatpush1.msra.mxu0 0.0
    %3964 = vmatprep.subr.mxu0 0.0
    %3965 = vmatpush1.msra.mxu0 0.0
    %3966 = vmatprep.subr.mxu0 0.0
    %3967 = vmatpush1.msra.mxu0 0.0
    %3968 = vmatprep.subr.mxu0 0.0
    %3969 = vmatpush1.msra.mxu0 0.0
    %3970 = vmatprep.subr.mxu0 0.0
    %3971 = vmatpush1.msra.mxu0 0.0
    %3972 = vmatprep.subr.mxu0 0.0
    %3973 = vmatpush1.msra.mxu0 0.0
    %3974 = vmatprep.subr.mxu0 0.0
    %3975 = vmatpush1.msra.mxu0 0.0
    %3976 = vmatprep.subr.mxu0 0.0
    %3977 = vmatpush1.msra.mxu0 0.0
    %3978 = vmatprep.subr.mxu0 0.0
    %3979 = vmatpush1.msra.mxu0 0.0
    %3980 = vmatprep.subr.mxu0 0.0
    %3981 = vmatpush1.msra.mxu0 0.0
    %3982 = vmatprep.subr.mxu0 0.0
    %3983 = vmatpush1.msra.mxu0 0.0
    %3984 = vmatprep.subr.mxu0 0.0
    %3985 = vmatpush1.msra.mxu0 0.0
    %3986 = vmatprep.subr.mxu0 0.0
    %3987 = vmatpush1.msra.mxu0 0.0
    %3988 = vmatprep.subr.mxu0 0.0
    %3989 = vmatpush1.msra.mxu0 0.0
    %3990 = vmatprep.subr.mxu0 0.0
    %3991 = vmatpush1.msra.mxu0 0.0
    %3992 = vmatprep.subr.mxu0 0.0
    %3993 = vmatpush1.msra.mxu0 0.0
    %3994 = vmatprep.subr.mxu0 0.0
    %3995 = vmatpush1.msra.mxu0 0.0
    %3996 = vmatprep.subr.mxu0 0.0
    %3997 = vmatpush1.msra.mxu0 0.0
    %3998 = vmatprep.subr.mxu0 0.0
    %3999 = vmatpush1.msra.mxu0 0.0
    %4000 = vmatprep.subr.mxu0 0.0
    %4001 = vmatpush1.msra.mxu0 0.0
    %4002 = vmatprep.subr.mxu0 0.0
    %4003 = vmatpush1.msra.mxu0 0.0
    %4004 = vmatprep.subr.mxu0 0.0
    %4005 = vmatpush1.msra.mxu0 0.0
    %4006 = vmatprep.subr.mxu0 0.0
    %4007 = vmatpush1.msra.mxu0 0.0
    %4008 = vmatprep.subr.mxu0 0.0
    %4009 = vmatpush1.msra.mxu0 0.0
    %4010 = vmatprep.subr.mxu0 0.0
    %4011 = vmatpush1.msra.mxu0 0.0
    %4012 = vmatprep.mubr.f32.mxu0 0.0
    %4013 = vmatmul.mubr.f32.gmra.mrb[0].mxu0 %v3944
    %v4014 = vpop.f32.mrb[0].mxu0
    %v4015 = vadd.f32 0.0, %v4014
    %v4016 = vpop.f32.mrb[0].mxu0
    %4017 = vdwg.mxu0
    %4018 = vrot.lane.b32.xlu0 %v3681, 96
    %v4019 = vpop.permute.xlu0 %4018
    %4020 = vrot.lane.b32.xlu0 %v3685, 96
    %v4021 = vpop.permute.xlu0 %4020
    %v4022 = vsel %vm919, %v4019, 0
    %v4024 = vsel %vm919, %v4021, 0
    %4026 = vmatprep.subr.mxu0 0.0
    %4027 = vmatpush1.xpose.msra.mxu0 %v4024
    %4028 = vmatprep.subr.mxu0 0.0
    %4029 = vmatpush1.xpose.msra.mxu0 0.0
    %4030 = vmatprep.subr.mxu0 0.0
    %4031 = vmatpush1.xpose.msra.mxu0 0.0
    %4032 = vmatprep.subr.mxu0 0.0
    %4033 = vmatpush1.xpose.msra.mxu0 0.0
    %4034 = vmatprep.subr.mxu0 0.0
    %4035 = vmatpush1.xpose.msra.mxu0 0.0
    %4036 = vmatprep.subr.mxu0 0.0
    %4037 = vmatpush1.xpose.msra.mxu0 0.0
    %4038 = vmatprep.subr.mxu0 0.0
    %4039 = vmatpush1.xpose.msra.mxu0 0.0
    %4040 = vmatprep.subr.mxu0 0.0
    %4041 = vmatpush1.xpose.msra.mxu0 0.0
    %4042 = vmatprep.subr.mxu0 0.0
    %4043 = vmatpush1.xpose.msra.mxu0 0.0
    %4044 = vmatprep.subr.mxu0 0.0
    %4045 = vmatpush1.xpose.msra.mxu0 0.0
    %4046 = vmatprep.subr.mxu0 0.0
    %4047 = vmatpush1.xpose.msra.mxu0 0.0
    %4048 = vmatprep.subr.mxu0 0.0
    %4049 = vmatpush1.xpose.msra.mxu0 0.0
    %4050 = vmatprep.subr.mxu0 0.0
    %4051 = vmatpush1.xpose.msra.mxu0 0.0
    %4052 = vmatprep.subr.mxu0 0.0
    %4053 = vmatpush1.xpose.msra.mxu0 0.0
    %4054 = vmatprep.subr.mxu0 0.0
    %4055 = vmatpush1.xpose.msra.mxu0 0.0
    %4056 = vmatprep.subr.mxu0 0.0
    %4057 = vmatpush1.xpose.msra.mxu0 0.0
    %4058 = vmatprep.subr.mxu0 0.0
    %4059 = vmatpush1.xpose.msra.mxu0 0.0
    %4060 = vmatprep.subr.mxu0 0.0
    %4061 = vmatpush1.xpose.msra.mxu0 0.0
    %4062 = vmatprep.subr.mxu0 0.0
    %4063 = vmatpush1.xpose.msra.mxu0 0.0
    %4064 = vmatprep.subr.mxu0 0.0
    %4065 = vmatpush1.xpose.msra.mxu0 0.0
    %4066 = vmatprep.subr.mxu0 0.0
    %4067 = vmatpush1.xpose.msra.mxu0 0.0
    %4068 = vmatprep.subr.mxu0 0.0
    %4069 = vmatpush1.xpose.msra.mxu0 0.0
    %4070 = vmatprep.subr.mxu0 0.0
    %4071 = vmatpush1.xpose.msra.mxu0 0.0
    %4072 = vmatprep.subr.mxu0 0.0
    %4073 = vmatpush1.xpose.msra.mxu0 0.0
    %4074 = vmatprep.subr.mxu0 0.0
    %4075 = vmatpush1.xpose.msra.mxu0 0.0
    %4076 = vmatprep.subr.mxu0 0.0
    %4077 = vmatpush1.xpose.msra.mxu0 0.0
    %4078 = vmatprep.subr.mxu0 0.0
    %4079 = vmatpush1.xpose.msra.mxu0 0.0
    %4080 = vmatprep.subr.mxu0 0.0
    %4081 = vmatpush1.xpose.msra.mxu0 0.0
    %4082 = vmatprep.subr.mxu0 0.0
    %4083 = vmatpush1.xpose.msra.mxu0 0.0
    %4084 = vmatprep.subr.mxu0 0.0
    %4085 = vmatpush1.xpose.msra.mxu0 0.0
    %4086 = vmatprep.subr.mxu0 0.0
    %4087 = vmatpush1.xpose.msra.mxu0 0.0
    %4088 = vmatprep.subr.mxu0 0.0
    %4089 = vmatpush1.xpose.msra.mxu0 0.0
    %4090 = vmatprep.mubr.f32.mxu0 0.0
    %4091 = vmatmul.mubr.f32.gmra.mrb[0].mxu0 %v4022
    %v4092 = vpop.f32.mrb[0].mxu0
    %v4093 = vadd.f32 0.0, %v4092
    %v4094 = vpop.f32.mrb[0].mxu0
    %4095 = vdwg.mxu0
    %v4096 = vmul.f32 %v4093, 0.25
    %v4097 = vsel %vm997, %v4096, -inf
    %4098 = vmax.xlane.f32.xlu0 %v4097
    %v4099 = vpop.xlane.xlu0 %4098
    %v4100 = vsub.f32 %v4096, %v4099
    %v4101 = vmul.f32 %v4100, 1.442695
    %v4102 = vpow.pop %v4101
    %v4103 = vsel %vm997, %v4102, 0.0
    %4104 = vadd.xlane.f32.xlu0 %v4103
    %v4105 = vpop.xlane.xlu0 %4104
    %v4106 = vrcp.pop %v4105
    %v4107 = vmul.f32 %v4102, %v4106
    %4108 = vrot.lane.b32.xlu0 %v3775, 96
    %v4109 = vpop.permute.xlu0 %4108
    %v4111 = vsel %vm1009, %v4107, 0
    %v4113 = vsel %vm635, %v4109, 0
    %4115 = vmatprep.subr.mxu0 0.0
    %4116 = vmatpush1.msra.mxu0 %v4113
    %4117 = vmatprep.subr.mxu0 0.0
    %4118 = vmatpush1.msra.mxu0 0.0
    %4119 = vmatprep.subr.mxu0 0.0
    %4120 = vmatpush1.msra.mxu0 0.0
    %4121 = vmatprep.subr.mxu0 0.0
    %4122 = vmatpush1.msra.mxu0 0.0
    %4123 = vmatprep.subr.mxu0 0.0
    %4124 = vmatpush1.msra.mxu0 0.0
    %4125 = vmatprep.subr.mxu0 0.0
    %4126 = vmatpush1.msra.mxu0 0.0
    %4127 = vmatprep.subr.mxu0 0.0
    %4128 = vmatpush1.msra.mxu0 0.0
    %4129 = vmatprep.subr.mxu0 0.0
    %4130 = vmatpush1.msra.mxu0 0.0
    %4131 = vmatprep.subr.mxu0 0.0
    %4132 = vmatpush1.msra.mxu0 0.0
    %4133 = vmatprep.subr.mxu0 0.0
    %4134 = vmatpush1.msra.mxu0 0.0
    %4135 = vmatprep.subr.mxu0 0.0
    %4136 = vmatpush1.msra.mxu0 0.0
    %4137 = vmatprep.subr.mxu0 0.0
    %4138 = vmatpush1.msra.mxu0 0.0
    %4139 = vmatprep.subr.mxu0 0.0
    %4140 = vmatpush1.msra.mxu0 0.0
    %4141 = vmatprep.subr.mxu0 0.0
    %4142 = vmatpush1.msra.mxu0 0.0
    %4143 = vmatprep.subr.mxu0 0.0
    %4144 = vmatpush1.msra.mxu0 0.0
    %4145 = vmatprep.subr.mxu0 0.0
    %4146 = vmatpush1.msra.mxu0 0.0
    %4147 = vmatprep.subr.mxu0 0.0
    %4148 = vmatpush1.msra.mxu0 0.0
    %4149 = vmatprep.subr.mxu0 0.0
    %4150 = vmatpush1.msra.mxu0 0.0
    %4151 = vmatprep.subr.mxu0 0.0
    %4152 = vmatpush1.msra.mxu0 0.0
    %4153 = vmatprep.subr.mxu0 0.0
    %4154 = vmatpush1.msra.mxu0 0.0
    %4155 = vmatprep.subr.mxu0 0.0
    %4156 = vmatpush1.msra.mxu0 0.0
    %4157 = vmatprep.subr.mxu0 0.0
    %4158 = vmatpush1.msra.mxu0 0.0
    %4159 = vmatprep.subr.mxu0 0.0
    %4160 = vmatpush1.msra.mxu0 0.0
    %4161 = vmatprep.subr.mxu0 0.0
    %4162 = vmatpush1.msra.mxu0 0.0
    %4163 = vmatprep.subr.mxu0 0.0
    %4164 = vmatpush1.msra.mxu0 0.0
    %4165 = vmatprep.subr.mxu0 0.0
    %4166 = vmatpush1.msra.mxu0 0.0
    %4167 = vmatprep.subr.mxu0 0.0
    %4168 = vmatpush1.msra.mxu0 0.0
    %4169 = vmatprep.subr.mxu0 0.0
    %4170 = vmatpush1.msra.mxu0 0.0
    %4171 = vmatprep.subr.mxu0 0.0
    %4172 = vmatpush1.msra.mxu0 0.0
    %4173 = vmatprep.subr.mxu0 0.0
    %4174 = vmatpush1.msra.mxu0 0.0
    %4175 = vmatprep.subr.mxu0 0.0
    %4176 = vmatpush1.msra.mxu0 0.0
    %4177 = vmatprep.subr.mxu0 0.0
    %4178 = vmatpush1.msra.mxu0 0.0
    %4179 = vmatprep.mubr.f32.mxu0 0.0
    %4180 = vmatmul.mubr.f32.gmra.mrb[0].mxu0 %v4111
    %v4181 = vpop.f32.mrb[0].mxu0
    %v4182 = vadd.f32 0.0, %v4181
    %v4183 = vpop.f32.mrb[0].mxu0
    %4184 = vdwg.mxu0
    %4185 = vrot.lane.b32.xlu0 %v3681, 80
    %v4186 = vpop.permute.xlu0 %4185
    %4187 = vrot.lane.b32.xlu0 %v3685, 80
    %v4188 = vpop.permute.xlu0 %4187
    %v4189 = vsel %vm919, %v4186, 0
    %v4191 = vsel %vm919, %v4188, 0
    %4193 = vmatprep.subr.mxu0 0.0
    %4194 = vmatpush1.xpose.msra.mxu0 %v4191
    %4195 = vmatprep.subr.mxu0 0.0
    %4196 = vmatpush1.xpose.msra.mxu0 0.0
    %4197 = vmatprep.subr.mxu0 0.0
    %4198 = vmatpush1.xpose.msra.mxu0 0.0
    %4199 = vmatprep.subr.mxu0 0.0
    %4200 = vmatpush1.xpose.msra.mxu0 0.0
    %4201 = vmatprep.subr.mxu0 0.0
    %4202 = vmatpush1.xpose.msra.mxu0 0.0
    %4203 = vmatprep.subr.mxu0 0.0
    %4204 = vmatpush1.xpose.msra.mxu0 0.0
    %4205 = vmatprep.subr.mxu0 0.0
    %4206 = vmatpush1.xpose.msra.mxu0 0.0
    %4207 = vmatprep.subr.mxu0 0.0
    %4208 = vmatpush1.xpose.msra.mxu0 0.0
    %4209 = vmatprep.subr.mxu0 0.0
    %4210 = vmatpush1.xpose.msra.mxu0 0.0
    %4211 = vmatprep.subr.mxu0 0.0
    %4212 = vmatpush1.xpose.msra.mxu0 0.0
    %4213 = vmatprep.subr.mxu0 0.0
    %4214 = vmatpush1.xpose.msra.mxu0 0.0
    %4215 = vmatprep.subr.mxu0 0.0
    %4216 = vmatpush1.xpose.msra.mxu0 0.0
    %4217 = vmatprep.subr.mxu0 0.0
    %4218 = vmatpush1.xpose.msra.mxu0 0.0
    %4219 = vmatprep.subr.mxu0 0.0
    %4220 = vmatpush1.xpose.msra.mxu0 0.0
    %4221 = vmatprep.subr.mxu0 0.0
    %4222 = vmatpush1.xpose.msra.mxu0 0.0
    %4223 = vmatprep.subr.mxu0 0.0
    %4224 = vmatpush1.xpose.msra.mxu0 0.0
    %4225 = vmatprep.subr.mxu0 0.0
    %4226 = vmatpush1.xpose.msra.mxu0 0.0
    %4227 = vmatprep.subr.mxu0 0.0
    %4228 = vmatpush1.xpose.msra.mxu0 0.0
    %4229 = vmatprep.subr.mxu0 0.0
    %4230 = vmatpush1.xpose.msra.mxu0 0.0
    %4231 = vmatprep.subr.mxu0 0.0
    %4232 = vmatpush1.xpose.msra.mxu0 0.0
    %4233 = vmatprep.subr.mxu0 0.0
    %4234 = vmatpush1.xpose.msra.mxu0 0.0
    %4235 = vmatprep.subr.mxu0 0.0
    %4236 = vmatpush1.xpose.msra.mxu0 0.0
    %4237 = vmatprep.subr.mxu0 0.0
    %4238 = vmatpush1.xpose.msra.mxu0 0.0
    %4239 = vmatprep.subr.mxu0 0.0
    %4240 = vmatpush1.xpose.msra.mxu0 0.0
    %4241 = vmatprep.subr.mxu0 0.0
    %4242 = vmatpush1.xpose.msra.mxu0 0.0
    %4243 = vmatprep.subr.mxu0 0.0
    %4244 = vmatpush1.xpose.msra.mxu0 0.0
    %4245 = vmatprep.subr.mxu0 0.0
    %4246 = vmatpush1.xpose.msra.mxu0 0.0
    %4247 = vmatprep.subr.mxu0 0.0
    %4248 = vmatpush1.xpose.msra.mxu0 0.0
    %4249 = vmatprep.subr.mxu0 0.0
    %4250 = vmatpush1.xpose.msra.mxu0 0.0
    %4251 = vmatprep.subr.mxu0 0.0
    %4252 = vmatpush1.xpose.msra.mxu0 0.0
    %4253 = vmatprep.subr.mxu0 0.0
    %4254 = vmatpush1.xpose.msra.mxu0 0.0
    %4255 = vmatprep.subr.mxu0 0.0
    %4256 = vmatpush1.xpose.msra.mxu0 0.0
    %4257 = vmatprep.mubr.f32.mxu0 0.0
    %4258 = vmatmul.mubr.f32.gmra.mrb[0].mxu0 %v4189
    %v4259 = vpop.f32.mrb[0].mxu0
    %v4260 = vadd.f32 0.0, %v4259
    %v4261 = vpop.f32.mrb[0].mxu0
    %4262 = vdwg.mxu0
    %v4263 = vmul.f32 %v4260, 0.25
    %v4264 = vsel %vm997, %v4263, -inf
    %4265 = vmax.xlane.f32.xlu0 %v4264
    %v4266 = vpop.xlane.xlu0 %4265
    %v4267 = vsub.f32 %v4263, %v4266
    %v4268 = vmul.f32 %v4267, 1.442695
    %v4269 = vpow.pop %v4268
    %v4270 = vsel %vm997, %v4269, 0.0
    %4271 = vadd.xlane.f32.xlu0 %v4270
    %v4272 = vpop.xlane.xlu0 %4271
    %v4273 = vrcp.pop %v4272
    %v4274 = vmul.f32 %v4269, %v4273
    %4275 = vrot.lane.b32.xlu0 %v3775, 80
    %v4276 = vpop.permute.xlu0 %4275
    %v4278 = vsel %vm1009, %v4274, 0
    %v4280 = vsel %vm635, %v4276, 0
    %4282 = vmatprep.subr.mxu0 0.0
    %4283 = vmatpush1.msra.mxu0 %v4280
    %4284 = vmatprep.subr.mxu0 0.0
    %4285 = vmatpush1.msra.mxu0 0.0
    %4286 = vmatprep.subr.mxu0 0.0
    %4287 = vmatpush1.msra.mxu0 0.0
    %4288 = vmatprep.subr.mxu0 0.0
    %4289 = vmatpush1.msra.mxu0 0.0
    %4290 = vmatprep.subr.mxu0 0.0
    %4291 = vmatpush1.msra.mxu0 0.0
    %4292 = vmatprep.subr.mxu0 0.0
    %4293 = vmatpush1.msra.mxu0 0.0
    %4294 = vmatprep.subr.mxu0 0.0
    %4295 = vmatpush1.msra.mxu0 0.0
    %4296 = vmatprep.subr.mxu0 0.0
    %4297 = vmatpush1.msra.mxu0 0.0
    %4298 = vmatprep.subr.mxu0 0.0
    %4299 = vmatpush1.msra.mxu0 0.0
    %4300 = vmatprep.subr.mxu0 0.0
    %4301 = vmatpush1.msra.mxu0 0.0
    %4302 = vmatprep.subr.mxu0 0.0
    %4303 = vmatpush1.msra.mxu0 0.0
    %4304 = vmatprep.subr.mxu0 0.0
    %4305 = vmatpush1.msra.mxu0 0.0
    %4306 = vmatprep.subr.mxu0 0.0
    %4307 = vmatpush1.msra.mxu0 0.0
    %4308 = vmatprep.subr.mxu0 0.0
    %4309 = vmatpush1.msra.mxu0 0.0
    %4310 = vmatprep.subr.mxu0 0.0
    %4311 = vmatpush1.msra.mxu0 0.0
    %4312 = vmatprep.subr.mxu0 0.0
    %4313 = vmatpush1.msra.mxu0 0.0
    %4314 = vmatprep.subr.mxu0 0.0
    %4315 = vmatpush1.msra.mxu0 0.0
    %4316 = vmatprep.subr.mxu0 0.0
    %4317 = vmatpush1.msra.mxu0 0.0
    %4318 = vmatprep.subr.mxu0 0.0
    %4319 = vmatpush1.msra.mxu0 0.0
    %4320 = vmatprep.subr.mxu0 0.0
    %4321 = vmatpush1.msra.mxu0 0.0
    %4322 = vmatprep.subr.mxu0 0.0
    %4323 = vmatpush1.msra.mxu0 0.0
    %4324 = vmatprep.subr.mxu0 0.0
    %4325 = vmatpush1.msra.mxu0 0.0
    %4326 = vmatprep.subr.mxu0 0.0
    %4327 = vmatpush1.msra.mxu0 0.0
    %4328 = vmatprep.subr.mxu0 0.0
    %4329 = vmatpush1.msra.mxu0 0.0
    %4330 = vmatprep.subr.mxu0 0.0
    %4331 = vmatpush1.msra.mxu0 0.0
    %4332 = vmatprep.subr.mxu0 0.0
    %4333 = vmatpush1.msra.mxu0 0.0
    %4334 = vmatprep.subr.mxu0 0.0
    %4335 = vmatpush1.msra.mxu0 0.0
    %4336 = vmatprep.subr.mxu0 0.0
    %4337 = vmatpush1.msra.mxu0 0.0
    %4338 = vmatprep.subr.mxu0 0.0
    %4339 = vmatpush1.msra.mxu0 0.0
    %4340 = vmatprep.subr.mxu0 0.0
    %4341 = vmatpush1.msra.mxu0 0.0
    %4342 = vmatprep.subr.mxu0 0.0
    %4343 = vmatpush1.msra.mxu0 0.0
    %4344 = vmatprep.subr.mxu0 0.0
    %4345 = vmatpush1.msra.mxu0 0.0
    %4346 = vmatprep.mubr.f32.mxu0 0.0
    %4347 = vmatmul.mubr.f32.gmra.mrb[0].mxu0 %v4278
    %v4348 = vpop.f32.mrb[0].mxu0
    %v4349 = vadd.f32 0.0, %v4348
    %v4350 = vpop.f32.mrb[0].mxu0
    %4351 = vdwg.mxu0
    %4353 = vrot.lane.b32.xlu0 %v4015, 16
    %v4354 = vpop.permute.xlu0 %4353
    %4357 = vrot.lane.b32.xlu0 %v4182, 32
    %v4358 = vpop.permute.xlu0 %4357
    %4361 = vrot.lane.b32.xlu0 %v4349, 48
    %v4362 = vpop.permute.xlu0 %4361
    %v4364 = vsel %vm919, %v3848, %v4354
    %v4365 = vsel %vm1600, %v4364, %v4358
    %v4366 = vsel %vm1602, %v4365, %v4362
    %v4368 = vrot.slane %v4366, 1
    %v4370 = vsel %vm635, %v3677, %v4368
    %s4371 = scalar_lea.vmem %s21, 64
    %v4372 = vld [vmem:[%s4371] sm:$0xff]
    %v4373 = vld [vmem:[%s4371 + $0x8] sm:$0xff]
    %v4374 = vld [vmem:[%s4371 + $0x10] sm:$0xff]
    %v4375 = vld [vmem:[%s4371 + $0x18] sm:$0xff]
    %v4376 = vld [vmem:[%s4371 + $0x20] sm:$0xff]
    %v4377 = vld [vmem:[%s4371 + $0x28] sm:$0xff]
    %v4378 = vld [vmem:[%s4371 + $0x30] sm:$0xff]
    %v4379 = vld [vmem:[%s4371 + $0x38] sm:$0xff]
    %s4380 = scalar_lea.vmem [#allocation15], 1
    %v4381 = vld [vmem:[%s4380] sm:$0x1]
    %v4383 = vlaneseq
    %v4384 = vshrl.u32 %v4383, 7
    %v4385 = vsub.s32 0, %v4384
    %v4386 = vrot.slane %v4381, %v4385
    %v4389 = vsel %vm451, %v4370, 0
    %v4391 = vsel %vm451, %v4368, 0
    %4393 = vmatprep.subr.mxu0 0.0
    %4394 = vmatpush1.msra.mxu0 %v4372
    %4395 = vmatprep.subr.mxu0 0.0
    %4396 = vmatpush1.msra.mxu0 %v4373
    %4397 = vmatprep.subr.mxu0 0.0
    %4398 = vmatpush1.msra.mxu0 %v4374
    %4399 = vmatprep.subr.mxu0 0.0
    %4400 = vmatpush1.msra.mxu0 %v4375
    %4401 = vmatprep.subr.mxu0 0.0
    %4402 = vmatpush1.msra.mxu0 %v4376
    %4403 = vmatprep.subr.mxu0 0.0
    %4404 = vmatpush1.msra.mxu0 %v4377
    %4405 = vmatprep.subr.mxu0 0.0
    %4406 = vmatpush1.msra.mxu0 %v4378
    %4407 = vmatprep.subr.mxu0 0.0
    %4408 = vmatpush1.msra.mxu0 %v4379
    %4409 = vmatprep.subr.mxu0 0.0
    %4410 = vmatpush1.msra.mxu0 0.0
    %4411 = vmatprep.subr.mxu0 0.0
    %4412 = vmatpush1.msra.mxu0 0.0
    %4413 = vmatprep.subr.mxu0 0.0
    %4414 = vmatpush1.msra.mxu0 0.0
    %4415 = vmatprep.subr.mxu0 0.0
    %4416 = vmatpush1.msra.mxu0 0.0
    %4417 = vmatprep.subr.mxu0 0.0
    %4418 = vmatpush1.msra.mxu0 0.0
    %4419 = vmatprep.subr.mxu0 0.0
    %4420 = vmatpush1.msra.mxu0 0.0
    %4421 = vmatprep.subr.mxu0 0.0
    %4422 = vmatpush1.msra.mxu0 0.0
    %4423 = vmatprep.subr.mxu0 0.0
    %4424 = vmatpush1.msra.mxu0 0.0
    %4425 = vmatprep.subr.mxu0 0.0
    %4426 = vmatpush1.msra.mxu0 0.0
    %4427 = vmatprep.subr.mxu0 0.0
    %4428 = vmatpush1.msra.mxu0 0.0
    %4429 = vmatprep.subr.mxu0 0.0
    %4430 = vmatpush1.msra.mxu0 0.0
    %4431 = vmatprep.subr.mxu0 0.0
    %4432 = vmatpush1.msra.mxu0 0.0
    %4433 = vmatprep.subr.mxu0 0.0
    %4434 = vmatpush1.msra.mxu0 0.0
    %4435 = vmatprep.subr.mxu0 0.0
    %4436 = vmatpush1.msra.mxu0 0.0
    %4437 = vmatprep.subr.mxu0 0.0
    %4438 = vmatpush1.msra.mxu0 0.0
    %4439 = vmatprep.subr.mxu0 0.0
    %4440 = vmatpush1.msra.mxu0 0.0
    %4441 = vmatprep.subr.mxu0 0.0
    %4442 = vmatpush1.msra.mxu0 0.0
    %4443 = vmatprep.subr.mxu0 0.0
    %4444 = vmatpush1.msra.mxu0 0.0
    %4445 = vmatprep.subr.mxu0 0.0
    %4446 = vmatpush1.msra.mxu0 0.0
    %4447 = vmatprep.subr.mxu0 0.0
    %4448 = vmatpush1.msra.mxu0 0.0
    %4449 = vmatprep.subr.mxu0 0.0
    %4450 = vmatpush1.msra.mxu0 0.0
    %4451 = vmatprep.subr.mxu0 0.0
    %4452 = vmatpush1.msra.mxu0 0.0
    %4453 = vmatprep.subr.mxu0 0.0
    %4454 = vmatpush1.msra.mxu0 0.0
    %4455 = vmatprep.subr.mxu0 0.0
    %4456 = vmatpush1.msra.mxu0 0.0
    %4457 = vmatprep.mubr.f32.mxu0 0.0
    %4458 = vmatmul.mubr.f32.gmra.mrb[0].mxu0 %v4389
    %v4459 = vpop.f32.mrb[0].mxu0
    %v4460 = vadd.f32 %v4386, %v4459
    %v4461 = vpop.f32.mrb[0].mxu0
    %4462 = vmatprep.mubr.f32.mxu0 0.0
    %4463 = vmatmul.mubr.f32.gmra.mrb[0].mxu0 %v4391
    %v4464 = vpop.f32.mrb[0].mxu0
    %v4465 = vadd.f32 %v4386, %v4464
    %v4466 = vpop.f32.mrb[0].mxu0
    %4467 = vdwg.mxu0
    %v4468 = vadd.f32 %v2714, %v4460
    %v4469 = vadd.f32 %v2715, %v4465
    %s4470 = scalar_lea.vmem [#allocation16], 1
    %v4471 = vld [vmem:[%s4470] sm:$0x1]
    %s4472 = scalar_lea.vmem [#allocation18], 1
    %v4473 = vld [vmem:[%s4472] sm:$0x1]
    %v4474 = vsel %vm451, %v4468, 0.0
    %4475 = vadd.xlane.f32.xlu0 %v4474
    %v4476 = vpop.xlane.xlu0 %4475
    %v4477 = vsel %vm2400, %v4469, 0.0
    %4478 = vadd.xlane.f32.xlu0 %v4477
    %v4479 = vpop.xlane.xlu0 %4478
    %v4480 = vmul.f32 %v4476, %v2404
    %v4481 = vmul.f32 %v4479, %v2404
    %v4482 = vsub.f32 %v4468, %v4480
    %v4483 = vsub.f32 %v4469, %v4481
    %v4484 = vmul.f32 %v4482, %v4482
    %v4485 = vmul.f32 %v4483, %v4483
    %v4486 = vsel %vm451, %v4484, 0.0
    %4487 = vadd.xlane.f32.xlu0 %v4486
    %v4488 = vpop.xlane.xlu0 %4487
    %v4489 = vsel %vm2400, %v4485, 0.0
    %4490 = vadd.xlane.f32.xlu0 %v4489
    %v4491 = vpop.xlane.xlu0 %4490
    %v4492 = vmul.f32 %v4488, %v2404
    %v4493 = vmul.f32 %v4491, %v2404
    %v4494 = vadd.f32 %v4492, 1e-05
    %v4495 = vadd.f32 %v4493, 1e-05
    %v4496 = vrsqrt.pop %v4494
    %v4497 = vrsqrt.pop %v4495
    %v4498 = vmul.f32 %v4482, %v4496
    %v4499 = vmul.f32 %v4483, %v4497
    %v4501 = vlaneseq
    %v4502 = vshrl.u32 %v4501, 7
    %v4503 = vsub.s32 0, %v4502
    %v4504 = vrot.slane %v4471, %v4503
    %v4506 = vmul.f32 %v4498, %v4504
    %v4507 = vmul.f32 %v4499, %v4504
    %v4509 = vlaneseq
    %v4510 = vshrl.u32 %v4509, 7
    %v4511 = vsub.s32 0, %v4510
    %v4512 = vrot.slane %v4473, %v4511
    %v4514 = vadd.f32 %v4506, %v4512
    %v4515 = vadd.f32 %v4507, %v4512
    %s4516 = scalar_lea.vmem %s29, 128
    %v4517 = vld [vmem:[%s4516] sm:$0xff]
    %v4518 = vld [vmem:[%s4516 + $0x8] sm:$0xff]
    %v4519 = vld [vmem:[%s4516 + $0x10] sm:$0xff]
    %v4520 = vld [vmem:[%s4516 + $0x18] sm:$0xff]
    %v4521 = vld [vmem:[%s4516 + $0x20] sm:$0xff]
    %v4522 = vld [vmem:[%s4516 + $0x28] sm:$0xff]
    %v4523 = vld [vmem:[%s4516 + $0x30] sm:$0xff]
    %v4524 = vld [vmem:[%s4516 + $0x38] sm:$0xff]
    %v4525 = vld [vmem:[%s4516 + $0x40] sm:$0xff]
    %v4526 = vld [vmem:[%s4516 + $0x48] sm:$0xff]
    %v4527 = vld [vmem:[%s4516 + $0x50] sm:$0xff]
    %v4528 = vld [vmem:[%s4516 + $0x58] sm:$0xff]
    %v4529 = vld [vmem:[%s4516 + $0x60] sm:$0xff]
    %v4530 = vld [vmem:[%s4516 + $0x68] sm:$0xff]
    %v4531 = vld [vmem:[%s4516 + $0x70] sm:$0xff]
    %v4532 = vld [vmem:[%s4516 + $0x78] sm:$0xff]
    %s4533 = scalar_lea.vmem [#allocation19], 2
    %v4534 = vld [vmem:[%s4533] sm:$0x3]
    %v4536 = vlaneseq
    %v4537 = vshrl.u32 %v4536, 7
    %v4538 = vsub.s32 0, %v4537
    %v4539 = vrot.slane %v4534, %v4538
    %v4540 = vlaneseq
    %v4541 = vshrl.u32 %v4540, 7
    %v4542 = vsub.s32 1, %v4541
    %v4543 = vrot.slane %v4534, %v4542
    %v4547 = vsel %vm451, %v4514, 0
    %v4550 = vsel %vm451, %v4515, 0
    %4552 = vmatprep.subr.mxu0 %v4518
    %4553 = vmatpush1.msra.mxu0 %v4517
    %4554 = vmatprep.subr.mxu0 %v4520
    %4555 = vmatpush1.msra.mxu0 %v4519
    %4556 = vmatprep.subr.mxu0 %v4522
    %4557 = vmatpush1.msra.mxu0 %v4521
    %4558 = vmatprep.subr.mxu0 %v4524
    %4559 = vmatpush1.msra.mxu0 %v4523
    %4560 = vmatprep.subr.mxu0 %v4526
    %4561 = vmatpush1.msra.mxu0 %v4525
    %4562 = vmatprep.subr.mxu0 %v4528
    %4563 = vmatpush1.msra.mxu0 %v4527
    %4564 = vmatprep.subr.mxu0 %v4530
    %4565 = vmatpush1.msra.mxu0 %v4529
    %4566 = vmatprep.subr.mxu0 %v4532
    %4567 = vmatpush1.msra.mxu0 %v4531
    %4568 = vmatprep.subr.mxu0 0.0
    %4569 = vmatpush1.msra.mxu0 0.0
    %4570 = vmatprep.subr.mxu0 0.0
    %4571 = vmatpush1.msra.mxu0 0.0
    %4572 = vmatprep.subr.mxu0 0.0
    %4573 = vmatpush1.msra.mxu0 0.0
    %4574 = vmatprep.subr.mxu0 0.0
    %4575 = vmatpush1.msra.mxu0 0.0
    %4576 = vmatprep.subr.mxu0 0.0
    %4577 = vmatpush1.msra.mxu0 0.0
    %4578 = vmatprep.subr.mxu0 0.0
    %4579 = vmatpush1.msra.mxu0 0.0
    %4580 = vmatprep.subr.mxu0 0.0
    %4581 = vmatpush1.msra.mxu0 0.0
    %4582 = vmatprep.subr.mxu0 0.0
    %4583 = vmatpush1.msra.mxu0 0.0
    %4584 = vmatprep.subr.mxu0 0.0
    %4585 = vmatpush1.msra.mxu0 0.0
    %4586 = vmatprep.subr.mxu0 0.0
    %4587 = vmatpush1.msra.mxu0 0.0
    %4588 = vmatprep.subr.mxu0 0.0
    %4589 = vmatpush1.msra.mxu0 0.0
    %4590 = vmatprep.subr.mxu0 0.0
    %4591 = vmatpush1.msra.mxu0 0.0
    %4592 = vmatprep.subr.mxu0 0.0
    %4593 = vmatpush1.msra.mxu0 0.0
    %4594 = vmatprep.subr.mxu0 0.0
    %4595 = vmatpush1.msra.mxu0 0.0
    %4596 = vmatprep.subr.mxu0 0.0
    %4597 = vmatpush1.msra.mxu0 0.0
    %4598 = vmatprep.subr.mxu0 0.0
    %4599 = vmatpush1.msra.mxu0 0.0
    %4600 = vmatprep.subr.mxu0 0.0
    %4601 = vmatpush1.msra.mxu0 0.0
    %4602 = vmatprep.subr.mxu0 0.0
    %4603 = vmatpush1.msra.mxu0 0.0
    %4604 = vmatprep.subr.mxu0 0.0
    %4605 = vmatpush1.msra.mxu0 0.0
    %4606 = vmatprep.subr.mxu0 0.0
    %4607 = vmatpush1.msra.mxu0 0.0
    %4608 = vmatprep.subr.mxu0 0.0
    %4609 = vmatpush1.msra.mxu0 0.0
    %4610 = vmatprep.subr.mxu0 0.0
    %4611 = vmatpush1.msra.mxu0 0.0
    %4612 = vmatprep.subr.mxu0 0.0
    %4613 = vmatpush1.msra.mxu0 0.0
    %4614 = vmatprep.subr.mxu0 0.0
    %4615 = vmatpush1.msra.mxu0 0.0
    %4616 = vmatprep.mubr.f32.mxu0 0.0
    %4617 = vmatmul.mubr.f32.gmra.mrb[0].mxu0 %v4547
    %v4618 = vpop.f32.mrb[0].mxu0
    %v4619 = vadd.f32 %v4539, %v4618
    %v4620 = vpop.f32.mrb[0].mxu0
    %v4621 = vadd.f32 %v4543, %v4620
    %4622 = vmatprep.mubr.f32.mxu0 0.0
    %4623 = vmatmul.mubr.f32.gmra.mrb[0].mxu0 %v4550
    %v4624 = vpop.f32.mrb[0].mxu0
    %v4625 = vadd.f32 %v4539, %v4624
    %v4626 = vpop.f32.mrb[0].mxu0
    %v4627 = vadd.f32 %v4543, %v4626
    %4628 = vdwg.mxu0
    %v4629 = vmax.f32 %v4619, 0.0
    %v4630 = vmax.f32 %v4621, 0.0
    %v4631 = vmax.f32 %v4625, 0.0
    %v4632 = vmax.f32 %v4627, 0.0
    %s4633 = scalar_lea.vmem %s33, 256
    %v4634 = vld [vmem:[%s4633] sm:$0xff]
    %v4635 = vld [vmem:[%s4633 + $0x8] sm:$0xff]
    %v4636 = vld [vmem:[%s4633 + $0x10] sm:$0xff]
    %v4637 = vld [vmem:[%s4633 + $0x18] sm:$0xff]
    %v4638 = vld [vmem:[%s4633 + $0x20] sm:$0xff]
    %v4639 = vld [vmem:[%s4633 + $0x28] sm:$0xff]
    %v4640 = vld [vmem:[%s4633 + $0x30] sm:$0xff]
    %v4641 = vld [vmem:[%s4633 + $0x38] sm:$0xff]
    %v4642 = vld [vmem:[%s4633 + $0x40] sm:$0xff]
    %v4643 = vld [vmem:[%s4633 + $0x48] sm:$0xff]
    %v4644 = vld [vmem:[%s4633 + $0x50] sm:$0xff]
    %v4645 = vld [vmem:[%s4633 + $0x58] sm:$0xff]
    %v4646 = vld [vmem:[%s4633 + $0x60] sm:$0xff]
    %v4647 = vld [vmem:[%s4633 + $0x68] sm:$0xff]
    %v4648 = vld [vmem:[%s4633 + $0x70] sm:$0xff]
    %v4649 = vld [vmem:[%s4633 + $0x78] sm:$0xff]
    %v4650 = vld [vmem:[%s4633 + $0x80] sm:$0xff]
    %v4651 = vld [vmem:[%s4633 + $0x88] sm:$0xff]
    %v4652 = vld [vmem:[%s4633 + $0x90] sm:$0xff]
    %v4653 = vld [vmem:[%s4633 + $0x98] sm:$0xff]
    %v4654 = vld [vmem:[%s4633 + $0xa0] sm:$0xff]
    %v4655 = vld [vmem:[%s4633 + $0xa8] sm:$0xff]
    %v4656 = vld [vmem:[%s4633 + $0xb0] sm:$0xff]
    %v4657 = vld [vmem:[%s4633 + $0xb8] sm:$0xff]
    %v4658 = vld [vmem:[%s4633 + $0xc0] sm:$0xff]
    %v4659 = vld [vmem:[%s4633 + $0xc8] sm:$0xff]
    %v4660 = vld [vmem:[%s4633 + $0xd0] sm:$0xff]
    %v4661 = vld [vmem:[%s4633 + $0xd8] sm:$0xff]
    %v4662 = vld [vmem:[%s4633 + $0xe0] sm:$0xff]
    %v4663 = vld [vmem:[%s4633 + $0xe8] sm:$0xff]
    %v4664 = vld [vmem:[%s4633 + $0xf0] sm:$0xff]
    %v4665 = vld [vmem:[%s4633 + $0xf8] sm:$0xff]
    %s4666 = scalar_lea.vmem [#allocation21], 1
    %v4667 = vld [vmem:[%s4666] sm:$0x1]
    %v4669 = vlaneseq
    %v4670 = vshrl.u32 %v4669, 7
    %v4671 = vsub.s32 0, %v4670
    %v4672 = vrot.slane %v4667, %v4671
    %4674 = vmatprep.subr.mxu0 0.0
    %4675 = vmatpush1.msra.mxu0 %v4634
    %4676 = vmatprep.subr.mxu0 0.0
    %4677 = vmatpush1.msra.mxu0 %v4635
    %4678 = vmatprep.subr.mxu0 0.0
    %4679 = vmatpush1.msra.mxu0 %v4636
    %4680 = vmatprep.subr.mxu0 0.0
    %4681 = vmatpush1.msra.mxu0 %v4637
    %4682 = vmatprep.subr.mxu0 0.0
    %4683 = vmatpush1.msra.mxu0 %v4638
    %4684 = vmatprep.subr.mxu0 0.0
    %4685 = vmatpush1.msra.mxu0 %v4639
    %4686 = vmatprep.subr.mxu0 0.0
    %4687 = vmatpush1.msra.mxu0 %v4640
    %4688 = vmatprep.subr.mxu0 0.0
    %4689 = vmatpush1.msra.mxu0 %v4641
    %4690 = vmatprep.subr.mxu0 0.0
    %4691 = vmatpush1.msra.mxu0 %v4642
    %4692 = vmatprep.subr.mxu0 0.0
    %4693 = vmatpush1.msra.mxu0 %v4643
    %4694 = vmatprep.subr.mxu0 0.0
    %4695 = vmatpush1.msra.mxu0 %v4644
    %4696 = vmatprep.subr.mxu0 0.0
    %4697 = vmatpush1.msra.mxu0 %v4645
    %4698 = vmatprep.subr.mxu0 0.0
    %4699 = vmatpush1.msra.mxu0 %v4646
    %4700 = vmatprep.subr.mxu0 0.0
    %4701 = vmatpush1.msra.mxu0 %v4647
    %4702 = vmatprep.subr.mxu0 0.0
    %4703 = vmatpush1.msra.mxu0 %v4648
    %4704 = vmatprep.subr.mxu0 0.0
    %4705 = vmatpush1.msra.mxu0 %v4649
    %4706 = vmatprep.subr.mxu0 0.0
    %4707 = vmatpush1.msra.mxu0 %v4650
    %4708 = vmatprep.subr.mxu0 0.0
    %4709 = vmatpush1.msra.mxu0 %v4651
    %4710 = vmatprep.subr.mxu0 0.0
    %4711 = vmatpush1.msra.mxu0 %v4652
    %4712 = vmatprep.subr.mxu0 0.0
    %4713 = vmatpush1.msra.mxu0 %v4653
    %4714 = vmatprep.subr.mxu0 0.0
    %4715 = vmatpush1.msra.mxu0 %v4654
    %4716 = vmatprep.subr.mxu0 0.0
    %4717 = vmatpush1.msra.mxu0 %v4655
    %4718 = vmatprep.subr.mxu0 0.0
    %4719 = vmatpush1.msra.mxu0 %v4656
    %4720 = vmatprep.subr.mxu0 0.0
    %4721 = vmatpush1.msra.mxu0 %v4657
    %4722 = vmatprep.subr.mxu0 0.0
    %4723 = vmatpush1.msra.mxu0 %v4658
    %4724 = vmatprep.subr.mxu0 0.0
    %4725 = vmatpush1.msra.mxu0 %v4659
    %4726 = vmatprep.subr.mxu0 0.0
    %4727 = vmatpush1.msra.mxu0 %v4660
    %4728 = vmatprep.subr.mxu0 0.0
    %4729 = vmatpush1.msra.mxu0 %v4661
    %4730 = vmatprep.subr.mxu0 0.0
    %4731 = vmatpush1.msra.mxu0 %v4662
    %4732 = vmatprep.subr.mxu0 0.0
    %4733 = vmatpush1.msra.mxu0 %v4663
    %4734 = vmatprep.subr.mxu0 0.0
    %4735 = vmatpush1.msra.mxu0 %v4664
    %4736 = vmatprep.subr.mxu0 0.0
    %4737 = vmatpush1.msra.mxu0 %v4665
    %4738 = vmatprep.mubr.f32.mxu0 %v4630
    %4739 = vmatmul.mubr.f32.gmra.mrb[0].mxu0 %v4629
    %v4740 = vpop.f32.mrb[0].mxu0
    %v4741 = vadd.f32 %v4672, %v4740
    %v4742 = vpop.f32.mrb[0].mxu0
    %4743 = vmatprep.mubr.f32.mxu0 %v4632
    %4744 = vmatmul.mubr.f32.gmra.mrb[0].mxu0 %v4631
    %v4745 = vpop.f32.mrb[0].mxu0
    %v4746 = vadd.f32 %v4672, %v4745
    %v4747 = vpop.f32.mrb[0].mxu0
    %4748 = vdwg.mxu0
    %v4749 = vadd.f32 %v4514, %v4741
    %v4750 = vadd.f32 %v4515, %v4746
    %s4751 = scalar_lea.vmem [#allocation22], 1
    %v4752 = vld [vmem:[%s4751] sm:$0x1]
    %s4753 = scalar_lea.vmem [#allocation24], 1
    %v4754 = vld [vmem:[%s4753] sm:$0x1]
    %v4755 = vsel %vm451, %v4749, 0.0
    %4756 = vadd.xlane.f32.xlu0 %v4755
    %v4757 = vpop.xlane.xlu0 %4756
    %v4758 = vsel %vm2400, %v4750, 0.0
    %4759 = vadd.xlane.f32.xlu0 %v4758
    %v4760 = vpop.xlane.xlu0 %4759
    %v4761 = vmul.f32 %v4757, %v2404
    %v4762 = vmul.f32 %v4760, %v2404
    %v4763 = vsub.f32 %v4749, %v4761
    %v4764 = vsub.f32 %v4750, %v4762
    %v4765 = vmul.f32 %v4763, %v4763
    %v4766 = vmul.f32 %v4764, %v4764
    %v4767 = vsel %vm451, %v4765, 0.0
    %4768 = vadd.xlane.f32.xlu0 %v4767
    %v4769 = vpop.xlane.xlu0 %4768
    %v4770 = vsel %vm2400, %v4766, 0.0
    %4771 = vadd.xlane.f32.xlu0 %v4770
    %v4772 = vpop.xlane.xlu0 %4771
    %v4773 = vmul.f32 %v4769, %v2404
    %v4774 = vmul.f32 %v4772, %v2404
    %v4775 = vadd.f32 %v4773, 1e-05
    %v4776 = vadd.f32 %v4774, 1e-05
    %v4777 = vrsqrt.pop %v4775
    %v4778 = vrsqrt.pop %v4776
    %v4779 = vmul.f32 %v4763, %v4777
    %v4780 = vmul.f32 %v4764, %v4778
    %v4782 = vlaneseq
    %v4783 = vshrl.u32 %v4782, 7
    %v4784 = vsub.s32 0, %v4783
    %v4785 = vrot.slane %v4752, %v4784
    %v4787 = vmul.f32 %v4779, %v4785
    %v4788 = vmul.f32 %v4780, %v4785
    %v4790 = vlaneseq
    %v4791 = vshrl.u32 %v4790, 7
    %v4792 = vsub.s32 0, %v4791
    %v4793 = vrot.slane %v4754, %v4792
    %v4795 = vadd.f32 %v4787, %v4793
    %v4796 = vadd.f32 %v4788, %v4793
    %s4797 = scalar_lea.vmem %s17, 384
    %v4798 = vld [vmem:[%s4797] sm:$0xff]
    %v4799 = vld [vmem:[%s4797 + $0x8] sm:$0xff]
    %v4800 = vld [vmem:[%s4797 + $0x10] sm:$0xff]
    %v4801 = vld [vmem:[%s4797 + $0x18] sm:$0xff]
    %v4802 = vld [vmem:[%s4797 + $0x20] sm:$0xff]
    %v4803 = vld [vmem:[%s4797 + $0x28] sm:$0xff]
    %v4804 = vld [vmem:[%s4797 + $0x30] sm:$0xff]
    %v4805 = vld [vmem:[%s4797 + $0x38] sm:$0xff]
    %s4806 = scalar_lea.vmem %s19, 6
    %v4807 = vld [vmem:[%s4806] sm:$0x1]
    %v4809 = vlaneseq
    %v4810 = vshrl.u32 %v4809, 7
    %v4811 = vsub.s32 0, %v4810
    %v4812 = vrot.slane %v4807, %v4811
    %v4815 = vsel %vm451, %v4795, 0
    %v4818 = vsel %vm451, %v4796, 0
    %4820 = vmatprep.subr.mxu0 0.0
    %4821 = vmatpush1.msra.mxu0 %v4798
    %4822 = vmatprep.subr.mxu0 0.0
    %4823 = vmatpush1.msra.mxu0 %v4799
    %4824 = vmatprep.subr.mxu0 0.0
    %4825 = vmatpush1.msra.mxu0 %v4800
    %4826 = vmatprep.subr.mxu0 0.0
    %4827 = vmatpush1.msra.mxu0 %v4801
    %4828 = vmatprep.subr.mxu0 0.0
    %4829 = vmatpush1.msra.mxu0 %v4802
    %4830 = vmatprep.subr.mxu0 0.0
    %4831 = vmatpush1.msra.mxu0 %v4803
    %4832 = vmatprep.subr.mxu0 0.0
    %4833 = vmatpush1.msra.mxu0 %v4804
    %4834 = vmatprep.subr.mxu0 0.0
    %4835 = vmatpush1.msra.mxu0 %v4805
    %4836 = vmatprep.subr.mxu0 0.0
    %4837 = vmatpush1.msra.mxu0 0.0
    %4838 = vmatprep.subr.mxu0 0.0
    %4839 = vmatpush1.msra.mxu0 0.0
    %4840 = vmatprep.subr.mxu0 0.0
    %4841 = vmatpush1.msra.mxu0 0.0
    %4842 = vmatprep.subr.mxu0 0.0
    %4843 = vmatpush1.msra.mxu0 0.0
    %4844 = vmatprep.subr.mxu0 0.0
    %4845 = vmatpush1.msra.mxu0 0.0
    %4846 = vmatprep.subr.mxu0 0.0
    %4847 = vmatpush1.msra.mxu0 0.0
    %4848 = vmatprep.subr.mxu0 0.0
    %4849 = vmatpush1.msra.mxu0 0.0
    %4850 = vmatprep.subr.mxu0 0.0
    %4851 = vmatpush1.msra.mxu0 0.0
    %4852 = vmatprep.subr.mxu0 0.0
    %4853 = vmatpush1.msra.mxu0 0.0
    %4854 = vmatprep.subr.mxu0 0.0
    %4855 = vmatpush1.msra.mxu0 0.0
    %4856 = vmatprep.subr.mxu0 0.0
    %4857 = vmatpush1.msra.mxu0 0.0
    %4858 = vmatprep.subr.mxu0 0.0
    %4859 = vmatpush1.msra.mxu0 0.0
    %4860 = vmatprep.subr.mxu0 0.0
    %4861 = vmatpush1.msra.mxu0 0.0
    %4862 = vmatprep.subr.mxu0 0.0
    %4863 = vmatpush1.msra.mxu0 0.0
    %4864 = vmatprep.subr.mxu0 0.0
    %4865 = vmatpush1.msra.mxu0 0.0
    %4866 = vmatprep.subr.mxu0 0.0
    %4867 = vmatpush1.msra.mxu0 0.0
    %4868 = vmatprep.subr.mxu0 0.0
    %4869 = vmatpush1.msra.mxu0 0.0
    %4870 = vmatprep.subr.mxu0 0.0
    %4871 = vmatpush1.msra.mxu0 0.0
    %4872 = vmatprep.subr.mxu0 0.0
    %4873 = vmatpush1.msra.mxu0 0.0
    %4874 = vmatprep.subr.mxu0 0.0
    %4875 = vmatpush1.msra.mxu0 0.0
    %4876 = vmatprep.subr.mxu0 0.0
    %4877 = vmatpush1.msra.mxu0 0.0
    %4878 = vmatprep.subr.mxu0 0.0
    %4879 = vmatpush1.msra.mxu0 0.0
    %4880 = vmatprep.subr.mxu0 0.0
    %4881 = vmatpush1.msra.mxu0 0.0
    %4882 = vmatprep.subr.mxu0 0.0
    %4883 = vmatpush1.msra.mxu0 0.0
    %4884 = vmatprep.mubr.f32.mxu0 0.0
    %4885 = vmatmul.mubr.f32.gmra.mrb[0].mxu0 %v4815
    %v4886 = vpop.f32.mrb[0].mxu0
    %v4887 = vadd.f32 %v4812, %v4886
    %v4888 = vpop.f32.mrb[0].mxu0
    %4889 = vmatprep.mubr.f32.mxu0 0.0
    %4890 = vmatmul.mubr.f32.gmra.mrb[0].mxu0 %v4818
    %v4891 = vpop.f32.mrb[0].mxu0
    %v4892 = vadd.f32 %v4812, %v4891
    %v4893 = vpop.f32.mrb[0].mxu0
    %4894 = vdwg.mxu0
    %s4895 = scalar_lea.vmem %s17, 448
    %v4896 = vld [vmem:[%s4895] sm:$0xff]
    %v4897 = vld [vmem:[%s4895 + $0x8] sm:$0xff]
    %v4898 = vld [vmem:[%s4895 + $0x10] sm:$0xff]
    %v4899 = vld [vmem:[%s4895 + $0x18] sm:$0xff]
    %v4900 = vld [vmem:[%s4895 + $0x20] sm:$0xff]
    %v4901 = vld [vmem:[%s4895 + $0x28] sm:$0xff]
    %v4902 = vld [vmem:[%s4895 + $0x30] sm:$0xff]
    %v4903 = vld [vmem:[%s4895 + $0x38] sm:$0xff]
    %s4904 = scalar_lea.vmem %s19, 7
    %v4905 = vld [vmem:[%s4904] sm:$0x1]
    %v4907 = vlaneseq
    %v4908 = vshrl.u32 %v4907, 7
    %v4909 = vsub.s32 0, %v4908
    %v4910 = vrot.slane %v4905, %v4909
    %4912 = vmatprep.subr.mxu0 0.0
    %4913 = vmatpush1.msra.mxu0 %v4896
    %4914 = vmatprep.subr.mxu0 0.0
    %4915 = vmatpush1.msra.mxu0 %v4897
    %4916 = vmatprep.subr.mxu0 0.0
    %4917 = vmatpush1.msra.mxu0 %v4898
    %4918 = vmatprep.subr.mxu0 0.0
    %4919 = vmatpush1.msra.mxu0 %v4899
    %4920 = vmatprep.subr.mxu0 0.0
    %4921 = vmatpush1.msra.mxu0 %v4900
    %4922 = vmatprep.subr.mxu0 0.0
    %4923 = vmatpush1.msra.mxu0 %v4901
    %4924 = vmatprep.subr.mxu0 0.0
    %4925 = vmatpush1.msra.mxu0 %v4902
    %4926 = vmatprep.subr.mxu0 0.0
    %4927 = vmatpush1.msra.mxu0 %v4903
    %4928 = vmatprep.subr.mxu0 0.0
    %4929 = vmatpush1.msra.mxu0 0.0
    %4930 = vmatprep.subr.mxu0 0.0
    %4931 = vmatpush1.msra.mxu0 0.0
    %4932 = vmatprep.subr.mxu0 0.0
    %4933 = vmatpush1.msra.mxu0 0.0
    %4934 = vmatprep.subr.mxu0 0.0
    %4935 = vmatpush1.msra.mxu0 0.0
    %4936 = vmatprep.subr.mxu0 0.0
    %4937 = vmatpush1.msra.mxu0 0.0
    %4938 = vmatprep.subr.mxu0 0.0
    %4939 = vmatpush1.msra.mxu0 0.0
    %4940 = vmatprep.subr.mxu0 0.0
    %4941 = vmatpush1.msra.mxu0 0.0
    %4942 = vmatprep.subr.mxu0 0.0
    %4943 = vmatpush1.msra.mxu0 0.0
    %4944 = vmatprep.subr.mxu0 0.0
    %4945 = vmatpush1.msra.mxu0 0.0
    %4946 = vmatprep.subr.mxu0 0.0
    %4947 = vmatpush1.msra.mxu0 0.0
    %4948 = vmatprep.subr.mxu0 0.0
    %4949 = vmatpush1.msra.mxu0 0.0
    %4950 = vmatprep.subr.mxu0 0.0
    %4951 = vmatpush1.msra.mxu0 0.0
    %4952 = vmatprep.subr.mxu0 0.0
    %4953 = vmatpush1.msra.mxu0 0.0
    %4954 = vmatprep.subr.mxu0 0.0
    %4955 = vmatpush1.msra.mxu0 0.0
    %4956 = vmatprep.subr.mxu0 0.0
    %4957 = vmatpush1.msra.mxu0 0.0
    %4958 = vmatprep.subr.mxu0 0.0
    %4959 = vmatpush1.msra.mxu0 0.0
    %4960 = vmatprep.subr.mxu0 0.0
    %4961 = vmatpush1.msra.mxu0 0.0
    %4962 = vmatprep.subr.mxu0 0.0
    %4963 = vmatpush1.msra.mxu0 0.0
    %4964 = vmatprep.subr.mxu0 0.0
    %4965 = vmatpush1.msra.mxu0 0.0
    %4966 = vmatprep.subr.mxu0 0.0
    %4967 = vmatpush1.msra.mxu0 0.0
    %4968 = vmatprep.subr.mxu0 0.0
    %4969 = vmatpush1.msra.mxu0 0.0
    %4970 = vmatprep.subr.mxu0 0.0
    %4971 = vmatpush1.msra.mxu0 0.0
    %4972 = vmatprep.subr.mxu0 0.0
    %4973 = vmatpush1.msra.mxu0 0.0
    %4974 = vmatprep.subr.mxu0 0.0
    %4975 = vmatpush1.msra.mxu0 0.0
    %4976 = vmatprep.mubr.f32.mxu0 0.0
    %4977 = vmatmul.mubr.f32.gmra.mrb[0].mxu0 %v4815
    %v4978 = vpop.f32.mrb[0].mxu0
    %v4979 = vadd.f32 %v4910, %v4978
    %v4980 = vpop.f32.mrb[0].mxu0
    %4981 = vmatprep.mubr.f32.mxu0 0.0
    %4982 = vmatmul.mubr.f32.gmra.mrb[0].mxu0 %v4818
    %v4983 = vpop.f32.mrb[0].mxu0
    %v4984 = vadd.f32 %v4910, %v4983
    %v4985 = vpop.f32.mrb[0].mxu0
    %4986 = vdwg.mxu0
    %s4987 = scalar_lea.vmem %s17, 512
    %v4988 = vld [vmem:[%s4987] sm:$0xff]
    %v4989 = vld [vmem:[%s4987 + $0x8] sm:$0xff]
    %v4990 = vld [vmem:[%s4987 + $0x10] sm:$0xff]
    %v4991 = vld [vmem:[%s4987 + $0x18] sm:$0xff]
    %v4992 = vld [vmem:[%s4987 + $0x20] sm:$0xff]
    %v4993 = vld [vmem:[%s4987 + $0x28] sm:$0xff]
    %v4994 = vld [vmem:[%s4987 + $0x30] sm:$0xff]
    %v4995 = vld [vmem:[%s4987 + $0x38] sm:$0xff]
    %s4996 = scalar_lea.vmem %s19, 8
    %v4997 = vld [vmem:[%s4996] sm:$0x1]
    %v4999 = vlaneseq
    %v5000 = vshrl.u32 %v4999, 7
    %v5001 = vsub.s32 0, %v5000
    %v5002 = vrot.slane %v4997, %v5001
    %5004 = vmatprep.subr.mxu0 0.0
    %5005 = vmatpush1.msra.mxu0 %v4988
    %5006 = vmatprep.subr.mxu0 0.0
    %5007 = vmatpush1.msra.mxu0 %v4989
    %5008 = vmatprep.subr.mxu0 0.0
    %5009 = vmatpush1.msra.mxu0 %v4990
    %5010 = vmatprep.subr.mxu0 0.0
    %5011 = vmatpush1.msra.mxu0 %v4991
    %5012 = vmatprep.subr.mxu0 0.0
    %5013 = vmatpush1.msra.mxu0 %v4992
    %5014 = vmatprep.subr.mxu0 0.0
    %5015 = vmatpush1.msra.mxu0 %v4993
    %5016 = vmatprep.subr.mxu0 0.0
    %5017 = vmatpush1.msra.mxu0 %v4994
    %5018 = vmatprep.subr.mxu0 0.0
    %5019 = vmatpush1.msra.mxu0 %v4995
    %5020 = vmatprep.subr.mxu0 0.0
    %5021 = vmatpush1.msra.mxu0 0.0
    %5022 = vmatprep.subr.mxu0 0.0
    %5023 = vmatpush1.msra.mxu0 0.0
    %5024 = vmatprep.subr.mxu0 0.0
    %5025 = vmatpush1.msra.mxu0 0.0
    %5026 = vmatprep.subr.mxu0 0.0
    %5027 = vmatpush1.msra.mxu0 0.0
    %5028 = vmatprep.subr.mxu0 0.0
    %5029 = vmatpush1.msra.mxu0 0.0
    %5030 = vmatprep.subr.mxu0 0.0
    %5031 = vmatpush1.msra.mxu0 0.0
    %5032 = vmatprep.subr.mxu0 0.0
    %5033 = vmatpush1.msra.mxu0 0.0
    %5034 = vmatprep.subr.mxu0 0.0
    %5035 = vmatpush1.msra.mxu0 0.0
    %5036 = vmatprep.subr.mxu0 0.0
    %5037 = vmatpush1.msra.mxu0 0.0
    %5038 = vmatprep.subr.mxu0 0.0
    %5039 = vmatpush1.msra.mxu0 0.0
    %5040 = vmatprep.subr.mxu0 0.0
    %5041 = vmatpush1.msra.mxu0 0.0
    %5042 = vmatprep.subr.mxu0 0.0
    %5043 = vmatpush1.msra.mxu0 0.0
    %5044 = vmatprep.subr.mxu0 0.0
    %5045 = vmatpush1.msra.mxu0 0.0
    %5046 = vmatprep.subr.mxu0 0.0
    %5047 = vmatpush1.msra.mxu0 0.0
    %5048 = vmatprep.subr.mxu0 0.0
    %5049 = vmatpush1.msra.mxu0 0.0
    %5050 = vmatprep.subr.mxu0 0.0
    %5051 = vmatpush1.msra.mxu0 0.0
    %5052 = vmatprep.subr.mxu0 0.0
    %5053 = vmatpush1.msra.mxu0 0.0
    %5054 = vmatprep.subr.mxu0 0.0
    %5055 = vmatpush1.msra.mxu0 0.0
    %5056 = vmatprep.subr.mxu0 0.0
    %5057 = vmatpush1.msra.mxu0 0.0
    %5058 = vmatprep.subr.mxu0 0.0
    %5059 = vmatpush1.msra.mxu0 0.0
    %5060 = vmatprep.subr.mxu0 0.0
    %5061 = vmatpush1.msra.mxu0 0.0
    %5062 = vmatprep.subr.mxu0 0.0
    %5063 = vmatpush1.msra.mxu0 0.0
    %5064 = vmatprep.subr.mxu0 0.0
    %5065 = vmatpush1.msra.mxu0 0.0
    %5066 = vmatprep.subr.mxu0 0.0
    %5067 = vmatpush1.msra.mxu0 0.0
    %5068 = vmatprep.mubr.f32.mxu0 0.0
    %5069 = vmatmul.mubr.f32.gmra.mrb[0].mxu0 %v4815
    %v5070 = vpop.f32.mrb[0].mxu0
    %v5071 = vadd.f32 %v5002, %v5070
    %v5072 = vpop.f32.mrb[0].mxu0
    %5073 = vmatprep.mubr.f32.mxu0 0.0
    %5074 = vmatmul.mubr.f32.gmra.mrb[0].mxu0 %v4818
    %v5075 = vpop.f32.mrb[0].mxu0
    %v5076 = vadd.f32 %v5002, %v5075
    %v5077 = vpop.f32.mrb[0].mxu0
    %5078 = vdwg.mxu0
    %v5080 = vsel %vm919, %v4887, 0
    %v5083 = vsel %vm919, %v4979, 0
    %5085 = vmatprep.subr.mxu0 0.0
    %5086 = vmatpush1.xpose.msra.mxu0 %v5083
    %5087 = vmatprep.subr.mxu0 0.0
    %5088 = vmatpush1.xpose.msra.mxu0 0.0
    %5089 = vmatprep.subr.mxu0 0.0
    %5090 = vmatpush1.xpose.msra.mxu0 0.0
    %5091 = vmatprep.subr.mxu0 0.0
    %5092 = vmatpush1.xpose.msra.mxu0 0.0
    %5093 = vmatprep.subr.mxu0 0.0
    %5094 = vmatpush1.xpose.msra.mxu0 0.0
    %5095 = vmatprep.subr.mxu0 0.0
    %5096 = vmatpush1.xpose.msra.mxu0 0.0
    %5097 = vmatprep.subr.mxu0 0.0
    %5098 = vmatpush1.xpose.msra.mxu0 0.0
    %5099 = vmatprep.subr.mxu0 0.0
    %5100 = vmatpush1.xpose.msra.mxu0 0.0
    %5101 = vmatprep.subr.mxu0 0.0
    %5102 = vmatpush1.xpose.msra.mxu0 0.0
    %5103 = vmatprep.subr.mxu0 0.0
    %5104 = vmatpush1.xpose.msra.mxu0 0.0
    %5105 = vmatprep.subr.mxu0 0.0
    %5106 = vmatpush1.xpose.msra.mxu0 0.0
    %5107 = vmatprep.subr.mxu0 0.0
    %5108 = vmatpush1.xpose.msra.mxu0 0.0
    %5109 = vmatprep.subr.mxu0 0.0
    %5110 = vmatpush1.xpose.msra.mxu0 0.0
    %5111 = vmatprep.subr.mxu0 0.0
    %5112 = vmatpush1.xpose.msra.mxu0 0.0
    %5113 = vmatprep.subr.mxu0 0.0
    %5114 = vmatpush1.xpose.msra.mxu0 0.0
    %5115 = vmatprep.subr.mxu0 0.0
    %5116 = vmatpush1.xpose.msra.mxu0 0.0
    %5117 = vmatprep.subr.mxu0 0.0
    %5118 = vmatpush1.xpose.msra.mxu0 0.0
    %5119 = vmatprep.subr.mxu0 0.0
    %5120 = vmatpush1.xpose.msra.mxu0 0.0
    %5121 = vmatprep.subr.mxu0 0.0
    %5122 = vmatpush1.xpose.msra.mxu0 0.0
    %5123 = vmatprep.subr.mxu0 0.0
    %5124 = vmatpush1.xpose.msra.mxu0 0.0
    %5125 = vmatprep.subr.mxu0 0.0
    %5126 = vmatpush1.xpose.msra.mxu0 0.0
    %5127 = vmatprep.subr.mxu0 0.0
    %5128 = vmatpush1.xpose.msra.mxu0 0.0
    %5129 = vmatprep.subr.mxu0 0.0
    %5130 = vmatpush1.xpose.msra.mxu0 0.0
    %5131 = vmatprep.subr.mxu0 0.0
    %5132 = vmatpush1.xpose.msra.mxu0 0.0
    %5133 = vmatprep.subr.mxu0 0.0
    %5134 = vmatpush1.xpose.msra.mxu0 0.0
    %5135 = vmatprep.subr.mxu0 0.0
    %5136 = vmatpush1.xpose.msra.mxu0 0.0
    %5137 = vmatprep.subr.mxu0 0.0
    %5138 = vmatpush1.xpose.msra.mxu0 0.0
    %5139 = vmatprep.subr.mxu0 0.0
    %5140 = vmatpush1.xpose.msra.mxu0 0.0
    %5141 = vmatprep.subr.mxu0 0.0
    %5142 = vmatpush1.xpose.msra.mxu0 0.0
    %5143 = vmatprep.subr.mxu0 0.0
    %5144 = vmatpush1.xpose.msra.mxu0 0.0
    %5145 = vmatprep.subr.mxu0 0.0
    %5146 = vmatpush1.xpose.msra.mxu0 0.0
    %5147 = vmatprep.subr.mxu0 0.0
    %5148 = vmatpush1.xpose.msra.mxu0 0.0
    %5149 = vmatprep.mubr.f32.mxu0 0.0
    %5150 = vmatmul.mubr.f32.gmra.mrb[0].mxu0 %v5080
    %v5151 = vpop.f32.mrb[0].mxu0
    %v5152 = vadd.f32 0.0, %v5151
    %v5153 = vpop.f32.mrb[0].mxu0
    %5154 = vdwg.mxu0
    %v5155 = vmul.f32 %v5152, 0.25
    %v5156 = vsel %vm997, %v5155, -inf
    %5157 = vmax.xlane.f32.xlu0 %v5156
    %v5158 = vpop.xlane.xlu0 %5157
    %v5159 = vsub.f32 %v5155, %v5158
    %v5160 = vmul.f32 %v5159, 1.442695
    %v5161 = vpow.pop %v5160
    %v5162 = vsel %vm997, %v5161, 0.0
    %5163 = vadd.xlane.f32.xlu0 %v5162
    %v5164 = vpop.xlane.xlu0 %5163
    %v5165 = vrcp.pop %v5164
    %v5166 = vmul.f32 %v5161, %v5165
    %v5168 = vsel %vm1009, %v5166, 0
    %v5171 = vsel %vm635, %v5071, 0
    %5173 = vmatprep.subr.mxu0 0.0
    %5174 = vmatpush1.msra.mxu0 %v5171
    %5175 = vmatprep.subr.mxu0 0.0
    %5176 = vmatpush1.msra.mxu0 0.0
    %5177 = vmatprep.subr.mxu0 0.0
    %5178 = vmatpush1.msra.mxu0 0.0
    %5179 = vmatprep.subr.mxu0 0.0
    %5180 = vmatpush1.msra.mxu0 0.0
    %5181 = vmatprep.subr.mxu0 0.0
    %5182 = vmatpush1.msra.mxu0 0.0
    %5183 = vmatprep.subr.mxu0 0.0
    %5184 = vmatpush1.msra.mxu0 0.0
    %5185 = vmatprep.subr.mxu0 0.0
    %5186 = vmatpush1.msra.mxu0 0.0
    %5187 = vmatprep.subr.mxu0 0.0
    %5188 = vmatpush1.msra.mxu0 0.0
    %5189 = vmatprep.subr.mxu0 0.0
    %5190 = vmatpush1.msra.mxu0 0.0
    %5191 = vmatprep.subr.mxu0 0.0
    %5192 = vmatpush1.msra.mxu0 0.0
    %5193 = vmatprep.subr.mxu0 0.0
    %5194 = vmatpush1.msra.mxu0 0.0
    %5195 = vmatprep.subr.mxu0 0.0
    %5196 = vmatpush1.msra.mxu0 0.0
    %5197 = vmatprep.subr.mxu0 0.0
    %5198 = vmatpush1.msra.mxu0 0.0
    %5199 = vmatprep.subr.mxu0 0.0
    %5200 = vmatpush1.msra.mxu0 0.0
    %5201 = vmatprep.subr.mxu0 0.0
    %5202 = vmatpush1.msra.mxu0 0.0
    %5203 = vmatprep.subr.mxu0 0.0
    %5204 = vmatpush1.msra.mxu0 0.0
    %5205 = vmatprep.subr.mxu0 0.0
    %5206 = vmatpush1.msra.mxu0 0.0
    %5207 = vmatprep.subr.mxu0 0.0
    %5208 = vmatpush1.msra.mxu0 0.0
    %5209 = vmatprep.subr.mxu0 0.0
    %5210 = vmatpush1.msra.mxu0 0.0
    %5211 = vmatprep.subr.mxu0 0.0
    %5212 = vmatpush1.msra.mxu0 0.0
    %5213 = vmatprep.subr.mxu0 0.0
    %5214 = vmatpush1.msra.mxu0 0.0
    %5215 = vmatprep.subr.mxu0 0.0
    %5216 = vmatpush1.msra.mxu0 0.0
    %5217 = vmatprep.subr.mxu0 0.0
    %5218 = vmatpush1.msra.mxu0 0.0
    %5219 = vmatprep.subr.mxu0 0.0
    %5220 = vmatpush1.msra.mxu0 0.0
    %5221 = vmatprep.subr.mxu0 0.0
    %5222 = vmatpush1.msra.mxu0 0.0
    %5223 = vmatprep.subr.mxu0 0.0
    %5224 = vmatpush1.msra.mxu0 0.0
    %5225 = vmatprep.subr.mxu0 0.0
    %5226 = vmatpush1.msra.mxu0 0.0
    %5227 = vmatprep.subr.mxu0 0.0
    %5228 = vmatpush1.msra.mxu0 0.0
    %5229 = vmatprep.subr.mxu0 0.0
    %5230 = vmatpush1.msra.mxu0 0.0
    %5231 = vmatprep.subr.mxu0 0.0
    %5232 = vmatpush1.msra.mxu0 0.0
    %5233 = vmatprep.subr.mxu0 0.0
    %5234 = vmatpush1.msra.mxu0 0.0
    %5235 = vmatprep.subr.mxu0 0.0
    %5236 = vmatpush1.msra.mxu0 0.0
    %5237 = vmatprep.mubr.f32.mxu0 0.0
    %5238 = vmatmul.mubr.f32.gmra.mrb[0].mxu0 %v5168
    %v5239 = vpop.f32.mrb[0].mxu0
    %v5240 = vadd.f32 0.0, %v5239
    %v5241 = vpop.f32.mrb[0].mxu0
    %5242 = vdwg.mxu0
    %5243 = vrot.lane.b32.xlu0 %v4887, 112
    %v5244 = vpop.permute.xlu0 %5243
    %5245 = vrot.lane.b32.xlu0 %v4979, 112
    %v5246 = vpop.permute.xlu0 %5245
    %v5247 = vsel %vm919, %v5244, 0
    %v5249 = vsel %vm919, %v5246, 0
    %5251 = vmatprep.subr.mxu0 0.0
    %5252 = vmatpush1.xpose.msra.mxu0 %v5249
    %5253 = vmatprep.subr.mxu0 0.0
    %5254 = vmatpush1.xpose.msra.mxu0 0.0
    %5255 = vmatprep.subr.mxu0 0.0
    %5256 = vmatpush1.xpose.msra.mxu0 0.0
    %5257 = vmatprep.subr.mxu0 0.0
    %5258 = vmatpush1.xpose.msra.mxu0 0.0
    %5259 = vmatprep.subr.mxu0 0.0
    %5260 = vmatpush1.xpose.msra.mxu0 0.0
    %5261 = vmatprep.subr.mxu0 0.0
    %5262 = vmatpush1.xpose.msra.mxu0 0.0
    %5263 = vmatprep.subr.mxu0 0.0
    %5264 = vmatpush1.xpose.msra.mxu0 0.0
    %5265 = vmatprep.subr.mxu0 0.0
    %5266 = vmatpush1.xpose.msra.mxu0 0.0
    %5267 = vmatprep.subr.mxu0 0.0
    %5268 = vmatpush1.xpose.msra.mxu0 0.0
    %5269 = vmatprep.subr.mxu0 0.0
    %5270 = vmatpush1.xpose.msra.mxu0 0.0
    %5271 = vmatprep.subr.mxu0 0.0
    %5272 = vmatpush1.xpose.msra.mxu0 0.0
    %5273 = vmatprep.subr.mxu0 0.0
    %5274 = vmatpush1.xpose.msra.mxu0 0.0
    %5275 = vmatprep.subr.mxu0 0.0
    %5276 = vmatpush1.xpose.msra.mxu0 0.0
    %5277 = vmatprep.subr.mxu0 0.0
    %5278 = vmatpush1.xpose.msra.mxu0 0.0
    %5279 = vmatprep.subr.mxu0 0.0
    %5280 = vmatpush1.xpose.msra.mxu0 0.0
    %5281 = vmatprep.subr.mxu0 0.0
    %5282 = vmatpush1.xpose.msra.mxu0 0.0
    %5283 = vmatprep.subr.mxu0 0.0
    %5284 = vmatpush1.xpose.msra.mxu0 0.0
    %5285 = vmatprep.subr.mxu0 0.0
    %5286 = vmatpush1.xpose.msra.mxu0 0.0
    %5287 = vmatprep.subr.mxu0 0.0
    %5288 = vmatpush1.xpose.msra.mxu0 0.0
    %5289 = vmatprep.subr.mxu0 0.0
    %5290 = vmatpush1.xpose.msra.mxu0 0.0
    %5291 = vmatprep.subr.mxu0 0.0
    %5292 = vmatpush1.xpose.msra.mxu0 0.0
    %5293 = vmatprep.subr.mxu0 0.0
    %5294 = vmatpush1.xpose.msra.mxu0 0.0
    %5295 = vmatprep.subr.mxu0 0.0
    %5296 = vmatpush1.xpose.msra.mxu0 0.0
    %5297 = vmatprep.subr.mxu0 0.0
    %5298 = vmatpush1.xpose.msra.mxu0 0.0
    %5299 = vmatprep.subr.mxu0 0.0
    %5300 = vmatpush1.xpose.msra.mxu0 0.0
    %5301 = vmatprep.subr.mxu0 0.0
    %5302 = vmatpush1.xpose.msra.mxu0 0.0
    %5303 = vmatprep.subr.mxu0 0.0
    %5304 = vmatpush1.xpose.msra.mxu0 0.0
    %5305 = vmatprep.subr.mxu0 0.0
    %5306 = vmatpush1.xpose.msra.mxu0 0.0
    %5307 = vmatprep.subr.mxu0 0.0
    %5308 = vmatpush1.xpose.msra.mxu0 0.0
    %5309 = vmatprep.subr.mxu0 0.0
    %5310 = vmatpush1.xpose.msra.mxu0 0.0
    %5311 = vmatprep.subr.mxu0 0.0
    %5312 = vmatpush1.xpose.msra.mxu0 0.0
    %5313 = vmatprep.subr.mxu0 0.0
    %5314 = vmatpush1.xpose.msra.mxu0 0.0
    %5315 = vmatprep.mubr.f32.mxu0 0.0
    %5316 = vmatmul.mubr.f32.gmra.mrb[0].mxu0 %v5247
    %v5317 = vpop.f32.mrb[0].mxu0
    %v5318 = vadd.f32 0.0, %v5317
    %v5319 = vpop.f32.mrb[0].mxu0
    %5320 = vdwg.mxu0
    %v5321 = vmul.f32 %v5318, 0.25
    %v5322 = vsel %vm997, %v5321, -inf
    %5323 = vmax.xlane.f32.xlu0 %v5322
    %v5324 = vpop.xlane.xlu0 %5323
    %v5325 = vsub.f32 %v5321, %v5324
    %v5326 = vmul.f32 %v5325, 1.442695
    %v5327 = vpow.pop %v5326
    %v5328 = vsel %vm997, %v5327, 0.0
    %5329 = vadd.xlane.f32.xlu0 %v5328
    %v5330 = vpop.xlane.xlu0 %5329
    %v5331 = vrcp.pop %v5330
    %v5332 = vmul.f32 %v5327, %v5331
    %5333 = vrot.lane.b32.xlu0 %v5071, 112
    %v5334 = vpop.permute.xlu0 %5333
    %v5336 = vsel %vm1009, %v5332, 0
    %v5338 = vsel %vm635, %v5334, 0
    %5340 = vmatprep.subr.mxu0 0.0
    %5341 = vmatpush1.msra.mxu0 %v5338
    %5342 = vmatprep.subr.mxu0 0.0
    %5343 = vmatpush1.msra.mxu0 0.0
    %5344 = vmatprep.subr.mxu0 0.0
    %5345 = vmatpush1.msra.mxu0 0.0
    %5346 = vmatprep.subr.mxu0 0.0
    %5347 = vmatpush1.msra.mxu0 0.0
    %5348 = vmatprep.subr.mxu0 0.0
    %5349 = vmatpush1.msra.mxu0 0.0
    %5350 = vmatprep.subr.mxu0 0.0
    %5351 = vmatpush1.msra.mxu0 0.0
    %5352 = vmatprep.subr.mxu0 0.0
    %5353 = vmatpush1.msra.mxu0 0.0
    %5354 = vmatprep.subr.mxu0 0.0
    %5355 = vmatpush1.msra.mxu0 0.0
    %5356 = vmatprep.subr.mxu0 0.0
    %5357 = vmatpush1.msra.mxu0 0.0
    %5358 = vmatprep.subr.mxu0 0.0
    %5359 = vmatpush1.msra.mxu0 0.0
    %5360 = vmatprep.subr.mxu0 0.0
    %5361 = vmatpush1.msra.mxu0 0.0
    %5362 = vmatprep.subr.mxu0 0.0
    %5363 = vmatpush1.msra.mxu0 0.0
    %5364 = vmatprep.subr.mxu0 0.0
    %5365 = vmatpush1.msra.mxu0 0.0
    %5366 = vmatprep.subr.mxu0 0.0
    %5367 = vmatpush1.msra.mxu0 0.0
    %5368 = vmatprep.subr.mxu0 0.0
    %5369 = vmatpush1.msra.mxu0 0.0
    %5370 = vmatprep.subr.mxu0 0.0
    %5371 = vmatpush1.msra.mxu0 0.0
    %5372 = vmatprep.subr.mxu0 0.0
    %5373 = vmatpush1.msra.mxu0 0.0
    %5374 = vmatprep.subr.mxu0 0.0
    %5375 = vmatpush1.msra.mxu0 0.0
    %5376 = vmatprep.subr.mxu0 0.0
    %5377 = vmatpush1.msra.mxu0 0.0
    %5378 = vmatprep.subr.mxu0 0.0
    %5379 = vmatpush1.msra.mxu0 0.0
    %5380 = vmatprep.subr.mxu0 0.0
    %5381 = vmatpush1.msra.mxu0 0.0
    %5382 = vmatprep.subr.mxu0 0.0
    %5383 = vmatpush1.msra.mxu0 0.0
    %5384 = vmatprep.subr.mxu0 0.0
    %5385 = vmatpush1.msra.mxu0 0.0
    %5386 = vmatprep.subr.mxu0 0.0
    %5387 = vmatpush1.msra.mxu0 0.0
    %5388 = vmatprep.subr.mxu0 0.0
    %5389 = vmatpush1.msra.mxu0 0.0
    %5390 = vmatprep.subr.mxu0 0.0
    %5391 = vmatpush1.msra.mxu0 0.0
    %5392 = vmatprep.subr.mxu0 0.0
    %5393 = vmatpush1.msra.mxu0 0.0
    %5394 = vmatprep.subr.mxu0 0.0
    %5395 = vmatpush1.msra.mxu0 0.0
    %5396 = vmatprep.subr.mxu0 0.0
    %5397 = vmatpush1.msra.mxu0 0.0
    %5398 = vmatprep.subr.mxu0 0.0
    %5399 = vmatpush1.msra.mxu0 0.0
    %5400 = vmatprep.subr.mxu0 0.0
    %5401 = vmatpush1.msra.mxu0 0.0
    %5402 = vmatprep.subr.mxu0 0.0
    %5403 = vmatpush1.msra.mxu0 0.0
    %5404 = vmatprep.mubr.f32.mxu0 0.0
    %5405 = vmatmul.mubr.f32.gmra.mrb[0].mxu0 %v5336
    %v5406 = vpop.f32.mrb[0].mxu0
    %v5407 = vadd.f32 0.0, %v5406
    %v5408 = vpop.f32.mrb[0].mxu0
    %5409 = vdwg.mxu0
    %5410 = vrot.lane.b32.xlu0 %v4887, 96
    %v5411 = vpop.permute.xlu0 %5410
    %5412 = vrot.lane.b32.xlu0 %v4979, 96
    %v5413 = vpop.permute.xlu0 %5412
    %v5414 = vsel %vm919, %v5411, 0
    %v5416 = vsel %vm919, %v5413, 0
    %5418 = vmatprep.subr.mxu0 0.0
    %5419 = vmatpush1.xpose.msra.mxu0 %v5416
    %5420 = vmatprep.subr.mxu0 0.0
    %5421 = vmatpush1.xpose.msra.mxu0 0.0
    %5422 = vmatprep.subr.mxu0 0.0
    %5423 = vmatpush1.xpose.msra.mxu0 0.0
    %5424 = vmatprep.subr.mxu0 0.0
    %5425 = vmatpush1.xpose.msra.mxu0 0.0
    %5426 = vmatprep.subr.mxu0 0.0
    %5427 = vmatpush1.xpose.msra.mxu0 0.0
    %5428 = vmatprep.subr.mxu0 0.0
    %5429 = vmatpush1.xpose.msra.mxu0 0.0
    %5430 = vmatprep.subr.mxu0 0.0
    %5431 = vmatpush1.xpose.msra.mxu0 0.0
    %5432 = vmatprep.subr.mxu0 0.0
    %5433 = vmatpush1.xpose.msra.mxu0 0.0
    %5434 = vmatprep.subr.mxu0 0.0
    %5435 = vmatpush1.xpose.msra.mxu0 0.0
    %5436 = vmatprep.subr.mxu0 0.0
    %5437 = vmatpush1.xpose.msra.mxu0 0.0
    %5438 = vmatprep.subr.mxu0 0.0
    %5439 = vmatpush1.xpose.msra.mxu0 0.0
    %5440 = vmatprep.subr.mxu0 0.0
    %5441 = vmatpush1.xpose.msra.mxu0 0.0
    %5442 = vmatprep.subr.mxu0 0.0
    %5443 = vmatpush1.xpose.msra.mxu0 0.0
    %5444 = vmatprep.subr.mxu0 0.0
    %5445 = vmatpush1.xpose.msra.mxu0 0.0
    %5446 = vmatprep.subr.mxu0 0.0
    %5447 = vmatpush1.xpose.msra.mxu0 0.0
    %5448 = vmatprep.subr.mxu0 0.0
    %5449 = vmatpush1.xpose.msra.mxu0 0.0
    %5450 = vmatprep.subr.mxu0 0.0
    %5451 = vmatpush1.xpose.msra.mxu0 0.0
    %5452 = vmatprep.subr.mxu0 0.0
    %5453 = vmatpush1.xpose.msra.mxu0 0.0
    %5454 = vmatprep.subr.mxu0 0.0
    %5455 = vmatpush1.xpose.msra.mxu0 0.0
    %5456 = vmatprep.subr.mxu0 0.0
    %5457 = vmatpush1.xpose.msra.mxu0 0.0
    %5458 = vmatprep.subr.mxu0 0.0
    %5459 = vmatpush1.xpose.msra.mxu0 0.0
    %5460 = vmatprep.subr.mxu0 0.0
    %5461 = vmatpush1.xpose.msra.mxu0 0.0
    %5462 = vmatprep.subr.mxu0 0.0
    %5463 = vmatpush1.xpose.msra.mxu0 0.0
    %5464 = vmatprep.subr.mxu0 0.0
    %5465 = vmatpush1.xpose.msra.mxu0 0.0
    %5466 = vmatprep.subr.mxu0 0.0
    %5467 = vmatpush1.xpose.msra.mxu0 0.0
    %5468 = vmatprep.subr.mxu0 0.0
    %5469 = vmatpush1.xpose.msra.mxu0 0.0
    %5470 = vmatprep.subr.mxu0 0.0
    %5471 = vmatpush1.xpose.msra.mxu0 0.0
    %5472 = vmatprep.subr.mxu0 0.0
    %5473 = vmatpush1.xpose.msra.mxu0 0.0
    %5474 = vmatprep.subr.mxu0 0.0
    %5475 = vmatpush1.xpose.msra.mxu0 0.0
    %5476 = vmatprep.subr.mxu0 0.0
    %5477 = vmatpush1.xpose.msra.mxu0 0.0
    %5478 = vmatprep.subr.mxu0 0.0
    %5479 = vmatpush1.xpose.msra.mxu0 0.0
    %5480 = vmatprep.subr.mxu0 0.0
    %5481 = vmatpush1.xpose.msra.mxu0 0.0
    %5482 = vmatprep.mubr.f32.mxu0 0.0
    %5483 = vmatmul.mubr.f32.gmra.mrb[0].mxu0 %v5414
    %v5484 = vpop.f32.mrb[0].mxu0
    %v5485 = vadd.f32 0.0, %v5484
    %v5486 = vpop.f32.mrb[0].mxu0
    %5487 = vdwg.mxu0
    %v5488 = vmul.f32 %v5485, 0.25
    %v5489 = vsel %vm997, %v5488, -inf
    %5490 = vmax.xlane.f32.xlu0 %v5489
    %v5491 = vpop.xlane.xlu0 %5490
    %v5492 = vsub.f32 %v5488, %v5491
    %v5493 = vmul.f32 %v5492, 1.442695
    %v5494 = vpow.pop %v5493
    %v5495 = vsel %vm997, %v5494, 0.0
    %5496 = vadd.xlane.f32.xlu0 %v5495
    %v5497 = vpop.xlane.xlu0 %5496
    %v5498 = vrcp.pop %v5497
    %v5499 = vmul.f32 %v5494, %v5498
    %5500 = vrot.lane.b32.xlu0 %v5071, 96
    %v5501 = vpop.permute.xlu0 %5500
    %v5503 = vsel %vm1009, %v5499, 0
    %v5505 = vsel %vm635, %v5501, 0
    %5507 = vmatprep.subr.mxu0 0.0
    %5508 = vmatpush1.msra.mxu0 %v5505
    %5509 = vmatprep.subr.mxu0 0.0
    %5510 = vmatpush1.msra.mxu0 0.0
    %5511 = vmatprep.subr.mxu0 0.0
    %5512 = vmatpush1.msra.mxu0 0.0
    %5513 = vmatprep.subr.mxu0 0.0
    %5514 = vmatpush1.msra.mxu0 0.0
    %5515 = vmatprep.subr.mxu0 0.0
    %5516 = vmatpush1.msra.mxu0 0.0
    %5517 = vmatprep.subr.mxu0 0.0
    %5518 = vmatpush1.msra.mxu0 0.0
    %5519 = vmatprep.subr.mxu0 0.0
    %5520 = vmatpush1.msra.mxu0 0.0
    %5521 = vmatprep.subr.mxu0 0.0
    %5522 = vmatpush1.msra.mxu0 0.0
    %5523 = vmatprep.subr.mxu0 0.0
    %5524 = vmatpush1.msra.mxu0 0.0
    %5525 = vmatprep.subr.mxu0 0.0
    %5526 = vmatpush1.msra.mxu0 0.0
    %5527 = vmatprep.subr.mxu0 0.0
    %5528 = vmatpush1.msra.mxu0 0.0
    %5529 = vmatprep.subr.mxu0 0.0
    %5530 = vmatpush1.msra.mxu0 0.0
    %5531 = vmatprep.subr.mxu0 0.0
    %5532 = vmatpush1.msra.mxu0 0.0
    %5533 = vmatprep.subr.mxu0 0.0
    %5534 = vmatpush1.msra.mxu0 0.0
    %5535 = vmatprep.subr.mxu0 0.0
    %5536 = vmatpush1.msra.mxu0 0.0
    %5537 = vmatprep.subr.mxu0 0.0
    %5538 = vmatpush1.msra.mxu0 0.0
    %5539 = vmatprep.subr.mxu0 0.0
    %5540 = vmatpush1.msra.mxu0 0.0
    %5541 = vmatprep.subr.mxu0 0.0
    %5542 = vmatpush1.msra.mxu0 0.0
    %5543 = vmatprep.subr.mxu0 0.0
    %5544 = vmatpush1.msra.mxu0 0.0
    %5545 = vmatprep.subr.mxu0 0.0
    %5546 = vmatpush1.msra.mxu0 0.0
    %5547 = vmatprep.subr.mxu0 0.0
    %5548 = vmatpush1.msra.mxu0 0.0
    %5549 = vmatprep.subr.mxu0 0.0
    %5550 = vmatpush1.msra.mxu0 0.0
    %5551 = vmatprep.subr.mxu0 0.0
    %5552 = vmatpush1.msra.mxu0 0.0
    %5553 = vmatprep.subr.mxu0 0.0
    %5554 = vmatpush1.msra.mxu0 0.0
    %5555 = vmatprep.subr.mxu0 0.0
    %5556 = vmatpush1.msra.mxu0 0.0
    %5557 = vmatprep.subr.mxu0 0.0
    %5558 = vmatpush1.msra.mxu0 0.0
    %5559 = vmatprep.subr.mxu0 0.0
    %5560 = vmatpush1.msra.mxu0 0.0
    %5561 = vmatprep.subr.mxu0 0.0
    %5562 = vmatpush1.msra.mxu0 0.0
    %5563 = vmatprep.subr.mxu0 0.0
    %5564 = vmatpush1.msra.mxu0 0.0
    %5565 = vmatprep.subr.mxu0 0.0
    %5566 = vmatpush1.msra.mxu0 0.0
    %5567 = vmatprep.subr.mxu0 0.0
    %5568 = vmatpush1.msra.mxu0 0.0
    %5569 = vmatprep.subr.mxu0 0.0
    %5570 = vmatpush1.msra.mxu0 0.0
    %5571 = vmatprep.mubr.f32.mxu0 0.0
    %5572 = vmatmul.mubr.f32.gmra.mrb[0].mxu0 %v5503
    %v5573 = vpop.f32.mrb[0].mxu0
    %v5574 = vadd.f32 0.0, %v5573
    %v5575 = vpop.f32.mrb[0].mxu0
    %5576 = vdwg.mxu0
    %5577 = vrot.lane.b32.xlu0 %v4887, 80
    %v5578 = vpop.permute.xlu0 %5577
    %5579 = vrot.lane.b32.xlu0 %v4979, 80
    %v5580 = vpop.permute.xlu0 %5579
    %v5581 = vsel %vm919, %v5578, 0
    %v5583 = vsel %vm919, %v5580, 0
    %5585 = vmatprep.subr.mxu0 0.0
    %5586 = vmatpush1.xpose.msra.mxu0 %v5583
    %5587 = vmatprep.subr.mxu0 0.0
    %5588 = vmatpush1.xpose.msra.mxu0 0.0
    %5589 = vmatprep.subr.mxu0 0.0
    %5590 = vmatpush1.xpose.msra.mxu0 0.0
    %5591 = vmatprep.subr.mxu0 0.0
    %5592 = vmatpush1.xpose.msra.mxu0 0.0
    %5593 = vmatprep.subr.mxu0 0.0
    %5594 = vmatpush1.xpose.msra.mxu0 0.0
    %5595 = vmatprep.subr.mxu0 0.0
    %5596 = vmatpush1.xpose.msra.mxu0 0.0
    %5597 = vmatprep.subr.mxu0 0.0
    %5598 = vmatpush1.xpose.msra.mxu0 0.0
    %5599 = vmatprep.subr.mxu0 0.0
    %5600 = vmatpush1.xpose.msra.mxu0 0.0
    %5601 = vmatprep.subr.mxu0 0.0
    %5602 = vmatpush1.xpose.msra.mxu0 0.0
    %5603 = vmatprep.subr.mxu0 0.0
    %5604 = vmatpush1.xpose.msra.mxu0 0.0
    %5605 = vmatprep.subr.mxu0 0.0
    %5606 = vmatpush1.xpose.msra.mxu0 0.0
    %5607 = vmatprep.subr.mxu0 0.0
    %5608 = vmatpush1.xpose.msra.mxu0 0.0
    %5609 = vmatprep.subr.mxu0 0.0
    %5610 = vmatpush1.xpose.msra.mxu0 0.0
    %5611 = vmatprep.subr.mxu0 0.0
    %5612 = vmatpush1.xpose.msra.mxu0 0.0
    %5613 = vmatprep.subr.mxu0 0.0
    %5614 = vmatpush1.xpose.msra.mxu0 0.0
    %5615 = vmatprep.subr.mxu0 0.0
    %5616 = vmatpush1.xpose.msra.mxu0 0.0
    %5617 = vmatprep.subr.mxu0 0.0
    %5618 = vmatpush1.xpose.msra.mxu0 0.0
    %5619 = vmatprep.subr.mxu0 0.0
    %5620 = vmatpush1.xpose.msra.mxu0 0.0
    %5621 = vmatprep.subr.mxu0 0.0
    %5622 = vmatpush1.xpose.msra.mxu0 0.0
    %5623 = vmatprep.subr.mxu0 0.0
    %5624 = vmatpush1.xpose.msra.mxu0 0.0
    %5625 = vmatprep.subr.mxu0 0.0
    %5626 = vmatpush1.xpose.msra.mxu0 0.0
    %5627 = vmatprep.subr.mxu0 0.0
    %5628 = vmatpush1.xpose.msra.mxu0 0.0
    %5629 = vmatprep.subr.mxu0 0.0
    %5630 = vmatpush1.xpose.msra.mxu0 0.0
    %5631 = vmatprep.subr.mxu0 0.0
    %5632 = vmatpush1.xpose.msra.mxu0 0.0
    %5633 = vmatprep.subr.mxu0 0.0
    %5634 = vmatpush1.xpose.msra.mxu0 0.0
    %5635 = vmatprep.subr.mxu0 0.0
    %5636 = vmatpush1.xpose.msra.mxu0 0.0
    %5637 = vmatprep.subr.mxu0 0.0
    %5638 = vmatpush1.xpose.msra.mxu0 0.0
    %5639 = vmatprep.subr.mxu0 0.0
    %5640 = vmatpush1.xpose.msra.mxu0 0.0
    %5641 = vmatprep.subr.mxu0 0.0
    %5642 = vmatpush1.xpose.msra.mxu0 0.0
    %5643 = vmatprep.subr.mxu0 0.0
    %5644 = vmatpush1.xpose.msra.mxu0 0.0
    %5645 = vmatprep.subr.mxu0 0.0
    %5646 = vmatpush1.xpose.msra.mxu0 0.0
    %5647 = vmatprep.subr.mxu0 0.0
    %5648 = vmatpush1.xpose.msra.mxu0 0.0
    %5649 = vmatprep.mubr.f32.mxu0 0.0
    %5650 = vmatmul.mubr.f32.gmra.mrb[0].mxu0 %v5581
    %v5651 = vpop.f32.mrb[0].mxu0
    %v5652 = vadd.f32 0.0, %v5651
    %v5653 = vpop.f32.mrb[0].mxu0
    %5654 = vdwg.mxu0
    %v5655 = vmul.f32 %v5652, 0.25
    %v5656 = vsel %vm997, %v5655, -inf
    %5657 = vmax.xlane.f32.xlu0 %v5656
    %v5658 = vpop.xlane.xlu0 %5657
    %v5659 = vsub.f32 %v5655, %v5658
    %v5660 = vmul.f32 %v5659, 1.442695
    %v5661 = vpow.pop %v5660
    %v5662 = vsel %vm997, %v5661, 0.0
    %5663 = vadd.xlane.f32.xlu0 %v5662
    %v5664 = vpop.xlane.xlu0 %5663
    %v5665 = vrcp.pop %v5664
    %v5666 = vmul.f32 %v5661, %v5665
    %5667 = vrot.lane.b32.xlu0 %v5071, 80
    %v5668 = vpop.permute.xlu0 %5667
    %v5670 = vsel %vm1009, %v5666, 0
    %v5672 = vsel %vm635, %v5668, 0
    %5674 = vmatprep.subr.mxu0 0.0
    %5675 = vmatpush1.msra.mxu0 %v5672
    %5676 = vmatprep.subr.mxu0 0.0
    %5677 = vmatpush1.msra.mxu0 0.0
    %5678 = vmatprep.subr.mxu0 0.0
    %5679 = vmatpush1.msra.mxu0 0.0
    %5680 = vmatprep.subr.mxu0 0.0
    %5681 = vmatpush1.msra.mxu0 0.0
    %5682 = vmatprep.subr.mxu0 0.0
    %5683 = vmatpush1.msra.mxu0 0.0
    %5684 = vmatprep.subr.mxu0 0.0
    %5685 = vmatpush1.msra.mxu0 0.0
    %5686 = vmatprep.subr.mxu0 0.0
    %5687 = vmatpush1.msra.mxu0 0.0
    %5688 = vmatprep.subr.mxu0 0.0
    %5689 = vmatpush1.msra.mxu0 0.0
    %5690 = vmatprep.subr.mxu0 0.0
    %5691 = vmatpush1.msra.mxu0 0.0
    %5692 = vmatprep.subr.mxu0 0.0
    %5693 = vmatpush1.msra.mxu0 0.0
    %5694 = vmatprep.subr.mxu0 0.0
    %5695 = vmatpush1.msra.mxu0 0.0
    %5696 = vmatprep.subr.mxu0 0.0
    %5697 = vmatpush1.msra.mxu0 0.0
    %5698 = vmatprep.subr.mxu0 0.0
    %5699 = vmatpush1.msra.mxu0 0.0
    %5700 = vmatprep.subr.mxu0 0.0
    %5701 = vmatpush1.msra.mxu0 0.0
    %5702 = vmatprep.subr.mxu0 0.0
    %5703 = vmatpush1.msra.mxu0 0.0
    %5704 = vmatprep.subr.mxu0 0.0
    %5705 = vmatpush1.msra.mxu0 0.0
    %5706 = vmatprep.subr.mxu0 0.0
    %5707 = vmatpush1.msra.mxu0 0.0
    %5708 = vmatprep.subr.mxu0 0.0
    %5709 = vmatpush1.msra.mxu0 0.0
    %5710 = vmatprep.subr.mxu0 0.0
    %5711 = vmatpush1.msra.mxu0 0.0
    %5712 = vmatprep.subr.mxu0 0.0
    %5713 = vmatpush1.msra.mxu0 0.0
    %5714 = vmatprep.subr.mxu0 0.0
    %5715 = vmatpush1.msra.mxu0 0.0
    %5716 = vmatprep.subr.mxu0 0.0
    %5717 = vmatpush1.msra.mxu0 0.0
    %5718 = vmatprep.subr.mxu0 0.0
    %5719 = vmatpush1.msra.mxu0 0.0
    %5720 = vmatprep.subr.mxu0 0.0
    %5721 = vmatpush1.msra.mxu0 0.0
    %5722 = vmatprep.subr.mxu0 0.0
    %5723 = vmatpush1.msra.mxu0 0.0
    %5724 = vmatprep.subr.mxu0 0.0
    %5725 = vmatpush1.msra.mxu0 0.0
    %5726 = vmatprep.subr.mxu0 0.0
    %5727 = vmatpush1.msra.mxu0 0.0
    %5728 = vmatprep.subr.mxu0 0.0
    %5729 = vmatpush1.msra.mxu0 0.0
    %5730 = vmatprep.subr.mxu0 0.0
    %5731 = vmatpush1.msra.mxu0 0.0
    %5732 = vmatprep.subr.mxu0 0.0
    %5733 = vmatpush1.msra.mxu0 0.0
    %5734 = vmatprep.subr.mxu0 0.0
    %5735 = vmatpush1.msra.mxu0 0.0
    %5736 = vmatprep.subr.mxu0 0.0
    %5737 = vmatpush1.msra.mxu0 0.0
    %5738 = vmatprep.mubr.f32.mxu0 0.0
    %5739 = vmatmul.mubr.f32.gmra.mrb[0].mxu0 %v5670
    %v5740 = vpop.f32.mrb[0].mxu0
    %v5741 = vadd.f32 0.0, %v5740
    %v5742 = vpop.f32.mrb[0].mxu0
    %5743 = vdwg.mxu0
    %5745 = vrot.lane.b32.xlu0 %v5407, 16
    %v5746 = vpop.permute.xlu0 %5745
    %5749 = vrot.lane.b32.xlu0 %v5574, 32
    %v5750 = vpop.permute.xlu0 %5749
    %5753 = vrot.lane.b32.xlu0 %v5741, 48
    %v5754 = vpop.permute.xlu0 %5753
    %v5756 = vsel %vm919, %v5240, %v5746
    %v5757 = vsel %vm1600, %v5756, %v5750
    %v5758 = vsel %vm1602, %v5757, %v5754
    %v5760 = vrot.slane %v4887, 7
    %v5761 = vrot.slane %v4892, 7
    %v5762 = vsel %vm1605, %v5760, %v5761
    %v5764 = vrot.slane %v4979, 7
    %v5765 = vrot.slane %v4984, 7
    %v5766 = vsel %vm1605, %v5764, %v5765
    %v5767 = vsel %vm919, %v5762, 0
    %v5769 = vsel %vm919, %v5766, 0
    %5771 = vmatprep.subr.mxu0 0.0
    %5772 = vmatpush1.xpose.msra.mxu0 %v5769
    %5773 = vmatprep.subr.mxu0 0.0
    %5774 = vmatpush1.xpose.msra.mxu0 0.0
    %5775 = vmatprep.subr.mxu0 0.0
    %5776 = vmatpush1.xpose.msra.mxu0 0.0
    %5777 = vmatprep.subr.mxu0 0.0
    %5778 = vmatpush1.xpose.msra.mxu0 0.0
    %5779 = vmatprep.subr.mxu0 0.0
    %5780 = vmatpush1.xpose.msra.mxu0 0.0
    %5781 = vmatprep.subr.mxu0 0.0
    %5782 = vmatpush1.xpose.msra.mxu0 0.0
    %5783 = vmatprep.subr.mxu0 0.0
    %5784 = vmatpush1.xpose.msra.mxu0 0.0
    %5785 = vmatprep.subr.mxu0 0.0
    %5786 = vmatpush1.xpose.msra.mxu0 0.0
    %5787 = vmatprep.subr.mxu0 0.0
    %5788 = vmatpush1.xpose.msra.mxu0 0.0
    %5789 = vmatprep.subr.mxu0 0.0
    %5790 = vmatpush1.xpose.msra.mxu0 0.0
    %5791 = vmatprep.subr.mxu0 0.0
    %5792 = vmatpush1.xpose.msra.mxu0 0.0
    %5793 = vmatprep.subr.mxu0 0.0
    %5794 = vmatpush1.xpose.msra.mxu0 0.0
    %5795 = vmatprep.subr.mxu0 0.0
    %5796 = vmatpush1.xpose.msra.mxu0 0.0
    %5797 = vmatprep.subr.mxu0 0.0
    %5798 = vmatpush1.xpose.msra.mxu0 0.0
    %5799 = vmatprep.subr.mxu0 0.0
    %5800 = vmatpush1.xpose.msra.mxu0 0.0
    %5801 = vmatprep.subr.mxu0 0.0
    %5802 = vmatpush1.xpose.msra.mxu0 0.0
    %5803 = vmatprep.subr.mxu0 0.0
    %5804 = vmatpush1.xpose.msra.mxu0 0.0
    %5805 = vmatprep.subr.mxu0 0.0
    %5806 = vmatpush1.xpose.msra.mxu0 0.0
    %5807 = vmatprep.subr.mxu0 0.0
    %5808 = vmatpush1.xpose.msra.mxu0 0.0
    %5809 = vmatprep.subr.mxu0 0.0
    %5810 = vmatpush1.xpose.msra.mxu0 0.0
    %5811 = vmatprep.subr.mxu0 0.0
    %5812 = vmatpush1.xpose.msra.mxu0 0.0
    %5813 = vmatprep.subr.mxu0 0.0
    %5814 = vmatpush1.xpose.msra.mxu0 0.0
    %5815 = vmatprep.subr.mxu0 0.0
    %5816 = vmatpush1.xpose.msra.mxu0 0.0
    %5817 = vmatprep.subr.mxu0 0.0
    %5818 = vmatpush1.xpose.msra.mxu0 0.0
    %5819 = vmatprep.subr.mxu0 0.0
    %5820 = vmatpush1.xpose.msra.mxu0 0.0
    %5821 = vmatprep.subr.mxu0 0.0
    %5822 = vmatpush1.xpose.msra.mxu0 0.0
    %5823 = vmatprep.subr.mxu0 0.0
    %5824 = vmatpush1.xpose.msra.mxu0 0.0
    %5825 = vmatprep.subr.mxu0 0.0
    %5826 = vmatpush1.xpose.msra.mxu0 0.0
    %5827 = vmatprep.subr.mxu0 0.0
    %5828 = vmatpush1.xpose.msra.mxu0 0.0
    %5829 = vmatprep.subr.mxu0 0.0
    %5830 = vmatpush1.xpose.msra.mxu0 0.0
    %5831 = vmatprep.subr.mxu0 0.0
    %5832 = vmatpush1.xpose.msra.mxu0 0.0
    %5833 = vmatprep.subr.mxu0 0.0
    %5834 = vmatpush1.xpose.msra.mxu0 0.0
    %5835 = vmatprep.mubr.f32.mxu0 0.0
    %5836 = vmatmul.mubr.f32.gmra.mrb[0].mxu0 %v5767
    %v5837 = vpop.f32.mrb[0].mxu0
    %v5838 = vadd.f32 0.0, %v5837
    %v5839 = vpop.f32.mrb[0].mxu0
    %5840 = vdwg.mxu0
    %v5841 = vmul.f32 %v5838, 0.25
    %v5842 = vsel %vm997, %v5841, -inf
    %5843 = vmax.xlane.f32.xlu0 %v5842
    %v5844 = vpop.xlane.xlu0 %5843
    %v5845 = vsub.f32 %v5841, %v5844
    %v5846 = vmul.f32 %v5845, 1.442695
    %v5847 = vpow.pop %v5846
    %v5848 = vsel %vm997, %v5847, 0.0
    %5849 = vadd.xlane.f32.xlu0 %v5848
    %v5850 = vpop.xlane.xlu0 %5849
    %v5851 = vrcp.pop %v5850
    %v5852 = vmul.f32 %v5847, %v5851
    %v5854 = vrot.slane %v5071, 7
    %v5855 = vrot.slane %v5076, 7
    %v5856 = vsel %vm1605, %v5854, %v5855
    %v5858 = vsel %vm1009, %v5852, 0
    %v5860 = vsel %vm635, %v5856, 0
    %5862 = vmatprep.subr.mxu0 0.0
    %5863 = vmatpush1.msra.mxu0 %v5860
    %5864 = vmatprep.subr.mxu0 0.0
    %5865 = vmatpush1.msra.mxu0 0.0
    %5866 = vmatprep.subr.mxu0 0.0
    %5867 = vmatpush1.msra.mxu0 0.0
    %5868 = vmatprep.subr.mxu0 0.0
    %5869 = vmatpush1.msra.mxu0 0.0
    %5870 = vmatprep.subr.mxu0 0.0
    %5871 = vmatpush1.msra.mxu0 0.0
    %5872 = vmatprep.subr.mxu0 0.0
    %5873 = vmatpush1.msra.mxu0 0.0
    %5874 = vmatprep.subr.mxu0 0.0
    %5875 = vmatpush1.msra.mxu0 0.0
    %5876 = vmatprep.subr.mxu0 0.0
    %5877 = vmatpush1.msra.mxu0 0.0
    %5878 = vmatprep.subr.mxu0 0.0
    %5879 = vmatpush1.msra.mxu0 0.0
    %5880 = vmatprep.subr.mxu0 0.0
    %5881 = vmatpush1.msra.mxu0 0.0
    %5882 = vmatprep.subr.mxu0 0.0
    %5883 = vmatpush1.msra.mxu0 0.0
    %5884 = vmatprep.subr.mxu0 0.0
    %5885 = vmatpush1.msra.mxu0 0.0
    %5886 = vmatprep.subr.mxu0 0.0
    %5887 = vmatpush1.msra.mxu0 0.0
    %5888 = vmatprep.subr.mxu0 0.0
    %5889 = vmatpush1.msra.mxu0 0.0
    %5890 = vmatprep.subr.mxu0 0.0
    %5891 = vmatpush1.msra.mxu0 0.0
    %5892 = vmatprep.subr.mxu0 0.0
    %5893 = vmatpush1.msra.mxu0 0.0
    %5894 = vmatprep.subr.mxu0 0.0
    %5895 = vmatpush1.msra.mxu0 0.0
    %5896 = vmatprep.subr.mxu0 0.0
    %5897 = vmatpush1.msra.mxu0 0.0
    %5898 = vmatprep.subr.mxu0 0.0
    %5899 = vmatpush1.msra.mxu0 0.0
    %5900 = vmatprep.subr.mxu0 0.0
    %5901 = vmatpush1.msra.mxu0 0.0
    %5902 = vmatprep.subr.mxu0 0.0
    %5903 = vmatpush1.msra.mxu0 0.0
    %5904 = vmatprep.subr.mxu0 0.0
    %5905 = vmatpush1.msra.mxu0 0.0
    %5906 = vmatprep.subr.mxu0 0.0
    %5907 = vmatpush1.msra.mxu0 0.0
    %5908 = vmatprep.subr.mxu0 0.0
    %5909 = vmatpush1.msra.mxu0 0.0
    %5910 = vmatprep.subr.mxu0 0.0
    %5911 = vmatpush1.msra.mxu0 0.0
    %5912 = vmatprep.subr.mxu0 0.0
    %5913 = vmatpush1.msra.mxu0 0.0
    %5914 = vmatprep.subr.mxu0 0.0
    %5915 = vmatpush1.msra.mxu0 0.0
    %5916 = vmatprep.subr.mxu0 0.0
    %5917 = vmatpush1.msra.mxu0 0.0
    %5918 = vmatprep.subr.mxu0 0.0
    %5919 = vmatpush1.msra.mxu0 0.0
    %5920 = vmatprep.subr.mxu0 0.0
    %5921 = vmatpush1.msra.mxu0 0.0
    %5922 = vmatprep.subr.mxu0 0.0
    %5923 = vmatpush1.msra.mxu0 0.0
    %5924 = vmatprep.subr.mxu0 0.0
    %5925 = vmatpush1.msra.mxu0 0.0
    %5926 = vmatprep.mubr.f32.mxu0 0.0
    %5927 = vmatmul.mubr.f32.gmra.mrb[0].mxu0 %v5858
    %v5928 = vpop.f32.mrb[0].mxu0
    %v5929 = vadd.f32 0.0, %v5928
    %v5930 = vpop.f32.mrb[0].mxu0
    %5931 = vdwg.mxu0
    %5932 = vrot.lane.b32.xlu0 %v5762, 112
    %v5933 = vpop.permute.xlu0 %5932
    %5934 = vrot.lane.b32.xlu0 %v5766, 112
    %v5935 = vpop.permute.xlu0 %5934
    %v5936 = vsel %vm919, %v5933, 0
    %v5938 = vsel %vm919, %v5935, 0
    %5940 = vmatprep.subr.mxu0 0.0
    %5941 = vmatpush1.xpose.msra.mxu0 %v5938
    %5942 = vmatprep.subr.mxu0 0.0
    %5943 = vmatpush1.xpose.msra.mxu0 0.0
    %5944 = vmatprep.subr.mxu0 0.0
    %5945 = vmatpush1.xpose.msra.mxu0 0.0
    %5946 = vmatprep.subr.mxu0 0.0
    %5947 = vmatpush1.xpose.msra.mxu0 0.0
    %5948 = vmatprep.subr.mxu0 0.0
    %5949 = vmatpush1.xpose.msra.mxu0 0.0
    %5950 = vmatprep.subr.mxu0 0.0
    %5951 = vmatpush1.xpose.msra.mxu0 0.0
    %5952 = vmatprep.subr.mxu0 0.0
    %5953 = vmatpush1.xpose.msra.mxu0 0.0
    %5954 = vmatprep.subr.mxu0 0.0
    %5955 = vmatpush1.xpose.msra.mxu0 0.0
    %5956 = vmatprep.subr.mxu0 0.0
    %5957 = vmatpush1.xpose.msra.mxu0 0.0
    %5958 = vmatprep.subr.mxu0 0.0
    %5959 = vmatpush1.xpose.msra.mxu0 0.0
    %5960 = vmatprep.subr.mxu0 0.0
    %5961 = vmatpush1.xpose.msra.mxu0 0.0
    %5962 = vmatprep.subr.mxu0 0.0
    %5963 = vmatpush1.xpose.msra.mxu0 0.0
    %5964 = vmatprep.subr.mxu0 0.0
    %5965 = vmatpush1.xpose.msra.mxu0 0.0
    %5966 = vmatprep.subr.mxu0 0.0
    %5967 = vmatpush1.xpose.msra.mxu0 0.0
    %5968 = vmatprep.subr.mxu0 0.0
    %5969 = vmatpush1.xpose.msra.mxu0 0.0
    %5970 = vmatprep.subr.mxu0 0.0
    %5971 = vmatpush1.xpose.msra.mxu0 0.0
    %5972 = vmatprep.subr.mxu0 0.0
    %5973 = vmatpush1.xpose.msra.mxu0 0.0
    %5974 = vmatprep.subr.mxu0 0.0
    %5975 = vmatpush1.xpose.msra.mxu0 0.0
    %5976 = vmatprep.subr.mxu0 0.0
    %5977 = vmatpush1.xpose.msra.mxu0 0.0
    %5978 = vmatprep.subr.mxu0 0.0
    %5979 = vmatpush1.xpose.msra.mxu0 0.0
    %5980 = vmatprep.subr.mxu0 0.0
    %5981 = vmatpush1.xpose.msra.mxu0 0.0
    %5982 = vmatprep.subr.mxu0 0.0
    %5983 = vmatpush1.xpose.msra.mxu0 0.0
    %5984 = vmatprep.subr.mxu0 0.0
    %5985 = vmatpush1.xpose.msra.mxu0 0.0
    %5986 = vmatprep.subr.mxu0 0.0
    %5987 = vmatpush1.xpose.msra.mxu0 0.0
    %5988 = vmatprep.subr.mxu0 0.0
    %5989 = vmatpush1.xpose.msra.mxu0 0.0
    %5990 = vmatprep.subr.mxu0 0.0
    %5991 = vmatpush1.xpose.msra.mxu0 0.0
    %5992 = vmatprep.subr.mxu0 0.0
    %5993 = vmatpush1.xpose.msra.mxu0 0.0
    %5994 = vmatprep.subr.mxu0 0.0
    %5995 = vmatpush1.xpose.msra.mxu0 0.0
    %5996 = vmatprep.subr.mxu0 0.0
    %5997 = vmatpush1.xpose.msra.mxu0 0.0
    %5998 = vmatprep.subr.mxu0 0.0
    %5999 = vmatpush1.xpose.msra.mxu0 0.0
    %6000 = vmatprep.subr.mxu0 0.0
    %6001 = vmatpush1.xpose.msra.mxu0 0.0
    %6002 = vmatprep.subr.mxu0 0.0
    %6003 = vmatpush1.xpose.msra.mxu0 0.0
    %6004 = vmatprep.mubr.f32.mxu0 0.0
    %6005 = vmatmul.mubr.f32.gmra.mrb[0].mxu0 %v5936
    %v6006 = vpop.f32.mrb[0].mxu0
    %v6007 = vadd.f32 0.0, %v6006
    %v6008 = vpop.f32.mrb[0].mxu0
    %6009 = vdwg.mxu0
    %v6010 = vmul.f32 %v6007, 0.25
    %v6011 = vsel %vm997, %v6010, -inf
    %6012 = vmax.xlane.f32.xlu0 %v6011
    %v6013 = vpop.xlane.xlu0 %6012
    %v6014 = vsub.f32 %v6010, %v6013
    %v6015 = vmul.f32 %v6014, 1.442695
    %v6016 = vpow.pop %v6015
    %v6017 = vsel %vm997, %v6016, 0.0
    %6018 = vadd.xlane.f32.xlu0 %v6017
    %v6019 = vpop.xlane.xlu0 %6018
    %v6020 = vrcp.pop %v6019
    %v6021 = vmul.f32 %v6016, %v6020
    %6022 = vrot.lane.b32.xlu0 %v5856, 112
    %v6023 = vpop.permute.xlu0 %6022
    %v6025 = vsel %vm1009, %v6021, 0
    %v6027 = vsel %vm635, %v6023, 0
    %6029 = vmatprep.subr.mxu0 0.0
    %6030 = vmatpush1.msra.mxu0 %v6027
    %6031 = vmatprep.subr.mxu0 0.0
    %6032 = vmatpush1.msra.mxu0 0.0
    %6033 = vmatprep.subr.mxu0 0.0
    %6034 = vmatpush1.msra.mxu0 0.0
    %6035 = vmatprep.subr.mxu0 0.0
    %6036 = vmatpush1.msra.mxu0 0.0
    %6037 = vmatprep.subr.mxu0 0.0
    %6038 = vmatpush1.msra.mxu0 0.0
    %6039 = vmatprep.subr.mxu0 0.0
    %6040 = vmatpush1.msra.mxu0 0.0
    %6041 = vmatprep.subr.mxu0 0.0
    %6042 = vmatpush1.msra.mxu0 0.0
    %6043 = vmatprep.subr.mxu0 0.0
    %6044 = vmatpush1.msra.mxu0 0.0
    %6045 = vmatprep.subr.mxu0 0.0
    %6046 = vmatpush1.msra.mxu0 0.0
    %6047 = vmatprep.subr.mxu0 0.0
    %6048 = vmatpush1.msra.mxu0 0.0
    %6049 = vmatprep.subr.mxu0 0.0
    %6050 = vmatpush1.msra.mxu0 0.0
    %6051 = vmatprep.subr.mxu0 0.0
    %6052 = vmatpush1.msra.mxu0 0.0
    %6053 = vmatprep.subr.mxu0 0.0
    %6054 = vmatpush1.msra.mxu0 0.0
    %6055 = vmatprep.subr.mxu0 0.0
    %6056 = vmatpush1.msra.mxu0 0.0
    %6057 = vmatprep.subr.mxu0 0.0
    %6058 = vmatpush1.msra.mxu0 0.0
    %6059 = vmatprep.subr.mxu0 0.0
    %6060 = vmatpush1.msra.mxu0 0.0
    %6061 = vmatprep.subr.mxu0 0.0
    %6062 = vmatpush1.msra.mxu0 0.0
    %6063 = vmatprep.subr.mxu0 0.0
    %6064 = vmatpush1.msra.mxu0 0.0
    %6065 = vmatprep.subr.mxu0 0.0
    %6066 = vmatpush1.msra.mxu0 0.0
    %6067 = vmatprep.subr.mxu0 0.0
    %6068 = vmatpush1.msra.mxu0 0.0
    %6069 = vmatprep.subr.mxu0 0.0
    %6070 = vmatpush1.msra.mxu0 0.0
    %6071 = vmatprep.subr.mxu0 0.0
    %6072 = vmatpush1.msra.mxu0 0.0
    %6073 = vmatprep.subr.mxu0 0.0
    %6074 = vmatpush1.msra.mxu0 0.0
    %6075 = vmatprep.subr.mxu0 0.0
    %6076 = vmatpush1.msra.mxu0 0.0
    %6077 = vmatprep.subr.mxu0 0.0
    %6078 = vmatpush1.msra.mxu0 0.0
    %6079 = vmatprep.subr.mxu0 0.0
    %6080 = vmatpush1.msra.mxu0 0.0
    %6081 = vmatprep.subr.mxu0 0.0
    %6082 = vmatpush1.msra.mxu0 0.0
    %6083 = vmatprep.subr.mxu0 0.0
    %6084 = vmatpush1.msra.mxu0 0.0
    %6085 = vmatprep.subr.mxu0 0.0
    %6086 = vmatpush1.msra.mxu0 0.0
    %6087 = vmatprep.subr.mxu0 0.0
    %6088 = vmatpush1.msra.mxu0 0.0
    %6089 = vmatprep.subr.mxu0 0.0
    %6090 = vmatpush1.msra.mxu0 0.0
    %6091 = vmatprep.subr.mxu0 0.0
    %6092 = vmatpush1.msra.mxu0 0.0
    %6093 = vmatprep.mubr.f32.mxu0 0.0
    %6094 = vmatmul.mubr.f32.gmra.mrb[0].mxu0 %v6025
    %v6095 = vpop.f32.mrb[0].mxu0
    %v6096 = vadd.f32 0.0, %v6095
    %v6097 = vpop.f32.mrb[0].mxu0
    %6098 = vdwg.mxu0
    %6099 = vrot.lane.b32.xlu0 %v5762, 96
    %v6100 = vpop.permute.xlu0 %6099
    %6101 = vrot.lane.b32.xlu0 %v5766, 96
    %v6102 = vpop.permute.xlu0 %6101
    %v6103 = vsel %vm919, %v6100, 0
    %v6105 = vsel %vm919, %v6102, 0
    %6107 = vmatprep.subr.mxu0 0.0
    %6108 = vmatpush1.xpose.msra.mxu0 %v6105
    %6109 = vmatprep.subr.mxu0 0.0
    %6110 = vmatpush1.xpose.msra.mxu0 0.0
    %6111 = vmatprep.subr.mxu0 0.0
    %6112 = vmatpush1.xpose.msra.mxu0 0.0
    %6113 = vmatprep.subr.mxu0 0.0
    %6114 = vmatpush1.xpose.msra.mxu0 0.0
    %6115 = vmatprep.subr.mxu0 0.0
    %6116 = vmatpush1.xpose.msra.mxu0 0.0
    %6117 = vmatprep.subr.mxu0 0.0
    %6118 = vmatpush1.xpose.msra.mxu0 0.0
    %6119 = vmatprep.subr.mxu0 0.0
    %6120 = vmatpush1.xpose.msra.mxu0 0.0
    %6121 = vmatprep.subr.mxu0 0.0
    %6122 = vmatpush1.xpose.msra.mxu0 0.0
    %6123 = vmatprep.subr.mxu0 0.0
    %6124 = vmatpush1.xpose.msra.mxu0 0.0
    %6125 = vmatprep.subr.mxu0 0.0
    %6126 = vmatpush1.xpose.msra.mxu0 0.0
    %6127 = vmatprep.subr.mxu0 0.0
    %6128 = vmatpush1.xpose.msra.mxu0 0.0
    %6129 = vmatprep.subr.mxu0 0.0
    %6130 = vmatpush1.xpose.msra.mxu0 0.0
    %6131 = vmatprep.subr.mxu0 0.0
    %6132 = vmatpush1.xpose.msra.mxu0 0.0
    %6133 = vmatprep.subr.mxu0 0.0
    %6134 = vmatpush1.xpose.msra.mxu0 0.0
    %6135 = vmatprep.subr.mxu0 0.0
    %6136 = vmatpush1.xpose.msra.mxu0 0.0
    %6137 = vmatprep.subr.mxu0 0.0
    %6138 = vmatpush1.xpose.msra.mxu0 0.0
    %6139 = vmatprep.subr.mxu0 0.0
    %6140 = vmatpush1.xpose.msra.mxu0 0.0
    %6141 = vmatprep.subr.mxu0 0.0
    %6142 = vmatpush1.xpose.msra.mxu0 0.0
    %6143 = vmatprep.subr.mxu0 0.0
    %6144 = vmatpush1.xpose.msra.mxu0 0.0
    %6145 = vmatprep.subr.mxu0 0.0
    %6146 = vmatpush1.xpose.msra.mxu0 0.0
    %6147 = vmatprep.subr.mxu0 0.0
    %6148 = vmatpush1.xpose.msra.mxu0 0.0
    %6149 = vmatprep.subr.mxu0 0.0
    %6150 = vmatpush1.xpose.msra.mxu0 0.0
    %6151 = vmatprep.subr.mxu0 0.0
    %6152 = vmatpush1.xpose.msra.mxu0 0.0
    %6153 = vmatprep.subr.mxu0 0.0
    %6154 = vmatpush1.xpose.msra.mxu0 0.0
    %6155 = vmatprep.subr.mxu0 0.0
    %6156 = vmatpush1.xpose.msra.mxu0 0.0
    %6157 = vmatprep.subr.mxu0 0.0
    %6158 = vmatpush1.xpose.msra.mxu0 0.0
    %6159 = vmatprep.subr.mxu0 0.0
    %6160 = vmatpush1.xpose.msra.mxu0 0.0
    %6161 = vmatprep.subr.mxu0 0.0
    %6162 = vmatpush1.xpose.msra.mxu0 0.0
    %6163 = vmatprep.subr.mxu0 0.0
    %6164 = vmatpush1.xpose.msra.mxu0 0.0
    %6165 = vmatprep.subr.mxu0 0.0
    %6166 = vmatpush1.xpose.msra.mxu0 0.0
    %6167 = vmatprep.subr.mxu0 0.0
    %6168 = vmatpush1.xpose.msra.mxu0 0.0
    %6169 = vmatprep.subr.mxu0 0.0
    %6170 = vmatpush1.xpose.msra.mxu0 0.0
    %6171 = vmatprep.mubr.f32.mxu0 0.0
    %6172 = vmatmul.mubr.f32.gmra.mrb[0].mxu0 %v6103
    %v6173 = vpop.f32.mrb[0].mxu0
    %v6174 = vadd.f32 0.0, %v6173
    %v6175 = vpop.f32.mrb[0].mxu0
    %6176 = vdwg.mxu0
    %v6177 = vmul.f32 %v6174, 0.25
    %v6178 = vsel %vm997, %v6177, -inf
    %6179 = vmax.xlane.f32.xlu0 %v6178
    %v6180 = vpop.xlane.xlu0 %6179
    %v6181 = vsub.f32 %v6177, %v6180
    %v6182 = vmul.f32 %v6181, 1.442695
    %v6183 = vpow.pop %v6182
    %v6184 = vsel %vm997, %v6183, 0.0
    %6185 = vadd.xlane.f32.xlu0 %v6184
    %v6186 = vpop.xlane.xlu0 %6185
    %v6187 = vrcp.pop %v6186
    %v6188 = vmul.f32 %v6183, %v6187
    %6189 = vrot.lane.b32.xlu0 %v5856, 96
    %v6190 = vpop.permute.xlu0 %6189
    %v6192 = vsel %vm1009, %v6188, 0
    %v6194 = vsel %vm635, %v6190, 0
    %6196 = vmatprep.subr.mxu0 0.0
    %6197 = vmatpush1.msra.mxu0 %v6194
    %6198 = vmatprep.subr.mxu0 0.0
    %6199 = vmatpush1.msra.mxu0 0.0
    %6200 = vmatprep.subr.mxu0 0.0
    %6201 = vmatpush1.msra.mxu0 0.0
    %6202 = vmatprep.subr.mxu0 0.0
    %6203 = vmatpush1.msra.mxu0 0.0
    %6204 = vmatprep.subr.mxu0 0.0
    %6205 = vmatpush1.msra.mxu0 0.0
    %6206 = vmatprep.subr.mxu0 0.0
    %6207 = vmatpush1.msra.mxu0 0.0
    %6208 = vmatprep.subr.mxu0 0.0
    %6209 = vmatpush1.msra.mxu0 0.0
    %6210 = vmatprep.subr.mxu0 0.0
    %6211 = vmatpush1.msra.mxu0 0.0
    %6212 = vmatprep.subr.mxu0 0.0
    %6213 = vmatpush1.msra.mxu0 0.0
    %6214 = vmatprep.subr.mxu0 0.0
    %6215 = vmatpush1.msra.mxu0 0.0
    %6216 = vmatprep.subr.mxu0 0.0
    %6217 = vmatpush1.msra.mxu0 0.0
    %6218 = vmatprep.subr.mxu0 0.0
    %6219 = vmatpush1.msra.mxu0 0.0
    %6220 = vmatprep.subr.mxu0 0.0
    %6221 = vmatpush1.msra.mxu0 0.0
    %6222 = vmatprep.subr.mxu0 0.0
    %6223 = vmatpush1.msra.mxu0 0.0
    %6224 = vmatprep.subr.mxu0 0.0
    %6225 = vmatpush1.msra.mxu0 0.0
    %6226 = vmatprep.subr.mxu0 0.0
    %6227 = vmatpush1.msra.mxu0 0.0
    %6228 = vmatprep.subr.mxu0 0.0
    %6229 = vmatpush1.msra.mxu0 0.0
    %6230 = vmatprep.subr.mxu0 0.0
    %6231 = vmatpush1.msra.mxu0 0.0
    %6232 = vmatprep.subr.mxu0 0.0
    %6233 = vmatpush1.msra.mxu0 0.0
    %6234 = vmatprep.subr.mxu0 0.0
    %6235 = vmatpush1.msra.mxu0 0.0
    %6236 = vmatprep.subr.mxu0 0.0
    %6237 = vmatpush1.msra.mxu0 0.0
    %6238 = vmatprep.subr.mxu0 0.0
    %6239 = vmatpush1.msra.mxu0 0.0
    %6240 = vmatprep.subr.mxu0 0.0
    %6241 = vmatpush1.msra.mxu0 0.0
    %6242 = vmatprep.subr.mxu0 0.0
    %6243 = vmatpush1.msra.mxu0 0.0
    %6244 = vmatprep.subr.mxu0 0.0
    %6245 = vmatpush1.msra.mxu0 0.0
    %6246 = vmatprep.subr.mxu0 0.0
    %6247 = vmatpush1.msra.mxu0 0.0
    %6248 = vmatprep.subr.mxu0 0.0
    %6249 = vmatpush1.msra.mxu0 0.0
    %6250 = vmatprep.subr.mxu0 0.0
    %6251 = vmatpush1.msra.mxu0 0.0
    %6252 = vmatprep.subr.mxu0 0.0
    %6253 = vmatpush1.msra.mxu0 0.0
    %6254 = vmatprep.subr.mxu0 0.0
    %6255 = vmatpush1.msra.mxu0 0.0
    %6256 = vmatprep.subr.mxu0 0.0
    %6257 = vmatpush1.msra.mxu0 0.0
    %6258 = vmatprep.subr.mxu0 0.0
    %6259 = vmatpush1.msra.mxu0 0.0
    %6260 = vmatprep.mubr.f32.mxu0 0.0
    %6261 = vmatmul.mubr.f32.gmra.mrb[0].mxu0 %v6192
    %v6262 = vpop.f32.mrb[0].mxu0
    %v6263 = vadd.f32 0.0, %v6262
    %v6264 = vpop.f32.mrb[0].mxu0
    %6265 = vdwg.mxu0
    %6266 = vrot.lane.b32.xlu0 %v5762, 80
    %v6267 = vpop.permute.xlu0 %6266
    %6268 = vrot.lane.b32.xlu0 %v5766, 80
    %v6269 = vpop.permute.xlu0 %6268
    %v6270 = vsel %vm919, %v6267, 0
    %v6272 = vsel %vm919, %v6269, 0
    %6274 = vmatprep.subr.mxu0 0.0
    %6275 = vmatpush1.xpose.msra.mxu0 %v6272
    %6276 = vmatprep.subr.mxu0 0.0
    %6277 = vmatpush1.xpose.msra.mxu0 0.0
    %6278 = vmatprep.subr.mxu0 0.0
    %6279 = vmatpush1.xpose.msra.mxu0 0.0
    %6280 = vmatprep.subr.mxu0 0.0
    %6281 = vmatpush1.xpose.msra.mxu0 0.0
    %6282 = vmatprep.subr.mxu0 0.0
    %6283 = vmatpush1.xpose.msra.mxu0 0.0
    %6284 = vmatprep.subr.mxu0 0.0
    %6285 = vmatpush1.xpose.msra.mxu0 0.0
    %6286 = vmatprep.subr.mxu0 0.0
    %6287 = vmatpush1.xpose.msra.mxu0 0.0
    %6288 = vmatprep.subr.mxu0 0.0
    %6289 = vmatpush1.xpose.msra.mxu0 0.0
    %6290 = vmatprep.subr.mxu0 0.0
    %6291 = vmatpush1.xpose.msra.mxu0 0.0
    %6292 = vmatprep.subr.mxu0 0.0
    %6293 = vmatpush1.xpose.msra.mxu0 0.0
    %6294 = vmatprep.subr.mxu0 0.0
    %6295 = vmatpush1.xpose.msra.mxu0 0.0
    %6296 = vmatprep.subr.mxu0 0.0
    %6297 = vmatpush1.xpose.msra.mxu0 0.0
    %6298 = vmatprep.subr.mxu0 0.0
    %6299 = vmatpush1.xpose.msra.mxu0 0.0
    %6300 = vmatprep.subr.mxu0 0.0
    %6301 = vmatpush1.xpose.msra.mxu0 0.0
    %6302 = vmatprep.subr.mxu0 0.0
    %6303 = vmatpush1.xpose.msra.mxu0 0.0
    %6304 = vmatprep.subr.mxu0 0.0
    %6305 = vmatpush1.xpose.msra.mxu0 0.0
    %6306 = vmatprep.subr.mxu0 0.0
    %6307 = vmatpush1.xpose.msra.mxu0 0.0
    %6308 = vmatprep.subr.mxu0 0.0
    %6309 = vmatpush1.xpose.msra.mxu0 0.0
    %6310 = vmatprep.subr.mxu0 0.0
    %6311 = vmatpush1.xpose.msra.mxu0 0.0
    %6312 = vmatprep.subr.mxu0 0.0
    %6313 = vmatpush1.xpose.msra.mxu0 0.0
    %6314 = vmatprep.subr.mxu0 0.0
    %6315 = vmatpush1.xpose.msra.mxu0 0.0
    %6316 = vmatprep.subr.mxu0 0.0
    %6317 = vmatpush1.xpose.msra.mxu0 0.0
    %6318 = vmatprep.subr.mxu0 0.0
    %6319 = vmatpush1.xpose.msra.mxu0 0.0
    %6320 = vmatprep.subr.mxu0 0.0
    %6321 = vmatpush1.xpose.msra.mxu0 0.0
    %6322 = vmatprep.subr.mxu0 0.0
    %6323 = vmatpush1.xpose.msra.mxu0 0.0
    %6324 = vmatprep.subr.mxu0 0.0
    %6325 = vmatpush1.xpose.msra.mxu0 0.0
    %6326 = vmatprep.subr.mxu0 0.0
    %6327 = vmatpush1.xpose.msra.mxu0 0.0
    %6328 = vmatprep.subr.mxu0 0.0
    %6329 = vmatpush1.xpose.msra.mxu0 0.0
    %6330 = vmatprep.subr.mxu0 0.0
    %6331 = vmatpush1.xpose.msra.mxu0 0.0
    %6332 = vmatprep.subr.mxu0 0.0
    %6333 = vmatpush1.xpose.msra.mxu0 0.0
    %6334 = vmatprep.subr.mxu0 0.0
    %6335 = vmatpush1.xpose.msra.mxu0 0.0
    %6336 = vmatprep.subr.mxu0 0.0
    %6337 = vmatpush1.xpose.msra.mxu0 0.0
    %6338 = vmatprep.mubr.f32.mxu0 0.0
    %6339 = vmatmul.mubr.f32.gmra.mrb[0].mxu0 %v6270
    %v6340 = vpop.f32.mrb[0].mxu0
    %v6341 = vadd.f32 0.0, %v6340
    %v6342 = vpop.f32.mrb[0].mxu0
    %6343 = vdwg.mxu0
    %v6344 = vmul.f32 %v6341, 0.25
    %v6345 = vsel %vm997, %v6344, -inf
    %6346 = vmax.xlane.f32.xlu0 %v6345
    %v6347 = vpop.xlane.xlu0 %6346
    %v6348 = vsub.f32 %v6344, %v6347
    %v6349 = vmul.f32 %v6348, 1.442695
    %v6350 = vpow.pop %v6349
    %v6351 = vsel %vm997, %v6350, 0.0
    %6352 = vadd.xlane.f32.xlu0 %v6351
    %v6353 = vpop.xlane.xlu0 %6352
    %v6354 = vrcp.pop %v6353
    %v6355 = vmul.f32 %v6350, %v6354
    %6356 = vrot.lane.b32.xlu0 %v5856, 80
    %v6357 = vpop.permute.xlu0 %6356
    %v6359 = vsel %vm1009, %v6355, 0
    %v6361 = vsel %vm635, %v6357, 0
    %6363 = vmatprep.subr.mxu0 0.0
    %6364 = vmatpush1.msra.mxu0 %v6361
    %6365 = vmatprep.subr.mxu0 0.0
    %6366 = vmatpush1.msra.mxu0 0.0
    %6367 = vmatprep.subr.mxu0 0.0
    %6368 = vmatpush1.msra.mxu0 0.0
    %6369 = vmatprep.subr.mxu0 0.0
    %6370 = vmatpush1.msra.mxu0 0.0
    %6371 = vmatprep.subr.mxu0 0.0
    %6372 = vmatpush1.msra.mxu0 0.0
    %6373 = vmatprep.subr.mxu0 0.0
    %6374 = vmatpush1.msra.mxu0 0.0
    %6375 = vmatprep.subr.mxu0 0.0
    %6376 = vmatpush1.msra.mxu0 0.0
    %6377 = vmatprep.subr.mxu0 0.0
    %6378 = vmatpush1.msra.mxu0 0.0
    %6379 = vmatprep.subr.mxu0 0.0
    %6380 = vmatpush1.msra.mxu0 0.0
    %6381 = vmatprep.subr.mxu0 0.0
    %6382 = vmatpush1.msra.mxu0 0.0
    %6383 = vmatprep.subr.mxu0 0.0
    %6384 = vmatpush1.msra.mxu0 0.0
    %6385 = vmatprep.subr.mxu0 0.0
    %6386 = vmatpush1.msra.mxu0 0.0
    %6387 = vmatprep.subr.mxu0 0.0
    %6388 = vmatpush1.msra.mxu0 0.0
    %6389 = vmatprep.subr.mxu0 0.0
    %6390 = vmatpush1.msra.mxu0 0.0
    %6391 = vmatprep.subr.mxu0 0.0
    %6392 = vmatpush1.msra.mxu0 0.0
    %6393 = vmatprep.subr.mxu0 0.0
    %6394 = vmatpush1.msra.mxu0 0.0
    %6395 = vmatprep.subr.mxu0 0.0
    %6396 = vmatpush1.msra.mxu0 0.0
    %6397 = vmatprep.subr.mxu0 0.0
    %6398 = vmatpush1.msra.mxu0 0.0
    %6399 = vmatprep.subr.mxu0 0.0
    %6400 = vmatpush1.msra.mxu0 0.0
    %6401 = vmatprep.subr.mxu0 0.0
    %6402 = vmatpush1.msra.mxu0 0.0
    %6403 = vmatprep.subr.mxu0 0.0
    %6404 = vmatpush1.msra.mxu0 0.0
    %6405 = vmatprep.subr.mxu0 0.0
    %6406 = vmatpush1.msra.mxu0 0.0
    %6407 = vmatprep.subr.mxu0 0.0
    %6408 = vmatpush1.msra.mxu0 0.0
    %6409 = vmatprep.subr.mxu0 0.0
    %6410 = vmatpush1.msra.mxu0 0.0
    %6411 = vmatprep.subr.mxu0 0.0
    %6412 = vmatpush1.msra.mxu0 0.0
    %6413 = vmatprep.subr.mxu0 0.0
    %6414 = vmatpush1.msra.mxu0 0.0
    %6415 = vmatprep.subr.mxu0 0.0
    %6416 = vmatpush1.msra.mxu0 0.0
    %6417 = vmatprep.subr.mxu0 0.0
    %6418 = vmatpush1.msra.mxu0 0.0
    %6419 = vmatprep.subr.mxu0 0.0
    %6420 = vmatpush1.msra.mxu0 0.0
    %6421 = vmatprep.subr.mxu0 0.0
    %6422 = vmatpush1.msra.mxu0 0.0
    %6423 = vmatprep.subr.mxu0 0.0
    %6424 = vmatpush1.msra.mxu0 0.0
    %6425 = vmatprep.subr.mxu0 0.0
    %6426 = vmatpush1.msra.mxu0 0.0
    %6427 = vmatprep.mubr.f32.mxu0 0.0
    %6428 = vmatmul.mubr.f32.gmra.mrb[0].mxu0 %v6359
    %v6429 = vpop.f32.mrb[0].mxu0
    %v6430 = vadd.f32 0.0, %v6429
    %v6431 = vpop.f32.mrb[0].mxu0
    %6432 = vdwg.mxu0
    %6434 = vrot.lane.b32.xlu0 %v6096, 16
    %v6435 = vpop.permute.xlu0 %6434
    %6438 = vrot.lane.b32.xlu0 %v6263, 32
    %v6439 = vpop.permute.xlu0 %6438
    %6442 = vrot.lane.b32.xlu0 %v6430, 48
    %v6443 = vpop.permute.xlu0 %6442
    %v6445 = vsel %vm919, %v5929, %v6435
    %v6446 = vsel %vm1600, %v6445, %v6439
    %v6447 = vsel %vm1602, %v6446, %v6443
    %v6449 = vrot.slane %v6447, 1
    %v6451 = vsel %vm635, %v5758, %v6449
    %s6452 = scalar_lea.vmem %s21, 128
    %v6453 = vld [vmem:[%s6452] sm:$0xff]
    %v6454 = vld [vmem:[%s6452 + $0x8] sm:$0xff]
    %v6455 = vld [vmem:[%s6452 + $0x10] sm:$0xff]
    %v6456 = vld [vmem:[%s6452 + $0x18] sm:$0xff]
    %v6457 = vld [vmem:[%s6452 + $0x20] sm:$0xff]
    %v6458 = vld [vmem:[%s6452 + $0x28] sm:$0xff]
    %v6459 = vld [vmem:[%s6452 + $0x30] sm:$0xff]
    %v6460 = vld [vmem:[%s6452 + $0x38] sm:$0xff]
    %s6461 = scalar_lea.vmem [#allocation15], 2
    %v6462 = vld [vmem:[%s6461] sm:$0x1]
    %v6464 = vlaneseq
    %v6465 = vshrl.u32 %v6464, 7
    %v6466 = vsub.s32 0, %v6465
    %v6467 = vrot.slane %v6462, %v6466
    %v6470 = vsel %vm451, %v6451, 0
    %v6472 = vsel %vm451, %v6449, 0
    %6474 = vmatprep.subr.mxu0 0.0
    %6475 = vmatpush1.msra.mxu0 %v6453
    %6476 = vmatprep.subr.mxu0 0.0
    %6477 = vmatpush1.msra.mxu0 %v6454
    %6478 = vmatprep.subr.mxu0 0.0
    %6479 = vmatpush1.msra.mxu0 %v6455
    %6480 = vmatprep.subr.mxu0 0.0
    %6481 = vmatpush1.msra.mxu0 %v6456
    %6482 = vmatprep.subr.mxu0 0.0
    %6483 = vmatpush1.msra.mxu0 %v6457
    %6484 = vmatprep.subr.mxu0 0.0
    %6485 = vmatpush1.msra.mxu0 %v6458
    %6486 = vmatprep.subr.mxu0 0.0
    %6487 = vmatpush1.msra.mxu0 %v6459
    %6488 = vmatprep.subr.mxu0 0.0
    %6489 = vmatpush1.msra.mxu0 %v6460
    %6490 = vmatprep.subr.mxu0 0.0
    %6491 = vmatpush1.msra.mxu0 0.0
    %6492 = vmatprep.subr.mxu0 0.0
    %6493 = vmatpush1.msra.mxu0 0.0
    %6494 = vmatprep.subr.mxu0 0.0
    %6495 = vmatpush1.msra.mxu0 0.0
    %6496 = vmatprep.subr.mxu0 0.0
    %6497 = vmatpush1.msra.mxu0 0.0
    %6498 = vmatprep.subr.mxu0 0.0
    %6499 = vmatpush1.msra.mxu0 0.0
    %6500 = vmatprep.subr.mxu0 0.0
    %6501 = vmatpush1.msra.mxu0 0.0
    %6502 = vmatprep.subr.mxu0 0.0
    %6503 = vmatpush1.msra.mxu0 0.0
    %6504 = vmatprep.subr.mxu0 0.0
    %6505 = vmatpush1.msra.mxu0 0.0
    %6506 = vmatprep.subr.mxu0 0.0
    %6507 = vmatpush1.msra.mxu0 0.0
    %6508 = vmatprep.subr.mxu0 0.0
    %6509 = vmatpush1.msra.mxu0 0.0
    %6510 = vmatprep.subr.mxu0 0.0
    %6511 = vmatpush1.msra.mxu0 0.0
    %6512 = vmatprep.subr.mxu0 0.0
    %6513 = vmatpush1.msra.mxu0 0.0
    %6514 = vmatprep.subr.mxu0 0.0
    %6515 = vmatpush1.msra.mxu0 0.0
    %6516 = vmatprep.subr.mxu0 0.0
    %6517 = vmatpush1.msra.mxu0 0.0
    %6518 = vmatprep.subr.mxu0 0.0
    %6519 = vmatpush1.msra.mxu0 0.0
    %6520 = vmatprep.subr.mxu0 0.0
    %6521 = vmatpush1.msra.mxu0 0.0
    %6522 = vmatprep.subr.mxu0 0.0
    %6523 = vmatpush1.msra.mxu0 0.0
    %6524 = vmatprep.subr.mxu0 0.0
    %6525 = vmatpush1.msra.mxu0 0.0
    %6526 = vmatprep.subr.mxu0 0.0
    %6527 = vmatpush1.msra.mxu0 0.0
    %6528 = vmatprep.subr.mxu0 0.0
    %6529 = vmatpush1.msra.mxu0 0.0
    %6530 = vmatprep.subr.mxu0 0.0
    %6531 = vmatpush1.msra.mxu0 0.0
    %6532 = vmatprep.subr.mxu0 0.0
    %6533 = vmatpush1.msra.mxu0 0.0
    %6534 = vmatprep.subr.mxu0 0.0
    %6535 = vmatpush1.msra.mxu0 0.0
    %6536 = vmatprep.subr.mxu0 0.0
    %6537 = vmatpush1.msra.mxu0 0.0
    %6538 = vmatprep.mubr.f32.mxu0 0.0
    %6539 = vmatmul.mubr.f32.gmra.mrb[0].mxu0 %v6470
    %v6540 = vpop.f32.mrb[0].mxu0
    %v6541 = vadd.f32 %v6467, %v6540
    %v6542 = vpop.f32.mrb[0].mxu0
    %6543 = vmatprep.mubr.f32.mxu0 0.0
    %6544 = vmatmul.mubr.f32.gmra.mrb[0].mxu0 %v6472
    %v6545 = vpop.f32.mrb[0].mxu0
    %v6546 = vadd.f32 %v6467, %v6545
    %v6547 = vpop.f32.mrb[0].mxu0
    %6548 = vdwg.mxu0
    %v6549 = vadd.f32 %v4795, %v6541
    %v6550 = vadd.f32 %v4796, %v6546
    %s6551 = scalar_lea.vmem [#allocation16], 2
    %v6552 = vld [vmem:[%s6551] sm:$0x1]
    %s6553 = scalar_lea.vmem [#allocation18], 2
    %v6554 = vld [vmem:[%s6553] sm:$0x1]
    %v6555 = vsel %vm451, %v6549, 0.0
    %6556 = vadd.xlane.f32.xlu0 %v6555
    %v6557 = vpop.xlane.xlu0 %6556
    %v6558 = vsel %vm2400, %v6550, 0.0
    %6559 = vadd.xlane.f32.xlu0 %v6558
    %v6560 = vpop.xlane.xlu0 %6559
    %v6561 = vmul.f32 %v6557, %v2404
    %v6562 = vmul.f32 %v6560, %v2404
    %v6563 = vsub.f32 %v6549, %v6561
    %v6564 = vsub.f32 %v6550, %v6562
    %v6565 = vmul.f32 %v6563, %v6563
    %v6566 = vmul.f32 %v6564, %v6564
    %v6567 = vsel %vm451, %v6565, 0.0
    %6568 = vadd.xlane.f32.xlu0 %v6567
    %v6569 = vpop.xlane.xlu0 %6568
    %v6570 = vsel %vm2400, %v6566, 0.0
    %6571 = vadd.xlane.f32.xlu0 %v6570
    %v6572 = vpop.xlane.xlu0 %6571
    %v6573 = vmul.f32 %v6569, %v2404
    %v6574 = vmul.f32 %v6572, %v2404
    %v6575 = vadd.f32 %v6573, 1e-05
    %v6576 = vadd.f32 %v6574, 1e-05
    %v6577 = vrsqrt.pop %v6575
    %v6578 = vrsqrt.pop %v6576
    %v6579 = vmul.f32 %v6563, %v6577
    %v6580 = vmul.f32 %v6564, %v6578
    %v6582 = vlaneseq
    %v6583 = vshrl.u32 %v6582, 7
    %v6584 = vsub.s32 0, %v6583
    %v6585 = vrot.slane %v6552, %v6584
    %v6587 = vmul.f32 %v6579, %v6585
    %v6588 = vmul.f32 %v6580, %v6585
    %v6590 = vlaneseq
    %v6591 = vshrl.u32 %v6590, 7
    %v6592 = vsub.s32 0, %v6591
    %v6593 = vrot.slane %v6554, %v6592
    %v6595 = vadd.f32 %v6587, %v6593
    %v6596 = vadd.f32 %v6588, %v6593
    %s6597 = scalar_lea.vmem %s29, 256
    %v6598 = vld [vmem:[%s6597] sm:$0xff]
    %v6599 = vld [vmem:[%s6597 + $0x8] sm:$0xff]
    %v6600 = vld [vmem:[%s6597 + $0x10] sm:$0xff]
    %v6601 = vld [vmem:[%s6597 + $0x18] sm:$0xff]
    %v6602 = vld [vmem:[%s6597 + $0x20] sm:$0xff]
    %v6603 = vld [vmem:[%s6597 + $0x28] sm:$0xff]
    %v6604 = vld [vmem:[%s6597 + $0x30] sm:$0xff]
    %v6605 = vld [vmem:[%s6597 + $0x38] sm:$0xff]
    %v6606 = vld [vmem:[%s6597 + $0x40] sm:$0xff]
    %v6607 = vld [vmem:[%s6597 + $0x48] sm:$0xff]
    %v6608 = vld [vmem:[%s6597 + $0x50] sm:$0xff]
    %v6609 = vld [vmem:[%s6597 + $0x58] sm:$0xff]
    %v6610 = vld [vmem:[%s6597 + $0x60] sm:$0xff]
    %v6611 = vld [vmem:[%s6597 + $0x68] sm:$0xff]
    %v6612 = vld [vmem:[%s6597 + $0x70] sm:$0xff]
    %v6613 = vld [vmem:[%s6597 + $0x78] sm:$0xff]
    %s6614 = scalar_lea.vmem [#allocation19], 4
    %v6615 = vld [vmem:[%s6614] sm:$0x3]
    %v6617 = vlaneseq
    %v6618 = vshrl.u32 %v6617, 7
    %v6619 = vsub.s32 0, %v6618
    %v6620 = vrot.slane %v6615, %v6619
    %v6621 = vlaneseq
    %v6622 = vshrl.u32 %v6621, 7
    %v6623 = vsub.s32 1, %v6622
    %v6624 = vrot.slane %v6615, %v6623
    %v6628 = vsel %vm451, %v6595, 0
    %v6631 = vsel %vm451, %v6596, 0
    %6633 = vmatprep.subr.mxu0 %v6599
    %6634 = vmatpush1.msra.mxu0 %v6598
    %6635 = vmatprep.subr.mxu0 %v6601
    %6636 = vmatpush1.msra.mxu0 %v6600
    %6637 = vmatprep.subr.mxu0 %v6603
    %6638 = vmatpush1.msra.mxu0 %v6602
    %6639 = vmatprep.subr.mxu0 %v6605
    %6640 = vmatpush1.msra.mxu0 %v6604
    %6641 = vmatprep.subr.mxu0 %v6607
    %6642 = vmatpush1.msra.mxu0 %v6606
    %6643 = vmatprep.subr.mxu0 %v6609
    %6644 = vmatpush1.msra.mxu0 %v6608
    %6645 = vmatprep.subr.mxu0 %v6611
    %6646 = vmatpush1.msra.mxu0 %v6610
    %6647 = vmatprep.subr.mxu0 %v6613
    %6648 = vmatpush1.msra.mxu0 %v6612
    %6649 = vmatprep.subr.mxu0 0.0
    %6650 = vmatpush1.msra.mxu0 0.0
    %6651 = vmatprep.subr.mxu0 0.0
    %6652 = vmatpush1.msra.mxu0 0.0
    %6653 = vmatprep.subr.mxu0 0.0
    %6654 = vmatpush1.msra.mxu0 0.0
    %6655 = vmatprep.subr.mxu0 0.0
    %6656 = vmatpush1.msra.mxu0 0.0
    %6657 = vmatprep.subr.mxu0 0.0
    %6658 = vmatpush1.msra.mxu0 0.0
    %6659 = vmatprep.subr.mxu0 0.0
    %6660 = vmatpush1.msra.mxu0 0.0
    %6661 = vmatprep.subr.mxu0 0.0
    %6662 = vmatpush1.msra.mxu0 0.0
    %6663 = vmatprep.subr.mxu0 0.0
    %6664 = vmatpush1.msra.mxu0 0.0
    %6665 = vmatprep.subr.mxu0 0.0
    %6666 = vmatpush1.msra.mxu0 0.0
    %6667 = vmatprep.subr.mxu0 0.0
    %6668 = vmatpush1.msra.mxu0 0.0
    %6669 = vmatprep.subr.mxu0 0.0
    %6670 = vmatpush1.msra.mxu0 0.0
    %6671 = vmatprep.subr.mxu0 0.0
    %6672 = vmatpush1.msra.mxu0 0.0
    %6673 = vmatprep.subr.mxu0 0.0
    %6674 = vmatpush1.msra.mxu0 0.0
    %6675 = vmatprep.subr.mxu0 0.0
    %6676 = vmatpush1.msra.mxu0 0.0
    %6677 = vmatprep.subr.mxu0 0.0
    %6678 = vmatpush1.msra.mxu0 0.0
    %6679 = vmatprep.subr.mxu0 0.0
    %6680 = vmatpush1.msra.mxu0 0.0
    %6681 = vmatprep.subr.mxu0 0.0
    %6682 = vmatpush1.msra.mxu0 0.0
    %6683 = vmatprep.subr.mxu0 0.0
    %6684 = vmatpush1.msra.mxu0 0.0
    %6685 = vmatprep.subr.mxu0 0.0
    %6686 = vmatpush1.msra.mxu0 0.0
    %6687 = vmatprep.subr.mxu0 0.0
    %6688 = vmatpush1.msra.mxu0 0.0
    %6689 = vmatprep.subr.mxu0 0.0
    %6690 = vmatpush1.msra.mxu0 0.0
    %6691 = vmatprep.subr.mxu0 0.0
    %6692 = vmatpush1.msra.mxu0 0.0
    %6693 = vmatprep.subr.mxu0 0.0
    %6694 = vmatpush1.msra.mxu0 0.0
    %6695 = vmatprep.subr.mxu0 0.0
    %6696 = vmatpush1.msra.mxu0 0.0
    %6697 = vmatprep.mubr.f32.mxu0 0.0
    %6698 = vmatmul.mubr.f32.gmra.mrb[0].mxu0 %v6628
    %v6699 = vpop.f32.mrb[0].mxu0
    %v6700 = vadd.f32 %v6620, %v6699
    %v6701 = vpop.f32.mrb[0].mxu0
    %v6702 = vadd.f32 %v6624, %v6701
    %6703 = vmatprep.mubr.f32.mxu0 0.0
    %6704 = vmatmul.mubr.f32.gmra.mrb[0].mxu0 %v6631
    %v6705 = vpop.f32.mrb[0].mxu0
    %v6706 = vadd.f32 %v6620, %v6705
    %v6707 = vpop.f32.mrb[0].mxu0
    %v6708 = vadd.f32 %v6624, %v6707
    %6709 = vdwg.mxu0
    %v6710 = vmax.f32 %v6700, 0.0
    %v6711 = vmax.f32 %v6702, 0.0
    %v6712 = vmax.f32 %v6706, 0.0
    %v6713 = vmax.f32 %v6708, 0.0
    %s6714 = scalar_lea.vmem %s33, 512
    %v6715 = vld [vmem:[%s6714] sm:$0xff]
    %v6716 = vld [vmem:[%s6714 + $0x8] sm:$0xff]
    %v6717 = vld [vmem:[%s6714 + $0x10] sm:$0xff]
    %v6718 = vld [vmem:[%s6714 + $0x18] sm:$0xff]
    %v6719 = vld [vmem:[%s6714 + $0x20] sm:$0xff]
    %v6720 = vld [vmem:[%s6714 + $0x28] sm:$0xff]
    %v6721 = vld [vmem:[%s6714 + $0x30] sm:$0xff]
    %v6722 = vld [vmem:[%s6714 + $0x38] sm:$0xff]
    %v6723 = vld [vmem:[%s6714 + $0x40] sm:$0xff]
    %v6724 = vld [vmem:[%s6714 + $0x48] sm:$0xff]
    %v6725 = vld [vmem:[%s6714 + $0x50] sm:$0xff]
    %v6726 = vld [vmem:[%s6714 + $0x58] sm:$0xff]
    %v6727 = vld [vmem:[%s6714 + $0x60] sm:$0xff]
    %v6728 = vld [vmem:[%s6714 + $0x68] sm:$0xff]
    %v6729 = vld [vmem:[%s6714 + $0x70] sm:$0xff]
    %v6730 = vld [vmem:[%s6714 + $0x78] sm:$0xff]
    %v6731 = vld [vmem:[%s6714 + $0x80] sm:$0xff]
    %v6732 = vld [vmem:[%s6714 + $0x88] sm:$0xff]
    %v6733 = vld [vmem:[%s6714 + $0x90] sm:$0xff]
    %v6734 = vld [vmem:[%s6714 + $0x98] sm:$0xff]
    %v6735 = vld [vmem:[%s6714 + $0xa0] sm:$0xff]
    %v6736 = vld [vmem:[%s6714 + $0xa8] sm:$0xff]
    %v6737 = vld [vmem:[%s6714 + $0xb0] sm:$0xff]
    %v6738 = vld [vmem:[%s6714 + $0xb8] sm:$0xff]
    %v6739 = vld [vmem:[%s6714 + $0xc0] sm:$0xff]
    %v6740 = vld [vmem:[%s6714 + $0xc8] sm:$0xff]
    %v6741 = vld [vmem:[%s6714 + $0xd0] sm:$0xff]
    %v6742 = vld [vmem:[%s6714 + $0xd8] sm:$0xff]
    %v6743 = vld [vmem:[%s6714 + $0xe0] sm:$0xff]
    %v6744 = vld [vmem:[%s6714 + $0xe8] sm:$0xff]
    %v6745 = vld [vmem:[%s6714 + $0xf0] sm:$0xff]
    %v6746 = vld [vmem:[%s6714 + $0xf8] sm:$0xff]
    %s6747 = scalar_lea.vmem [#allocation21], 2
    %v6748 = vld [vmem:[%s6747] sm:$0x1]
    %v6750 = vlaneseq
    %v6751 = vshrl.u32 %v6750, 7
    %v6752 = vsub.s32 0, %v6751
    %v6753 = vrot.slane %v6748, %v6752
    %6755 = vmatprep.subr.mxu0 0.0
    %6756 = vmatpush1.msra.mxu0 %v6715
    %6757 = vmatprep.subr.mxu0 0.0
    %6758 = vmatpush1.msra.mxu0 %v6716
    %6759 = vmatprep.subr.mxu0 0.0
    %6760 = vmatpush1.msra.mxu0 %v6717
    %6761 = vmatprep.subr.mxu0 0.0
    %6762 = vmatpush1.msra.mxu0 %v6718
    %6763 = vmatprep.subr.mxu0 0.0
    %6764 = vmatpush1.msra.mxu0 %v6719
    %6765 = vmatprep.subr.mxu0 0.0
    %6766 = vmatpush1.msra.mxu0 %v6720
    %6767 = vmatprep.subr.mxu0 0.0
    %6768 = vmatpush1.msra.mxu0 %v6721
    %6769 = vmatprep.subr.mxu0 0.0
    %6770 = vmatpush1.msra.mxu0 %v6722
    %6771 = vmatprep.subr.mxu0 0.0
    %6772 = vmatpush1.msra.mxu0 %v6723
    %6773 = vmatprep.subr.mxu0 0.0
    %6774 = vmatpush1.msra.mxu0 %v6724
    %6775 = vmatprep.subr.mxu0 0.0
    %6776 = vmatpush1.msra.mxu0 %v6725
    %6777 = vmatprep.subr.mxu0 0.0
    %6778 = vmatpush1.msra.mxu0 %v6726
    %6779 = vmatprep.subr.mxu0 0.0
    %6780 = vmatpush1.msra.mxu0 %v6727
    %6781 = vmatprep.subr.mxu0 0.0
    %6782 = vmatpush1.msra.mxu0 %v6728
    %6783 = vmatprep.subr.mxu0 0.0
    %6784 = vmatpush1.msra.mxu0 %v6729
    %6785 = vmatprep.subr.mxu0 0.0
    %6786 = vmatpush1.msra.mxu0 %v6730
    %6787 = vmatprep.subr.mxu0 0.0
    %6788 = vmatpush1.msra.mxu0 %v6731
    %6789 = vmatprep.subr.mxu0 0.0
    %6790 = vmatpush1.msra.mxu0 %v6732
    %6791 = vmatprep.subr.mxu0 0.0
    %6792 = vmatpush1.msra.mxu0 %v6733
    %6793 = vmatprep.subr.mxu0 0.0
    %6794 = vmatpush1.msra.mxu0 %v6734
    %6795 = vmatprep.subr.mxu0 0.0
    %6796 = vmatpush1.msra.mxu0 %v6735
    %6797 = vmatprep.subr.mxu0 0.0
    %6798 = vmatpush1.msra.mxu0 %v6736
    %6799 = vmatprep.subr.mxu0 0.0
    %6800 = vmatpush1.msra.mxu0 %v6737
    %6801 = vmatprep.subr.mxu0 0.0
    %6802 = vmatpush1.msra.mxu0 %v6738
    %6803 = vmatprep.subr.mxu0 0.0
    %6804 = vmatpush1.msra.mxu0 %v6739
    %6805 = vmatprep.subr.mxu0 0.0
    %6806 = vmatpush1.msra.mxu0 %v6740
    %6807 = vmatprep.subr.mxu0 0.0
    %6808 = vmatpush1.msra.mxu0 %v6741
    %6809 = vmatprep.subr.mxu0 0.0
    %6810 = vmatpush1.msra.mxu0 %v6742
    %6811 = vmatprep.subr.mxu0 0.0
    %6812 = vmatpush1.msra.mxu0 %v6743
    %6813 = vmatprep.subr.mxu0 0.0
    %6814 = vmatpush1.msra.mxu0 %v6744
    %6815 = vmatprep.subr.mxu0 0.0
    %6816 = vmatpush1.msra.mxu0 %v6745
    %6817 = vmatprep.subr.mxu0 0.0
    %6818 = vmatpush1.msra.mxu0 %v6746
    %6819 = vmatprep.mubr.f32.mxu0 %v6711
    %6820 = vmatmul.mubr.f32.gmra.mrb[0].mxu0 %v6710
    %v6821 = vpop.f32.mrb[0].mxu0
    %v6822 = vadd.f32 %v6753, %v6821
    %v6823 = vpop.f32.mrb[0].mxu0
    %6824 = vmatprep.mubr.f32.mxu0 %v6713
    %6825 = vmatmul.mubr.f32.gmra.mrb[0].mxu0 %v6712
    %v6826 = vpop.f32.mrb[0].mxu0
    %v6827 = vadd.f32 %v6753, %v6826
    %v6828 = vpop.f32.mrb[0].mxu0
    %6829 = vdwg.mxu0
    %v6830 = vadd.f32 %v6595, %v6822
    %v6831 = vadd.f32 %v6596, %v6827
    %s6832 = scalar_lea.vmem [#allocation22], 2
    %v6833 = vld [vmem:[%s6832] sm:$0x1]
    %s6834 = scalar_lea.vmem [#allocation24], 2
    %v6835 = vld [vmem:[%s6834] sm:$0x1]
    %v6836 = vsel %vm451, %v6830, 0.0
    %6837 = vadd.xlane.f32.xlu0 %v6836
    %v6838 = vpop.xlane.xlu0 %6837
    %v6839 = vsel %vm2400, %v6831, 0.0
    %6840 = vadd.xlane.f32.xlu0 %v6839
    %v6841 = vpop.xlane.xlu0 %6840
    %v6842 = vmul.f32 %v6838, %v2404
    %v6843 = vmul.f32 %v6841, %v2404
    %v6844 = vsub.f32 %v6830, %v6842
    %v6845 = vsub.f32 %v6831, %v6843
    %v6846 = vmul.f32 %v6844, %v6844
    %v6847 = vmul.f32 %v6845, %v6845
    %v6848 = vsel %vm451, %v6846, 0.0
    %6849 = vadd.xlane.f32.xlu0 %v6848
    %v6850 = vpop.xlane.xlu0 %6849
    %v6851 = vsel %vm2400, %v6847, 0.0
    %6852 = vadd.xlane.f32.xlu0 %v6851
    %v6853 = vpop.xlane.xlu0 %6852
    %v6854 = vmul.f32 %v6850, %v2404
    %v6855 = vmul.f32 %v6853, %v2404
    %v6856 = vadd.f32 %v6854, 1e-05
    %v6857 = vadd.f32 %v6855, 1e-05
    %v6858 = vrsqrt.pop %v6856
    %v6859 = vrsqrt.pop %v6857
    %v6860 = vmul.f32 %v6844, %v6858
    %v6861 = vmul.f32 %v6845, %v6859
    %v6863 = vlaneseq
    %v6864 = vshrl.u32 %v6863, 7
    %v6865 = vsub.s32 0, %v6864
    %v6866 = vrot.slane %v6833, %v6865
    %v6868 = vmul.f32 %v6860, %v6866
    %v6869 = vmul.f32 %v6861, %v6866
    %v6871 = vlaneseq
    %v6872 = vshrl.u32 %v6871, 7
    %v6873 = vsub.s32 0, %v6872
    %v6874 = vrot.slane %v6835, %v6873
    %v6876 = vadd.f32 %v6868, %v6874
    %v6877 = vadd.f32 %v6869, %v6874
    %v6878 = vld [vmem:[#allocation25] sm:$0x1]
    %v6879 = vld [vmem:[#allocation2] sm:$0x1]
    %6881 = vset.pattern.permute.xlu0 0
    %6882 = vperm.xlu0 %6881, %v6879
    %v6883 = vpop.permute.xlu0 %6882
    %v6885 = vlaneseq
    %v6886 = vshrl.u32 %v6885, 7
    %v6887 = vsub.s32 0, %v6886
    %v6888 = vrot.slane %v6883, %v6887
    %v6890 = vsel %vm451, %v6878, 0
    %v6893 = vsel %vm451, %v6876, 0
    %6895 = vmatprep.subr.mxu0 0.0
    %6896 = vmatpush1.xpose.msra.mxu0 %v6893
    %6897 = vmatprep.subr.mxu0 0.0
    %6898 = vmatpush1.xpose.msra.mxu0 0.0
    %6899 = vmatprep.subr.mxu0 0.0
    %6900 = vmatpush1.xpose.msra.mxu0 0.0
    %6901 = vmatprep.subr.mxu0 0.0
    %6902 = vmatpush1.xpose.msra.mxu0 0.0
    %6903 = vmatprep.subr.mxu0 0.0
    %6904 = vmatpush1.xpose.msra.mxu0 0.0
    %6905 = vmatprep.subr.mxu0 0.0
    %6906 = vmatpush1.xpose.msra.mxu0 0.0
    %6907 = vmatprep.subr.mxu0 0.0
    %6908 = vmatpush1.xpose.msra.mxu0 0.0
    %6909 = vmatprep.subr.mxu0 0.0
    %6910 = vmatpush1.xpose.msra.mxu0 0.0
    %6911 = vmatprep.subr.mxu0 0.0
    %6912 = vmatpush1.xpose.msra.mxu0 0.0
    %6913 = vmatprep.subr.mxu0 0.0
    %6914 = vmatpush1.xpose.msra.mxu0 0.0
    %6915 = vmatprep.subr.mxu0 0.0
    %6916 = vmatpush1.xpose.msra.mxu0 0.0
    %6917 = vmatprep.subr.mxu0 0.0
    %6918 = vmatpush1.xpose.msra.mxu0 0.0
    %6919 = vmatprep.subr.mxu0 0.0
    %6920 = vmatpush1.xpose.msra.mxu0 0.0
    %6921 = vmatprep.subr.mxu0 0.0
    %6922 = vmatpush1.xpose.msra.mxu0 0.0
    %6923 = vmatprep.subr.mxu0 0.0
    %6924 = vmatpush1.xpose.msra.mxu0 0.0
    %6925 = vmatprep.subr.mxu0 0.0
    %6926 = vmatpush1.xpose.msra.mxu0 0.0
    %6927 = vmatprep.subr.mxu0 0.0
    %6928 = vmatpush1.xpose.msra.mxu0 0.0
    %6929 = vmatprep.subr.mxu0 0.0
    %6930 = vmatpush1.xpose.msra.mxu0 0.0
    %6931 = vmatprep.subr.mxu0 0.0
    %6932 = vmatpush1.xpose.msra.mxu0 0.0
    %6933 = vmatprep.subr.mxu0 0.0
    %6934 = vmatpush1.xpose.msra.mxu0 0.0
    %6935 = vmatprep.subr.mxu0 0.0
    %6936 = vmatpush1.xpose.msra.mxu0 0.0
    %6937 = vmatprep.subr.mxu0 0.0
    %6938 = vmatpush1.xpose.msra.mxu0 0.0
    %6939 = vmatprep.subr.mxu0 0.0
    %6940 = vmatpush1.xpose.msra.mxu0 0.0
    %6941 = vmatprep.subr.mxu0 0.0
    %6942 = vmatpush1.xpose.msra.mxu0 0.0
    %6943 = vmatprep.subr.mxu0 0.0
    %6944 = vmatpush1.xpose.msra.mxu0 0.0
    %6945 = vmatprep.subr.mxu0 0.0
    %6946 = vmatpush1.xpose.msra.mxu0 0.0
    %6947 = vmatprep.subr.mxu0 0.0
    %6948 = vmatpush1.xpose.msra.mxu0 0.0
    %6949 = vmatprep.subr.mxu0 0.0
    %6950 = vmatpush1.xpose.msra.mxu0 0.0
    %6951 = vmatprep.subr.mxu0 0.0
    %6952 = vmatpush1.xpose.msra.mxu0 0.0
    %6953 = vmatprep.subr.mxu0 0.0
    %6954 = vmatpush1.xpose.msra.mxu0 0.0
    %6955 = vmatprep.subr.mxu0 0.0
    %6956 = vmatpush1.xpose.msra.mxu0 0.0
    %6957 = vmatprep.subr.mxu0 0.0
    %6958 = vmatpush1.xpose.msra.mxu0 0.0
    %6959 = vmatprep.mubr.f32.mxu0 0.0
    %6960 = vmatmul.mubr.f32.gmra.mrb[0].mxu0 %v6890
    %v6961 = vpop.f32.mrb[0].mxu0
    %v6962 = vadd.f32 %v6888, %v6961
    %v6963 = vpop.f32.mrb[0].mxu0
    %6964 = vdwg.mxu0
    %vm6965 = vcmask 49152
    %v6966 = vsel %vm6965, %v6962, -inf
    %6967 = vmax.xlane.f32.xlu0 %v6966
    %v6968 = vpop.xlane.xlu0 %6967
    %v6969 = vsub.f32 %v6962, %v6968
    %v6970 = vmul.f32 %v6969, 1.442695
    %v6971 = vpow.pop %v6970
    %v6972 = vsel %vm6965, %v6971, 0.0
    %6973 = vadd.xlane.f32.xlu0 %v6972
    %v6974 = vpop.xlane.xlu0 %6973
    %v6975 = vrcp.pop %v6974
    %v6976 = vmul.f32 %v6971, %v6975
    %6977 = vst.msk [vmem:[#allocation31] sm:$0x1] %vm6965, %v6976
    %v6979 = vsel %vm1009, %v6976, 0
    %v6981 = vsel %vm635, %v6876, 0
    %6983 = vmatprep.subr.mxu0 0.0
    %6984 = vmatpush1.msra.mxu0 %v6981
    %6985 = vmatprep.subr.mxu0 0.0
    %6986 = vmatpush1.msra.mxu0 0.0
    %6987 = vmatprep.subr.mxu0 0.0
    %6988 = vmatpush1.msra.mxu0 0.0
    %6989 = vmatprep.subr.mxu0 0.0
    %6990 = vmatpush1.msra.mxu0 0.0
    %6991 = vmatprep.subr.mxu0 0.0
    %6992 = vmatpush1.msra.mxu0 0.0
    %6993 = vmatprep.subr.mxu0 0.0
    %6994 = vmatpush1.msra.mxu0 0.0
    %6995 = vmatprep.subr.mxu0 0.0
    %6996 = vmatpush1.msra.mxu0 0.0
    %6997 = vmatprep.subr.mxu0 0.0
    %6998 = vmatpush1.msra.mxu0 0.0
    %6999 = vmatprep.subr.mxu0 0.0
    %7000 = vmatpush1.msra.mxu0 0.0
    %7001 = vmatprep.subr.mxu0 0.0
    %7002 = vmatpush1.msra.mxu0 0.0
    %7003 = vmatprep.subr.mxu0 0.0
    %7004 = vmatpush1.msra.mxu0 0.0
    %7005 = vmatprep.subr.mxu0 0.0
    %7006 = vmatpush1.msra.mxu0 0.0
    %7007 = vmatprep.subr.mxu0 0.0
    %7008 = vmatpush1.msra.mxu0 0.0
    %7009 = vmatprep.subr.mxu0 0.0
    %7010 = vmatpush1.msra.mxu0 0.0
    %7011 = vmatprep.subr.mxu0 0.0
    %7012 = vmatpush1.msra.mxu0 0.0
    %7013 = vmatprep.subr.mxu0 0.0
    %7014 = vmatpush1.msra.mxu0 0.0
    %7015 = vmatprep.subr.mxu0 0.0
    %7016 = vmatpush1.msra.mxu0 0.0
    %7017 = vmatprep.subr.mxu0 0.0
    %7018 = vmatpush1.msra.mxu0 0.0
    %7019 = vmatprep.subr.mxu0 0.0
    %7020 = vmatpush1.msra.mxu0 0.0
    %7021 = vmatprep.subr.mxu0 0.0
    %7022 = vmatpush1.msra.mxu0 0.0
    %7023 = vmatprep.subr.mxu0 0.0
    %7024 = vmatpush1.msra.mxu0 0.0
    %7025 = vmatprep.subr.mxu0 0.0
    %7026 = vmatpush1.msra.mxu0 0.0
    %7027 = vmatprep.subr.mxu0 0.0
    %7028 = vmatpush1.msra.mxu0 0.0
    %7029 = vmatprep.subr.mxu0 0.0
    %7030 = vmatpush1.msra.mxu0 0.0
    %7031 = vmatprep.subr.mxu0 0.0
    %7032 = vmatpush1.msra.mxu0 0.0
    %7033 = vmatprep.subr.mxu0 0.0
    %7034 = vmatpush1.msra.mxu0 0.0
    %7035 = vmatprep.subr.mxu0 0.0
    %7036 = vmatpush1.msra.mxu0 0.0
    %7037 = vmatprep.subr.mxu0 0.0
    %7038 = vmatpush1.msra.mxu0 0.0
    %7039 = vmatprep.subr.mxu0 0.0
    %7040 = vmatpush1.msra.mxu0 0.0
    %7041 = vmatprep.subr.mxu0 0.0
    %7042 = vmatpush1.msra.mxu0 0.0
    %7043 = vmatprep.subr.mxu0 0.0
    %7044 = vmatpush1.msra.mxu0 0.0
    %7045 = vmatprep.subr.mxu0 0.0
    %7046 = vmatpush1.msra.mxu0 0.0
    %7047 = vmatprep.mubr.f32.mxu0 0.0
    %7048 = vmatmul.mubr.f32.gmra.mrb[0].mxu0 %v6979
    %v7049 = vpop.f32.mrb[0].mxu0
    %v7050 = vadd.f32 0.0, %v7049
    %v7051 = vpop.f32.mrb[0].mxu0
    %7052 = vdwg.mxu0
    %v7054 = vrot.slane %v6876, 7
    %v7055 = vrot.slane %v6877, 7
    %v7056 = vsel %vm1605, %v7054, %v7055
    %v7057 = vsel %vm451, %v7056, 0
    %7059 = vmatprep.subr.mxu0 0.0
    %7060 = vmatpush1.xpose.msra.mxu0 %v7057
    %7061 = vmatprep.subr.mxu0 0.0
    %7062 = vmatpush1.xpose.msra.mxu0 0.0
    %7063 = vmatprep.subr.mxu0 0.0
    %7064 = vmatpush1.xpose.msra.mxu0 0.0
    %7065 = vmatprep.subr.mxu0 0.0
    %7066 = vmatpush1.xpose.msra.mxu0 0.0
    %7067 = vmatprep.subr.mxu0 0.0
    %7068 = vmatpush1.xpose.msra.mxu0 0.0
    %7069 = vmatprep.subr.mxu0 0.0
    %7070 = vmatpush1.xpose.msra.mxu0 0.0
    %7071 = vmatprep.subr.mxu0 0.0
    %7072 = vmatpush1.xpose.msra.mxu0 0.0
    %7073 = vmatprep.subr.mxu0 0.0
    %7074 = vmatpush1.xpose.msra.mxu0 0.0
    %7075 = vmatprep.subr.mxu0 0.0
    %7076 = vmatpush1.xpose.msra.mxu0 0.0
    %7077 = vmatprep.subr.mxu0 0.0
    %7078 = vmatpush1.xpose.msra.mxu0 0.0
    %7079 = vmatprep.subr.mxu0 0.0
    %7080 = vmatpush1.xpose.msra.mxu0 0.0
    %7081 = vmatprep.subr.mxu0 0.0
    %7082 = vmatpush1.xpose.msra.mxu0 0.0
    %7083 = vmatprep.subr.mxu0 0.0
    %7084 = vmatpush1.xpose.msra.mxu0 0.0
    %7085 = vmatprep.subr.mxu0 0.0
    %7086 = vmatpush1.xpose.msra.mxu0 0.0
    %7087 = vmatprep.subr.mxu0 0.0
    %7088 = vmatpush1.xpose.msra.mxu0 0.0
    %7089 = vmatprep.subr.mxu0 0.0
    %7090 = vmatpush1.xpose.msra.mxu0 0.0
    %7091 = vmatprep.subr.mxu0 0.0
    %7092 = vmatpush1.xpose.msra.mxu0 0.0
    %7093 = vmatprep.subr.mxu0 0.0
    %7094 = vmatpush1.xpose.msra.mxu0 0.0
    %7095 = vmatprep.subr.mxu0 0.0
    %7096 = vmatpush1.xpose.msra.mxu0 0.0
    %7097 = vmatprep.subr.mxu0 0.0
    %7098 = vmatpush1.xpose.msra.mxu0 0.0
    %7099 = vmatprep.subr.mxu0 0.0
    %7100 = vmatpush1.xpose.msra.mxu0 0.0
    %7101 = vmatprep.subr.mxu0 0.0
    %7102 = vmatpush1.xpose.msra.mxu0 0.0
    %7103 = vmatprep.subr.mxu0 0.0
    %7104 = vmatpush1.xpose.msra.mxu0 0.0
    %7105 = vmatprep.subr.mxu0 0.0
    %7106 = vmatpush1.xpose.msra.mxu0 0.0
    %7107 = vmatprep.subr.mxu0 0.0
    %7108 = vmatpush1.xpose.msra.mxu0 0.0
    %7109 = vmatprep.subr.mxu0 0.0
    %7110 = vmatpush1.xpose.msra.mxu0 0.0
    %7111 = vmatprep.subr.mxu0 0.0
    %7112 = vmatpush1.xpose.msra.mxu0 0.0
    %7113 = vmatprep.subr.mxu0 0.0
    %7114 = vmatpush1.xpose.msra.mxu0 0.0
    %7115 = vmatprep.subr.mxu0 0.0
    %7116 = vmatpush1.xpose.msra.mxu0 0.0
    %7117 = vmatprep.subr.mxu0 0.0
    %7118 = vmatpush1.xpose.msra.mxu0 0.0
    %7119 = vmatprep.subr.mxu0 0.0
    %7120 = vmatpush1.xpose.msra.mxu0 0.0
    %7121 = vmatprep.subr.mxu0 0.0
    %7122 = vmatpush1.xpose.msra.mxu0 0.0
    %7123 = vmatprep.mubr.f32.mxu0 0.0
    %7124 = vmatmul.mubr.f32.gmra.mrb[0].mxu0 %v6890
    %v7125 = vpop.f32.mrb[0].mxu0
    %v7126 = vadd.f32 %v6888, %v7125
    %v7127 = vpop.f32.mrb[0].mxu0
    %7128 = vdwg.mxu0
    %v7129 = vsel %vm6965, %v7126, -inf
    %7130 = vmax.xlane.f32.xlu0 %v7129
    %v7131 = vpop.xlane.xlu0 %7130
    %v7132 = vsub.f32 %v7126, %v7131
    %v7133 = vmul.f32 %v7132, 1.442695
    %v7134 = vpow.pop %v7133
    %v7135 = vsel %vm6965, %v7134, 0.0
    %7136 = vadd.xlane.f32.xlu0 %v7135
    %v7137 = vpop.xlane.xlu0 %7136
    %v7138 = vrcp.pop %v7137
    %v7139 = vmul.f32 %v7134, %v7138
    %s7140 = scalar_lea.vmem [#allocation31], 1
    %7141 = vst.msk [vmem:[%s7140] sm:$0x1] %vm6965, %v7139
    %v7143 = vsel %vm1009, %v7139, 0
    %v7145 = vsel %vm635, %v7056, 0
    %7147 = vmatprep.subr.mxu0 0.0
    %7148 = vmatpush1.msra.mxu0 %v7145
    %7149 = vmatprep.subr.mxu0 0.0
    %7150 = vmatpush1.msra.mxu0 0.0
    %7151 = vmatprep.subr.mxu0 0.0
    %7152 = vmatpush1.msra.mxu0 0.0
    %7153 = vmatprep.subr.mxu0 0.0
    %7154 = vmatpush1.msra.mxu0 0.0
    %7155 = vmatprep.subr.mxu0 0.0
    %7156 = vmatpush1.msra.mxu0 0.0
    %7157 = vmatprep.subr.mxu0 0.0
    %7158 = vmatpush1.msra.mxu0 0.0
    %7159 = vmatprep.subr.mxu0 0.0
    %7160 = vmatpush1.msra.mxu0 0.0
    %7161 = vmatprep.subr.mxu0 0.0
    %7162 = vmatpush1.msra.mxu0 0.0
    %7163 = vmatprep.subr.mxu0 0.0
    %7164 = vmatpush1.msra.mxu0 0.0
    %7165 = vmatprep.subr.mxu0 0.0
    %7166 = vmatpush1.msra.mxu0 0.0
    %7167 = vmatprep.subr.mxu0 0.0
    %7168 = vmatpush1.msra.mxu0 0.0
    %7169 = vmatprep.subr.mxu0 0.0
    %7170 = vmatpush1.msra.mxu0 0.0
    %7171 = vmatprep.subr.mxu0 0.0
    %7172 = vmatpush1.msra.mxu0 0.0
    %7173 = vmatprep.subr.mxu0 0.0
    %7174 = vmatpush1.msra.mxu0 0.0
    %7175 = vmatprep.subr.mxu0 0.0
    %7176 = vmatpush1.msra.mxu0 0.0
    %7177 = vmatprep.subr.mxu0 0.0
    %7178 = vmatpush1.msra.mxu0 0.0
    %7179 = vmatprep.subr.mxu0 0.0
    %7180 = vmatpush1.msra.mxu0 0.0
    %7181 = vmatprep.subr.mxu0 0.0
    %7182 = vmatpush1.msra.mxu0 0.0
    %7183 = vmatprep.subr.mxu0 0.0
    %7184 = vmatpush1.msra.mxu0 0.0
    %7185 = vmatprep.subr.mxu0 0.0
    %7186 = vmatpush1.msra.mxu0 0.0
    %7187 = vmatprep.subr.mxu0 0.0
    %7188 = vmatpush1.msra.mxu0 0.0
    %7189 = vmatprep.subr.mxu0 0.0
    %7190 = vmatpush1.msra.mxu0 0.0
    %7191 = vmatprep.subr.mxu0 0.0
    %7192 = vmatpush1.msra.mxu0 0.0
    %7193 = vmatprep.subr.mxu0 0.0
    %7194 = vmatpush1.msra.mxu0 0.0
    %7195 = vmatprep.subr.mxu0 0.0
    %7196 = vmatpush1.msra.mxu0 0.0
    %7197 = vmatprep.subr.mxu0 0.0
    %7198 = vmatpush1.msra.mxu0 0.0
    %7199 = vmatprep.subr.mxu0 0.0
    %7200 = vmatpush1.msra.mxu0 0.0
    %7201 = vmatprep.subr.mxu0 0.0
    %7202 = vmatpush1.msra.mxu0 0.0
    %7203 = vmatprep.subr.mxu0 0.0
    %7204 = vmatpush1.msra.mxu0 0.0
    %7205 = vmatprep.subr.mxu0 0.0
    %7206 = vmatpush1.msra.mxu0 0.0
    %7207 = vmatprep.subr.mxu0 0.0
    %7208 = vmatpush1.msra.mxu0 0.0
    %7209 = vmatprep.subr.mxu0 0.0
    %7210 = vmatpush1.msra.mxu0 0.0
    %7211 = vmatprep.mubr.f32.mxu0 0.0
    %7212 = vmatmul.mubr.f32.gmra.mrb[0].mxu0 %v7143
    %v7213 = vpop.f32.mrb[0].mxu0
    %v7214 = vadd.f32 0.0, %v7213
    %v7215 = vpop.f32.mrb[0].mxu0
    %7216 = vdwg.mxu0
    %v7218 = vrot.slane %v7214, 7
    %v7220 = vsel %vm1605, %v7050, %v7218
    %v7221 = vld [vmem:[#allocation27] sm:$0xff]
    %v7222 = vld [vmem:[#allocation27 + $0x8] sm:$0xff]
    %v7223 = vld [vmem:[#allocation27 + $0x10] sm:$0xff]
    %v7224 = vld [vmem:[#allocation27 + $0x18] sm:$0xff]
    %v7225 = vld [vmem:[#allocation27 + $0x20] sm:$0xff]
    %v7226 = vld [vmem:[#allocation27 + $0x28] sm:$0xff]
    %v7227 = vld [vmem:[#allocation27 + $0x30] sm:$0xff]
    %v7228 = vld [vmem:[#allocation27 + $0x38] sm:$0xff]
    %v7229 = vld [vmem:[#allocation27 + $0x40] sm:$0xff]
    %v7230 = vld [vmem:[#allocation27 + $0x48] sm:$0xff]
    %v7231 = vld [vmem:[#allocation27 + $0x50] sm:$0xff]
    %v7232 = vld [vmem:[#allocation27 + $0x58] sm:$0xff]
    %v7233 = vld [vmem:[#allocation27 + $0x60] sm:$0xff]
    %v7234 = vld [vmem:[#allocation27 + $0x68] sm:$0xff]
    %v7235 = vld [vmem:[#allocation27 + $0x70] sm:$0xff]
    %v7236 = vld [vmem:[#allocation27 + $0x78] sm:$0xff]
    %v7237 = vld [vmem:[#allocation28] sm:$0x3]
    %v7239 = vlaneseq
    %v7240 = vshrl.u32 %v7239, 7
    %v7241 = vsub.s32 0, %v7240
    %v7242 = vrot.slane %v7237, %v7241
    %v7243 = vlaneseq
    %v7244 = vshrl.u32 %v7243, 7
    %v7245 = vsub.s32 1, %v7244
    %v7246 = vrot.slane %v7237, %v7245
    %v7250 = vsel %vm451, %v7220, 0
    %7252 = vmatprep.subr.mxu0 %v7222
    %7253 = vmatpush1.msra.mxu0 %v7221
    %7254 = vmatprep.subr.mxu0 %v7224
    %7255 = vmatpush1.msra.mxu0 %v7223
    %7256 = vmatprep.subr.mxu0 %v7226
    %7257 = vmatpush1.msra.mxu0 %v7225
    %7258 = vmatprep.subr.mxu0 %v7228
    %7259 = vmatpush1.msra.mxu0 %v7227
    %7260 = vmatprep.subr.mxu0 %v7230
    %7261 = vmatpush1.msra.mxu0 %v7229
    %7262 = vmatprep.subr.mxu0 %v7232
    %7263 = vmatpush1.msra.mxu0 %v7231
    %7264 = vmatprep.subr.mxu0 %v7234
    %7265 = vmatpush1.msra.mxu0 %v7233
    %7266 = vmatprep.subr.mxu0 %v7236
    %7267 = vmatpush1.msra.mxu0 %v7235
    %7268 = vmatprep.subr.mxu0 0.0
    %7269 = vmatpush1.msra.mxu0 0.0
    %7270 = vmatprep.subr.mxu0 0.0
    %7271 = vmatpush1.msra.mxu0 0.0
    %7272 = vmatprep.subr.mxu0 0.0
    %7273 = vmatpush1.msra.mxu0 0.0
    %7274 = vmatprep.subr.mxu0 0.0
    %7275 = vmatpush1.msra.mxu0 0.0
    %7276 = vmatprep.subr.mxu0 0.0
    %7277 = vmatpush1.msra.mxu0 0.0
    %7278 = vmatprep.subr.mxu0 0.0
    %7279 = vmatpush1.msra.mxu0 0.0
    %7280 = vmatprep.subr.mxu0 0.0
    %7281 = vmatpush1.msra.mxu0 0.0
    %7282 = vmatprep.subr.mxu0 0.0
    %7283 = vmatpush1.msra.mxu0 0.0
    %7284 = vmatprep.subr.mxu0 0.0
    %7285 = vmatpush1.msra.mxu0 0.0
    %7286 = vmatprep.subr.mxu0 0.0
    %7287 = vmatpush1.msra.mxu0 0.0
    %7288 = vmatprep.subr.mxu0 0.0
    %7289 = vmatpush1.msra.mxu0 0.0
    %7290 = vmatprep.subr.mxu0 0.0
    %7291 = vmatpush1.msra.mxu0 0.0
    %7292 = vmatprep.subr.mxu0 0.0
    %7293 = vmatpush1.msra.mxu0 0.0
    %7294 = vmatprep.subr.mxu0 0.0
    %7295 = vmatpush1.msra.mxu0 0.0
    %7296 = vmatprep.subr.mxu0 0.0
    %7297 = vmatpush1.msra.mxu0 0.0
    %7298 = vmatprep.subr.mxu0 0.0
    %7299 = vmatpush1.msra.mxu0 0.0
    %7300 = vmatprep.subr.mxu0 0.0
    %7301 = vmatpush1.msra.mxu0 0.0
    %7302 = vmatprep.subr.mxu0 0.0
    %7303 = vmatpush1.msra.mxu0 0.0
    %7304 = vmatprep.subr.mxu0 0.0
    %7305 = vmatpush1.msra.mxu0 0.0
    %7306 = vmatprep.subr.mxu0 0.0
    %7307 = vmatpush1.msra.mxu0 0.0
    %7308 = vmatprep.subr.mxu0 0.0
    %7309 = vmatpush1.msra.mxu0 0.0
    %7310 = vmatprep.subr.mxu0 0.0
    %7311 = vmatpush1.msra.mxu0 0.0
    %7312 = vmatprep.subr.mxu0 0.0
    %7313 = vmatpush1.msra.mxu0 0.0
    %7314 = vmatprep.subr.mxu0 0.0
    %7315 = vmatpush1.msra.mxu0 0.0
    %7316 = vmatprep.mubr.f32.mxu0 0.0
    %7317 = vmatmul.mubr.f32.gmra.mrb[0].mxu0 %v7250
    %v7318 = vpop.f32.mrb[0].mxu0
    %v7319 = vadd.f32 %v7242, %v7318
    %v7320 = vpop.f32.mrb[0].mxu0
    %v7321 = vadd.f32 %v7246, %v7320
    %7322 = vdwg.mxu0
    %v7323 = vmul.f32 %v7319, 0.5
    %v7324 = vmul.f32 %v7321, 0.5
    %v7325 = vmul.f32 %v7319, 0.70710677
    %v7326 = vmul.f32 %v7321, 0.70710677
    %v7327 = verf.f32.pop %v7325
    %v7328 = verf.f32.pop %v7326
    %v7329 = vadd.f32 %v7327, 1.0
    %v7330 = vadd.f32 %v7328, 1.0
    %v7331 = vmul.f32 %v7323, %v7329
    %v7332 = vmul.f32 %v7324, %v7330
    %v7333 = vld [vmem:[%s49] sm:$0xff]
    %v7334 = vld [vmem:[%s49 + $0x8] sm:$0xff]
    %v7335 = vld [vmem:[%s49 + $0x10] sm:$0xff]
    %v7336 = vld [vmem:[%s49 + $0x18] sm:$0xff]
    %v7337 = vld [vmem:[%s49 + $0x20] sm:$0xff]
    %v7338 = vld [vmem:[%s49 + $0x28] sm:$0xff]
    %v7339 = vld [vmem:[%s49 + $0x30] sm:$0xff]
    %v7340 = vld [vmem:[%s49 + $0x38] sm:$0xff]
    %v7341 = vld [vmem:[%s49 + $0x40] sm:$0xff]
    %v7342 = vld [vmem:[%s49 + $0x48] sm:$0xff]
    %v7343 = vld [vmem:[%s49 + $0x50] sm:$0xff]
    %v7344 = vld [vmem:[%s49 + $0x58] sm:$0xff]
    %v7345 = vld [vmem:[%s49 + $0x60] sm:$0xff]
    %v7346 = vld [vmem:[%s49 + $0x68] sm:$0xff]
    %v7347 = vld [vmem:[%s49 + $0x70] sm:$0xff]
    %v7348 = vld [vmem:[%s49 + $0x78] sm:$0xff]
    %v7349 = vld [vmem:[%s49 + $0x80] sm:$0xff]
    %v7350 = vld [vmem:[%s49 + $0x88] sm:$0xff]
    %v7351 = vld [vmem:[%s49 + $0x90] sm:$0xff]
    %v7352 = vld [vmem:[%s49 + $0x98] sm:$0xff]
    %v7353 = vld [vmem:[%s49 + $0xa0] sm:$0xff]
    %v7354 = vld [vmem:[%s49 + $0xa8] sm:$0xff]
    %v7355 = vld [vmem:[%s49 + $0xb0] sm:$0xff]
    %v7356 = vld [vmem:[%s49 + $0xb8] sm:$0xff]
    %v7357 = vld [vmem:[%s49 + $0xc0] sm:$0xff]
    %v7358 = vld [vmem:[%s49 + $0xc8] sm:$0xff]
    %v7359 = vld [vmem:[%s49 + $0xd0] sm:$0xff]
    %v7360 = vld [vmem:[%s49 + $0xd8] sm:$0xff]
    %v7361 = vld [vmem:[%s49 + $0xe0] sm:$0xff]
    %v7362 = vld [vmem:[%s49 + $0xe8] sm:$0xff]
    %v7363 = vld [vmem:[%s49 + $0xf0] sm:$0xff]
    %v7364 = vld [vmem:[%s49 + $0xf8] sm:$0xff]
    %v7365 = vld [vmem:[#allocation30] sm:$0x1]
    %v7367 = vlaneseq
    %v7368 = vshrl.u32 %v7367, 7
    %v7369 = vsub.s32 0, %v7368
    %v7370 = vrot.slane %v7365, %v7369
    %7372 = vmatprep.subr.mxu0 0.0
    %7373 = vmatpush1.msra.mxu0 %v7333
    %7374 = vmatprep.subr.mxu0 0.0
    %7375 = vmatpush1.msra.mxu0 %v7334
    %7376 = vmatprep.subr.mxu0 0.0
    %7377 = vmatpush1.msra.mxu0 %v7335
    %7378 = vmatprep.subr.mxu0 0.0
    %7379 = vmatpush1.msra.mxu0 %v7336
    %7380 = vmatprep.subr.mxu0 0.0
    %7381 = vmatpush1.msra.mxu0 %v7337
    %7382 = vmatprep.subr.mxu0 0.0
    %7383 = vmatpush1.msra.mxu0 %v7338
    %7384 = vmatprep.subr.mxu0 0.0
    %7385 = vmatpush1.msra.mxu0 %v7339
    %7386 = vmatprep.subr.mxu0 0.0
    %7387 = vmatpush1.msra.mxu0 %v7340
    %7388 = vmatprep.subr.mxu0 0.0
    %7389 = vmatpush1.msra.mxu0 %v7341
    %7390 = vmatprep.subr.mxu0 0.0
    %7391 = vmatpush1.msra.mxu0 %v7342
    %7392 = vmatprep.subr.mxu0 0.0
    %7393 = vmatpush1.msra.mxu0 %v7343
    %7394 = vmatprep.subr.mxu0 0.0
    %7395 = vmatpush1.msra.mxu0 %v7344
    %7396 = vmatprep.subr.mxu0 0.0
    %7397 = vmatpush1.msra.mxu0 %v7345
    %7398 = vmatprep.subr.mxu0 0.0
    %7399 = vmatpush1.msra.mxu0 %v7346
    %7400 = vmatprep.subr.mxu0 0.0
    %7401 = vmatpush1.msra.mxu0 %v7347
    %7402 = vmatprep.subr.mxu0 0.0
    %7403 = vmatpush1.msra.mxu0 %v7348
    %7404 = vmatprep.subr.mxu0 0.0
    %7405 = vmatpush1.msra.mxu0 %v7349
    %7406 = vmatprep.subr.mxu0 0.0
    %7407 = vmatpush1.msra.mxu0 %v7350
    %7408 = vmatprep.subr.mxu0 0.0
    %7409 = vmatpush1.msra.mxu0 %v7351
    %7410 = vmatprep.subr.mxu0 0.0
    %7411 = vmatpush1.msra.mxu0 %v7352
    %7412 = vmatprep.subr.mxu0 0.0
    %7413 = vmatpush1.msra.mxu0 %v7353
    %7414 = vmatprep.subr.mxu0 0.0
    %7415 = vmatpush1.msra.mxu0 %v7354
    %7416 = vmatprep.subr.mxu0 0.0
    %7417 = vmatpush1.msra.mxu0 %v7355
    %7418 = vmatprep.subr.mxu0 0.0
    %7419 = vmatpush1.msra.mxu0 %v7356
    %7420 = vmatprep.subr.mxu0 0.0
    %7421 = vmatpush1.msra.mxu0 %v7357
    %7422 = vmatprep.subr.mxu0 0.0
    %7423 = vmatpush1.msra.mxu0 %v7358
    %7424 = vmatprep.subr.mxu0 0.0
    %7425 = vmatpush1.msra.mxu0 %v7359
    %7426 = vmatprep.subr.mxu0 0.0
    %7427 = vmatpush1.msra.mxu0 %v7360
    %7428 = vmatprep.subr.mxu0 0.0
    %7429 = vmatpush1.msra.mxu0 %v7361
    %7430 = vmatprep.subr.mxu0 0.0
    %7431 = vmatpush1.msra.mxu0 %v7362
    %7432 = vmatprep.subr.mxu0 0.0
    %7433 = vmatpush1.msra.mxu0 %v7363
    %7434 = vmatprep.subr.mxu0 0.0
    %7435 = vmatpush1.msra.mxu0 %v7364
    %7436 = vmatprep.mubr.f32.mxu0 %v7332
    %7437 = vmatmul.mubr.f32.gmra.mrb[0].mxu0 %v7331
    %v7438 = vpop.f32.mrb[0].mxu0
    %v7439 = vadd.f32 %v7370, %v7438
    %v7440 = vpop.f32.mrb[0].mxu0
    %7441 = vdwg.mxu0
    %v7442 = vmul.f32 %v7439, 0.5
    %v7443 = vmul.f32 %v7439, 0.70710677
    %v7444 = verf.f32.pop %v7443
    %v7445 = vadd.f32 %v7444, 1.0
    %v7446 = vmul.f32 %v7442, %v7445
    %v7447 = vld [vmem:[%s53] sm:$0xff]
    %v7448 = vld [vmem:[%s53 + $0x8] sm:$0xff]
    %v7449 = vld [vmem:[%s53 + $0x10] sm:$0xff]
    %v7450 = vld [vmem:[%s53 + $0x18] sm:$0xff]
    %v7451 = vld [vmem:[%s53 + $0x20] sm:$0xff]
    %v7452 = vld [vmem:[%s53 + $0x28] sm:$0xff]
    %v7453 = vld [vmem:[%s53 + $0x30] sm:$0xff]
    %v7454 = vld [vmem:[%s53 + $0x38] sm:$0xff]
    %v7455 = vld [vmem:[%s53 + $0x40] sm:$0xff]
    %v7456 = vld [vmem:[%s53 + $0x48] sm:$0xff]
    %v7457 = vld [vmem:[%s53 + $0x50] sm:$0xff]
    %v7458 = vld [vmem:[%s53 + $0x58] sm:$0xff]
    %v7459 = vld [vmem:[%s53 + $0x60] sm:$0xff]
    %v7460 = vld [vmem:[%s53 + $0x68] sm:$0xff]
    %v7461 = vld [vmem:[%s53 + $0x70] sm:$0xff]
    %v7462 = vld [vmem:[%s53 + $0x78] sm:$0xff]
    %v7463 = vld [vmem:[#allocation3] sm:$0x1]
    %v7465 = vlaneseq
    %v7466 = vshrl.u32 %v7465, 7
    %v7467 = vsub.s32 0, %v7466
    %v7468 = vrot.slane %v7463, %v7467
    %7470 = vmatprep.subr.mxu0 0.0
    %7471 = vmatpush1.msra.mxu0 %v7447
    %7472 = vmatprep.subr.mxu0 0.0
    %7473 = vmatpush1.msra.mxu0 %v7448
    %7474 = vmatprep.subr.mxu0 0.0
    %7475 = vmatpush1.msra.mxu0 %v7449
    %7476 = vmatprep.subr.mxu0 0.0
    %7477 = vmatpush1.msra.mxu0 %v7450
    %7478 = vmatprep.subr.mxu0 0.0
    %7479 = vmatpush1.msra.mxu0 %v7451
    %7480 = vmatprep.subr.mxu0 0.0
    %7481 = vmatpush1.msra.mxu0 %v7452
    %7482 = vmatprep.subr.mxu0 0.0
    %7483 = vmatpush1.msra.mxu0 %v7453
    %7484 = vmatprep.subr.mxu0 0.0
    %7485 = vmatpush1.msra.mxu0 %v7454
    %7486 = vmatprep.subr.mxu0 0.0
    %7487 = vmatpush1.msra.mxu0 %v7455
    %7488 = vmatprep.subr.mxu0 0.0
    %7489 = vmatpush1.msra.mxu0 %v7456
    %7490 = vmatprep.subr.mxu0 0.0
    %7491 = vmatpush1.msra.mxu0 %v7457
    %7492 = vmatprep.subr.mxu0 0.0
    %7493 = vmatpush1.msra.mxu0 %v7458
    %7494 = vmatprep.subr.mxu0 0.0
    %7495 = vmatpush1.msra.mxu0 %v7459
    %7496 = vmatprep.subr.mxu0 0.0
    %7497 = vmatpush1.msra.mxu0 %v7460
    %7498 = vmatprep.subr.mxu0 0.0
    %7499 = vmatpush1.msra.mxu0 %v7461
    %7500 = vmatprep.subr.mxu0 0.0
    %7501 = vmatpush1.msra.mxu0 %v7462
    %7502 = vmatprep.subr.mxu0 0.0
    %7503 = vmatpush1.msra.mxu0 0.0
    %7504 = vmatprep.subr.mxu0 0.0
    %7505 = vmatpush1.msra.mxu0 0.0
    %7506 = vmatprep.subr.mxu0 0.0
    %7507 = vmatpush1.msra.mxu0 0.0
    %7508 = vmatprep.subr.mxu0 0.0
    %7509 = vmatpush1.msra.mxu0 0.0
    %7510 = vmatprep.subr.mxu0 0.0
    %7511 = vmatpush1.msra.mxu0 0.0
    %7512 = vmatprep.subr.mxu0 0.0
    %7513 = vmatpush1.msra.mxu0 0.0
    %7514 = vmatprep.subr.mxu0 0.0
    %7515 = vmatpush1.msra.mxu0 0.0
    %7516 = vmatprep.subr.mxu0 0.0
    %7517 = vmatpush1.msra.mxu0 0.0
    %7518 = vmatprep.subr.mxu0 0.0
    %7519 = vmatpush1.msra.mxu0 0.0
    %7520 = vmatprep.subr.mxu0 0.0
    %7521 = vmatpush1.msra.mxu0 0.0
    %7522 = vmatprep.subr.mxu0 0.0
    %7523 = vmatpush1.msra.mxu0 0.0
    %7524 = vmatprep.subr.mxu0 0.0
    %7525 = vmatpush1.msra.mxu0 0.0
    %7526 = vmatprep.subr.mxu0 0.0
    %7527 = vmatpush1.msra.mxu0 0.0
    %7528 = vmatprep.subr.mxu0 0.0
    %7529 = vmatpush1.msra.mxu0 0.0
    %7530 = vmatprep.subr.mxu0 0.0
    %7531 = vmatpush1.msra.mxu0 0.0
    %7532 = vmatprep.subr.mxu0 0.0
    %7533 = vmatpush1.msra.mxu0 0.0
    %7534 = vmatprep.mubr.f32.mxu0 0.0
    %7535 = vmatmul.mubr.f32.gmra.mrb[0].mxu0 %v7446
    %v7536 = vpop.f32.mrb[0].mxu0
    %v7537 = vadd.f32 %v7468, %v7536
    %v7538 = vpop.f32.mrb[0].mxu0
    %7539 = vdwg.mxu0
    %vm7540 = vcmask 1024
    %7541 = vst.msk [vmem:[%s57] sm:$0x3] %vm7540, %v7537
    // Predicated region
    $region182: #{improved_transformer_forward.1} parent=1 // pred_check
      _
    $region183: #{improved_transformer_forward.1} parent=1 // pred_check_branch
      %7543 = sbr.rel (0) target = $region185
    $region184: #{improved_transformer_forward.1} parent=1 // pred_region
      _
    $region185: #{improved_transformer_forward.1} parent=1 // pred_fallthru
      _
    // Predicated region
    $region186: #{improved_transformer_forward.1} parent=1 // pred_check
      _
    $region187: #{improved_transformer_forward.1} parent=1 // pred_check_branch
      %7545 = sbr.rel (0) target = $region189
    $region188: #{improved_transformer_forward.1} parent=1 // pred_region
      %s7547 = ssub.s32 32, 32
      %7548 = vsyncadd [#allocation6], %s7547
      %s7549 = sshll.u32 [#allocation31], 4
      %s7550 = int_to_ptr.vmem [resolvable:$true] %s7549
      %7555 = dma.vmem_to_hbm [thread:$0]  %s7550, 32, %s59, [#allocation6], 16, 16, 1
    $region189: #{improved_transformer_forward.1} parent=1 // pred_fallthru
      _
    // Predicated region
    $region190: #{improved_transformer_forward.1} parent=1 // pred_check
      _
    $region191: #{improved_transformer_forward.1} parent=1 // pred_check_branch
      %7557 = sbr.rel (0) target = $region193
    $region192: #{improved_transformer_forward.1} parent=1 // pred_region
      _
    $region193: #{improved_transformer_forward.1} parent=1 // pred_fallthru
      _
    // Predicated region
    $region194: #{improved_transformer_forward.1} parent=1 // pred_check
      _
    $region195: #{improved_transformer_forward.1} parent=1 // pred_check_branch
      %7559 = sbr.rel (0) target = $region197
    $region196: #{improved_transformer_forward.1} parent=1 // pred_region
      %7560 = dma.done [#allocation6], 32
    $region197: #{improved_transformer_forward.1} parent=1 // pred_fallthru
      _
    %7561 = vsyncpa [#allocation5], 1
    %7562 = vsyncpa [#allocation8], 1
    %7563 = vsyncpa [#allocation11], 1
    %7564 = vsyncpa [#allocation14], 1
    %7565 = vsyncpa [#allocation17], 1
    %7566 = vsyncpa [#allocation20], 1
    %7567 = vsyncpa [#allocation23], 1
    %7568 = vsyncpa [#allocation26], 1
    %7569 = vsyncpa [#allocation29], 1
    %7570 = vsyncpa [#allocation6], 1

</llo_original>
